<compile_context>
chip_gen: v6e
topology: v6e:2x2x1
jax: 0.10.0
libtpu: 0.0.40
codegen_flags: <defaults>
</compile_context>

<pallas_src>
import functools

import jax
import jax.numpy as jnp
from jax import lax
from jax.experimental import pallas as pl
from jax.experimental.pallas import tpu as pltpu

KSIZE = 4
BN_EPS = 1e-5
LANE = 128

_VMEM = pl.BlockSpec(memory_space=pltpu.MemorySpace.VMEM)


# ----------------------------------------------------------------------------
# In-kernel helpers (pure jnp values; everything lives in VMEM / vregs)
# ----------------------------------------------------------------------------
def _pad_hw1(x):
    """Zero-pad the two leading spatial dims of an (H, W, N, C) tensor by 1."""
    h, w, n, c = x.shape
    zr = jnp.zeros((1, w, n, c), x.dtype)
    x = jnp.concatenate([zr, x, zr], axis=0)
    zc = jnp.zeros((h + 2, 1, n, c), x.dtype)
    return jnp.concatenate([zc, x, zc], axis=1)


def _phase_matmuls(x, w_ref):
    """Polyphase ConvTranspose2d(k=4, s=2, p=1) as 4 deep-K MXU matmuls.

    x:     (H, W, N, Cin) bf16 activation.
    w_ref: (2, 2, 4*Cin, Cout) bf16 phase-packed weights (see _pack_phase_weight).
    Returns {(py, px): (H*W*N, Cout) f32} output-parity sub-grids."""
    h, w, n, cin = x.shape
    xp = _pad_hw1(x)
    accs = {}
    for py in range(2):
        for px in range(2):
            taps = []
            for dy in range(2):
                for dx in range(2):
                    v = xp[py + dy:py + dy + h, px + dx:px + dx + w]
                    taps.append(v.reshape(h * w * n, cin))
            patch = jnp.concatenate(taps, axis=-1)            # (M, 4*Cin) bf16
            accs[(py, px)] = jnp.dot(patch, w_ref[py, px],
                                     preferred_element_type=jnp.float32)
    return accs


def _bn_relu(accs, gamma, beta):
    """One-pass BatchNorm (batch stats, biased variance -- like torch BN in
    training mode) + ReLU over f32 (M, C) accumulators sharing channels.
    Returns bf16 results (they feed the next MXU matmul)."""
    m_total = sum(a.shape[0] for a in accs)
    s = ss = jnp.zeros((1, accs[0].shape[1]), jnp.float32)
    for a in accs:
        s = s + jnp.sum(a, axis=0, keepdims=True)
        ss = ss + jnp.sum(a * a, axis=0, keepdims=True)
    mean = s / m_total
    var = ss / m_total - mean * mean
    scale = gamma * lax.rsqrt(var + BN_EPS)
    shift = beta - mean * scale
    return [jnp.maximum(a * scale + shift, 0.0).astype(jnp.bfloat16)
            for a in accs]


def _interleave_phases(ph):
    """ph[py][px]: (H, W, N, C) -> (2H, 2W, N, C) with
    out[2j+py, 2i+px] = ph[py][px][j, i].
    Implemented with leading-dim-only concats/reshapes (layout preserving)."""
    h, w, n, c = ph[0][0].shape
    rows = []
    for py in range(2):
        a = ph[py][0].reshape(h * w, 1, n, c)
        b = ph[py][1].reshape(h * w, 1, n, c)
        rows.append(jnp.concatenate([a, b], axis=1).reshape(h, 2 * w, n, c))
    return jnp.concatenate(rows, axis=1).reshape(2 * h, 2 * w, n, c)


# ----------------------------------------------------------------------------
# Fused whole-decoder kernel
# ----------------------------------------------------------------------------
def make_decoder_kernel(n, c0, mid_channels, c_pad):
    """Ref order: z, w0, g0, b0, [w_i, g_i, b_i] * n_mid, w_final, out."""
    n_mid = len(mid_channels)

    def kernel(*refs):
        z_ref, w0_ref, g0_ref, b0_ref = refs[0:4]
        mid_refs = [refs[4 + 3 * i: 7 + 3 * i] for i in range(n_mid)]
        wf_ref = refs[4 + 3 * n_mid]
        o_ref = refs[5 + 3 * n_mid]

        # -- layer 0: ConvT(zdim->c0, k4, s1, p0) on a 1x1 input is a weight
        #    "stamp": ONE dense matmul producing all 16 output pixels at once.
        z = z_ref[...].astype(jnp.bfloat16)                       # (N, zdim)
        y0 = jnp.dot(z, w0_ref[...],
                     preferred_element_type=jnp.float32)          # (N, 16*c0)
        # lane-aligned slices -> rows ordered (ky*4+kx, n); BN is order-free.
        y0 = jnp.concatenate(
            [y0[:, t * c0:(t + 1) * c0] for t in range(KSIZE * KSIZE)],
            axis=0)                                               # (16N, c0)
        x = _bn_relu([y0], g0_ref[...], b0_ref[...])[0]
        x = x.reshape(KSIZE, KSIZE, n, c0)                        # HWNC, bf16
        h = KSIZE

        # -- hidden stride-2 ConvT + BN + ReLU layers (polyphase, fused BN).
        for (w_ref, g_ref, b_ref), (_, cout) in zip(mid_refs, mid_channels):
            accs = _phase_matmuls(x, w_ref)
            normed = _bn_relu(list(accs.values()), g_ref[...], b_ref[...])
            ph = [[None, None], [None, None]]
            for (py, px), a in zip(accs.keys(), normed):
                ph[py][px] = a.reshape(h, h, n, cout)
            x = _interleave_phases(ph)                            # (2h,2h,N,cout)
            h *= 2

        # -- final stride-2 ConvT (Cout lane-padded to 128) + Hardtanh(0, 1).
        accs = _phase_matmuls(x, wf_ref)
        ph = [[None, None], [None, None]]
        for (py, px), a in accs.items():
            ph[py][px] = jnp.clip(a, 0.0, 1.0).reshape(h, h, n, c_pad)
        o_ref[...] = _interleave_phases(ph)                       # (2h,2h,N,c_pad)

    return kernel


# ----------------------------------------------------------------------------
# Wrapper-side parameter packing (pure JAX glue, done once)
# ----------------------------------------------------------------------------
def _pack_phase_weight(w_pt, c_out_pad):
    """PyTorch ConvTranspose2d weight (Cin, Cout, 4, 4) -> polyphase-packed
    (2, 2, 4*Cin, c_out_pad) bf16.  For output parity (py, px) the row blocks
    are ordered (dy, dx) in [(0,0),(0,1),(1,0),(1,1)], matching the kernel's
    im2col concat; tap (dy,dx) corresponds to kernel index (3-py-2dy, 3-px-2dx)."""
    cin, cout = w_pt.shape[0], w_pt.shape[1]
    if c_out_pad > cout:
        w_pt = jnp.pad(w_pt, ((0, 0), (0, c_out_pad - cout), (0, 0), (0, 0)))
    phases = []
    for py in range(2):
        row = []
        for px in range(2):
            taps = []
            for dy in range(2):
                for dx in range(2):
                    ky = (KSIZE - 1) - py - 2 * dy
                    kx = (KSIZE - 1) - px - 2 * dx
                    taps.append(w_pt[:, :, ky, kx])               # (Cin, Cpad)
            row.append(jnp.concatenate(taps, axis=0))             # (4Cin, Cpad)
        phases.append(jnp.stack(row, axis=0))
    return jnp.stack(phases, axis=0).astype(jnp.bfloat16)         # (2,2,4Cin,Cpad)


def prepare_decoder(layers, zdim, nc):
    """Raw (PyTorch-layout) params -> flat list of kernel operands + meta."""
    first, mids, last = layers[0], layers[1:-1], layers[-1]
    c0 = first["w"].shape[1]
    # layer 0: (zdim, C0, 4, 4) -> (zdim, 16*C0) with lane order (ky, kx, co).
    w0 = jnp.transpose(first["w"], (0, 2, 3, 1)).reshape(zdim, KSIZE * KSIZE * c0)
    args = [w0.astype(jnp.bfloat16),
            first["gamma"].reshape(1, c0).astype(jnp.float32),
            first["beta"].reshape(1, c0).astype(jnp.float32)]
    mid_channels = []
    for lyr in mids:
        cin, cout = lyr["w"].shape[0], lyr["w"].shape[1]
        mid_channels.append((cin, cout))
        args += [_pack_phase_weight(lyr["w"], cout),
                 lyr["gamma"].reshape(1, cout).astype(jnp.float32),
                 lyr["beta"].reshape(1, cout).astype(jnp.float32)]
    c_pad = max(LANE, pl.cdiv(nc, LANE) * LANE)                   # lane-dense out
    args.append(_pack_phase_weight(last["w"], c_pad))
    meta = dict(c0=c0, mid_channels=tuple(mid_channels), c_pad=c_pad)
    return args, meta


def decoders_forward(z, kernel_args, meta, *, zdim, nc, img_size):
    """z: anything reshapeable to (-1, zdim).  Returns NCHW (N, nc, H, W) f32."""
    z2 = z.reshape(-1, zdim).astype(jnp.float32)
    n = z2.shape[0]
    kernel = make_decoder_kernel(n, meta["c0"], meta["mid_channels"],
                                 meta["c_pad"])
    inputs = [z2] + list(kernel_args)
    out_hwnc = pl.pallas_call(
        kernel,
        out_shape=jax.ShapeDtypeStruct(
            (img_size, img_size, n, meta["c_pad"]), jnp.float32),
        in_specs=[_VMEM] * len(inputs),
        out_specs=_VMEM,
    )(*inputs)
    # Pure layout glue: drop the lane padding, HWNC -> NCHW (PyTorch order).
    return jnp.transpose(out_hwnc[..., :nc], (2, 3, 0, 1))


# ----------------------------------------------------------------------------
# Synthetic params mirroring Decoders.__init__, and a pure-JAX reference
# ----------------------------------------------------------------------------
def build_decoder_params(key, zdim, img_size, nc):
    def q(x):  # bf16-representable values (kernel uses bf16 MXU operands)
        return x.astype(jnp.bfloat16).astype(jnp.float32)

    layers = []
    cngf = 256
    key, k0 = jax.random.split(key)
    layers.append(dict(
        w=q(0.05 * jax.random.normal(k0, (zdim, cngf, KSIZE, KSIZE), jnp.float32)),
        gamma=1.0 + 0.1 * jax.random.normal(jax.random.fold_in(key, 100),
                                            (cngf,), jnp.float32),
        beta=0.1 * jax.random.normal(jax.random.fold_in(key, 200),
                                     (cngf,), jnp.float32),
        stride=1, pad=0, kind="bn_relu"))
    csize, layer_cnt = 4, 1
    while csize < img_size // 2:
        in_feat, out_feat = cngf, max(cngf // 2, 32)
        key, kw = jax.random.split(key)
        layers.append(dict(
            w=q(0.05 * jax.random.normal(kw, (in_feat, out_feat, KSIZE, KSIZE),
                                         jnp.float32)),
            gamma=1.0 + 0.1 * jax.random.normal(
                jax.random.fold_in(key, 100 + layer_cnt), (out_feat,), jnp.float32),
            beta=0.1 * jax.random.normal(
                jax.random.fold_in(key, 200 + layer_cnt), (out_feat,), jnp.float32),
            stride=2, pad=1, kind="bn_relu"))
        layer_cnt += 1
        csize *= 2
        cngf = out_feat
    key, kf = jax.random.split(key)
    layers.append(dict(
        w=q(0.05 * jax.random.normal(kf, (cngf, nc, KSIZE, KSIZE), jnp.float32)),
        gamma=None, beta=None, stride=2, pad=1, kind="hardtanh"))
    return layers


def _convt_ref(x, w, stride, pad):
    """Exact ConvTranspose2d(k=4, stride, pad, bias=False), NCHW, f32."""
    wk = jnp.transpose(w[:, :, ::-1, ::-1], (1, 0, 2, 3))         # OIHW, flipped
    return lax.conv_general_dilated(
        x, wk, window_strides=(1, 1),
        padding=[(KSIZE - 1 - pad, KSIZE - 1 - pad)] * 2,
        lhs_dilation=(stride, stride),
        dimension_numbers=("NCHW", "OIHW", "NCHW"),
        precision=lax.Precision.HIGHEST)


def decoders_reference(z, layers, zdim):
    x = z.reshape(-1, zdim)[:, :, None, None]
    for lyr in layers:
        x = _convt_ref(x, lyr["w"], lyr["stride"], lyr["pad"])
        if lyr["kind"] == "bn_relu":
            mean = jnp.mean(x, axis=(0, 2, 3), keepdims=True)
            var = jnp.mean((x - mean) ** 2, axis=(0, 2, 3), keepdims=True)
            xn = (x - mean) * lax.rsqrt(var + BN_EPS)
            x = jnp.maximum(xn * lyr["gamma"][None, :, None, None]
                            + lyr["beta"][None, :, None, None], 0.0)
        else:
            x = jnp.clip(x, 0.0, 1.0)
    return x


# ----------------------------------------------------------------------------
if __name__ == "__main__":
    # Config consistent with the module: opt.zdim=32, opt.imgSize=16, opt.nc=3
    ZDIM, IMG_SIZE, NC, BATCH = 32, 16, 3, 2

    key = jax.random.PRNGKey(0)
    key, kz = jax.random.split(key)
    z = jax.random.normal(kz, (BATCH, ZDIM), jnp.float32)
    z = z.astype(jnp.bfloat16).astype(jnp.float32)   # bf16-representable latents

    raw_layers = build_decoder_params(key, ZDIM, IMG_SIZE, NC)
    kernel_args, meta = prepare_decoder(raw_layers, ZDIM, NC)

    fwd = jax.jit(functools.partial(
        decoders_forward, kernel_args=kernel_args, meta=meta,
        zdim=ZDIM, nc=NC, img_size=IMG_SIZE))
    out = fwd(z)
    jax.block_until_ready(out)

    assert out.shape == (BATCH, NC, IMG_SIZE, IMG_SIZE), out.shape
    assert bool(jnp.all(out >= 0.0)) and bool(jnp.all(out <= 1.0))

    # Correctness vs a pure-JAX (XLA, f32) reference of the PyTorch module.
    ref = decoders_reference(z, raw_layers, ZDIM)
    err = float(jnp.max(jnp.abs(out - ref)))
    assert err < 0.1, f"max abs err {err}"

    print("KERNEL_OK")
</pallas_src>

<mosaic_0001>
module attributes {stable_mosaic.version = 11 : i64} {
  func.func @kernel(%arg0: memref<2x32xf32, #tpu.memory_space<vmem>>, %arg1: memref<32x4096xbf16, #tpu.memory_space<vmem>>, %arg2: memref<1x256xf32, #tpu.memory_space<vmem>>, %arg3: memref<1x256xf32, #tpu.memory_space<vmem>>, %arg4: memref<2x2x1024x128xbf16, #tpu.memory_space<vmem>>, %arg5: memref<1x128xf32, #tpu.memory_space<vmem>>, %arg6: memref<1x128xf32, #tpu.memory_space<vmem>>, %arg7: memref<2x2x512x128xbf16, #tpu.memory_space<vmem>>, %arg8: memref<16x16x2x128xf32, #tpu.memory_space<vmem>>) attributes {dimension_semantics = [], scalar_prefetch = 0 : i64, scratch_operands = 0 : i64, tpu.core_type = #tpu.core_type<tc>} {
    %c0 = arith.constant 0 : index
    %c0_0 = arith.constant 0 : index
    %0 = vector.load %arg0[%c0, %c0_0] : memref<2x32xf32, #tpu.memory_space<vmem>>, vector<2x32xf32>
    %1 = arith.truncf %0 : vector<2x32xf32> to vector<2x32xbf16>
    %c0_1 = arith.constant 0 : index
    %c0_2 = arith.constant 0 : index
    %2 = vector.load %arg1[%c0_1, %c0_2] : memref<32x4096xbf16, #tpu.memory_space<vmem>>, vector<32x4096xbf16>
    %cst = arith.constant dense<0.000000e+00> : vector<2x4096xf32>
    %3 = tpu.matmul %1, %2, %cst {dimension_numbers = #tpu.dot_dimension_numbers<[1], [0], [0], [1], [0, 0, 1, 1], [], []>} : vector<2x32xbf16>, vector<32x4096xbf16>, vector<2x4096xf32> -> vector<2x4096xf32>
    %4 = vector.extract_strided_slice %3 {offsets = [0, 0], sizes = [2, 256], strides = [1, 1]} : vector<2x4096xf32> to vector<2x256xf32>
    %5 = vector.extract_strided_slice %3 {offsets = [0, 256], sizes = [2, 256], strides = [1, 1]} : vector<2x4096xf32> to vector<2x256xf32>
    %6 = vector.extract_strided_slice %3 {offsets = [0, 512], sizes = [2, 256], strides = [1, 1]} : vector<2x4096xf32> to vector<2x256xf32>
    %7 = vector.extract_strided_slice %3 {offsets = [0, 768], sizes = [2, 256], strides = [1, 1]} : vector<2x4096xf32> to vector<2x256xf32>
    %8 = vector.extract_strided_slice %3 {offsets = [0, 1024], sizes = [2, 256], strides = [1, 1]} : vector<2x4096xf32> to vector<2x256xf32>
    %9 = vector.extract_strided_slice %3 {offsets = [0, 1280], sizes = [2, 256], strides = [1, 1]} : vector<2x4096xf32> to vector<2x256xf32>
    %10 = vector.extract_strided_slice %3 {offsets = [0, 1536], sizes = [2, 256], strides = [1, 1]} : vector<2x4096xf32> to vector<2x256xf32>
    %11 = vector.extract_strided_slice %3 {offsets = [0, 1792], sizes = [2, 256], strides = [1, 1]} : vector<2x4096xf32> to vector<2x256xf32>
    %12 = vector.extract_strided_slice %3 {offsets = [0, 2048], sizes = [2, 256], strides = [1, 1]} : vector<2x4096xf32> to vector<2x256xf32>
    %13 = vector.extract_strided_slice %3 {offsets = [0, 2304], sizes = [2, 256], strides = [1, 1]} : vector<2x4096xf32> to vector<2x256xf32>
    %14 = vector.extract_strided_slice %3 {offsets = [0, 2560], sizes = [2, 256], strides = [1, 1]} : vector<2x4096xf32> to vector<2x256xf32>
    %15 = vector.extract_strided_slice %3 {offsets = [0, 2816], sizes = [2, 256], strides = [1, 1]} : vector<2x4096xf32> to vector<2x256xf32>
    %16 = vector.extract_strided_slice %3 {offsets = [0, 3072], sizes = [2, 256], strides = [1, 1]} : vector<2x4096xf32> to vector<2x256xf32>
    %17 = vector.extract_strided_slice %3 {offsets = [0, 3328], sizes = [2, 256], strides = [1, 1]} : vector<2x4096xf32> to vector<2x256xf32>
    %18 = vector.extract_strided_slice %3 {offsets = [0, 3584], sizes = [2, 256], strides = [1, 1]} : vector<2x4096xf32> to vector<2x256xf32>
    %19 = vector.extract_strided_slice %3 {offsets = [0, 3840], sizes = [2, 256], strides = [1, 1]} : vector<2x4096xf32> to vector<2x256xf32>
    %20 = tpu.concatenate %4, %5, %6, %7, %8, %9, %10, %11, %12, %13, %14, %15, %16, %17, %18, %19 in 0 : vector<2x256xf32>, vector<2x256xf32>, vector<2x256xf32>, vector<2x256xf32>, vector<2x256xf32>, vector<2x256xf32>, vector<2x256xf32>, vector<2x256xf32>, vector<2x256xf32>, vector<2x256xf32>, vector<2x256xf32>, vector<2x256xf32>, vector<2x256xf32>, vector<2x256xf32>, vector<2x256xf32>, vector<2x256xf32> -> vector<32x256xf32>
    %c0_3 = arith.constant 0 : index
    %c0_4 = arith.constant 0 : index
    %21 = vector.load %arg2[%c0_3, %c0_4] : memref<1x256xf32, #tpu.memory_space<vmem>>, vector<1x256xf32>
    %c0_5 = arith.constant 0 : index
    %c0_6 = arith.constant 0 : index
    %22 = vector.load %arg3[%c0_5, %c0_6] : memref<1x256xf32, #tpu.memory_space<vmem>>, vector<1x256xf32>
    %cst_7 = arith.constant 0.000000e+00 : f32
    %23 = vector.broadcast %cst_7 : f32 to vector<1x256xf32>
    %cst_8 = arith.constant dense<0.000000e+00> : vector<256xf32>
    %24 = vector.multi_reduction <add>, %20, %cst_8 [0] : vector<32x256xf32> to vector<256xf32>
    %25 = vector.shape_cast %24 : vector<256xf32> to vector<1x256xf32>
    %26 = arith.addf %23, %25 : vector<1x256xf32>
    %27 = arith.mulf %20, %20 : vector<32x256xf32>
    %cst_9 = arith.constant dense<0.000000e+00> : vector<256xf32>
    %28 = vector.multi_reduction <add>, %27, %cst_9 [0] : vector<32x256xf32> to vector<256xf32>
    %29 = vector.shape_cast %28 : vector<256xf32> to vector<1x256xf32>
    %30 = arith.addf %23, %29 : vector<1x256xf32>
    %cst_10 = arith.constant 3.200000e+01 : f32
    %31 = vector.broadcast %cst_10 : f32 to vector<1x256xf32>
    %32 = arith.divf %26, %31 : vector<1x256xf32>
    %cst_11 = arith.constant 3.200000e+01 : f32
    %33 = vector.broadcast %cst_11 : f32 to vector<1x256xf32>
    %34 = arith.divf %30, %33 : vector<1x256xf32>
    %35 = arith.mulf %32, %32 : vector<1x256xf32>
    %36 = arith.subf %34, %35 : vector<1x256xf32>
    %cst_12 = arith.constant 9.99999974E-6 : f32
    %37 = vector.broadcast %cst_12 : f32 to vector<1x256xf32>
    %38 = arith.addf %36, %37 : vector<1x256xf32>
    %39 = math.rsqrt %38 : vector<1x256xf32>
    %40 = arith.mulf %21, %39 : vector<1x256xf32>
    %41 = arith.mulf %32, %40 : vector<1x256xf32>
    %42 = arith.subf %22, %41 : vector<1x256xf32>
    %43 = vector.broadcast %40 : vector<1x256xf32> to vector<32x256xf32>
    %44 = arith.mulf %20, %43 : vector<32x256xf32>
    %45 = vector.broadcast %42 : vector<1x256xf32> to vector<32x256xf32>
    %46 = arith.addf %44, %45 : vector<32x256xf32>
    %cst_13 = arith.constant 0.000000e+00 : f32
    %47 = vector.broadcast %cst_13 : f32 to vector<32x256xf32>
    %48 = arith.maximumf %46, %47 : vector<32x256xf32>
    %49 = arith.truncf %48 : vector<32x256xf32> to vector<32x256xbf16>
    %50 = vector.shape_cast %49 : vector<32x256xbf16> to vector<4x4x2x256xbf16>
    %cst_14 = arith.constant 0.000000e+00 : bf16
    %51 = vector.broadcast %cst_14 : bf16 to vector<1x4x2x256xbf16>
    %52 = tpu.concatenate %51, %50, %51 in 0 : vector<1x4x2x256xbf16>, vector<4x4x2x256xbf16>, vector<1x4x2x256xbf16> -> vector<6x4x2x256xbf16>
    %cst_15 = arith.constant 0.000000e+00 : bf16
    %53 = vector.broadcast %cst_15 : bf16 to vector<6x1x2x256xbf16>
    %54 = tpu.concatenate %53, %52, %53 in 1 : vector<6x1x2x256xbf16>, vector<6x4x2x256xbf16>, vector<6x1x2x256xbf16> -> vector<6x6x2x256xbf16>
    %55 = vector.extract_strided_slice %54 {offsets = [0, 0, 0, 0], sizes = [4, 4, 2, 256], strides = [1, 1, 1, 1]} : vector<6x6x2x256xbf16> to vector<4x4x2x256xbf16>
    %56 = vector.shape_cast %55 : vector<4x4x2x256xbf16> to vector<32x256xbf16>
    %57 = vector.extract_strided_slice %54 {offsets = [0, 1, 0, 0], sizes = [4, 4, 2, 256], strides = [1, 1, 1, 1]} : vector<6x6x2x256xbf16> to vector<4x4x2x256xbf16>
    %58 = vector.shape_cast %57 : vector<4x4x2x256xbf16> to vector<32x256xbf16>
    %59 = vector.extract_strided_slice %54 {offsets = [1, 0, 0, 0], sizes = [4, 4, 2, 256], strides = [1, 1, 1, 1]} : vector<6x6x2x256xbf16> to vector<4x4x2x256xbf16>
    %60 = vector.shape_cast %59 : vector<4x4x2x256xbf16> to vector<32x256xbf16>
    %61 = vector.extract_strided_slice %54 {offsets = [1, 1, 0, 0], sizes = [4, 4, 2, 256], strides = [1, 1, 1, 1]} : vector<6x6x2x256xbf16> to vector<4x4x2x256xbf16>
    %62 = vector.shape_cast %61 : vector<4x4x2x256xbf16> to vector<32x256xbf16>
    %63 = tpu.concatenate %56, %58, %60, %62 in 1 : vector<32x256xbf16>, vector<32x256xbf16>, vector<32x256xbf16>, vector<32x256xbf16> -> vector<32x1024xbf16>
    %c0_16 = arith.constant 0 : index
    %c0_17 = arith.constant 0 : index
    %c0_18 = arith.constant 0 : index
    %c0_19 = arith.constant 0 : index
    %64 = vector.load %arg4[%c0_16, %c0_17, %c0_18, %c0_19] : memref<2x2x1024x128xbf16, #tpu.memory_space<vmem>>, vector<1x1x1024x128xbf16>
    %65 = vector.shape_cast %64 : vector<1x1x1024x128xbf16> to vector<1024x128xbf16>
    %cst_20 = arith.constant dense<0.000000e+00> : vector<32x128xf32>
    %66 = tpu.matmul %63, %65, %cst_20 {dimension_numbers = #tpu.dot_dimension_numbers<[1], [0], [0], [1], [0, 0, 1, 1], [], []>} : vector<32x1024xbf16>, vector<1024x128xbf16>, vector<32x128xf32> -> vector<32x128xf32>
    %67 = vector.extract_strided_slice %54 {offsets = [0, 1, 0, 0], sizes = [4, 4, 2, 256], strides = [1, 1, 1, 1]} : vector<6x6x2x256xbf16> to vector<4x4x2x256xbf16>
    %68 = vector.shape_cast %67 : vector<4x4x2x256xbf16> to vector<32x256xbf16>
    %69 = vector.extract_strided_slice %54 {offsets = [0, 2, 0, 0], sizes = [4, 4, 2, 256], strides = [1, 1, 1, 1]} : vector<6x6x2x256xbf16> to vector<4x4x2x256xbf16>
    %70 = vector.shape_cast %69 : vector<4x4x2x256xbf16> to vector<32x256xbf16>
    %71 = vector.extract_strided_slice %54 {offsets = [1, 1, 0, 0], sizes = [4, 4, 2, 256], strides = [1, 1, 1, 1]} : vector<6x6x2x256xbf16> to vector<4x4x2x256xbf16>
    %72 = vector.shape_cast %71 : vector<4x4x2x256xbf16> to vector<32x256xbf16>
    %73 = vector.extract_strided_slice %54 {offsets = [1, 2, 0, 0], sizes = [4, 4, 2, 256], strides = [1, 1, 1, 1]} : vector<6x6x2x256xbf16> to vector<4x4x2x256xbf16>
    %74 = vector.shape_cast %73 : vector<4x4x2x256xbf16> to vector<32x256xbf16>
    %75 = tpu.concatenate %68, %70, %72, %74 in 1 : vector<32x256xbf16>, vector<32x256xbf16>, vector<32x256xbf16>, vector<32x256xbf16> -> vector<32x1024xbf16>
    %c0_21 = arith.constant 0 : index
    %c1 = arith.constant 1 : index
    %c0_22 = arith.constant 0 : index
    %c0_23 = arith.constant 0 : index
    %76 = vector.load %arg4[%c0_21, %c1, %c0_22, %c0_23] : memref<2x2x1024x128xbf16, #tpu.memory_space<vmem>>, vector<1x1x1024x128xbf16>
    %77 = vector.shape_cast %76 : vector<1x1x1024x128xbf16> to vector<1024x128xbf16>
    %cst_24 = arith.constant dense<0.000000e+00> : vector<32x128xf32>
    %78 = tpu.matmul %75, %77, %cst_24 {dimension_numbers = #tpu.dot_dimension_numbers<[1], [0], [0], [1], [0, 0, 1, 1], [], []>} : vector<32x1024xbf16>, vector<1024x128xbf16>, vector<32x128xf32> -> vector<32x128xf32>
    %79 = vector.extract_strided_slice %54 {offsets = [1, 0, 0, 0], sizes = [4, 4, 2, 256], strides = [1, 1, 1, 1]} : vector<6x6x2x256xbf16> to vector<4x4x2x256xbf16>
    %80 = vector.shape_cast %79 : vector<4x4x2x256xbf16> to vector<32x256xbf16>
    %81 = vector.extract_strided_slice %54 {offsets = [1, 1, 0, 0], sizes = [4, 4, 2, 256], strides = [1, 1, 1, 1]} : vector<6x6x2x256xbf16> to vector<4x4x2x256xbf16>
    %82 = vector.shape_cast %81 : vector<4x4x2x256xbf16> to vector<32x256xbf16>
    %83 = vector.extract_strided_slice %54 {offsets = [2, 0, 0, 0], sizes = [4, 4, 2, 256], strides = [1, 1, 1, 1]} : vector<6x6x2x256xbf16> to vector<4x4x2x256xbf16>
    %84 = vector.shape_cast %83 : vector<4x4x2x256xbf16> to vector<32x256xbf16>
    %85 = vector.extract_strided_slice %54 {offsets = [2, 1, 0, 0], sizes = [4, 4, 2, 256], strides = [1, 1, 1, 1]} : vector<6x6x2x256xbf16> to vector<4x4x2x256xbf16>
    %86 = vector.shape_cast %85 : vector<4x4x2x256xbf16> to vector<32x256xbf16>
    %87 = tpu.concatenate %80, %82, %84, %86 in 1 : vector<32x256xbf16>, vector<32x256xbf16>, vector<32x256xbf16>, vector<32x256xbf16> -> vector<32x1024xbf16>
    %c1_25 = arith.constant 1 : index
    %c0_26 = arith.constant 0 : index
    %c0_27 = arith.constant 0 : index
    %c0_28 = arith.constant 0 : index
    %88 = vector.load %arg4[%c1_25, %c0_26, %c0_27, %c0_28] : memref<2x2x1024x128xbf16, #tpu.memory_space<vmem>>, vector<1x1x1024x128xbf16>
    %89 = vector.shape_cast %88 : vector<1x1x1024x128xbf16> to vector<1024x128xbf16>
    %cst_29 = arith.constant dense<0.000000e+00> : vector<32x128xf32>
    %90 = tpu.matmul %87, %89, %cst_29 {dimension_numbers = #tpu.dot_dimension_numbers<[1], [0], [0], [1], [0, 0, 1, 1], [], []>} : vector<32x1024xbf16>, vector<1024x128xbf16>, vector<32x128xf32> -> vector<32x128xf32>
    %91 = vector.extract_strided_slice %54 {offsets = [1, 1, 0, 0], sizes = [4, 4, 2, 256], strides = [1, 1, 1, 1]} : vector<6x6x2x256xbf16> to vector<4x4x2x256xbf16>
    %92 = vector.shape_cast %91 : vector<4x4x2x256xbf16> to vector<32x256xbf16>
    %93 = vector.extract_strided_slice %54 {offsets = [1, 2, 0, 0], sizes = [4, 4, 2, 256], strides = [1, 1, 1, 1]} : vector<6x6x2x256xbf16> to vector<4x4x2x256xbf16>
    %94 = vector.shape_cast %93 : vector<4x4x2x256xbf16> to vector<32x256xbf16>
    %95 = vector.extract_strided_slice %54 {offsets = [2, 1, 0, 0], sizes = [4, 4, 2, 256], strides = [1, 1, 1, 1]} : vector<6x6x2x256xbf16> to vector<4x4x2x256xbf16>
    %96 = vector.shape_cast %95 : vector<4x4x2x256xbf16> to vector<32x256xbf16>
    %97 = vector.extract_strided_slice %54 {offsets = [2, 2, 0, 0], sizes = [4, 4, 2, 256], strides = [1, 1, 1, 1]} : vector<6x6x2x256xbf16> to vector<4x4x2x256xbf16>
    %98 = vector.shape_cast %97 : vector<4x4x2x256xbf16> to vector<32x256xbf16>
    %99 = tpu.concatenate %92, %94, %96, %98 in 1 : vector<32x256xbf16>, vector<32x256xbf16>, vector<32x256xbf16>, vector<32x256xbf16> -> vector<32x1024xbf16>
    %c1_30 = arith.constant 1 : index
    %c1_31 = arith.constant 1 : index
    %c0_32 = arith.constant 0 : index
    %c0_33 = arith.constant 0 : index
    %100 = vector.load %arg4[%c1_30, %c1_31, %c0_32, %c0_33] : memref<2x2x1024x128xbf16, #tpu.memory_space<vmem>>, vector<1x1x1024x128xbf16>
    %101 = vector.shape_cast %100 : vector<1x1x1024x128xbf16> to vector<1024x128xbf16>
    %cst_34 = arith.constant dense<0.000000e+00> : vector<32x128xf32>
    %102 = tpu.matmul %99, %101, %cst_34 {dimension_numbers = #tpu.dot_dimension_numbers<[1], [0], [0], [1], [0, 0, 1, 1], [], []>} : vector<32x1024xbf16>, vector<1024x128xbf16>, vector<32x128xf32> -> vector<32x128xf32>
    %c0_35 = arith.constant 0 : index
    %c0_36 = arith.constant 0 : index
    %103 = vector.load %arg5[%c0_35, %c0_36] : memref<1x128xf32, #tpu.memory_space<vmem>>, vector<1x128xf32>
    %c0_37 = arith.constant 0 : index
    %c0_38 = arith.constant 0 : index
    %104 = vector.load %arg6[%c0_37, %c0_38] : memref<1x128xf32, #tpu.memory_space<vmem>>, vector<1x128xf32>
    %cst_39 = arith.constant 0.000000e+00 : f32
    %105 = vector.broadcast %cst_39 : f32 to vector<1x128xf32>
    %cst_40 = arith.constant dense<0.000000e+00> : vector<128xf32>
    %106 = vector.multi_reduction <add>, %66, %cst_40 [0] : vector<32x128xf32> to vector<128xf32>
    %107 = vector.shape_cast %106 : vector<128xf32> to vector<1x128xf32>
    %108 = arith.addf %105, %107 : vector<1x128xf32>
    %109 = arith.mulf %66, %66 : vector<32x128xf32>
    %cst_41 = arith.constant dense<0.000000e+00> : vector<128xf32>
    %110 = vector.multi_reduction <add>, %109, %cst_41 [0] : vector<32x128xf32> to vector<128xf32>
    %111 = vector.shape_cast %110 : vector<128xf32> to vector<1x128xf32>
    %112 = arith.addf %105, %111 : vector<1x128xf32>
    %cst_42 = arith.constant dense<0.000000e+00> : vector<128xf32>
    %113 = vector.multi_reduction <add>, %78, %cst_42 [0] : vector<32x128xf32> to vector<128xf32>
    %114 = vector.shape_cast %113 : vector<128xf32> to vector<1x128xf32>
    %115 = arith.addf %108, %114 : vector<1x128xf32>
    %116 = arith.mulf %78, %78 : vector<32x128xf32>
    %cst_43 = arith.constant dense<0.000000e+00> : vector<128xf32>
    %117 = vector.multi_reduction <add>, %116, %cst_43 [0] : vector<32x128xf32> to vector<128xf32>
    %118 = vector.shape_cast %117 : vector<128xf32> to vector<1x128xf32>
    %119 = arith.addf %112, %118 : vector<1x128xf32>
    %cst_44 = arith.constant dense<0.000000e+00> : vector<128xf32>
    %120 = vector.multi_reduction <add>, %90, %cst_44 [0] : vector<32x128xf32> to vector<128xf32>
    %121 = vector.shape_cast %120 : vector<128xf32> to vector<1x128xf32>
    %122 = arith.addf %115, %121 : vector<1x128xf32>
    %123 = arith.mulf %90, %90 : vector<32x128xf32>
    %cst_45 = arith.constant dense<0.000000e+00> : vector<128xf32>
    %124 = vector.multi_reduction <add>, %123, %cst_45 [0] : vector<32x128xf32> to vector<128xf32>
    %125 = vector.shape_cast %124 : vector<128xf32> to vector<1x128xf32>
    %126 = arith.addf %119, %125 : vector<1x128xf32>
    %cst_46 = arith.constant dense<0.000000e+00> : vector<128xf32>
    %127 = vector.multi_reduction <add>, %102, %cst_46 [0] : vector<32x128xf32> to vector<128xf32>
    %128 = vector.shape_cast %127 : vector<128xf32> to vector<1x128xf32>
    %129 = arith.addf %122, %128 : vector<1x128xf32>
    %130 = arith.mulf %102, %102 : vector<32x128xf32>
    %cst_47 = arith.constant dense<0.000000e+00> : vector<128xf32>
    %131 = vector.multi_reduction <add>, %130, %cst_47 [0] : vector<32x128xf32> to vector<128xf32>
    %132 = vector.shape_cast %131 : vector<128xf32> to vector<1x128xf32>
    %133 = arith.addf %126, %132 : vector<1x128xf32>
    %cst_48 = arith.constant 1.280000e+02 : f32
    %134 = vector.broadcast %cst_48 : f32 to vector<1x128xf32>
    %135 = arith.divf %129, %134 : vector<1x128xf32>
    %cst_49 = arith.constant 1.280000e+02 : f32
    %136 = vector.broadcast %cst_49 : f32 to vector<1x128xf32>
    %137 = arith.divf %133, %136 : vector<1x128xf32>
    %138 = arith.mulf %135, %135 : vector<1x128xf32>
    %139 = arith.subf %137, %138 : vector<1x128xf32>
    %cst_50 = arith.constant 9.99999974E-6 : f32
    %140 = vector.broadcast %cst_50 : f32 to vector<1x128xf32>
    %141 = arith.addf %139, %140 : vector<1x128xf32>
    %142 = math.rsqrt %141 : vector<1x128xf32>
    %143 = arith.mulf %103, %142 : vector<1x128xf32>
    %144 = arith.mulf %135, %143 : vector<1x128xf32>
    %145 = arith.subf %104, %144 : vector<1x128xf32>
    %146 = vector.broadcast %143 : vector<1x128xf32> to vector<32x128xf32>
    %147 = arith.mulf %66, %146 : vector<32x128xf32>
    %148 = vector.broadcast %145 : vector<1x128xf32> to vector<32x128xf32>
    %149 = arith.addf %147, %148 : vector<32x128xf32>
    %cst_51 = arith.constant 0.000000e+00 : f32
    %150 = vector.broadcast %cst_51 : f32 to vector<32x128xf32>
    %151 = arith.maximumf %149, %150 : vector<32x128xf32>
    %152 = arith.truncf %151 : vector<32x128xf32> to vector<32x128xbf16>
    %153 = vector.broadcast %143 : vector<1x128xf32> to vector<32x128xf32>
    %154 = arith.mulf %78, %153 : vector<32x128xf32>
    %155 = vector.broadcast %145 : vector<1x128xf32> to vector<32x128xf32>
    %156 = arith.addf %154, %155 : vector<32x128xf32>
    %cst_52 = arith.constant 0.000000e+00 : f32
    %157 = vector.broadcast %cst_52 : f32 to vector<32x128xf32>
    %158 = arith.maximumf %156, %157 : vector<32x128xf32>
    %159 = arith.truncf %158 : vector<32x128xf32> to vector<32x128xbf16>
    %160 = vector.broadcast %143 : vector<1x128xf32> to vector<32x128xf32>
    %161 = arith.mulf %90, %160 : vector<32x128xf32>
    %162 = vector.broadcast %145 : vector<1x128xf32> to vector<32x128xf32>
    %163 = arith.addf %161, %162 : vector<32x128xf32>
    %cst_53 = arith.constant 0.000000e+00 : f32
    %164 = vector.broadcast %cst_53 : f32 to vector<32x128xf32>
    %165 = arith.maximumf %163, %164 : vector<32x128xf32>
    %166 = arith.truncf %165 : vector<32x128xf32> to vector<32x128xbf16>
    %167 = vector.broadcast %143 : vector<1x128xf32> to vector<32x128xf32>
    %168 = arith.mulf %102, %167 : vector<32x128xf32>
    %169 = vector.broadcast %145 : vector<1x128xf32> to vector<32x128xf32>
    %170 = arith.addf %168, %169 : vector<32x128xf32>
    %cst_54 = arith.constant 0.000000e+00 : f32
    %171 = vector.broadcast %cst_54 : f32 to vector<32x128xf32>
    %172 = arith.maximumf %170, %171 : vector<32x128xf32>
    %173 = arith.truncf %172 : vector<32x128xf32> to vector<32x128xbf16>
    %174 = vector.shape_cast %152 : vector<32x128xbf16> to vector<4x4x2x128xbf16>
    %175 = vector.shape_cast %159 : vector<32x128xbf16> to vector<4x4x2x128xbf16>
    %176 = vector.shape_cast %166 : vector<32x128xbf16> to vector<4x4x2x128xbf16>
    %177 = vector.shape_cast %173 : vector<32x128xbf16> to vector<4x4x2x128xbf16>
    %178 = vector.shape_cast %174 : vector<4x4x2x128xbf16> to vector<16x1x2x128xbf16>
    %179 = vector.shape_cast %175 : vector<4x4x2x128xbf16> to vector<16x1x2x128xbf16>
    %180 = tpu.concatenate %178, %179 in 1 : vector<16x1x2x128xbf16>, vector<16x1x2x128xbf16> -> vector<16x2x2x128xbf16>
    %181 = vector.shape_cast %180 : vector<16x2x2x128xbf16> to vector<4x8x2x128xbf16>
    %182 = vector.shape_cast %176 : vector<4x4x2x128xbf16> to vector<16x1x2x128xbf16>
    %183 = vector.shape_cast %177 : vector<4x4x2x128xbf16> to vector<16x1x2x128xbf16>
    %184 = tpu.concatenate %182, %183 in 1 : vector<16x1x2x128xbf16>, vector<16x1x2x128xbf16> -> vector<16x2x2x128xbf16>
    %185 = vector.shape_cast %184 : vector<16x2x2x128xbf16> to vector<4x8x2x128xbf16>
    %186 = tpu.concatenate %181, %185 in 1 : vector<4x8x2x128xbf16>, vector<4x8x2x128xbf16> -> vector<4x16x2x128xbf16>
    %187 = vector.shape_cast %186 : vector<4x16x2x128xbf16> to vector<8x8x2x128xbf16>
    %cst_55 = arith.constant 0.000000e+00 : bf16
    %188 = vector.broadcast %cst_55 : bf16 to vector<1x8x2x128xbf16>
    %189 = tpu.concatenate %188, %187, %188 in 0 : vector<1x8x2x128xbf16>, vector<8x8x2x128xbf16>, vector<1x8x2x128xbf16> -> vector<10x8x2x128xbf16>
    %cst_56 = arith.constant 0.000000e+00 : bf16
    %190 = vector.broadcast %cst_56 : bf16 to vector<10x1x2x128xbf16>
    %191 = tpu.concatenate %190, %189, %190 in 1 : vector<10x1x2x128xbf16>, vector<10x8x2x128xbf16>, vector<10x1x2x128xbf16> -> vector<10x10x2x128xbf16>
    %192 = vector.extract_strided_slice %191 {offsets = [0, 0, 0, 0], sizes = [8, 8, 2, 128], strides = [1, 1, 1, 1]} : vector<10x10x2x128xbf16> to vector<8x8x2x128xbf16>
    %193 = vector.shape_cast %192 : vector<8x8x2x128xbf16> to vector<128x128xbf16>
    %194 = vector.extract_strided_slice %191 {offsets = [0, 1, 0, 0], sizes = [8, 8, 2, 128], strides = [1, 1, 1, 1]} : vector<10x10x2x128xbf16> to vector<8x8x2x128xbf16>
    %195 = vector.shape_cast %194 : vector<8x8x2x128xbf16> to vector<128x128xbf16>
    %196 = vector.extract_strided_slice %191 {offsets = [1, 0, 0, 0], sizes = [8, 8, 2, 128], strides = [1, 1, 1, 1]} : vector<10x10x2x128xbf16> to vector<8x8x2x128xbf16>
    %197 = vector.shape_cast %196 : vector<8x8x2x128xbf16> to vector<128x128xbf16>
    %198 = vector.extract_strided_slice %191 {offsets = [1, 1, 0, 0], sizes = [8, 8, 2, 128], strides = [1, 1, 1, 1]} : vector<10x10x2x128xbf16> to vector<8x8x2x128xbf16>
    %199 = vector.shape_cast %198 : vector<8x8x2x128xbf16> to vector<128x128xbf16>
    %200 = tpu.concatenate %193, %195, %197, %199 in 1 : vector<128x128xbf16>, vector<128x128xbf16>, vector<128x128xbf16>, vector<128x128xbf16> -> vector<128x512xbf16>
    %c0_57 = arith.constant 0 : index
    %c0_58 = arith.constant 0 : index
    %c0_59 = arith.constant 0 : index
    %c0_60 = arith.constant 0 : index
    %201 = vector.load %arg7[%c0_57, %c0_58, %c0_59, %c0_60] : memref<2x2x512x128xbf16, #tpu.memory_space<vmem>>, vector<1x1x512x128xbf16>
    %202 = vector.shape_cast %201 : vector<1x1x512x128xbf16> to vector<512x128xbf16>
    %cst_61 = arith.constant dense<0.000000e+00> : vector<128x128xf32>
    %203 = tpu.matmul %200, %202, %cst_61 {dimension_numbers = #tpu.dot_dimension_numbers<[1], [0], [0], [1], [0, 0, 1, 1], [], []>} : vector<128x512xbf16>, vector<512x128xbf16>, vector<128x128xf32> -> vector<128x128xf32>
    %204 = vector.extract_strided_slice %191 {offsets = [0, 1, 0, 0], sizes = [8, 8, 2, 128], strides = [1, 1, 1, 1]} : vector<10x10x2x128xbf16> to vector<8x8x2x128xbf16>
    %205 = vector.shape_cast %204 : vector<8x8x2x128xbf16> to vector<128x128xbf16>
    %206 = vector.extract_strided_slice %191 {offsets = [0, 2, 0, 0], sizes = [8, 8, 2, 128], strides = [1, 1, 1, 1]} : vector<10x10x2x128xbf16> to vector<8x8x2x128xbf16>
    %207 = vector.shape_cast %206 : vector<8x8x2x128xbf16> to vector<128x128xbf16>
    %208 = vector.extract_strided_slice %191 {offsets = [1, 1, 0, 0], sizes = [8, 8, 2, 128], strides = [1, 1, 1, 1]} : vector<10x10x2x128xbf16> to vector<8x8x2x128xbf16>
    %209 = vector.shape_cast %208 : vector<8x8x2x128xbf16> to vector<128x128xbf16>
    %210 = vector.extract_strided_slice %191 {offsets = [1, 2, 0, 0], sizes = [8, 8, 2, 128], strides = [1, 1, 1, 1]} : vector<10x10x2x128xbf16> to vector<8x8x2x128xbf16>
    %211 = vector.shape_cast %210 : vector<8x8x2x128xbf16> to vector<128x128xbf16>
    %212 = tpu.concatenate %205, %207, %209, %211 in 1 : vector<128x128xbf16>, vector<128x128xbf16>, vector<128x128xbf16>, vector<128x128xbf16> -> vector<128x512xbf16>
    %c0_62 = arith.constant 0 : index
    %c1_63 = arith.constant 1 : index
    %c0_64 = arith.constant 0 : index
    %c0_65 = arith.constant 0 : index
    %213 = vector.load %arg7[%c0_62, %c1_63, %c0_64, %c0_65] : memref<2x2x512x128xbf16, #tpu.memory_space<vmem>>, vector<1x1x512x128xbf16>
    %214 = vector.shape_cast %213 : vector<1x1x512x128xbf16> to vector<512x128xbf16>
    %cst_66 = arith.constant dense<0.000000e+00> : vector<128x128xf32>
    %215 = tpu.matmul %212, %214, %cst_66 {dimension_numbers = #tpu.dot_dimension_numbers<[1], [0], [0], [1], [0, 0, 1, 1], [], []>} : vector<128x512xbf16>, vector<512x128xbf16>, vector<128x128xf32> -> vector<128x128xf32>
    %216 = vector.extract_strided_slice %191 {offsets = [1, 0, 0, 0], sizes = [8, 8, 2, 128], strides = [1, 1, 1, 1]} : vector<10x10x2x128xbf16> to vector<8x8x2x128xbf16>
    %217 = vector.shape_cast %216 : vector<8x8x2x128xbf16> to vector<128x128xbf16>
    %218 = vector.extract_strided_slice %191 {offsets = [1, 1, 0, 0], sizes = [8, 8, 2, 128], strides = [1, 1, 1, 1]} : vector<10x10x2x128xbf16> to vector<8x8x2x128xbf16>
    %219 = vector.shape_cast %218 : vector<8x8x2x128xbf16> to vector<128x128xbf16>
    %220 = vector.extract_strided_slice %191 {offsets = [2, 0, 0, 0], sizes = [8, 8, 2, 128], strides = [1, 1, 1, 1]} : vector<10x10x2x128xbf16> to vector<8x8x2x128xbf16>
    %221 = vector.shape_cast %220 : vector<8x8x2x128xbf16> to vector<128x128xbf16>
    %222 = vector.extract_strided_slice %191 {offsets = [2, 1, 0, 0], sizes = [8, 8, 2, 128], strides = [1, 1, 1, 1]} : vector<10x10x2x128xbf16> to vector<8x8x2x128xbf16>
    %223 = vector.shape_cast %222 : vector<8x8x2x128xbf16> to vector<128x128xbf16>
    %224 = tpu.concatenate %217, %219, %221, %223 in 1 : vector<128x128xbf16>, vector<128x128xbf16>, vector<128x128xbf16>, vector<128x128xbf16> -> vector<128x512xbf16>
    %c1_67 = arith.constant 1 : index
    %c0_68 = arith.constant 0 : index
    %c0_69 = arith.constant 0 : index
    %c0_70 = arith.constant 0 : index
    %225 = vector.load %arg7[%c1_67, %c0_68, %c0_69, %c0_70] : memref<2x2x512x128xbf16, #tpu.memory_space<vmem>>, vector<1x1x512x128xbf16>
    %226 = vector.shape_cast %225 : vector<1x1x512x128xbf16> to vector<512x128xbf16>
    %cst_71 = arith.constant dense<0.000000e+00> : vector<128x128xf32>
    %227 = tpu.matmul %224, %226, %cst_71 {dimension_numbers = #tpu.dot_dimension_numbers<[1], [0], [0], [1], [0, 0, 1, 1], [], []>} : vector<128x512xbf16>, vector<512x128xbf16>, vector<128x128xf32> -> vector<128x128xf32>
    %228 = vector.extract_strided_slice %191 {offsets = [1, 1, 0, 0], sizes = [8, 8, 2, 128], strides = [1, 1, 1, 1]} : vector<10x10x2x128xbf16> to vector<8x8x2x128xbf16>
    %229 = vector.shape_cast %228 : vector<8x8x2x128xbf16> to vector<128x128xbf16>
    %230 = vector.extract_strided_slice %191 {offsets = [1, 2, 0, 0], sizes = [8, 8, 2, 128], strides = [1, 1, 1, 1]} : vector<10x10x2x128xbf16> to vector<8x8x2x128xbf16>
    %231 = vector.shape_cast %230 : vector<8x8x2x128xbf16> to vector<128x128xbf16>
    %232 = vector.extract_strided_slice %191 {offsets = [2, 1, 0, 0], sizes = [8, 8, 2, 128], strides = [1, 1, 1, 1]} : vector<10x10x2x128xbf16> to vector<8x8x2x128xbf16>
    %233 = vector.shape_cast %232 : vector<8x8x2x128xbf16> to vector<128x128xbf16>
    %234 = vector.extract_strided_slice %191 {offsets = [2, 2, 0, 0], sizes = [8, 8, 2, 128], strides = [1, 1, 1, 1]} : vector<10x10x2x128xbf16> to vector<8x8x2x128xbf16>
    %235 = vector.shape_cast %234 : vector<8x8x2x128xbf16> to vector<128x128xbf16>
    %236 = tpu.concatenate %229, %231, %233, %235 in 1 : vector<128x128xbf16>, vector<128x128xbf16>, vector<128x128xbf16>, vector<128x128xbf16> -> vector<128x512xbf16>
    %c1_72 = arith.constant 1 : index
    %c1_73 = arith.constant 1 : index
    %c0_74 = arith.constant 0 : index
    %c0_75 = arith.constant 0 : index
    %237 = vector.load %arg7[%c1_72, %c1_73, %c0_74, %c0_75] : memref<2x2x512x128xbf16, #tpu.memory_space<vmem>>, vector<1x1x512x128xbf16>
    %238 = vector.shape_cast %237 : vector<1x1x512x128xbf16> to vector<512x128xbf16>
    %cst_76 = arith.constant dense<0.000000e+00> : vector<128x128xf32>
    %239 = tpu.matmul %236, %238, %cst_76 {dimension_numbers = #tpu.dot_dimension_numbers<[1], [0], [0], [1], [0, 0, 1, 1], [], []>} : vector<128x512xbf16>, vector<512x128xbf16>, vector<128x128xf32> -> vector<128x128xf32>
    %cst_77 = arith.constant 0.000000e+00 : f32
    %cst_78 = arith.constant 1.000000e+00 : f32
    %240 = vector.broadcast %cst_77 : f32 to vector<128x128xf32>
    %241 = arith.maximumf %240, %203 : vector<128x128xf32>
    %242 = vector.broadcast %cst_78 : f32 to vector<128x128xf32>
    %243 = arith.minimumf %242, %241 : vector<128x128xf32>
    %244 = vector.shape_cast %243 : vector<128x128xf32> to vector<8x8x2x128xf32>
    %cst_79 = arith.constant 0.000000e+00 : f32
    %cst_80 = arith.constant 1.000000e+00 : f32
    %245 = vector.broadcast %cst_79 : f32 to vector<128x128xf32>
    %246 = arith.maximumf %245, %215 : vector<128x128xf32>
    %247 = vector.broadcast %cst_80 : f32 to vector<128x128xf32>
    %248 = arith.minimumf %247, %246 : vector<128x128xf32>
    %249 = vector.shape_cast %248 : vector<128x128xf32> to vector<8x8x2x128xf32>
    %cst_81 = arith.constant 0.000000e+00 : f32
    %cst_82 = arith.constant 1.000000e+00 : f32
    %250 = vector.broadcast %cst_81 : f32 to vector<128x128xf32>
    %251 = arith.maximumf %250, %227 : vector<128x128xf32>
    %252 = vector.broadcast %cst_82 : f32 to vector<128x128xf32>
    %253 = arith.minimumf %252, %251 : vector<128x128xf32>
    %254 = vector.shape_cast %253 : vector<128x128xf32> to vector<8x8x2x128xf32>
    %cst_83 = arith.constant 0.000000e+00 : f32
    %cst_84 = arith.constant 1.000000e+00 : f32
    %255 = vector.broadcast %cst_83 : f32 to vector<128x128xf32>
    %256 = arith.maximumf %255, %239 : vector<128x128xf32>
    %257 = vector.broadcast %cst_84 : f32 to vector<128x128xf32>
    %258 = arith.minimumf %257, %256 : vector<128x128xf32>
    %259 = vector.shape_cast %258 : vector<128x128xf32> to vector<8x8x2x128xf32>
    %260 = vector.shape_cast %244 : vector<8x8x2x128xf32> to vector<64x1x2x128xf32>
    %261 = vector.shape_cast %249 : vector<8x8x2x128xf32> to vector<64x1x2x128xf32>
    %262 = tpu.concatenate %260, %261 in 1 : vector<64x1x2x128xf32>, vector<64x1x2x128xf32> -> vector<64x2x2x128xf32>
    %263 = vector.shape_cast %262 : vector<64x2x2x128xf32> to vector<8x16x2x128xf32>
    %264 = vector.shape_cast %254 : vector<8x8x2x128xf32> to vector<64x1x2x128xf32>
    %265 = vector.shape_cast %259 : vector<8x8x2x128xf32> to vector<64x1x2x128xf32>
    %266 = tpu.concatenate %264, %265 in 1 : vector<64x1x2x128xf32>, vector<64x1x2x128xf32> -> vector<64x2x2x128xf32>
    %267 = vector.shape_cast %266 : vector<64x2x2x128xf32> to vector<8x16x2x128xf32>
    %268 = tpu.concatenate %263, %267 in 1 : vector<8x16x2x128xf32>, vector<8x16x2x128xf32> -> vector<8x32x2x128xf32>
    %269 = vector.shape_cast %268 : vector<8x32x2x128xf32> to vector<16x16x2x128xf32>
    %c0_85 = arith.constant 0 : index
    %c0_86 = arith.constant 0 : index
    %c0_87 = arith.constant 0 : index
    %c0_88 = arith.constant 0 : index
    %270 = vector.load %arg8[%c0_85, %c0_86, %c0_87, %c0_88] : memref<16x16x2x128xf32, #tpu.memory_space<vmem>>, vector<16x16x2x128xf32>
    tpu.vector_store %arg8[%c0_85, %c0_86, %c0_87, %c0_88], %269 {strides = array<i32>} : memref<16x16x2x128xf32, #tpu.memory_space<vmem>>, vector<16x16x2x128xf32>,
    return
  }
}

</mosaic_0001>

<llo_original>
// kernel: decoders_forward.1
$region0: #{decoders_forward.1}
  #allocation0 [shape = 'u32[]', space=smem, size = 0x4, offset = 0x4, fixed_abs, tag = 'smem constant byte address 0x4 - core index']
  #allocation1 [shape = 'u32[144,128]{1,0:T(1,128)}', space=vmem, size = 0x12000, scoped, tag = 'internal scratch']
  %s0 = inlined_call_operand.hbm [shape: f32[2,32], index: 0, kind: input, shape index: {}]
  %s1 = inlined_call_operand.hbm [shape: bf16[32,4096], index: 1, kind: input, shape index: {}]
  %s2 = inlined_call_operand.hbm [shape: f32[1,256], index: 2, kind: input, shape index: {}]
  %s3 = inlined_call_operand.vmem [shape: f32[1,256], index: 3, kind: input, shape index: {}]
  %s4 = inlined_call_operand.hbm [shape: bf16[2,2,1024,128], index: 4, kind: input, shape index: {}]
  %s5 = inlined_call_operand.vmem [shape: f32[1,128], index: 5, kind: input, shape index: {}]
  %s6 = inlined_call_operand.vmem [shape: f32[1,128], index: 6, kind: input, shape index: {}]
  %s7 = inlined_call_operand.hbm [shape: bf16[2,2,512,128], index: 7, kind: input, shape index: {}]
  %s8 = inlined_call_operand.vmem [shape: f32[16,16,2,128], index: 8, kind: output, shape index: {}]
  %s9 = sld [smem:[#allocation0]]
  $region62: #{decoders_forward.1} parent=0
    _
  %s11 = ssub.s32 1, %s9
  %s12 = scalar_select 0, %s11, %s9
  $region1: #{decoders_forward.1} parent=0
    #allocation2 [shape = 'u8[1024]{0}', space=vmem, size = 0x400, scoped, tag = 'input window, operand 0, single buffered']
    #allocation3 [shape = 's32[1]{0}', space=sflag, size = 0x4, scoped, tag = 'scoped memory for decoders_forward.1']
    #allocation4 [shape = 'u8[262144]{0}', space=vmem, size = 0x40000, scoped, tag = 'input window, operand 1, single buffered']
    #allocation5 [shape = 's32[1]{0}', space=sflag, size = 0x4, scoped, tag = 'scoped memory for decoders_forward.1']
    #allocation6 [shape = 'u8[1024]{0}', space=vmem, size = 0x400, scoped, tag = 'input window, operand 2, single buffered']
    #allocation7 [shape = 'u8[1048576]{0}', space=vmem, size = 0x100000, scoped, tag = 'input window, operand 4, single buffered']
    #allocation8 [shape = 's32[1]{0}', space=sflag, size = 0x4, scoped, tag = 'scoped memory for decoders_forward.1']
    #allocation9 [shape = 'u8[524288]{0}', space=vmem, size = 0x80000, scoped, tag = 'input window, operand 7, single buffered']
    %13 = vsyncpa [#allocation3], 0
    %14 = vsyncpa [#allocation5], 0
    %15 = vsyncpa [#allocation8], 0
    // Predicated region
    $region2: #{decoders_forward.1} parent=1 // pred_check
      _
    $region3: #{decoders_forward.1} parent=1 // pred_check_branch
      %17 = sbr.rel (0) target = $region5
    $region4: #{decoders_forward.1} parent=1 // pred_region
      %s19 = ssub.s32 32, 32
      %20 = vsyncadd [#allocation3], %s19
      %s22 = sshll.u32 [#allocation2], 4
      %s23 = int_to_ptr.vmem [resolvable:$true] %s22
      %25 = dma.hbm_to_vmem [thread:$0]  %s0, 32, %s23, [#allocation3]
    $region5: #{decoders_forward.1} parent=1 // pred_fallthru
      _
    // Predicated region
    $region6: #{decoders_forward.1} parent=1 // pred_check
      _
    $region7: #{decoders_forward.1} parent=1 // pred_check_branch
      %27 = sbr.rel (0) target = $region9
    $region8: #{decoders_forward.1} parent=1 // pred_region
      %s29 = ssub.s32 8192, 8192
      %30 = vsyncadd [#allocation5], %s29
      %s31 = sshll.u32 [#allocation4], 4
      %s32 = int_to_ptr.vmem [resolvable:$true] %s31
      %37 = dma.hbm_to_vmem [thread:$0]  %s1, 8192, %s32, [#allocation5], 2048, 2048, 128
    $region9: #{decoders_forward.1} parent=1 // pred_fallthru
      _
    // Predicated region
    $region10: #{decoders_forward.1} parent=1 // pred_check
      _
    $region11: #{decoders_forward.1} parent=1 // pred_check_branch
      %39 = sbr.rel (0) target = $region13
    $region12: #{decoders_forward.1} parent=1 // pred_region
      %s41 = ssub.s32 32, 32
      %42 = vsyncadd [#allocation5], %s41
      %s44 = sshll.u32 [#allocation6], 4
      %s45 = int_to_ptr.vmem [resolvable:$true] %s44
      %47 = dma.hbm_to_vmem [thread:$0]  %s2, 32, %s45, [#allocation5]
    $region13: #{decoders_forward.1} parent=1 // pred_fallthru
      _
    // Predicated region
    $region14: #{decoders_forward.1} parent=1 // pred_check
      _
    $region15: #{decoders_forward.1} parent=1 // pred_check_branch
      %49 = sbr.rel (0) target = $region17
    $region16: #{decoders_forward.1} parent=1 // pred_region
      _
    $region17: #{decoders_forward.1} parent=1 // pred_fallthru
      _
    // Predicated region
    $region18: #{decoders_forward.1} parent=1 // pred_check
      _
    $region19: #{decoders_forward.1} parent=1 // pred_check_branch
      %51 = sbr.rel (0) target = $region21
    $region20: #{decoders_forward.1} parent=1 // pred_region
      %s53 = ssub.s32 32768, 32768
      %54 = vsyncadd [#allocation8], %s53
      %s55 = sshll.u32 [#allocation7], 4
      %s56 = int_to_ptr.vmem [resolvable:$true] %s55
      %61 = dma.hbm_to_vmem [thread:$0]  %s4, 32768, %s56, [#allocation8], 64, 64, 4
    $region21: #{decoders_forward.1} parent=1 // pred_fallthru
      _
    // Predicated region
    $region22: #{decoders_forward.1} parent=1 // pred_check
      _
    $region23: #{decoders_forward.1} parent=1 // pred_check_branch
      %63 = sbr.rel (0) target = $region25
    $region24: #{decoders_forward.1} parent=1 // pred_region
      _
    $region25: #{decoders_forward.1} parent=1 // pred_fallthru
      _
    // Predicated region
    $region26: #{decoders_forward.1} parent=1 // pred_check
      _
    $region27: #{decoders_forward.1} parent=1 // pred_check_branch
      %65 = sbr.rel (0) target = $region29
    $region28: #{decoders_forward.1} parent=1 // pred_region
      _
    $region29: #{decoders_forward.1} parent=1 // pred_fallthru
      _
    // Predicated region
    $region30: #{decoders_forward.1} parent=1 // pred_check
      _
    $region31: #{decoders_forward.1} parent=1 // pred_check_branch
      %67 = sbr.rel (0) target = $region33
    $region32: #{decoders_forward.1} parent=1 // pred_region
      %s69 = ssub.s32 16384, 16384
      %70 = vsyncadd [#allocation8], %s69
      %s71 = sshll.u32 [#allocation9], 4
      %s72 = int_to_ptr.vmem [resolvable:$true] %s71
      %77 = dma.hbm_to_vmem [thread:$0]  %s7, 16384, %s72, [#allocation8], 64, 64, 4
    $region33: #{decoders_forward.1} parent=1 // pred_fallthru
      _
    // Predicated region
    $region34: #{decoders_forward.1} parent=1 // pred_check
      _
    $region35: #{decoders_forward.1} parent=1 // pred_check_branch
      %79 = sbr.rel (0) target = $region37
    $region36: #{decoders_forward.1} parent=1 // pred_region
      %80 = dma.done [#allocation3], 32
    $region37: #{decoders_forward.1} parent=1 // pred_fallthru
      _
    // Predicated region
    $region38: #{decoders_forward.1} parent=1 // pred_check
      _
    $region39: #{decoders_forward.1} parent=1 // pred_check_branch
      %82 = sbr.rel (0) target = $region41
    $region40: #{decoders_forward.1} parent=1 // pred_region
      %83 = dma.done [#allocation5], 8192
    $region41: #{decoders_forward.1} parent=1 // pred_fallthru
      _
    // Predicated region
    $region42: #{decoders_forward.1} parent=1 // pred_check
      _
    $region43: #{decoders_forward.1} parent=1 // pred_check_branch
      %85 = sbr.rel (0) target = $region45
    $region44: #{decoders_forward.1} parent=1 // pred_region
      %86 = dma.done [#allocation5], 32
    $region45: #{decoders_forward.1} parent=1 // pred_fallthru
      _
    // Predicated region
    $region46: #{decoders_forward.1} parent=1 // pred_check
      _
    $region47: #{decoders_forward.1} parent=1 // pred_check_branch
      %88 = sbr.rel (0) target = $region49
    $region48: #{decoders_forward.1} parent=1 // pred_region
      %89 = dma.done [#allocation8], 32768
    $region49: #{decoders_forward.1} parent=1 // pred_fallthru
      _
    // Predicated region
    $region50: #{decoders_forward.1} parent=1 // pred_check
      _
    $region51: #{decoders_forward.1} parent=1 // pred_check_branch
      %91 = sbr.rel (0) target = $region53
    $region52: #{decoders_forward.1} parent=1 // pred_region
      %92 = dma.done [#allocation8], 16384
    $region53: #{decoders_forward.1} parent=1 // pred_fallthru
      _
    %v94 = vld [vmem:[#allocation2] sm:$0x3]
    %v95 = vpack.c.bf16 %v94, %v94
    %v96 = vld [vmem:[#allocation4] sm:$0xff]
    %v97 = vld [vmem:[#allocation4 + $0x8] sm:$0xff]
    %v98 = vld [vmem:[#allocation4 + $0x10] sm:$0xff]
    %v99 = vld [vmem:[#allocation4 + $0x18] sm:$0xff]
    %v100 = vld [vmem:[#allocation4 + $0x20] sm:$0xff]
    %v101 = vld [vmem:[#allocation4 + $0x28] sm:$0xff]
    %v102 = vld [vmem:[#allocation4 + $0x30] sm:$0xff]
    %v103 = vld [vmem:[#allocation4 + $0x38] sm:$0xff]
    %v104 = vld [vmem:[#allocation4 + $0x40] sm:$0xff]
    %v105 = vld [vmem:[#allocation4 + $0x48] sm:$0xff]
    %v106 = vld [vmem:[#allocation4 + $0x50] sm:$0xff]
    %v107 = vld [vmem:[#allocation4 + $0x58] sm:$0xff]
    %v108 = vld [vmem:[#allocation4 + $0x60] sm:$0xff]
    %v109 = vld [vmem:[#allocation4 + $0x68] sm:$0xff]
    %v110 = vld [vmem:[#allocation4 + $0x70] sm:$0xff]
    %v111 = vld [vmem:[#allocation4 + $0x78] sm:$0xff]
    %v112 = vld [vmem:[#allocation4 + $0x80] sm:$0xff]
    %v113 = vld [vmem:[#allocation4 + $0x88] sm:$0xff]
    %v114 = vld [vmem:[#allocation4 + $0x90] sm:$0xff]
    %v115 = vld [vmem:[#allocation4 + $0x98] sm:$0xff]
    %v116 = vld [vmem:[#allocation4 + $0xa0] sm:$0xff]
    %v117 = vld [vmem:[#allocation4 + $0xa8] sm:$0xff]
    %v118 = vld [vmem:[#allocation4 + $0xb0] sm:$0xff]
    %v119 = vld [vmem:[#allocation4 + $0xb8] sm:$0xff]
    %v120 = vld [vmem:[#allocation4 + $0xc0] sm:$0xff]
    %v121 = vld [vmem:[#allocation4 + $0xc8] sm:$0xff]
    %v122 = vld [vmem:[#allocation4 + $0xd0] sm:$0xff]
    %v123 = vld [vmem:[#allocation4 + $0xd8] sm:$0xff]
    %v124 = vld [vmem:[#allocation4 + $0xe0] sm:$0xff]
    %v125 = vld [vmem:[#allocation4 + $0xe8] sm:$0xff]
    %v126 = vld [vmem:[#allocation4 + $0xf0] sm:$0xff]
    %v127 = vld [vmem:[#allocation4 + $0xf8] sm:$0xff]
    %v128 = vld [vmem:[#allocation4 + $0x100] sm:$0xff]
    %v129 = vld [vmem:[#allocation4 + $0x108] sm:$0xff]
    %v130 = vld [vmem:[#allocation4 + $0x110] sm:$0xff]
    %v131 = vld [vmem:[#allocation4 + $0x118] sm:$0xff]
    %v132 = vld [vmem:[#allocation4 + $0x120] sm:$0xff]
    %v133 = vld [vmem:[#allocation4 + $0x128] sm:$0xff]
    %v134 = vld [vmem:[#allocation4 + $0x130] sm:$0xff]
    %v135 = vld [vmem:[#allocation4 + $0x138] sm:$0xff]
    %v136 = vld [vmem:[#allocation4 + $0x140] sm:$0xff]
    %v137 = vld [vmem:[#allocation4 + $0x148] sm:$0xff]
    %v138 = vld [vmem:[#allocation4 + $0x150] sm:$0xff]
    %v139 = vld [vmem:[#allocation4 + $0x158] sm:$0xff]
    %v140 = vld [vmem:[#allocation4 + $0x160] sm:$0xff]
    %v141 = vld [vmem:[#allocation4 + $0x168] sm:$0xff]
    %v142 = vld [vmem:[#allocation4 + $0x170] sm:$0xff]
    %v143 = vld [vmem:[#allocation4 + $0x178] sm:$0xff]
    %v144 = vld [vmem:[#allocation4 + $0x180] sm:$0xff]
    %v145 = vld [vmem:[#allocation4 + $0x188] sm:$0xff]
    %v146 = vld [vmem:[#allocation4 + $0x190] sm:$0xff]
    %v147 = vld [vmem:[#allocation4 + $0x198] sm:$0xff]
    %v148 = vld [vmem:[#allocation4 + $0x1a0] sm:$0xff]
    %v149 = vld [vmem:[#allocation4 + $0x1a8] sm:$0xff]
    %v150 = vld [vmem:[#allocation4 + $0x1b0] sm:$0xff]
    %v151 = vld [vmem:[#allocation4 + $0x1b8] sm:$0xff]
    %v152 = vld [vmem:[#allocation4 + $0x1c0] sm:$0xff]
    %v153 = vld [vmem:[#allocation4 + $0x1c8] sm:$0xff]
    %v154 = vld [vmem:[#allocation4 + $0x1d0] sm:$0xff]
    %v155 = vld [vmem:[#allocation4 + $0x1d8] sm:$0xff]
    %v156 = vld [vmem:[#allocation4 + $0x1e0] sm:$0xff]
    %v157 = vld [vmem:[#allocation4 + $0x1e8] sm:$0xff]
    %v158 = vld [vmem:[#allocation4 + $0x1f0] sm:$0xff]
    %v159 = vld [vmem:[#allocation4 + $0x1f8] sm:$0xff]
    %v224 = vunpack.c.l.b16 %v96
    %v225 = vunpack.c.h.b16 %v96
    %v226 = vunpack.c.l.b16 %v97
    %v227 = vunpack.c.h.b16 %v97
    %v228 = vunpack.c.l.b16 %v98
    %v229 = vunpack.c.h.b16 %v98
    %v230 = vunpack.c.l.b16 %v99
    %v231 = vunpack.c.h.b16 %v99
    %v232 = vunpack.c.l.b16 %v100
    %v233 = vunpack.c.h.b16 %v100
    %v234 = vunpack.c.l.b16 %v101
    %v235 = vunpack.c.h.b16 %v101
    %v236 = vunpack.c.l.b16 %v102
    %v237 = vunpack.c.h.b16 %v102
    %v238 = vunpack.c.l.b16 %v103
    %v239 = vunpack.c.h.b16 %v103
    %v240 = vunpack.c.l.b16 %v104
    %v241 = vunpack.c.h.b16 %v104
    %v242 = vunpack.c.l.b16 %v105
    %v243 = vunpack.c.h.b16 %v105
    %v244 = vunpack.c.l.b16 %v106
    %v245 = vunpack.c.h.b16 %v106
    %v246 = vunpack.c.l.b16 %v107
    %v247 = vunpack.c.h.b16 %v107
    %v248 = vunpack.c.l.b16 %v108
    %v249 = vunpack.c.h.b16 %v108
    %v250 = vunpack.c.l.b16 %v109
    %v251 = vunpack.c.h.b16 %v109
    %v252 = vunpack.c.l.b16 %v110
    %v253 = vunpack.c.h.b16 %v110
    %v254 = vunpack.c.l.b16 %v111
    %v255 = vunpack.c.h.b16 %v111
    %v256 = vunpack.c.l.b16 %v112
    %v257 = vunpack.c.h.b16 %v112
    %v258 = vunpack.c.l.b16 %v113
    %v259 = vunpack.c.h.b16 %v113
    %v260 = vunpack.c.l.b16 %v114
    %v261 = vunpack.c.h.b16 %v114
    %v262 = vunpack.c.l.b16 %v115
    %v263 = vunpack.c.h.b16 %v115
    %v264 = vunpack.c.l.b16 %v116
    %v265 = vunpack.c.h.b16 %v116
    %v266 = vunpack.c.l.b16 %v117
    %v267 = vunpack.c.h.b16 %v117
    %v268 = vunpack.c.l.b16 %v118
    %v269 = vunpack.c.h.b16 %v118
    %v270 = vunpack.c.l.b16 %v119
    %v271 = vunpack.c.h.b16 %v119
    %v272 = vunpack.c.l.b16 %v120
    %v273 = vunpack.c.h.b16 %v120
    %v274 = vunpack.c.l.b16 %v121
    %v275 = vunpack.c.h.b16 %v121
    %v276 = vunpack.c.l.b16 %v122
    %v277 = vunpack.c.h.b16 %v122
    %v278 = vunpack.c.l.b16 %v123
    %v279 = vunpack.c.h.b16 %v123
    %v280 = vunpack.c.l.b16 %v124
    %v281 = vunpack.c.h.b16 %v124
    %v282 = vunpack.c.l.b16 %v125
    %v283 = vunpack.c.h.b16 %v125
    %v284 = vunpack.c.l.b16 %v126
    %v285 = vunpack.c.h.b16 %v126
    %v286 = vunpack.c.l.b16 %v127
    %v287 = vunpack.c.h.b16 %v127
    %v288 = vunpack.c.l.b16 %v128
    %v289 = vunpack.c.h.b16 %v128
    %v290 = vunpack.c.l.b16 %v129
    %v291 = vunpack.c.h.b16 %v129
    %v292 = vunpack.c.l.b16 %v130
    %v293 = vunpack.c.h.b16 %v130
    %v294 = vunpack.c.l.b16 %v131
    %v295 = vunpack.c.h.b16 %v131
    %v296 = vunpack.c.l.b16 %v132
    %v297 = vunpack.c.h.b16 %v132
    %v298 = vunpack.c.l.b16 %v133
    %v299 = vunpack.c.h.b16 %v133
    %v300 = vunpack.c.l.b16 %v134
    %v301 = vunpack.c.h.b16 %v134
    %v302 = vunpack.c.l.b16 %v135
    %v303 = vunpack.c.h.b16 %v135
    %v304 = vunpack.c.l.b16 %v136
    %v305 = vunpack.c.h.b16 %v136
    %v306 = vunpack.c.l.b16 %v137
    %v307 = vunpack.c.h.b16 %v137
    %v308 = vunpack.c.l.b16 %v138
    %v309 = vunpack.c.h.b16 %v138
    %v310 = vunpack.c.l.b16 %v139
    %v311 = vunpack.c.h.b16 %v139
    %v312 = vunpack.c.l.b16 %v140
    %v313 = vunpack.c.h.b16 %v140
    %v314 = vunpack.c.l.b16 %v141
    %v315 = vunpack.c.h.b16 %v141
    %v316 = vunpack.c.l.b16 %v142
    %v317 = vunpack.c.h.b16 %v142
    %v318 = vunpack.c.l.b16 %v143
    %v319 = vunpack.c.h.b16 %v143
    %v320 = vunpack.c.l.b16 %v144
    %v321 = vunpack.c.h.b16 %v144
    %v322 = vunpack.c.l.b16 %v145
    %v323 = vunpack.c.h.b16 %v145
    %v324 = vunpack.c.l.b16 %v146
    %v325 = vunpack.c.h.b16 %v146
    %v326 = vunpack.c.l.b16 %v147
    %v327 = vunpack.c.h.b16 %v147
    %v328 = vunpack.c.l.b16 %v148
    %v329 = vunpack.c.h.b16 %v148
    %v330 = vunpack.c.l.b16 %v149
    %v331 = vunpack.c.h.b16 %v149
    %v332 = vunpack.c.l.b16 %v150
    %v333 = vunpack.c.h.b16 %v150
    %v334 = vunpack.c.l.b16 %v151
    %v335 = vunpack.c.h.b16 %v151
    %v336 = vunpack.c.l.b16 %v152
    %v337 = vunpack.c.h.b16 %v152
    %v338 = vunpack.c.l.b16 %v153
    %v339 = vunpack.c.h.b16 %v153
    %v340 = vunpack.c.l.b16 %v154
    %v341 = vunpack.c.h.b16 %v154
    %v342 = vunpack.c.l.b16 %v155
    %v343 = vunpack.c.h.b16 %v155
    %v344 = vunpack.c.l.b16 %v156
    %v345 = vunpack.c.h.b16 %v156
    %v346 = vunpack.c.l.b16 %v157
    %v347 = vunpack.c.h.b16 %v157
    %v348 = vunpack.c.l.b16 %v158
    %v349 = vunpack.c.h.b16 %v158
    %v350 = vunpack.c.l.b16 %v159
    %v351 = vunpack.c.h.b16 %v159
    %v352 = vpack.c.b16 %v256, %v224
    %v353 = vpack.c.b16 %v257, %v225
    %v354 = vpack.c.b16 %v258, %v226
    %v355 = vpack.c.b16 %v259, %v227
    %v356 = vpack.c.b16 %v260, %v228
    %v357 = vpack.c.b16 %v261, %v229
    %v358 = vpack.c.b16 %v262, %v230
    %v359 = vpack.c.b16 %v263, %v231
    %v360 = vpack.c.b16 %v264, %v232
    %v361 = vpack.c.b16 %v265, %v233
    %v362 = vpack.c.b16 %v266, %v234
    %v363 = vpack.c.b16 %v267, %v235
    %v364 = vpack.c.b16 %v268, %v236
    %v365 = vpack.c.b16 %v269, %v237
    %v366 = vpack.c.b16 %v270, %v238
    %v367 = vpack.c.b16 %v271, %v239
    %v368 = vpack.c.b16 %v272, %v240
    %v369 = vpack.c.b16 %v273, %v241
    %v370 = vpack.c.b16 %v274, %v242
    %v371 = vpack.c.b16 %v275, %v243
    %v372 = vpack.c.b16 %v276, %v244
    %v373 = vpack.c.b16 %v277, %v245
    %v374 = vpack.c.b16 %v278, %v246
    %v375 = vpack.c.b16 %v279, %v247
    %v376 = vpack.c.b16 %v280, %v248
    %v377 = vpack.c.b16 %v281, %v249
    %v378 = vpack.c.b16 %v282, %v250
    %v379 = vpack.c.b16 %v283, %v251
    %v380 = vpack.c.b16 %v284, %v252
    %v381 = vpack.c.b16 %v285, %v253
    %v382 = vpack.c.b16 %v286, %v254
    %v383 = vpack.c.b16 %v287, %v255
    %v384 = vpack.c.b16 %v320, %v288
    %v385 = vpack.c.b16 %v321, %v289
    %v386 = vpack.c.b16 %v322, %v290
    %v387 = vpack.c.b16 %v323, %v291
    %v388 = vpack.c.b16 %v324, %v292
    %v389 = vpack.c.b16 %v325, %v293
    %v390 = vpack.c.b16 %v326, %v294
    %v391 = vpack.c.b16 %v327, %v295
    %v392 = vpack.c.b16 %v328, %v296
    %v393 = vpack.c.b16 %v329, %v297
    %v394 = vpack.c.b16 %v330, %v298
    %v395 = vpack.c.b16 %v331, %v299
    %v396 = vpack.c.b16 %v332, %v300
    %v397 = vpack.c.b16 %v333, %v301
    %v398 = vpack.c.b16 %v334, %v302
    %v399 = vpack.c.b16 %v335, %v303
    %v400 = vpack.c.b16 %v336, %v304
    %v401 = vpack.c.b16 %v337, %v305
    %v402 = vpack.c.b16 %v338, %v306
    %v403 = vpack.c.b16 %v339, %v307
    %v404 = vpack.c.b16 %v340, %v308
    %v405 = vpack.c.b16 %v341, %v309
    %v406 = vpack.c.b16 %v342, %v310
    %v407 = vpack.c.b16 %v343, %v311
    %v408 = vpack.c.b16 %v344, %v312
    %v409 = vpack.c.b16 %v345, %v313
    %v410 = vpack.c.b16 %v346, %v314
    %v411 = vpack.c.b16 %v347, %v315
    %v412 = vpack.c.b16 %v348, %v316
    %v413 = vpack.c.b16 %v349, %v317
    %v414 = vpack.c.b16 %v350, %v318
    %v415 = vpack.c.b16 %v351, %v319
    %vm480 = vcmask 261120
    %v482 = vsel %vm480, %v95, 0
    %484 = vmatprep.subr.bf16.mxu0 0
    %485 = vmatpush1.bf16.msra.mxu0 0
    %486 = vmatprep.subr.bf16.mxu0 0
    %487 = vmatpush1.bf16.msra.mxu0 0
    %488 = vmatprep.subr.bf16.mxu0 0
    %489 = vmatpush1.bf16.msra.mxu0 0
    %490 = vmatprep.subr.bf16.mxu0 0
    %491 = vmatpush1.bf16.msra.mxu0 0
    %492 = vmatprep.subr.bf16.mxu0 0
    %493 = vmatpush1.bf16.msra.mxu0 0
    %494 = vmatprep.subr.bf16.mxu0 0
    %495 = vmatpush1.bf16.msra.mxu0 0
    %496 = vmatprep.subr.bf16.mxu0 %v385
    %497 = vmatpush1.bf16.msra.mxu0 %v384
    %498 = vmatprep.subr.bf16.mxu0 %v353
    %499 = vmatpush1.bf16.msra.mxu0 %v352
    %500 = vmatprep.subr.bf16.mxu0 0
    %501 = vmatpush2.bf16.msra.mxu0 0
    %502 = vmatprep.subr.bf16.mxu0 0
    %503 = vmatpush2.bf16.msra.mxu0 0
    %504 = vmatprep.subr.bf16.mxu0 0
    %505 = vmatpush2.bf16.msra.mxu0 0
    %506 = vmatprep.subr.bf16.mxu0 0
    %507 = vmatpush2.bf16.msra.mxu0 0
    %508 = vmatprep.subr.bf16.mxu0 0
    %509 = vmatpush2.bf16.msra.mxu0 0
    %510 = vmatprep.subr.bf16.mxu0 0
    %511 = vmatpush2.bf16.msra.mxu0 0
    %512 = vmatprep.subr.bf16.mxu0 0
    %513 = vmatpush2.bf16.msra.mxu0 0
    %514 = vmatprep.subr.bf16.mxu0 0
    %515 = vmatpush2.bf16.msra.mxu0 0
    %516 = vmatprep.mubr.bf16.mxu0 0
    %517 = vmatmul.mubr.bf16.gmra.mxu0 %v482
    %v518 = vpop.f32.mrf.mxu0
    %v519 = vadd.f32 0.0, %v518
    %v520 = vpop.f32.mrf.mxu0
    %v521 = vadd.f32 0.0, %v520
    %v522 = vpop.f32.mrf.mxu0
    %v523 = vpop.f32.mrf.mxu0
    %524 = vdwg.mxu0
    %525 = vmatprep.subr.bf16.mxu0 0
    %526 = vmatpush1.bf16.msra.mxu0 0
    %527 = vmatprep.subr.bf16.mxu0 0
    %528 = vmatpush1.bf16.msra.mxu0 0
    %529 = vmatprep.subr.bf16.mxu0 0
    %530 = vmatpush1.bf16.msra.mxu0 0
    %531 = vmatprep.subr.bf16.mxu0 0
    %532 = vmatpush1.bf16.msra.mxu0 0
    %533 = vmatprep.subr.bf16.mxu0 0
    %534 = vmatpush1.bf16.msra.mxu0 0
    %535 = vmatprep.subr.bf16.mxu0 0
    %536 = vmatpush1.bf16.msra.mxu0 0
    %537 = vmatprep.subr.bf16.mxu0 %v387
    %538 = vmatpush1.bf16.msra.mxu0 %v386
    %539 = vmatprep.subr.bf16.mxu0 %v355
    %540 = vmatpush1.bf16.msra.mxu0 %v354
    %541 = vmatprep.subr.bf16.mxu0 0
    %542 = vmatpush2.bf16.msra.mxu0 0
    %543 = vmatprep.subr.bf16.mxu0 0
    %544 = vmatpush2.bf16.msra.mxu0 0
    %545 = vmatprep.subr.bf16.mxu0 0
    %546 = vmatpush2.bf16.msra.mxu0 0
    %547 = vmatprep.subr.bf16.mxu0 0
    %548 = vmatpush2.bf16.msra.mxu0 0
    %549 = vmatprep.subr.bf16.mxu0 0
    %550 = vmatpush2.bf16.msra.mxu0 0
    %551 = vmatprep.subr.bf16.mxu0 0
    %552 = vmatpush2.bf16.msra.mxu0 0
    %553 = vmatprep.subr.bf16.mxu0 0
    %554 = vmatpush2.bf16.msra.mxu0 0
    %555 = vmatprep.subr.bf16.mxu0 0
    %556 = vmatpush2.bf16.msra.mxu0 0
    %557 = vmatprep.mubr.bf16.mxu0 0
    %558 = vmatmul.mubr.bf16.gmra.mxu0 %v482
    %v559 = vpop.f32.mrf.mxu0
    %v560 = vadd.f32 0.0, %v559
    %v561 = vpop.f32.mrf.mxu0
    %v562 = vadd.f32 0.0, %v561
    %v563 = vpop.f32.mrf.mxu0
    %v564 = vpop.f32.mrf.mxu0
    %565 = vdwg.mxu0
    %566 = vmatprep.subr.bf16.mxu0 0
    %567 = vmatpush1.bf16.msra.mxu0 0
    %568 = vmatprep.subr.bf16.mxu0 0
    %569 = vmatpush1.bf16.msra.mxu0 0
    %570 = vmatprep.subr.bf16.mxu0 0
    %571 = vmatpush1.bf16.msra.mxu0 0
    %572 = vmatprep.subr.bf16.mxu0 0
    %573 = vmatpush1.bf16.msra.mxu0 0
    %574 = vmatprep.subr.bf16.mxu0 0
    %575 = vmatpush1.bf16.msra.mxu0 0
    %576 = vmatprep.subr.bf16.mxu0 0
    %577 = vmatpush1.bf16.msra.mxu0 0
    %578 = vmatprep.subr.bf16.mxu0 %v389
    %579 = vmatpush1.bf16.msra.mxu0 %v388
    %580 = vmatprep.subr.bf16.mxu0 %v357
    %581 = vmatpush1.bf16.msra.mxu0 %v356
    %582 = vmatprep.subr.bf16.mxu0 0
    %583 = vmatpush2.bf16.msra.mxu0 0
    %584 = vmatprep.subr.bf16.mxu0 0
    %585 = vmatpush2.bf16.msra.mxu0 0
    %586 = vmatprep.subr.bf16.mxu0 0
    %587 = vmatpush2.bf16.msra.mxu0 0
    %588 = vmatprep.subr.bf16.mxu0 0
    %589 = vmatpush2.bf16.msra.mxu0 0
    %590 = vmatprep.subr.bf16.mxu0 0
    %591 = vmatpush2.bf16.msra.mxu0 0
    %592 = vmatprep.subr.bf16.mxu0 0
    %593 = vmatpush2.bf16.msra.mxu0 0
    %594 = vmatprep.subr.bf16.mxu0 0
    %595 = vmatpush2.bf16.msra.mxu0 0
    %596 = vmatprep.subr.bf16.mxu0 0
    %597 = vmatpush2.bf16.msra.mxu0 0
    %598 = vmatprep.mubr.bf16.mxu0 0
    %599 = vmatmul.mubr.bf16.gmra.mxu0 %v482
    %v600 = vpop.f32.mrf.mxu0
    %v601 = vadd.f32 0.0, %v600
    %v602 = vpop.f32.mrf.mxu0
    %v603 = vadd.f32 0.0, %v602
    %v604 = vpop.f32.mrf.mxu0
    %v605 = vpop.f32.mrf.mxu0
    %606 = vdwg.mxu0
    %607 = vmatprep.subr.bf16.mxu0 0
    %608 = vmatpush1.bf16.msra.mxu0 0
    %609 = vmatprep.subr.bf16.mxu0 0
    %610 = vmatpush1.bf16.msra.mxu0 0
    %611 = vmatprep.subr.bf16.mxu0 0
    %612 = vmatpush1.bf16.msra.mxu0 0
    %613 = vmatprep.subr.bf16.mxu0 0
    %614 = vmatpush1.bf16.msra.mxu0 0
    %615 = vmatprep.subr.bf16.mxu0 0
    %616 = vmatpush1.bf16.msra.mxu0 0
    %617 = vmatprep.subr.bf16.mxu0 0
    %618 = vmatpush1.bf16.msra.mxu0 0
    %619 = vmatprep.subr.bf16.mxu0 %v391
    %620 = vmatpush1.bf16.msra.mxu0 %v390
    %621 = vmatprep.subr.bf16.mxu0 %v359
    %622 = vmatpush1.bf16.msra.mxu0 %v358
    %623 = vmatprep.subr.bf16.mxu0 0
    %624 = vmatpush2.bf16.msra.mxu0 0
    %625 = vmatprep.subr.bf16.mxu0 0
    %626 = vmatpush2.bf16.msra.mxu0 0
    %627 = vmatprep.subr.bf16.mxu0 0
    %628 = vmatpush2.bf16.msra.mxu0 0
    %629 = vmatprep.subr.bf16.mxu0 0
    %630 = vmatpush2.bf16.msra.mxu0 0
    %631 = vmatprep.subr.bf16.mxu0 0
    %632 = vmatpush2.bf16.msra.mxu0 0
    %633 = vmatprep.subr.bf16.mxu0 0
    %634 = vmatpush2.bf16.msra.mxu0 0
    %635 = vmatprep.subr.bf16.mxu0 0
    %636 = vmatpush2.bf16.msra.mxu0 0
    %637 = vmatprep.subr.bf16.mxu0 0
    %638 = vmatpush2.bf16.msra.mxu0 0
    %639 = vmatprep.mubr.bf16.mxu0 0
    %640 = vmatmul.mubr.bf16.gmra.mxu0 %v482
    %v641 = vpop.f32.mrf.mxu0
    %v642 = vadd.f32 0.0, %v641
    %v643 = vpop.f32.mrf.mxu0
    %v644 = vadd.f32 0.0, %v643
    %v645 = vpop.f32.mrf.mxu0
    %v646 = vpop.f32.mrf.mxu0
    %647 = vdwg.mxu0
    %648 = vmatprep.subr.bf16.mxu0 0
    %649 = vmatpush1.bf16.msra.mxu0 0
    %650 = vmatprep.subr.bf16.mxu0 0
    %651 = vmatpush1.bf16.msra.mxu0 0
    %652 = vmatprep.subr.bf16.mxu0 0
    %653 = vmatpush1.bf16.msra.mxu0 0
    %654 = vmatprep.subr.bf16.mxu0 0
    %655 = vmatpush1.bf16.msra.mxu0 0
    %656 = vmatprep.subr.bf16.mxu0 0
    %657 = vmatpush1.bf16.msra.mxu0 0
    %658 = vmatprep.subr.bf16.mxu0 0
    %659 = vmatpush1.bf16.msra.mxu0 0
    %660 = vmatprep.subr.bf16.mxu0 %v393
    %661 = vmatpush1.bf16.msra.mxu0 %v392
    %662 = vmatprep.subr.bf16.mxu0 %v361
    %663 = vmatpush1.bf16.msra.mxu0 %v360
    %664 = vmatprep.subr.bf16.mxu0 0
    %665 = vmatpush2.bf16.msra.mxu0 0
    %666 = vmatprep.subr.bf16.mxu0 0
    %667 = vmatpush2.bf16.msra.mxu0 0
    %668 = vmatprep.subr.bf16.mxu0 0
    %669 = vmatpush2.bf16.msra.mxu0 0
    %670 = vmatprep.subr.bf16.mxu0 0
    %671 = vmatpush2.bf16.msra.mxu0 0
    %672 = vmatprep.subr.bf16.mxu0 0
    %673 = vmatpush2.bf16.msra.mxu0 0
    %674 = vmatprep.subr.bf16.mxu0 0
    %675 = vmatpush2.bf16.msra.mxu0 0
    %676 = vmatprep.subr.bf16.mxu0 0
    %677 = vmatpush2.bf16.msra.mxu0 0
    %678 = vmatprep.subr.bf16.mxu0 0
    %679 = vmatpush2.bf16.msra.mxu0 0
    %680 = vmatprep.mubr.bf16.mxu0 0
    %681 = vmatmul.mubr.bf16.gmra.mxu0 %v482
    %v682 = vpop.f32.mrf.mxu0
    %v683 = vadd.f32 0.0, %v682
    %v684 = vpop.f32.mrf.mxu0
    %v685 = vadd.f32 0.0, %v684
    %v686 = vpop.f32.mrf.mxu0
    %v687 = vpop.f32.mrf.mxu0
    %688 = vdwg.mxu0
    %689 = vmatprep.subr.bf16.mxu0 0
    %690 = vmatpush1.bf16.msra.mxu0 0
    %691 = vmatprep.subr.bf16.mxu0 0
    %692 = vmatpush1.bf16.msra.mxu0 0
    %693 = vmatprep.subr.bf16.mxu0 0
    %694 = vmatpush1.bf16.msra.mxu0 0
    %695 = vmatprep.subr.bf16.mxu0 0
    %696 = vmatpush1.bf16.msra.mxu0 0
    %697 = vmatprep.subr.bf16.mxu0 0
    %698 = vmatpush1.bf16.msra.mxu0 0
    %699 = vmatprep.subr.bf16.mxu0 0
    %700 = vmatpush1.bf16.msra.mxu0 0
    %701 = vmatprep.subr.bf16.mxu0 %v395
    %702 = vmatpush1.bf16.msra.mxu0 %v394
    %703 = vmatprep.subr.bf16.mxu0 %v363
    %704 = vmatpush1.bf16.msra.mxu0 %v362
    %705 = vmatprep.subr.bf16.mxu0 0
    %706 = vmatpush2.bf16.msra.mxu0 0
    %707 = vmatprep.subr.bf16.mxu0 0
    %708 = vmatpush2.bf16.msra.mxu0 0
    %709 = vmatprep.subr.bf16.mxu0 0
    %710 = vmatpush2.bf16.msra.mxu0 0
    %711 = vmatprep.subr.bf16.mxu0 0
    %712 = vmatpush2.bf16.msra.mxu0 0
    %713 = vmatprep.subr.bf16.mxu0 0
    %714 = vmatpush2.bf16.msra.mxu0 0
    %715 = vmatprep.subr.bf16.mxu0 0
    %716 = vmatpush2.bf16.msra.mxu0 0
    %717 = vmatprep.subr.bf16.mxu0 0
    %718 = vmatpush2.bf16.msra.mxu0 0
    %719 = vmatprep.subr.bf16.mxu0 0
    %720 = vmatpush2.bf16.msra.mxu0 0
    %721 = vmatprep.mubr.bf16.mxu0 0
    %722 = vmatmul.mubr.bf16.gmra.mxu0 %v482
    %v723 = vpop.f32.mrf.mxu0
    %v724 = vadd.f32 0.0, %v723
    %v725 = vpop.f32.mrf.mxu0
    %v726 = vadd.f32 0.0, %v725
    %v727 = vpop.f32.mrf.mxu0
    %v728 = vpop.f32.mrf.mxu0
    %729 = vdwg.mxu0
    %730 = vmatprep.subr.bf16.mxu0 0
    %731 = vmatpush1.bf16.msra.mxu0 0
    %732 = vmatprep.subr.bf16.mxu0 0
    %733 = vmatpush1.bf16.msra.mxu0 0
    %734 = vmatprep.subr.bf16.mxu0 0
    %735 = vmatpush1.bf16.msra.mxu0 0
    %736 = vmatprep.subr.bf16.mxu0 0
    %737 = vmatpush1.bf16.msra.mxu0 0
    %738 = vmatprep.subr.bf16.mxu0 0
    %739 = vmatpush1.bf16.msra.mxu0 0
    %740 = vmatprep.subr.bf16.mxu0 0
    %741 = vmatpush1.bf16.msra.mxu0 0
    %742 = vmatprep.subr.bf16.mxu0 %v397
    %743 = vmatpush1.bf16.msra.mxu0 %v396
    %744 = vmatprep.subr.bf16.mxu0 %v365
    %745 = vmatpush1.bf16.msra.mxu0 %v364
    %746 = vmatprep.subr.bf16.mxu0 0
    %747 = vmatpush2.bf16.msra.mxu0 0
    %748 = vmatprep.subr.bf16.mxu0 0
    %749 = vmatpush2.bf16.msra.mxu0 0
    %750 = vmatprep.subr.bf16.mxu0 0
    %751 = vmatpush2.bf16.msra.mxu0 0
    %752 = vmatprep.subr.bf16.mxu0 0
    %753 = vmatpush2.bf16.msra.mxu0 0
    %754 = vmatprep.subr.bf16.mxu0 0
    %755 = vmatpush2.bf16.msra.mxu0 0
    %756 = vmatprep.subr.bf16.mxu0 0
    %757 = vmatpush2.bf16.msra.mxu0 0
    %758 = vmatprep.subr.bf16.mxu0 0
    %759 = vmatpush2.bf16.msra.mxu0 0
    %760 = vmatprep.subr.bf16.mxu0 0
    %761 = vmatpush2.bf16.msra.mxu0 0
    %762 = vmatprep.mubr.bf16.mxu0 0
    %763 = vmatmul.mubr.bf16.gmra.mxu0 %v482
    %v764 = vpop.f32.mrf.mxu0
    %v765 = vadd.f32 0.0, %v764
    %v766 = vpop.f32.mrf.mxu0
    %v767 = vadd.f32 0.0, %v766
    %v768 = vpop.f32.mrf.mxu0
    %v769 = vpop.f32.mrf.mxu0
    %770 = vdwg.mxu0
    %771 = vmatprep.subr.bf16.mxu0 0
    %772 = vmatpush1.bf16.msra.mxu0 0
    %773 = vmatprep.subr.bf16.mxu0 0
    %774 = vmatpush1.bf16.msra.mxu0 0
    %775 = vmatprep.subr.bf16.mxu0 0
    %776 = vmatpush1.bf16.msra.mxu0 0
    %777 = vmatprep.subr.bf16.mxu0 0
    %778 = vmatpush1.bf16.msra.mxu0 0
    %779 = vmatprep.subr.bf16.mxu0 0
    %780 = vmatpush1.bf16.msra.mxu0 0
    %781 = vmatprep.subr.bf16.mxu0 0
    %782 = vmatpush1.bf16.msra.mxu0 0
    %783 = vmatprep.subr.bf16.mxu0 %v399
    %784 = vmatpush1.bf16.msra.mxu0 %v398
    %785 = vmatprep.subr.bf16.mxu0 %v367
    %786 = vmatpush1.bf16.msra.mxu0 %v366
    %787 = vmatprep.subr.bf16.mxu0 0
    %788 = vmatpush2.bf16.msra.mxu0 0
    %789 = vmatprep.subr.bf16.mxu0 0
    %790 = vmatpush2.bf16.msra.mxu0 0
    %791 = vmatprep.subr.bf16.mxu0 0
    %792 = vmatpush2.bf16.msra.mxu0 0
    %793 = vmatprep.subr.bf16.mxu0 0
    %794 = vmatpush2.bf16.msra.mxu0 0
    %795 = vmatprep.subr.bf16.mxu0 0
    %796 = vmatpush2.bf16.msra.mxu0 0
    %797 = vmatprep.subr.bf16.mxu0 0
    %798 = vmatpush2.bf16.msra.mxu0 0
    %799 = vmatprep.subr.bf16.mxu0 0
    %800 = vmatpush2.bf16.msra.mxu0 0
    %801 = vmatprep.subr.bf16.mxu0 0
    %802 = vmatpush2.bf16.msra.mxu0 0
    %803 = vmatprep.mubr.bf16.mxu0 0
    %804 = vmatmul.mubr.bf16.gmra.mxu0 %v482
    %v805 = vpop.f32.mrf.mxu0
    %v806 = vadd.f32 0.0, %v805
    %v807 = vpop.f32.mrf.mxu0
    %v808 = vadd.f32 0.0, %v807
    %v809 = vpop.f32.mrf.mxu0
    %v810 = vpop.f32.mrf.mxu0
    %811 = vdwg.mxu0
    %812 = vmatprep.subr.bf16.mxu0 0
    %813 = vmatpush1.bf16.msra.mxu0 0
    %814 = vmatprep.subr.bf16.mxu0 0
    %815 = vmatpush1.bf16.msra.mxu0 0
    %816 = vmatprep.subr.bf16.mxu0 0
    %817 = vmatpush1.bf16.msra.mxu0 0
    %818 = vmatprep.subr.bf16.mxu0 0
    %819 = vmatpush1.bf16.msra.mxu0 0
    %820 = vmatprep.subr.bf16.mxu0 0
    %821 = vmatpush1.bf16.msra.mxu0 0
    %822 = vmatprep.subr.bf16.mxu0 0
    %823 = vmatpush1.bf16.msra.mxu0 0
    %824 = vmatprep.subr.bf16.mxu0 %v401
    %825 = vmatpush1.bf16.msra.mxu0 %v400
    %826 = vmatprep.subr.bf16.mxu0 %v369
    %827 = vmatpush1.bf16.msra.mxu0 %v368
    %828 = vmatprep.subr.bf16.mxu0 0
    %829 = vmatpush2.bf16.msra.mxu0 0
    %830 = vmatprep.subr.bf16.mxu0 0
    %831 = vmatpush2.bf16.msra.mxu0 0
    %832 = vmatprep.subr.bf16.mxu0 0
    %833 = vmatpush2.bf16.msra.mxu0 0
    %834 = vmatprep.subr.bf16.mxu0 0
    %835 = vmatpush2.bf16.msra.mxu0 0
    %836 = vmatprep.subr.bf16.mxu0 0
    %837 = vmatpush2.bf16.msra.mxu0 0
    %838 = vmatprep.subr.bf16.mxu0 0
    %839 = vmatpush2.bf16.msra.mxu0 0
    %840 = vmatprep.subr.bf16.mxu0 0
    %841 = vmatpush2.bf16.msra.mxu0 0
    %842 = vmatprep.subr.bf16.mxu0 0
    %843 = vmatpush2.bf16.msra.mxu0 0
    %844 = vmatprep.mubr.bf16.mxu0 0
    %845 = vmatmul.mubr.bf16.gmra.mxu0 %v482
    %v846 = vpop.f32.mrf.mxu0
    %v847 = vadd.f32 0.0, %v846
    %v848 = vpop.f32.mrf.mxu0
    %v849 = vadd.f32 0.0, %v848
    %v850 = vpop.f32.mrf.mxu0
    %v851 = vpop.f32.mrf.mxu0
    %852 = vdwg.mxu0
    %853 = vmatprep.subr.bf16.mxu0 0
    %854 = vmatpush1.bf16.msra.mxu0 0
    %855 = vmatprep.subr.bf16.mxu0 0
    %856 = vmatpush1.bf16.msra.mxu0 0
    %857 = vmatprep.subr.bf16.mxu0 0
    %858 = vmatpush1.bf16.msra.mxu0 0
    %859 = vmatprep.subr.bf16.mxu0 0
    %860 = vmatpush1.bf16.msra.mxu0 0
    %861 = vmatprep.subr.bf16.mxu0 0
    %862 = vmatpush1.bf16.msra.mxu0 0
    %863 = vmatprep.subr.bf16.mxu0 0
    %864 = vmatpush1.bf16.msra.mxu0 0
    %865 = vmatprep.subr.bf16.mxu0 %v403
    %866 = vmatpush1.bf16.msra.mxu0 %v402
    %867 = vmatprep.subr.bf16.mxu0 %v371
    %868 = vmatpush1.bf16.msra.mxu0 %v370
    %869 = vmatprep.subr.bf16.mxu0 0
    %870 = vmatpush2.bf16.msra.mxu0 0
    %871 = vmatprep.subr.bf16.mxu0 0
    %872 = vmatpush2.bf16.msra.mxu0 0
    %873 = vmatprep.subr.bf16.mxu0 0
    %874 = vmatpush2.bf16.msra.mxu0 0
    %875 = vmatprep.subr.bf16.mxu0 0
    %876 = vmatpush2.bf16.msra.mxu0 0
    %877 = vmatprep.subr.bf16.mxu0 0
    %878 = vmatpush2.bf16.msra.mxu0 0
    %879 = vmatprep.subr.bf16.mxu0 0
    %880 = vmatpush2.bf16.msra.mxu0 0
    %881 = vmatprep.subr.bf16.mxu0 0
    %882 = vmatpush2.bf16.msra.mxu0 0
    %883 = vmatprep.subr.bf16.mxu0 0
    %884 = vmatpush2.bf16.msra.mxu0 0
    %885 = vmatprep.mubr.bf16.mxu0 0
    %886 = vmatmul.mubr.bf16.gmra.mxu0 %v482
    %v887 = vpop.f32.mrf.mxu0
    %v888 = vadd.f32 0.0, %v887
    %v889 = vpop.f32.mrf.mxu0
    %v890 = vadd.f32 0.0, %v889
    %v891 = vpop.f32.mrf.mxu0
    %v892 = vpop.f32.mrf.mxu0
    %893 = vdwg.mxu0
    %894 = vmatprep.subr.bf16.mxu0 0
    %895 = vmatpush1.bf16.msra.mxu0 0
    %896 = vmatprep.subr.bf16.mxu0 0
    %897 = vmatpush1.bf16.msra.mxu0 0
    %898 = vmatprep.subr.bf16.mxu0 0
    %899 = vmatpush1.bf16.msra.mxu0 0
    %900 = vmatprep.subr.bf16.mxu0 0
    %901 = vmatpush1.bf16.msra.mxu0 0
    %902 = vmatprep.subr.bf16.mxu0 0
    %903 = vmatpush1.bf16.msra.mxu0 0
    %904 = vmatprep.subr.bf16.mxu0 0
    %905 = vmatpush1.bf16.msra.mxu0 0
    %906 = vmatprep.subr.bf16.mxu0 %v405
    %907 = vmatpush1.bf16.msra.mxu0 %v404
    %908 = vmatprep.subr.bf16.mxu0 %v373
    %909 = vmatpush1.bf16.msra.mxu0 %v372
    %910 = vmatprep.subr.bf16.mxu0 0
    %911 = vmatpush2.bf16.msra.mxu0 0
    %912 = vmatprep.subr.bf16.mxu0 0
    %913 = vmatpush2.bf16.msra.mxu0 0
    %914 = vmatprep.subr.bf16.mxu0 0
    %915 = vmatpush2.bf16.msra.mxu0 0
    %916 = vmatprep.subr.bf16.mxu0 0
    %917 = vmatpush2.bf16.msra.mxu0 0
    %918 = vmatprep.subr.bf16.mxu0 0
    %919 = vmatpush2.bf16.msra.mxu0 0
    %920 = vmatprep.subr.bf16.mxu0 0
    %921 = vmatpush2.bf16.msra.mxu0 0
    %922 = vmatprep.subr.bf16.mxu0 0
    %923 = vmatpush2.bf16.msra.mxu0 0
    %924 = vmatprep.subr.bf16.mxu0 0
    %925 = vmatpush2.bf16.msra.mxu0 0
    %926 = vmatprep.mubr.bf16.mxu0 0
    %927 = vmatmul.mubr.bf16.gmra.mxu0 %v482
    %v928 = vpop.f32.mrf.mxu0
    %v929 = vadd.f32 0.0, %v928
    %v930 = vpop.f32.mrf.mxu0
    %v931 = vadd.f32 0.0, %v930
    %v932 = vpop.f32.mrf.mxu0
    %v933 = vpop.f32.mrf.mxu0
    %934 = vdwg.mxu0
    %935 = vmatprep.subr.bf16.mxu0 0
    %936 = vmatpush1.bf16.msra.mxu0 0
    %937 = vmatprep.subr.bf16.mxu0 0
    %938 = vmatpush1.bf16.msra.mxu0 0
    %939 = vmatprep.subr.bf16.mxu0 0
    %940 = vmatpush1.bf16.msra.mxu0 0
    %941 = vmatprep.subr.bf16.mxu0 0
    %942 = vmatpush1.bf16.msra.mxu0 0
    %943 = vmatprep.subr.bf16.mxu0 0
    %944 = vmatpush1.bf16.msra.mxu0 0
    %945 = vmatprep.subr.bf16.mxu0 0
    %946 = vmatpush1.bf16.msra.mxu0 0
    %947 = vmatprep.subr.bf16.mxu0 %v407
    %948 = vmatpush1.bf16.msra.mxu0 %v406
    %949 = vmatprep.subr.bf16.mxu0 %v375
    %950 = vmatpush1.bf16.msra.mxu0 %v374
    %951 = vmatprep.subr.bf16.mxu0 0
    %952 = vmatpush2.bf16.msra.mxu0 0
    %953 = vmatprep.subr.bf16.mxu0 0
    %954 = vmatpush2.bf16.msra.mxu0 0
    %955 = vmatprep.subr.bf16.mxu0 0
    %956 = vmatpush2.bf16.msra.mxu0 0
    %957 = vmatprep.subr.bf16.mxu0 0
    %958 = vmatpush2.bf16.msra.mxu0 0
    %959 = vmatprep.subr.bf16.mxu0 0
    %960 = vmatpush2.bf16.msra.mxu0 0
    %961 = vmatprep.subr.bf16.mxu0 0
    %962 = vmatpush2.bf16.msra.mxu0 0
    %963 = vmatprep.subr.bf16.mxu0 0
    %964 = vmatpush2.bf16.msra.mxu0 0
    %965 = vmatprep.subr.bf16.mxu0 0
    %966 = vmatpush2.bf16.msra.mxu0 0
    %967 = vmatprep.mubr.bf16.mxu0 0
    %968 = vmatmul.mubr.bf16.gmra.mxu0 %v482
    %v969 = vpop.f32.mrf.mxu0
    %v970 = vadd.f32 0.0, %v969
    %v971 = vpop.f32.mrf.mxu0
    %v972 = vadd.f32 0.0, %v971
    %v973 = vpop.f32.mrf.mxu0
    %v974 = vpop.f32.mrf.mxu0
    %975 = vdwg.mxu0
    %976 = vmatprep.subr.bf16.mxu0 0
    %977 = vmatpush1.bf16.msra.mxu0 0
    %978 = vmatprep.subr.bf16.mxu0 0
    %979 = vmatpush1.bf16.msra.mxu0 0
    %980 = vmatprep.subr.bf16.mxu0 0
    %981 = vmatpush1.bf16.msra.mxu0 0
    %982 = vmatprep.subr.bf16.mxu0 0
    %983 = vmatpush1.bf16.msra.mxu0 0
    %984 = vmatprep.subr.bf16.mxu0 0
    %985 = vmatpush1.bf16.msra.mxu0 0
    %986 = vmatprep.subr.bf16.mxu0 0
    %987 = vmatpush1.bf16.msra.mxu0 0
    %988 = vmatprep.subr.bf16.mxu0 %v409
    %989 = vmatpush1.bf16.msra.mxu0 %v408
    %990 = vmatprep.subr.bf16.mxu0 %v377
    %991 = vmatpush1.bf16.msra.mxu0 %v376
    %992 = vmatprep.subr.bf16.mxu0 0
    %993 = vmatpush2.bf16.msra.mxu0 0
    %994 = vmatprep.subr.bf16.mxu0 0
    %995 = vmatpush2.bf16.msra.mxu0 0
    %996 = vmatprep.subr.bf16.mxu0 0
    %997 = vmatpush2.bf16.msra.mxu0 0
    %998 = vmatprep.subr.bf16.mxu0 0
    %999 = vmatpush2.bf16.msra.mxu0 0
    %1000 = vmatprep.subr.bf16.mxu0 0
    %1001 = vmatpush2.bf16.msra.mxu0 0
    %1002 = vmatprep.subr.bf16.mxu0 0
    %1003 = vmatpush2.bf16.msra.mxu0 0
    %1004 = vmatprep.subr.bf16.mxu0 0
    %1005 = vmatpush2.bf16.msra.mxu0 0
    %1006 = vmatprep.subr.bf16.mxu0 0
    %1007 = vmatpush2.bf16.msra.mxu0 0
    %1008 = vmatprep.mubr.bf16.mxu0 0
    %1009 = vmatmul.mubr.bf16.gmra.mxu0 %v482
    %v1010 = vpop.f32.mrf.mxu0
    %v1011 = vadd.f32 0.0, %v1010
    %v1012 = vpop.f32.mrf.mxu0
    %v1013 = vadd.f32 0.0, %v1012
    %v1014 = vpop.f32.mrf.mxu0
    %v1015 = vpop.f32.mrf.mxu0
    %1016 = vdwg.mxu0
    %1017 = vmatprep.subr.bf16.mxu0 0
    %1018 = vmatpush1.bf16.msra.mxu0 0
    %1019 = vmatprep.subr.bf16.mxu0 0
    %1020 = vmatpush1.bf16.msra.mxu0 0
    %1021 = vmatprep.subr.bf16.mxu0 0
    %1022 = vmatpush1.bf16.msra.mxu0 0
    %1023 = vmatprep.subr.bf16.mxu0 0
    %1024 = vmatpush1.bf16.msra.mxu0 0
    %1025 = vmatprep.subr.bf16.mxu0 0
    %1026 = vmatpush1.bf16.msra.mxu0 0
    %1027 = vmatprep.subr.bf16.mxu0 0
    %1028 = vmatpush1.bf16.msra.mxu0 0
    %1029 = vmatprep.subr.bf16.mxu0 %v411
    %1030 = vmatpush1.bf16.msra.mxu0 %v410
    %1031 = vmatprep.subr.bf16.mxu0 %v379
    %1032 = vmatpush1.bf16.msra.mxu0 %v378
    %1033 = vmatprep.subr.bf16.mxu0 0
    %1034 = vmatpush2.bf16.msra.mxu0 0
    %1035 = vmatprep.subr.bf16.mxu0 0
    %1036 = vmatpush2.bf16.msra.mxu0 0
    %1037 = vmatprep.subr.bf16.mxu0 0
    %1038 = vmatpush2.bf16.msra.mxu0 0
    %1039 = vmatprep.subr.bf16.mxu0 0
    %1040 = vmatpush2.bf16.msra.mxu0 0
    %1041 = vmatprep.subr.bf16.mxu0 0
    %1042 = vmatpush2.bf16.msra.mxu0 0
    %1043 = vmatprep.subr.bf16.mxu0 0
    %1044 = vmatpush2.bf16.msra.mxu0 0
    %1045 = vmatprep.subr.bf16.mxu0 0
    %1046 = vmatpush2.bf16.msra.mxu0 0
    %1047 = vmatprep.subr.bf16.mxu0 0
    %1048 = vmatpush2.bf16.msra.mxu0 0
    %1049 = vmatprep.mubr.bf16.mxu0 0
    %1050 = vmatmul.mubr.bf16.gmra.mxu0 %v482
    %v1051 = vpop.f32.mrf.mxu0
    %v1052 = vadd.f32 0.0, %v1051
    %v1053 = vpop.f32.mrf.mxu0
    %v1054 = vadd.f32 0.0, %v1053
    %v1055 = vpop.f32.mrf.mxu0
    %v1056 = vpop.f32.mrf.mxu0
    %1057 = vdwg.mxu0
    %1058 = vmatprep.subr.bf16.mxu0 0
    %1059 = vmatpush1.bf16.msra.mxu0 0
    %1060 = vmatprep.subr.bf16.mxu0 0
    %1061 = vmatpush1.bf16.msra.mxu0 0
    %1062 = vmatprep.subr.bf16.mxu0 0
    %1063 = vmatpush1.bf16.msra.mxu0 0
    %1064 = vmatprep.subr.bf16.mxu0 0
    %1065 = vmatpush1.bf16.msra.mxu0 0
    %1066 = vmatprep.subr.bf16.mxu0 0
    %1067 = vmatpush1.bf16.msra.mxu0 0
    %1068 = vmatprep.subr.bf16.mxu0 0
    %1069 = vmatpush1.bf16.msra.mxu0 0
    %1070 = vmatprep.subr.bf16.mxu0 %v413
    %1071 = vmatpush1.bf16.msra.mxu0 %v412
    %1072 = vmatprep.subr.bf16.mxu0 %v381
    %1073 = vmatpush1.bf16.msra.mxu0 %v380
    %1074 = vmatprep.subr.bf16.mxu0 0
    %1075 = vmatpush2.bf16.msra.mxu0 0
    %1076 = vmatprep.subr.bf16.mxu0 0
    %1077 = vmatpush2.bf16.msra.mxu0 0
    %1078 = vmatprep.subr.bf16.mxu0 0
    %1079 = vmatpush2.bf16.msra.mxu0 0
    %1080 = vmatprep.subr.bf16.mxu0 0
    %1081 = vmatpush2.bf16.msra.mxu0 0
    %1082 = vmatprep.subr.bf16.mxu0 0
    %1083 = vmatpush2.bf16.msra.mxu0 0
    %1084 = vmatprep.subr.bf16.mxu0 0
    %1085 = vmatpush2.bf16.msra.mxu0 0
    %1086 = vmatprep.subr.bf16.mxu0 0
    %1087 = vmatpush2.bf16.msra.mxu0 0
    %1088 = vmatprep.subr.bf16.mxu0 0
    %1089 = vmatpush2.bf16.msra.mxu0 0
    %1090 = vmatprep.mubr.bf16.mxu0 0
    %1091 = vmatmul.mubr.bf16.gmra.mxu0 %v482
    %v1092 = vpop.f32.mrf.mxu0
    %v1093 = vadd.f32 0.0, %v1092
    %v1094 = vpop.f32.mrf.mxu0
    %v1095 = vadd.f32 0.0, %v1094
    %v1096 = vpop.f32.mrf.mxu0
    %v1097 = vpop.f32.mrf.mxu0
    %1098 = vdwg.mxu0
    %1099 = vmatprep.subr.bf16.mxu0 0
    %1100 = vmatpush1.bf16.msra.mxu0 0
    %1101 = vmatprep.subr.bf16.mxu0 0
    %1102 = vmatpush1.bf16.msra.mxu0 0
    %1103 = vmatprep.subr.bf16.mxu0 0
    %1104 = vmatpush1.bf16.msra.mxu0 0
    %1105 = vmatprep.subr.bf16.mxu0 0
    %1106 = vmatpush1.bf16.msra.mxu0 0
    %1107 = vmatprep.subr.bf16.mxu0 0
    %1108 = vmatpush1.bf16.msra.mxu0 0
    %1109 = vmatprep.subr.bf16.mxu0 0
    %1110 = vmatpush1.bf16.msra.mxu0 0
    %1111 = vmatprep.subr.bf16.mxu0 %v415
    %1112 = vmatpush1.bf16.msra.mxu0 %v414
    %1113 = vmatprep.subr.bf16.mxu0 %v383
    %1114 = vmatpush1.bf16.msra.mxu0 %v382
    %1115 = vmatprep.subr.bf16.mxu0 0
    %1116 = vmatpush2.bf16.msra.mxu0 0
    %1117 = vmatprep.subr.bf16.mxu0 0
    %1118 = vmatpush2.bf16.msra.mxu0 0
    %1119 = vmatprep.subr.bf16.mxu0 0
    %1120 = vmatpush2.bf16.msra.mxu0 0
    %1121 = vmatprep.subr.bf16.mxu0 0
    %1122 = vmatpush2.bf16.msra.mxu0 0
    %1123 = vmatprep.subr.bf16.mxu0 0
    %1124 = vmatpush2.bf16.msra.mxu0 0
    %1125 = vmatprep.subr.bf16.mxu0 0
    %1126 = vmatpush2.bf16.msra.mxu0 0
    %1127 = vmatprep.subr.bf16.mxu0 0
    %1128 = vmatpush2.bf16.msra.mxu0 0
    %1129 = vmatprep.subr.bf16.mxu0 0
    %1130 = vmatpush2.bf16.msra.mxu0 0
    %1131 = vmatprep.mubr.bf16.mxu0 0
    %1132 = vmatmul.mubr.bf16.gmra.mxu0 %v482
    %v1133 = vpop.f32.mrf.mxu0
    %v1134 = vadd.f32 0.0, %v1133
    %v1135 = vpop.f32.mrf.mxu0
    %v1136 = vadd.f32 0.0, %v1135
    %v1137 = vpop.f32.mrf.mxu0
    %v1138 = vpop.f32.mrf.mxu0
    %1139 = vdwg.mxu0
    %v1142 = vrot.slane %v560, 6
    %v1143 = vrot.slane %v562, 6
    %v1148 = vrot.slane %v601, 4
    %v1149 = vrot.slane %v603, 4
    %v1154 = vrot.slane %v642, 2
    %v1155 = vrot.slane %v644, 2
    %v1160 = vrot.slane %v724, 6
    %v1161 = vrot.slane %v726, 6
    %v1166 = vrot.slane %v765, 4
    %v1167 = vrot.slane %v767, 4
    %v1172 = vrot.slane %v806, 2
    %v1173 = vrot.slane %v808, 2
    %v1178 = vrot.slane %v888, 6
    %v1179 = vrot.slane %v890, 6
    %v1184 = vrot.slane %v929, 4
    %v1185 = vrot.slane %v931, 4
    %v1190 = vrot.slane %v970, 2
    %v1191 = vrot.slane %v972, 2
    %v1196 = vrot.slane %v1052, 6
    %v1197 = vrot.slane %v1054, 6
    %v1202 = vrot.slane %v1093, 4
    %v1203 = vrot.slane %v1095, 4
    %v1208 = vrot.slane %v1134, 2
    %v1209 = vrot.slane %v1136, 2
    %vm1212 = vcmask 1041408
    %v1213 = vsel %vm1212, %v519, %v1142
    %v1214 = vsel %vm1212, %v521, %v1143
    %vm1215 = vcmask 1043456
    %v1216 = vsel %vm1215, %v1213, %v1148
    %v1217 = vsel %vm1215, %v1214, %v1149
    %vm1218 = vcmask 1045504
    %v1219 = vsel %vm1218, %v1216, %v1154
    %v1220 = vsel %vm1218, %v1217, %v1155
    %v1221 = vsel %vm1212, %v683, %v1160
    %v1222 = vsel %vm1212, %v685, %v1161
    %v1223 = vsel %vm1215, %v1221, %v1166
    %v1224 = vsel %vm1215, %v1222, %v1167
    %v1225 = vsel %vm1218, %v1223, %v1172
    %v1226 = vsel %vm1218, %v1224, %v1173
    %v1227 = vsel %vm1212, %v847, %v1178
    %v1228 = vsel %vm1212, %v849, %v1179
    %v1229 = vsel %vm1215, %v1227, %v1184
    %v1230 = vsel %vm1215, %v1228, %v1185
    %v1231 = vsel %vm1218, %v1229, %v1190
    %v1232 = vsel %vm1218, %v1230, %v1191
    %v1233 = vsel %vm1212, %v1011, %v1196
    %v1234 = vsel %vm1212, %v1013, %v1197
    %v1235 = vsel %vm1215, %v1233, %v1202
    %v1236 = vsel %vm1215, %v1234, %v1203
    %v1237 = vsel %vm1218, %v1235, %v1208
    %v1238 = vsel %vm1218, %v1236, %v1209
    %v1239 = vld [vmem:[#allocation6] sm:$0x3]
    %v1240 = vld [vmem:[%s3] sm:$0x3]
    %v1241 = vadd.f32 %v1219, %v1225
    %v1242 = vadd.f32 %v1241, %v1231
    %v1243 = vadd.f32 %v1242, %v1237
    %v1244 = vrot.slane %v1243, 4
    %v1245 = vadd.f32 %v1243, %v1244
    %v1246 = vrot.slane %v1245, 2
    %v1247 = vadd.f32 %v1245, %v1246
    %v1248 = vrot.slane %v1247, 1
    %v1249 = vadd.f32 %v1247, %v1248
    %v1250 = vadd.f32 %v1220, %v1226
    %v1251 = vadd.f32 %v1250, %v1232
    %v1252 = vadd.f32 %v1251, %v1238
    %v1253 = vrot.slane %v1252, 4
    %v1254 = vadd.f32 %v1252, %v1253
    %v1255 = vrot.slane %v1254, 2
    %v1256 = vadd.f32 %v1254, %v1255
    %v1257 = vrot.slane %v1256, 1
    %v1258 = vadd.f32 %v1256, %v1257
    %v1259 = vadd.f32 %v1249, 0.0
    %v1260 = vadd.f32 %v1258, 0.0
    %v1261 = vmul.f32 %v1219, %v1219
    %v1262 = vmul.f32 %v1220, %v1220
    %v1263 = vmul.f32 %v1225, %v1225
    %v1264 = vmul.f32 %v1226, %v1226
    %v1265 = vmul.f32 %v1231, %v1231
    %v1266 = vmul.f32 %v1232, %v1232
    %v1267 = vmul.f32 %v1237, %v1237
    %v1268 = vmul.f32 %v1238, %v1238
    %v1269 = vadd.f32 %v1261, %v1263
    %v1270 = vadd.f32 %v1269, %v1265
    %v1271 = vadd.f32 %v1270, %v1267
    %v1272 = vrot.slane %v1271, 4
    %v1273 = vadd.f32 %v1271, %v1272
    %v1274 = vrot.slane %v1273, 2
    %v1275 = vadd.f32 %v1273, %v1274
    %v1276 = vrot.slane %v1275, 1
    %v1277 = vadd.f32 %v1275, %v1276
    %v1278 = vadd.f32 %v1262, %v1264
    %v1279 = vadd.f32 %v1278, %v1266
    %v1280 = vadd.f32 %v1279, %v1268
    %v1281 = vrot.slane %v1280, 4
    %v1282 = vadd.f32 %v1280, %v1281
    %v1283 = vrot.slane %v1282, 2
    %v1284 = vadd.f32 %v1282, %v1283
    %v1285 = vrot.slane %v1284, 1
    %v1286 = vadd.f32 %v1284, %v1285
    %v1287 = vadd.f32 %v1277, 0.0
    %v1288 = vadd.f32 %v1286, 0.0
    %v1289 = vrcp.pop 32.0
    %v1290 = vmul.f32 %v1259, %v1289
    %v1291 = vmul.f32 %v1260, %v1289
    %v1292 = vmul.f32 %v1287, %v1289
    %v1293 = vmul.f32 %v1288, %v1289
    %v1294 = vmul.f32 %v1290, %v1290
    %v1295 = vmul.f32 %v1291, %v1291
    %v1296 = vsub.f32 %v1292, %v1294
    %v1297 = vsub.f32 %v1293, %v1295
    %v1298 = vadd.f32 %v1296, 1e-05
    %v1299 = vadd.f32 %v1297, 1e-05
    %v1300 = vrsqrt.pop %v1298
    %v1301 = vrsqrt.pop %v1299
    %v1304 = vcombine.low %v1300, %v1301
    %v1306 = vunpack.c.l.s4 1966171168
    %v1307 = vunpack.c.0.s8 %v1306
    %v1308 = vlaneseq
    %v1309 = vshrl.u32 %v1308, 7
    %v1310 = vsub.s32 %v1307, %v1309
    %v1311 = vrot.slane %v1304, %v1310
    %v1313 = vunpack.c.l.s4 1966171168
    %v1314 = vunpack.c.0.s8 %v1313
    %v1315 = vlaneseq
    %v1316 = vshrl.u32 %v1315, 7
    %v1317 = vsub.s32 %v1314, %v1316
    %v1318 = vrot.slane %v1311, %v1317
    %v1320 = vmul.f32 %v1239, %v1318
    %v1322 = vlaneseq
    %v1323 = vshrl.u32 %v1322, 7
    %v1324 = vsub.s32 0, %v1323
    %v1325 = vrot.slane %v1320, %v1324
    %v1326 = vlaneseq
    %v1327 = vshrl.u32 %v1326, 7
    %v1328 = vsub.s32 1, %v1327
    %v1329 = vrot.slane %v1320, %v1328
    %v1332 = vmul.f32 %v1290, %v1325
    %v1333 = vmul.f32 %v1291, %v1329
    %v1336 = vcombine.low %v1332, %v1333
    %v1338 = vunpack.c.l.s4 1966171168
    %v1339 = vunpack.c.0.s8 %v1338
    %v1340 = vlaneseq
    %v1341 = vshrl.u32 %v1340, 7
    %v1342 = vsub.s32 %v1339, %v1341
    %v1343 = vrot.slane %v1336, %v1342
    %v1345 = vunpack.c.l.s4 1966171168
    %v1346 = vunpack.c.0.s8 %v1345
    %v1347 = vlaneseq
    %v1348 = vshrl.u32 %v1347, 7
    %v1349 = vsub.s32 %v1346, %v1348
    %v1350 = vrot.slane %v1343, %v1349
    %v1352 = vsub.f32 %v1240, %v1350
    %v1353 = vmul.f32 %v1219, %v1325
    %v1354 = vmul.f32 %v1220, %v1329
    %v1355 = vmul.f32 %v1225, %v1325
    %v1356 = vmul.f32 %v1226, %v1329
    %v1357 = vmul.f32 %v1231, %v1325
    %v1358 = vmul.f32 %v1232, %v1329
    %v1359 = vmul.f32 %v1237, %v1325
    %v1360 = vmul.f32 %v1238, %v1329
    %v1362 = vlaneseq
    %v1363 = vshrl.u32 %v1362, 7
    %v1364 = vsub.s32 0, %v1363
    %v1365 = vrot.slane %v1352, %v1364
    %v1366 = vlaneseq
    %v1367 = vshrl.u32 %v1366, 7
    %v1368 = vsub.s32 1, %v1367
    %v1369 = vrot.slane %v1352, %v1368
    %v1372 = vadd.f32 %v1353, %v1365
    %v1373 = vadd.f32 %v1354, %v1369
    %v1374 = vadd.f32 %v1355, %v1365
    %v1375 = vadd.f32 %v1356, %v1369
    %v1376 = vadd.f32 %v1357, %v1365
    %v1377 = vadd.f32 %v1358, %v1369
    %v1378 = vadd.f32 %v1359, %v1365
    %v1379 = vadd.f32 %v1360, %v1369
    %v1380 = vmax.f32 %v1372, 0.0
    %v1381 = vmax.f32 %v1373, 0.0
    %v1382 = vmax.f32 %v1374, 0.0
    %v1383 = vmax.f32 %v1375, 0.0
    %v1384 = vmax.f32 %v1376, 0.0
    %v1385 = vmax.f32 %v1377, 0.0
    %v1386 = vmax.f32 %v1378, 0.0
    %v1387 = vmax.f32 %v1379, 0.0
    %v1388 = vpack.c.bf16 %v1382, %v1380
    %v1389 = vpack.c.bf16 %v1383, %v1381
    %v1390 = vpack.c.bf16 %v1386, %v1384
    %v1391 = vpack.c.bf16 %v1387, %v1385
    %v1396 = vcombine.low %v1388, %v1389
    %v1397 = vcombine.high %v1388, %v1389
    %v1399 = vunpack.c.l.s4 1966171168
    %v1400 = vunpack.c.0.s8 %v1399
    %v1401 = vlaneseq
    %v1402 = vshrl.u32 %v1401, 7
    %v1403 = vsub.s32 %v1400, %v1402
    %v1404 = vrot.slane %v1396, %v1403
    %v1406 = vunpack.c.l.s4 1966171168
    %v1407 = vunpack.c.0.s8 %v1406
    %v1408 = vlaneseq
    %v1409 = vshrl.u32 %v1408, 7
    %v1410 = vsub.s32 %v1407, %v1409
    %v1411 = vrot.slane %v1397, %v1410
    %v1412 = vcombine.high %v1404, %v1404
    %v1413 = vcombine.high %v1411, %v1411
    %v1415 = vunpack.c.l.s4 1966171168
    %v1416 = vunpack.c.0.s8 %v1415
    %v1417 = vlaneseq
    %v1418 = vshrl.u32 %v1417, 7
    %v1419 = vsub.s32 %v1416, %v1418
    %v1420 = vrot.slane %v1404, %v1419
    %v1422 = vunpack.c.l.s4 1966171168
    %v1423 = vunpack.c.0.s8 %v1422
    %v1424 = vlaneseq
    %v1425 = vshrl.u32 %v1424, 7
    %v1426 = vsub.s32 %v1423, %v1425
    %v1427 = vrot.slane %v1411, %v1426
    %v1429 = vunpack.c.l.s4 1966171168
    %v1430 = vunpack.c.0.s8 %v1429
    %v1431 = vlaneseq
    %v1432 = vshrl.u32 %v1431, 7
    %v1433 = vsub.s32 %v1430, %v1432
    %v1434 = vrot.slane %v1412, %v1433
    %v1436 = vunpack.c.l.s4 1966171168
    %v1437 = vunpack.c.0.s8 %v1436
    %v1438 = vlaneseq
    %v1439 = vshrl.u32 %v1438, 7
    %v1440 = vsub.s32 %v1437, %v1439
    %v1441 = vrot.slane %v1413, %v1440
    %v1442 = vcombine.high %v1420, %v1420
    %v1443 = vcombine.high %v1427, %v1427
    %v1444 = vcombine.high %v1434, %v1434
    %v1445 = vcombine.high %v1441, %v1441
    %v1446 = vcombine.low %v1390, %v1391
    %v1447 = vcombine.high %v1390, %v1391
    %v1449 = vunpack.c.l.s4 1966171168
    %v1450 = vunpack.c.0.s8 %v1449
    %v1451 = vlaneseq
    %v1452 = vshrl.u32 %v1451, 7
    %v1453 = vsub.s32 %v1450, %v1452
    %v1454 = vrot.slane %v1446, %v1453
    %v1456 = vunpack.c.l.s4 1966171168
    %v1457 = vunpack.c.0.s8 %v1456
    %v1458 = vlaneseq
    %v1459 = vshrl.u32 %v1458, 7
    %v1460 = vsub.s32 %v1457, %v1459
    %v1461 = vrot.slane %v1447, %v1460
    %v1462 = vcombine.high %v1454, %v1454
    %v1463 = vcombine.high %v1461, %v1461
    %v1465 = vunpack.c.l.s4 1966171168
    %v1466 = vunpack.c.0.s8 %v1465
    %v1467 = vlaneseq
    %v1468 = vshrl.u32 %v1467, 7
    %v1469 = vsub.s32 %v1466, %v1468
    %v1470 = vrot.slane %v1454, %v1469
    %v1472 = vunpack.c.l.s4 1966171168
    %v1473 = vunpack.c.0.s8 %v1472
    %v1474 = vlaneseq
    %v1475 = vshrl.u32 %v1474, 7
    %v1476 = vsub.s32 %v1473, %v1475
    %v1477 = vrot.slane %v1461, %v1476
    %v1479 = vunpack.c.l.s4 1966171168
    %v1480 = vunpack.c.0.s8 %v1479
    %v1481 = vlaneseq
    %v1482 = vshrl.u32 %v1481, 7
    %v1483 = vsub.s32 %v1480, %v1482
    %v1484 = vrot.slane %v1462, %v1483
    %v1486 = vunpack.c.l.s4 1966171168
    %v1487 = vunpack.c.0.s8 %v1486
    %v1488 = vlaneseq
    %v1489 = vshrl.u32 %v1488, 7
    %v1490 = vsub.s32 %v1487, %v1489
    %v1491 = vrot.slane %v1463, %v1490
    %v1492 = vcombine.high %v1470, %v1470
    %v1493 = vcombine.high %v1477, %v1477
    %v1494 = vcombine.high %v1484, %v1484
    %v1495 = vcombine.high %v1491, %v1491
    %v1497 = vunpack.c.l.s4 1966171168
    %v1498 = vunpack.c.0.s8 %v1497
    %v1499 = vlaneseq
    %v1500 = vshrl.u32 %v1499, 7
    %v1501 = vsub.s32 %v1498, %v1500
    %v1502 = vrot.slane %v1420, %v1501
    %v1503 = vcombine.high %v1502, %v1502
    %v1505 = vunpack.c.l.s4 1966171168
    %v1506 = vunpack.c.0.s8 %v1505
    %v1507 = vlaneseq
    %v1508 = vshrl.u32 %v1507, 7
    %v1509 = vsub.s32 %v1506, %v1508
    %v1510 = vrot.slane %v1502, %v1509
    %v1512 = vunpack.c.l.s4 1966171168
    %v1513 = vunpack.c.0.s8 %v1512
    %v1514 = vlaneseq
    %v1515 = vshrl.u32 %v1514, 7
    %v1516 = vsub.s32 %v1513, %v1515
    %v1517 = vrot.slane %v1503, %v1516
    %v1519 = vunpack.c.l.s4 1966171168
    %v1520 = vunpack.c.0.s8 %v1519
    %v1521 = vlaneseq
    %v1522 = vshrl.u32 %v1521, 7
    %v1523 = vsub.s32 %v1520, %v1522
    %v1524 = vrot.slane %v1434, %v1523
    %v1525 = vcombine.high %v1524, %v1524
    %v1527 = vunpack.c.l.s4 1966171168
    %v1528 = vunpack.c.0.s8 %v1527
    %v1529 = vlaneseq
    %v1530 = vshrl.u32 %v1529, 7
    %v1531 = vsub.s32 %v1528, %v1530
    %v1532 = vrot.slane %v1524, %v1531
    %v1534 = vunpack.c.l.s4 1966171168
    %v1535 = vunpack.c.0.s8 %v1534
    %v1536 = vlaneseq
    %v1537 = vshrl.u32 %v1536, 7
    %v1538 = vsub.s32 %v1535, %v1537
    %v1539 = vrot.slane %v1525, %v1538
    %v1541 = vunpack.c.l.s4 1966171168
    %v1542 = vunpack.c.0.s8 %v1541
    %v1543 = vlaneseq
    %v1544 = vshrl.u32 %v1543, 7
    %v1545 = vsub.s32 %v1542, %v1544
    %v1546 = vrot.slane %v1442, %v1545
    %v1547 = vcombine.high %v1546, %v1546
    %v1549 = vunpack.c.l.s4 1966171168
    %v1550 = vunpack.c.0.s8 %v1549
    %v1551 = vlaneseq
    %v1552 = vshrl.u32 %v1551, 7
    %v1553 = vsub.s32 %v1550, %v1552
    %v1554 = vrot.slane %v1546, %v1553
    %v1556 = vunpack.c.l.s4 1966171168
    %v1557 = vunpack.c.0.s8 %v1556
    %v1558 = vlaneseq
    %v1559 = vshrl.u32 %v1558, 7
    %v1560 = vsub.s32 %v1557, %v1559
    %v1561 = vrot.slane %v1547, %v1560
    %v1563 = vunpack.c.l.s4 1966171168
    %v1564 = vunpack.c.0.s8 %v1563
    %v1565 = vlaneseq
    %v1566 = vshrl.u32 %v1565, 7
    %v1567 = vsub.s32 %v1564, %v1566
    %v1568 = vrot.slane %v1444, %v1567
    %v1569 = vcombine.high %v1568, %v1568
    %v1571 = vunpack.c.l.s4 1966171168
    %v1572 = vunpack.c.0.s8 %v1571
    %v1573 = vlaneseq
    %v1574 = vshrl.u32 %v1573, 7
    %v1575 = vsub.s32 %v1572, %v1574
    %v1576 = vrot.slane %v1568, %v1575
    %v1578 = vunpack.c.l.s4 1966171168
    %v1579 = vunpack.c.0.s8 %v1578
    %v1580 = vlaneseq
    %v1581 = vshrl.u32 %v1580, 7
    %v1582 = vsub.s32 %v1579, %v1581
    %v1583 = vrot.slane %v1569, %v1582
    %v1585 = vunpack.c.l.s4 1966171168
    %v1586 = vunpack.c.0.s8 %v1585
    %v1587 = vlaneseq
    %v1588 = vshrl.u32 %v1587, 7
    %v1589 = vsub.s32 %v1586, %v1588
    %v1590 = vrot.slane %v1427, %v1589
    %v1591 = vcombine.high %v1590, %v1590
    %v1593 = vunpack.c.l.s4 1966171168
    %v1594 = vunpack.c.0.s8 %v1593
    %v1595 = vlaneseq
    %v1596 = vshrl.u32 %v1595, 7
    %v1597 = vsub.s32 %v1594, %v1596
    %v1598 = vrot.slane %v1590, %v1597
    %v1600 = vunpack.c.l.s4 1966171168
    %v1601 = vunpack.c.0.s8 %v1600
    %v1602 = vlaneseq
    %v1603 = vshrl.u32 %v1602, 7
    %v1604 = vsub.s32 %v1601, %v1603
    %v1605 = vrot.slane %v1591, %v1604
    %v1607 = vunpack.c.l.s4 1966171168
    %v1608 = vunpack.c.0.s8 %v1607
    %v1609 = vlaneseq
    %v1610 = vshrl.u32 %v1609, 7
    %v1611 = vsub.s32 %v1608, %v1610
    %v1612 = vrot.slane %v1441, %v1611
    %v1613 = vcombine.high %v1612, %v1612
    %v1615 = vunpack.c.l.s4 1966171168
    %v1616 = vunpack.c.0.s8 %v1615
    %v1617 = vlaneseq
    %v1618 = vshrl.u32 %v1617, 7
    %v1619 = vsub.s32 %v1616, %v1618
    %v1620 = vrot.slane %v1612, %v1619
    %v1622 = vunpack.c.l.s4 1966171168
    %v1623 = vunpack.c.0.s8 %v1622
    %v1624 = vlaneseq
    %v1625 = vshrl.u32 %v1624, 7
    %v1626 = vsub.s32 %v1623, %v1625
    %v1627 = vrot.slane %v1613, %v1626
    %v1629 = vunpack.c.l.s4 1966171168
    %v1630 = vunpack.c.0.s8 %v1629
    %v1631 = vlaneseq
    %v1632 = vshrl.u32 %v1631, 7
    %v1633 = vsub.s32 %v1630, %v1632
    %v1634 = vrot.slane %v1443, %v1633
    %v1635 = vcombine.high %v1634, %v1634
    %v1637 = vunpack.c.l.s4 1966171168
    %v1638 = vunpack.c.0.s8 %v1637
    %v1639 = vlaneseq
    %v1640 = vshrl.u32 %v1639, 7
    %v1641 = vsub.s32 %v1638, %v1640
    %v1642 = vrot.slane %v1634, %v1641
    %v1644 = vunpack.c.l.s4 1966171168
    %v1645 = vunpack.c.0.s8 %v1644
    %v1646 = vlaneseq
    %v1647 = vshrl.u32 %v1646, 7
    %v1648 = vsub.s32 %v1645, %v1647
    %v1649 = vrot.slane %v1635, %v1648
    %v1651 = vunpack.c.l.s4 1966171168
    %v1652 = vunpack.c.0.s8 %v1651
    %v1653 = vlaneseq
    %v1654 = vshrl.u32 %v1653, 7
    %v1655 = vsub.s32 %v1652, %v1654
    %v1656 = vrot.slane %v1445, %v1655
    %v1657 = vcombine.high %v1656, %v1656
    %v1659 = vunpack.c.l.s4 1966171168
    %v1660 = vunpack.c.0.s8 %v1659
    %v1661 = vlaneseq
    %v1662 = vshrl.u32 %v1661, 7
    %v1663 = vsub.s32 %v1660, %v1662
    %v1664 = vrot.slane %v1656, %v1663
    %v1666 = vunpack.c.l.s4 1966171168
    %v1667 = vunpack.c.0.s8 %v1666
    %v1668 = vlaneseq
    %v1669 = vshrl.u32 %v1668, 7
    %v1670 = vsub.s32 %v1667, %v1669
    %v1671 = vrot.slane %v1657, %v1670
    %v1673 = vunpack.c.l.s4 1966171168
    %v1674 = vunpack.c.0.s8 %v1673
    %v1675 = vlaneseq
    %v1676 = vshrl.u32 %v1675, 7
    %v1677 = vsub.s32 %v1674, %v1676
    %v1678 = vrot.slane %v1470, %v1677
    %v1679 = vcombine.high %v1678, %v1678
    %v1681 = vunpack.c.l.s4 1966171168
    %v1682 = vunpack.c.0.s8 %v1681
    %v1683 = vlaneseq
    %v1684 = vshrl.u32 %v1683, 7
    %v1685 = vsub.s32 %v1682, %v1684
    %v1686 = vrot.slane %v1678, %v1685
    %v1688 = vunpack.c.l.s4 1966171168
    %v1689 = vunpack.c.0.s8 %v1688
    %v1690 = vlaneseq
    %v1691 = vshrl.u32 %v1690, 7
    %v1692 = vsub.s32 %v1689, %v1691
    %v1693 = vrot.slane %v1679, %v1692
    %v1695 = vunpack.c.l.s4 1966171168
    %v1696 = vunpack.c.0.s8 %v1695
    %v1697 = vlaneseq
    %v1698 = vshrl.u32 %v1697, 7
    %v1699 = vsub.s32 %v1696, %v1698
    %v1700 = vrot.slane %v1484, %v1699
    %v1701 = vcombine.high %v1700, %v1700
    %v1703 = vunpack.c.l.s4 1966171168
    %v1704 = vunpack.c.0.s8 %v1703
    %v1705 = vlaneseq
    %v1706 = vshrl.u32 %v1705, 7
    %v1707 = vsub.s32 %v1704, %v1706
    %v1708 = vrot.slane %v1700, %v1707
    %v1710 = vunpack.c.l.s4 1966171168
    %v1711 = vunpack.c.0.s8 %v1710
    %v1712 = vlaneseq
    %v1713 = vshrl.u32 %v1712, 7
    %v1714 = vsub.s32 %v1711, %v1713
    %v1715 = vrot.slane %v1701, %v1714
    %v1717 = vunpack.c.l.s4 1966171168
    %v1718 = vunpack.c.0.s8 %v1717
    %v1719 = vlaneseq
    %v1720 = vshrl.u32 %v1719, 7
    %v1721 = vsub.s32 %v1718, %v1720
    %v1722 = vrot.slane %v1492, %v1721
    %v1723 = vcombine.high %v1722, %v1722
    %v1725 = vunpack.c.l.s4 1966171168
    %v1726 = vunpack.c.0.s8 %v1725
    %v1727 = vlaneseq
    %v1728 = vshrl.u32 %v1727, 7
    %v1729 = vsub.s32 %v1726, %v1728
    %v1730 = vrot.slane %v1722, %v1729
    %v1732 = vunpack.c.l.s4 1966171168
    %v1733 = vunpack.c.0.s8 %v1732
    %v1734 = vlaneseq
    %v1735 = vshrl.u32 %v1734, 7
    %v1736 = vsub.s32 %v1733, %v1735
    %v1737 = vrot.slane %v1723, %v1736
    %v1739 = vunpack.c.l.s4 1966171168
    %v1740 = vunpack.c.0.s8 %v1739
    %v1741 = vlaneseq
    %v1742 = vshrl.u32 %v1741, 7
    %v1743 = vsub.s32 %v1740, %v1742
    %v1744 = vrot.slane %v1494, %v1743
    %v1745 = vcombine.high %v1744, %v1744
    %v1747 = vunpack.c.l.s4 1966171168
    %v1748 = vunpack.c.0.s8 %v1747
    %v1749 = vlaneseq
    %v1750 = vshrl.u32 %v1749, 7
    %v1751 = vsub.s32 %v1748, %v1750
    %v1752 = vrot.slane %v1744, %v1751
    %v1754 = vunpack.c.l.s4 1966171168
    %v1755 = vunpack.c.0.s8 %v1754
    %v1756 = vlaneseq
    %v1757 = vshrl.u32 %v1756, 7
    %v1758 = vsub.s32 %v1755, %v1757
    %v1759 = vrot.slane %v1745, %v1758
    %v1761 = vunpack.c.l.s4 1966171168
    %v1762 = vunpack.c.0.s8 %v1761
    %v1763 = vlaneseq
    %v1764 = vshrl.u32 %v1763, 7
    %v1765 = vsub.s32 %v1762, %v1764
    %v1766 = vrot.slane %v1477, %v1765
    %v1767 = vcombine.high %v1766, %v1766
    %v1769 = vunpack.c.l.s4 1966171168
    %v1770 = vunpack.c.0.s8 %v1769
    %v1771 = vlaneseq
    %v1772 = vshrl.u32 %v1771, 7
    %v1773 = vsub.s32 %v1770, %v1772
    %v1774 = vrot.slane %v1766, %v1773
    %v1776 = vunpack.c.l.s4 1966171168
    %v1777 = vunpack.c.0.s8 %v1776
    %v1778 = vlaneseq
    %v1779 = vshrl.u32 %v1778, 7
    %v1780 = vsub.s32 %v1777, %v1779
    %v1781 = vrot.slane %v1767, %v1780
    %v1783 = vunpack.c.l.s4 1966171168
    %v1784 = vunpack.c.0.s8 %v1783
    %v1785 = vlaneseq
    %v1786 = vshrl.u32 %v1785, 7
    %v1787 = vsub.s32 %v1784, %v1786
    %v1788 = vrot.slane %v1491, %v1787
    %v1789 = vcombine.high %v1788, %v1788
    %v1791 = vunpack.c.l.s4 1966171168
    %v1792 = vunpack.c.0.s8 %v1791
    %v1793 = vlaneseq
    %v1794 = vshrl.u32 %v1793, 7
    %v1795 = vsub.s32 %v1792, %v1794
    %v1796 = vrot.slane %v1788, %v1795
    %v1798 = vunpack.c.l.s4 1966171168
    %v1799 = vunpack.c.0.s8 %v1798
    %v1800 = vlaneseq
    %v1801 = vshrl.u32 %v1800, 7
    %v1802 = vsub.s32 %v1799, %v1801
    %v1803 = vrot.slane %v1789, %v1802
    %v1805 = vunpack.c.l.s4 1966171168
    %v1806 = vunpack.c.0.s8 %v1805
    %v1807 = vlaneseq
    %v1808 = vshrl.u32 %v1807, 7
    %v1809 = vsub.s32 %v1806, %v1808
    %v1810 = vrot.slane %v1493, %v1809
    %v1811 = vcombine.high %v1810, %v1810
    %v1813 = vunpack.c.l.s4 1966171168
    %v1814 = vunpack.c.0.s8 %v1813
    %v1815 = vlaneseq
    %v1816 = vshrl.u32 %v1815, 7
    %v1817 = vsub.s32 %v1814, %v1816
    %v1818 = vrot.slane %v1810, %v1817
    %v1820 = vunpack.c.l.s4 1966171168
    %v1821 = vunpack.c.0.s8 %v1820
    %v1822 = vlaneseq
    %v1823 = vshrl.u32 %v1822, 7
    %v1824 = vsub.s32 %v1821, %v1823
    %v1825 = vrot.slane %v1811, %v1824
    %v1827 = vunpack.c.l.s4 1966171168
    %v1828 = vunpack.c.0.s8 %v1827
    %v1829 = vlaneseq
    %v1830 = vshrl.u32 %v1829, 7
    %v1831 = vsub.s32 %v1828, %v1830
    %v1832 = vrot.slane %v1495, %v1831
    %v1833 = vcombine.high %v1832, %v1832
    %v1835 = vunpack.c.l.s4 1966171168
    %v1836 = vunpack.c.0.s8 %v1835
    %v1837 = vlaneseq
    %v1838 = vshrl.u32 %v1837, 7
    %v1839 = vsub.s32 %v1836, %v1838
    %v1840 = vrot.slane %v1832, %v1839
    %v1842 = vunpack.c.l.s4 1966171168
    %v1843 = vunpack.c.0.s8 %v1842
    %v1844 = vlaneseq
    %v1845 = vshrl.u32 %v1844, 7
    %v1846 = vsub.s32 %v1843, %v1845
    %v1847 = vrot.slane %v1833, %v1846
    %v1849 = vcombine.low 0, 0
    %v1851 = vunpack.c.l.s4 1966171168
    %v1852 = vunpack.c.0.s8 %v1851
    %v1853 = vlaneseq
    %v1854 = vshrl.u32 %v1853, 7
    %v1855 = vsub.s32 %v1852, %v1854
    %v1856 = vrot.slane %v1849, %v1855
    %v1858 = vunpack.c.l.s4 1966171168
    %v1859 = vunpack.c.0.s8 %v1858
    %v1860 = vlaneseq
    %v1861 = vshrl.u32 %v1860, 7
    %v1862 = vsub.s32 %v1859, %v1861
    %v1863 = vrot.slane %v1856, %v1862
    %v1864 = vcombine.low %v1510, %v1517
    %v1866 = vunpack.c.l.s4 1966171168
    %v1867 = vunpack.c.0.s8 %v1866
    %v1868 = vlaneseq
    %v1869 = vshrl.u32 %v1868, 7
    %v1870 = vsub.s32 %v1867, %v1869
    %v1871 = vrot.slane %v1864, %v1870
    %v1873 = vunpack.c.l.s4 1966171168
    %v1874 = vunpack.c.0.s8 %v1873
    %v1875 = vlaneseq
    %v1876 = vshrl.u32 %v1875, 7
    %v1877 = vsub.s32 %v1874, %v1876
    %v1878 = vrot.slane %v1871, %v1877
    %v1879 = vcombine.low %v1532, %v1539
    %v1881 = vunpack.c.l.s4 1966171168
    %v1882 = vunpack.c.0.s8 %v1881
    %v1883 = vlaneseq
    %v1884 = vshrl.u32 %v1883, 7
    %v1885 = vsub.s32 %v1882, %v1884
    %v1886 = vrot.slane %v1879, %v1885
    %v1888 = vunpack.c.l.s4 1966171168
    %v1889 = vunpack.c.0.s8 %v1888
    %v1890 = vlaneseq
    %v1891 = vshrl.u32 %v1890, 7
    %v1892 = vsub.s32 %v1889, %v1891
    %v1893 = vrot.slane %v1886, %v1892
    %v1894 = vcombine.low %v1554, %v1561
    %v1896 = vunpack.c.l.s4 1966171168
    %v1897 = vunpack.c.0.s8 %v1896
    %v1898 = vlaneseq
    %v1899 = vshrl.u32 %v1898, 7
    %v1900 = vsub.s32 %v1897, %v1899
    %v1901 = vrot.slane %v1894, %v1900
    %v1903 = vunpack.c.l.s4 1966171168
    %v1904 = vunpack.c.0.s8 %v1903
    %v1905 = vlaneseq
    %v1906 = vshrl.u32 %v1905, 7
    %v1907 = vsub.s32 %v1904, %v1906
    %v1908 = vrot.slane %v1901, %v1907
    %v1909 = vcombine.low %v1598, %v1605
    %v1911 = vunpack.c.l.s4 1966171168
    %v1912 = vunpack.c.0.s8 %v1911
    %v1913 = vlaneseq
    %v1914 = vshrl.u32 %v1913, 7
    %v1915 = vsub.s32 %v1912, %v1914
    %v1916 = vrot.slane %v1909, %v1915
    %v1918 = vunpack.c.l.s4 1966171168
    %v1919 = vunpack.c.0.s8 %v1918
    %v1920 = vlaneseq
    %v1921 = vshrl.u32 %v1920, 7
    %v1922 = vsub.s32 %v1919, %v1921
    %v1923 = vrot.slane %v1916, %v1922
    %v1924 = vcombine.low %v1620, %v1627
    %v1926 = vunpack.c.l.s4 1966171168
    %v1927 = vunpack.c.0.s8 %v1926
    %v1928 = vlaneseq
    %v1929 = vshrl.u32 %v1928, 7
    %v1930 = vsub.s32 %v1927, %v1929
    %v1931 = vrot.slane %v1924, %v1930
    %v1933 = vunpack.c.l.s4 1966171168
    %v1934 = vunpack.c.0.s8 %v1933
    %v1935 = vlaneseq
    %v1936 = vshrl.u32 %v1935, 7
    %v1937 = vsub.s32 %v1934, %v1936
    %v1938 = vrot.slane %v1931, %v1937
    %v1939 = vcombine.low %v1642, %v1649
    %v1941 = vunpack.c.l.s4 1966171168
    %v1942 = vunpack.c.0.s8 %v1941
    %v1943 = vlaneseq
    %v1944 = vshrl.u32 %v1943, 7
    %v1945 = vsub.s32 %v1942, %v1944
    %v1946 = vrot.slane %v1939, %v1945
    %v1948 = vunpack.c.l.s4 1966171168
    %v1949 = vunpack.c.0.s8 %v1948
    %v1950 = vlaneseq
    %v1951 = vshrl.u32 %v1950, 7
    %v1952 = vsub.s32 %v1949, %v1951
    %v1953 = vrot.slane %v1946, %v1952
    %v1954 = vcombine.low %v1686, %v1693
    %v1956 = vunpack.c.l.s4 1966171168
    %v1957 = vunpack.c.0.s8 %v1956
    %v1958 = vlaneseq
    %v1959 = vshrl.u32 %v1958, 7
    %v1960 = vsub.s32 %v1957, %v1959
    %v1961 = vrot.slane %v1954, %v1960
    %v1963 = vunpack.c.l.s4 1966171168
    %v1964 = vunpack.c.0.s8 %v1963
    %v1965 = vlaneseq
    %v1966 = vshrl.u32 %v1965, 7
    %v1967 = vsub.s32 %v1964, %v1966
    %v1968 = vrot.slane %v1961, %v1967
    %v1969 = vcombine.low %v1708, %v1715
    %v1971 = vunpack.c.l.s4 1966171168
    %v1972 = vunpack.c.0.s8 %v1971
    %v1973 = vlaneseq
    %v1974 = vshrl.u32 %v1973, 7
    %v1975 = vsub.s32 %v1972, %v1974
    %v1976 = vrot.slane %v1969, %v1975
    %v1978 = vunpack.c.l.s4 1966171168
    %v1979 = vunpack.c.0.s8 %v1978
    %v1980 = vlaneseq
    %v1981 = vshrl.u32 %v1980, 7
    %v1982 = vsub.s32 %v1979, %v1981
    %v1983 = vrot.slane %v1976, %v1982
    %v1984 = vcombine.low %v1730, %v1737
    %v1986 = vunpack.c.l.s4 1966171168
    %v1987 = vunpack.c.0.s8 %v1986
    %v1988 = vlaneseq
    %v1989 = vshrl.u32 %v1988, 7
    %v1990 = vsub.s32 %v1987, %v1989
    %v1991 = vrot.slane %v1984, %v1990
    %v1993 = vunpack.c.l.s4 1966171168
    %v1994 = vunpack.c.0.s8 %v1993
    %v1995 = vlaneseq
    %v1996 = vshrl.u32 %v1995, 7
    %v1997 = vsub.s32 %v1994, %v1996
    %v1998 = vrot.slane %v1991, %v1997
    %v1999 = vcombine.low %v1576, %v1583
    %v2001 = vunpack.c.l.s4 1966171168
    %v2002 = vunpack.c.0.s8 %v2001
    %v2003 = vlaneseq
    %v2004 = vshrl.u32 %v2003, 7
    %v2005 = vsub.s32 %v2002, %v2004
    %v2006 = vrot.slane %v1999, %v2005
    %v2008 = vunpack.c.l.s4 1966171168
    %v2009 = vunpack.c.0.s8 %v2008
    %v2010 = vlaneseq
    %v2011 = vshrl.u32 %v2010, 7
    %v2012 = vsub.s32 %v2009, %v2011
    %v2013 = vrot.slane %v2006, %v2012
    %v2014 = vcombine.low %v1664, %v1671
    %v2016 = vunpack.c.l.s4 1966171168
    %v2017 = vunpack.c.0.s8 %v2016
    %v2018 = vlaneseq
    %v2019 = vshrl.u32 %v2018, 7
    %v2020 = vsub.s32 %v2017, %v2019
    %v2021 = vrot.slane %v2014, %v2020
    %v2023 = vunpack.c.l.s4 1966171168
    %v2024 = vunpack.c.0.s8 %v2023
    %v2025 = vlaneseq
    %v2026 = vshrl.u32 %v2025, 7
    %v2027 = vsub.s32 %v2024, %v2026
    %v2028 = vrot.slane %v2021, %v2027
    %v2029 = vcombine.low %v1752, %v1759
    %v2031 = vunpack.c.l.s4 1966171168
    %v2032 = vunpack.c.0.s8 %v2031
    %v2033 = vlaneseq
    %v2034 = vshrl.u32 %v2033, 7
    %v2035 = vsub.s32 %v2032, %v2034
    %v2036 = vrot.slane %v2029, %v2035
    %v2038 = vunpack.c.l.s4 1966171168
    %v2039 = vunpack.c.0.s8 %v2038
    %v2040 = vlaneseq
    %v2041 = vshrl.u32 %v2040, 7
    %v2042 = vsub.s32 %v2039, %v2041
    %v2043 = vrot.slane %v2036, %v2042
    %v2044 = vcombine.low %v1774, %v1781
    %v2046 = vunpack.c.l.s4 1966171168
    %v2047 = vunpack.c.0.s8 %v2046
    %v2048 = vlaneseq
    %v2049 = vshrl.u32 %v2048, 7
    %v2050 = vsub.s32 %v2047, %v2049
    %v2051 = vrot.slane %v2044, %v2050
    %v2053 = vunpack.c.l.s4 1966171168
    %v2054 = vunpack.c.0.s8 %v2053
    %v2055 = vlaneseq
    %v2056 = vshrl.u32 %v2055, 7
    %v2057 = vsub.s32 %v2054, %v2056
    %v2058 = vrot.slane %v2051, %v2057
    %v2059 = vcombine.low %v1796, %v1803
    %v2061 = vunpack.c.l.s4 1966171168
    %v2062 = vunpack.c.0.s8 %v2061
    %v2063 = vlaneseq
    %v2064 = vshrl.u32 %v2063, 7
    %v2065 = vsub.s32 %v2062, %v2064
    %v2066 = vrot.slane %v2059, %v2065
    %v2068 = vunpack.c.l.s4 1966171168
    %v2069 = vunpack.c.0.s8 %v2068
    %v2070 = vlaneseq
    %v2071 = vshrl.u32 %v2070, 7
    %v2072 = vsub.s32 %v2069, %v2071
    %v2073 = vrot.slane %v2066, %v2072
    %v2074 = vcombine.low %v1818, %v1825
    %v2076 = vunpack.c.l.s4 1966171168
    %v2077 = vunpack.c.0.s8 %v2076
    %v2078 = vlaneseq
    %v2079 = vshrl.u32 %v2078, 7
    %v2080 = vsub.s32 %v2077, %v2079
    %v2081 = vrot.slane %v2074, %v2080
    %v2083 = vunpack.c.l.s4 1966171168
    %v2084 = vunpack.c.0.s8 %v2083
    %v2085 = vlaneseq
    %v2086 = vshrl.u32 %v2085, 7
    %v2087 = vsub.s32 %v2084, %v2086
    %v2088 = vrot.slane %v2081, %v2087
    %v2089 = vcombine.low %v1840, %v1847
    %v2091 = vunpack.c.l.s4 1966171168
    %v2092 = vunpack.c.0.s8 %v2091
    %v2093 = vlaneseq
    %v2094 = vshrl.u32 %v2093, 7
    %v2095 = vsub.s32 %v2092, %v2094
    %v2096 = vrot.slane %v2089, %v2095
    %v2098 = vunpack.c.l.s4 1966171168
    %v2099 = vunpack.c.0.s8 %v2098
    %v2100 = vlaneseq
    %v2101 = vshrl.u32 %v2100, 7
    %v2102 = vsub.s32 %v2099, %v2101
    %v2103 = vrot.slane %v2096, %v2102
    %v2104 = vcombine.low %v1863, %v1863
    %v2105 = vcombine.low %v1863, %v1878
    %v2106 = vcombine.low %v1893, %v1908
    %v2108 = vunpack.c.l.s4 1966171168
    %v2109 = vunpack.c.0.s8 %v2108
    %v2110 = vlaneseq
    %v2111 = vshrl.u32 %v2110, 7
    %v2112 = vsub.s32 %v2109, %v2111
    %v2113 = vrot.slane %v2104, %v2112
    %v2115 = vunpack.c.l.s4 1966171168
    %v2116 = vunpack.c.0.s8 %v2115
    %v2117 = vlaneseq
    %v2118 = vshrl.u32 %v2117, 7
    %v2119 = vsub.s32 %v2116, %v2118
    %v2120 = vrot.slane %v2105, %v2119
    %v2122 = vunpack.c.l.s4 1966171168
    %v2123 = vunpack.c.0.s8 %v2122
    %v2124 = vlaneseq
    %v2125 = vshrl.u32 %v2124, 7
    %v2126 = vsub.s32 %v2123, %v2125
    %v2127 = vrot.slane %v2106, %v2126
    %v2128 = vcombine.low %v2113, %v2113
    %v2129 = vcombine.high %v2113, %v2113
    %v2130 = vcombine.low %v2120, %v2127
    %v2131 = vcombine.high %v2120, %v2127
    %v2133 = vunpack.c.l.s4 1966171168
    %v2134 = vunpack.c.0.s8 %v2133
    %v2135 = vlaneseq
    %v2136 = vshrl.u32 %v2135, 7
    %v2137 = vsub.s32 %v2134, %v2136
    %v2138 = vrot.slane %v2128, %v2137
    %v2140 = vunpack.c.l.s4 1966171168
    %v2141 = vunpack.c.0.s8 %v2140
    %v2142 = vlaneseq
    %v2143 = vshrl.u32 %v2142, 7
    %v2144 = vsub.s32 %v2141, %v2143
    %v2145 = vrot.slane %v2129, %v2144
    %v2147 = vunpack.c.l.s4 1966171168
    %v2148 = vunpack.c.0.s8 %v2147
    %v2149 = vlaneseq
    %v2150 = vshrl.u32 %v2149, 7
    %v2151 = vsub.s32 %v2148, %v2150
    %v2152 = vrot.slane %v2130, %v2151
    %v2154 = vunpack.c.l.s4 1966171168
    %v2155 = vunpack.c.0.s8 %v2154
    %v2156 = vlaneseq
    %v2157 = vshrl.u32 %v2156, 7
    %v2158 = vsub.s32 %v2155, %v2157
    %v2159 = vrot.slane %v2131, %v2158
    %v2160 = vcombine.low %v2138, %v2152
    %v2161 = vcombine.low %v2145, %v2159
    %v2162 = vcombine.low %v1863, %v1923
    %v2163 = vcombine.low %v1938, %v1953
    %v2164 = vcombine.low %v1863, %v1968
    %v2165 = vcombine.low %v1983, %v1998
    %v2167 = vunpack.c.l.s4 1966171168
    %v2168 = vunpack.c.0.s8 %v2167
    %v2169 = vlaneseq
    %v2170 = vshrl.u32 %v2169, 7
    %v2171 = vsub.s32 %v2168, %v2170
    %v2172 = vrot.slane %v2162, %v2171
    %v2174 = vunpack.c.l.s4 1966171168
    %v2175 = vunpack.c.0.s8 %v2174
    %v2176 = vlaneseq
    %v2177 = vshrl.u32 %v2176, 7
    %v2178 = vsub.s32 %v2175, %v2177
    %v2179 = vrot.slane %v2163, %v2178
    %v2181 = vunpack.c.l.s4 1966171168
    %v2182 = vunpack.c.0.s8 %v2181
    %v2183 = vlaneseq
    %v2184 = vshrl.u32 %v2183, 7
    %v2185 = vsub.s32 %v2182, %v2184
    %v2186 = vrot.slane %v2164, %v2185
    %v2188 = vunpack.c.l.s4 1966171168
    %v2189 = vunpack.c.0.s8 %v2188
    %v2190 = vlaneseq
    %v2191 = vshrl.u32 %v2190, 7
    %v2192 = vsub.s32 %v2189, %v2191
    %v2193 = vrot.slane %v2165, %v2192
    %v2194 = vcombine.low %v2172, %v2179
    %v2195 = vcombine.high %v2172, %v2179
    %v2196 = vcombine.low %v2186, %v2193
    %v2197 = vcombine.high %v2186, %v2193
    %v2199 = vunpack.c.l.s4 1966171168
    %v2200 = vunpack.c.0.s8 %v2199
    %v2201 = vlaneseq
    %v2202 = vshrl.u32 %v2201, 7
    %v2203 = vsub.s32 %v2200, %v2202
    %v2204 = vrot.slane %v2194, %v2203
    %v2206 = vunpack.c.l.s4 1966171168
    %v2207 = vunpack.c.0.s8 %v2206
    %v2208 = vlaneseq
    %v2209 = vshrl.u32 %v2208, 7
    %v2210 = vsub.s32 %v2207, %v2209
    %v2211 = vrot.slane %v2195, %v2210
    %v2213 = vunpack.c.l.s4 1966171168
    %v2214 = vunpack.c.0.s8 %v2213
    %v2215 = vlaneseq
    %v2216 = vshrl.u32 %v2215, 7
    %v2217 = vsub.s32 %v2214, %v2216
    %v2218 = vrot.slane %v2196, %v2217
    %v2220 = vunpack.c.l.s4 1966171168
    %v2221 = vunpack.c.0.s8 %v2220
    %v2222 = vlaneseq
    %v2223 = vshrl.u32 %v2222, 7
    %v2224 = vsub.s32 %v2221, %v2223
    %v2225 = vrot.slane %v2197, %v2224
    %v2226 = vcombine.low %v2204, %v2218
    %v2227 = vcombine.low %v2211, %v2225
    %v2232 = vcombine.low %v1878, %v1893
    %v2233 = vcombine.low %v1908, %v2013
    %v2235 = vunpack.c.l.s4 1966171168
    %v2236 = vunpack.c.0.s8 %v2235
    %v2237 = vlaneseq
    %v2238 = vshrl.u32 %v2237, 7
    %v2239 = vsub.s32 %v2236, %v2238
    %v2240 = vrot.slane %v2232, %v2239
    %v2242 = vunpack.c.l.s4 1966171168
    %v2243 = vunpack.c.0.s8 %v2242
    %v2244 = vlaneseq
    %v2245 = vshrl.u32 %v2244, 7
    %v2246 = vsub.s32 %v2243, %v2245
    %v2247 = vrot.slane %v2233, %v2246
    %v2248 = vcombine.low %v2240, %v2247
    %v2249 = vcombine.high %v2240, %v2247
    %v2251 = vunpack.c.l.s4 1966171168
    %v2252 = vunpack.c.0.s8 %v2251
    %v2253 = vlaneseq
    %v2254 = vshrl.u32 %v2253, 7
    %v2255 = vsub.s32 %v2252, %v2254
    %v2256 = vrot.slane %v2248, %v2255
    %v2258 = vunpack.c.l.s4 1966171168
    %v2259 = vunpack.c.0.s8 %v2258
    %v2260 = vlaneseq
    %v2261 = vshrl.u32 %v2260, 7
    %v2262 = vsub.s32 %v2259, %v2261
    %v2263 = vrot.slane %v2249, %v2262
    %v2264 = vcombine.low %v2138, %v2256
    %v2265 = vcombine.low %v2145, %v2263
    %v2266 = vcombine.low %v1923, %v1938
    %v2267 = vcombine.low %v1953, %v2028
    %v2268 = vcombine.low %v1968, %v1983
    %v2269 = vcombine.low %v1998, %v2043
    %v2271 = vunpack.c.l.s4 1966171168
    %v2272 = vunpack.c.0.s8 %v2271
    %v2273 = vlaneseq
    %v2274 = vshrl.u32 %v2273, 7
    %v2275 = vsub.s32 %v2272, %v2274
    %v2276 = vrot.slane %v2266, %v2275
    %v2278 = vunpack.c.l.s4 1966171168
    %v2279 = vunpack.c.0.s8 %v2278
    %v2280 = vlaneseq
    %v2281 = vshrl.u32 %v2280, 7
    %v2282 = vsub.s32 %v2279, %v2281
    %v2283 = vrot.slane %v2267, %v2282
    %v2285 = vunpack.c.l.s4 1966171168
    %v2286 = vunpack.c.0.s8 %v2285
    %v2287 = vlaneseq
    %v2288 = vshrl.u32 %v2287, 7
    %v2289 = vsub.s32 %v2286, %v2288
    %v2290 = vrot.slane %v2268, %v2289
    %v2292 = vunpack.c.l.s4 1966171168
    %v2293 = vunpack.c.0.s8 %v2292
    %v2294 = vlaneseq
    %v2295 = vshrl.u32 %v2294, 7
    %v2296 = vsub.s32 %v2293, %v2295
    %v2297 = vrot.slane %v2269, %v2296
    %v2298 = vcombine.low %v2276, %v2283
    %v2299 = vcombine.high %v2276, %v2283
    %v2300 = vcombine.low %v2290, %v2297
    %v2301 = vcombine.high %v2290, %v2297
    %v2303 = vunpack.c.l.s4 1966171168
    %v2304 = vunpack.c.0.s8 %v2303
    %v2305 = vlaneseq
    %v2306 = vshrl.u32 %v2305, 7
    %v2307 = vsub.s32 %v2304, %v2306
    %v2308 = vrot.slane %v2298, %v2307
    %v2310 = vunpack.c.l.s4 1966171168
    %v2311 = vunpack.c.0.s8 %v2310
    %v2312 = vlaneseq
    %v2313 = vshrl.u32 %v2312, 7
    %v2314 = vsub.s32 %v2311, %v2313
    %v2315 = vrot.slane %v2299, %v2314
    %v2317 = vunpack.c.l.s4 1966171168
    %v2318 = vunpack.c.0.s8 %v2317
    %v2319 = vlaneseq
    %v2320 = vshrl.u32 %v2319, 7
    %v2321 = vsub.s32 %v2318, %v2320
    %v2322 = vrot.slane %v2300, %v2321
    %v2324 = vunpack.c.l.s4 1966171168
    %v2325 = vunpack.c.0.s8 %v2324
    %v2326 = vlaneseq
    %v2327 = vshrl.u32 %v2326, 7
    %v2328 = vsub.s32 %v2325, %v2327
    %v2329 = vrot.slane %v2301, %v2328
    %v2330 = vcombine.low %v2308, %v2322
    %v2331 = vcombine.low %v2315, %v2329
    %v2336 = vcombine.low %v2152, %v2204
    %v2337 = vcombine.low %v2159, %v2211
    %v2338 = vcombine.low %v1863, %v2058
    %v2339 = vcombine.low %v2073, %v2088
    %v2341 = vunpack.c.l.s4 1966171168
    %v2342 = vunpack.c.0.s8 %v2341
    %v2343 = vlaneseq
    %v2344 = vshrl.u32 %v2343, 7
    %v2345 = vsub.s32 %v2342, %v2344
    %v2346 = vrot.slane %v2338, %v2345
    %v2348 = vunpack.c.l.s4 1966171168
    %v2349 = vunpack.c.0.s8 %v2348
    %v2350 = vlaneseq
    %v2351 = vshrl.u32 %v2350, 7
    %v2352 = vsub.s32 %v2349, %v2351
    %v2353 = vrot.slane %v2339, %v2352
    %v2354 = vcombine.low %v2346, %v2353
    %v2355 = vcombine.high %v2346, %v2353
    %v2357 = vunpack.c.l.s4 1966171168
    %v2358 = vunpack.c.0.s8 %v2357
    %v2359 = vlaneseq
    %v2360 = vshrl.u32 %v2359, 7
    %v2361 = vsub.s32 %v2358, %v2360
    %v2362 = vrot.slane %v2354, %v2361
    %v2364 = vunpack.c.l.s4 1966171168
    %v2365 = vunpack.c.0.s8 %v2364
    %v2366 = vlaneseq
    %v2367 = vshrl.u32 %v2366, 7
    %v2368 = vsub.s32 %v2365, %v2367
    %v2369 = vrot.slane %v2355, %v2368
    %v2370 = vcombine.low %v2218, %v2362
    %v2371 = vcombine.low %v2225, %v2369
    %v2376 = vcombine.low %v2256, %v2308
    %v2377 = vcombine.low %v2263, %v2315
    %v2378 = vcombine.low %v2058, %v2073
    %v2379 = vcombine.low %v2088, %v2103
    %v2381 = vunpack.c.l.s4 1966171168
    %v2382 = vunpack.c.0.s8 %v2381
    %v2383 = vlaneseq
    %v2384 = vshrl.u32 %v2383, 7
    %v2385 = vsub.s32 %v2382, %v2384
    %v2386 = vrot.slane %v2378, %v2385
    %v2388 = vunpack.c.l.s4 1966171168
    %v2389 = vunpack.c.0.s8 %v2388
    %v2390 = vlaneseq
    %v2391 = vshrl.u32 %v2390, 7
    %v2392 = vsub.s32 %v2389, %v2391
    %v2393 = vrot.slane %v2379, %v2392
    %v2394 = vcombine.low %v2386, %v2393
    %v2395 = vcombine.high %v2386, %v2393
    %v2397 = vunpack.c.l.s4 1966171168
    %v2398 = vunpack.c.0.s8 %v2397
    %v2399 = vlaneseq
    %v2400 = vshrl.u32 %v2399, 7
    %v2401 = vsub.s32 %v2398, %v2400
    %v2402 = vrot.slane %v2394, %v2401
    %v2404 = vunpack.c.l.s4 1966171168
    %v2405 = vunpack.c.0.s8 %v2404
    %v2406 = vlaneseq
    %v2407 = vshrl.u32 %v2406, 7
    %v2408 = vsub.s32 %v2405, %v2407
    %v2409 = vrot.slane %v2395, %v2408
    %v2410 = vcombine.low %v2322, %v2402
    %v2411 = vcombine.low %v2329, %v2409
    %v2416 = vld [vmem:[#allocation7] sm:$0xf]
    %v2417 = vld [vmem:[#allocation7 + $0x4] sm:$0xf]
    %v2418 = vld [vmem:[#allocation7 + $0x8] sm:$0xf]
    %v2419 = vld [vmem:[#allocation7 + $0xc] sm:$0xf]
    %v2420 = vld [vmem:[#allocation7 + $0x10] sm:$0xf]
    %v2421 = vld [vmem:[#allocation7 + $0x14] sm:$0xf]
    %v2422 = vld [vmem:[#allocation7 + $0x18] sm:$0xf]
    %v2423 = vld [vmem:[#allocation7 + $0x1c] sm:$0xf]
    %v2424 = vld [vmem:[#allocation7 + $0x20] sm:$0xf]
    %v2425 = vld [vmem:[#allocation7 + $0x24] sm:$0xf]
    %v2426 = vld [vmem:[#allocation7 + $0x28] sm:$0xf]
    %v2427 = vld [vmem:[#allocation7 + $0x2c] sm:$0xf]
    %v2428 = vld [vmem:[#allocation7 + $0x30] sm:$0xf]
    %v2429 = vld [vmem:[#allocation7 + $0x34] sm:$0xf]
    %v2430 = vld [vmem:[#allocation7 + $0x38] sm:$0xf]
    %v2431 = vld [vmem:[#allocation7 + $0x3c] sm:$0xf]
    %v2432 = vld [vmem:[#allocation7 + $0x40] sm:$0xf]
    %v2433 = vld [vmem:[#allocation7 + $0x44] sm:$0xf]
    %v2434 = vld [vmem:[#allocation7 + $0x48] sm:$0xf]
    %v2435 = vld [vmem:[#allocation7 + $0x4c] sm:$0xf]
    %v2436 = vld [vmem:[#allocation7 + $0x50] sm:$0xf]
    %v2437 = vld [vmem:[#allocation7 + $0x54] sm:$0xf]
    %v2438 = vld [vmem:[#allocation7 + $0x58] sm:$0xf]
    %v2439 = vld [vmem:[#allocation7 + $0x5c] sm:$0xf]
    %v2440 = vld [vmem:[#allocation7 + $0x60] sm:$0xf]
    %v2441 = vld [vmem:[#allocation7 + $0x64] sm:$0xf]
    %v2442 = vld [vmem:[#allocation7 + $0x68] sm:$0xf]
    %v2443 = vld [vmem:[#allocation7 + $0x6c] sm:$0xf]
    %v2444 = vld [vmem:[#allocation7 + $0x70] sm:$0xf]
    %v2445 = vld [vmem:[#allocation7 + $0x74] sm:$0xf]
    %v2446 = vld [vmem:[#allocation7 + $0x78] sm:$0xf]
    %v2447 = vld [vmem:[#allocation7 + $0x7c] sm:$0xf]
    %v2448 = vld [vmem:[#allocation7 + $0x80] sm:$0xf]
    %v2449 = vld [vmem:[#allocation7 + $0x84] sm:$0xf]
    %v2450 = vld [vmem:[#allocation7 + $0x88] sm:$0xf]
    %v2451 = vld [vmem:[#allocation7 + $0x8c] sm:$0xf]
    %v2452 = vld [vmem:[#allocation7 + $0x90] sm:$0xf]
    %v2453 = vld [vmem:[#allocation7 + $0x94] sm:$0xf]
    %v2454 = vld [vmem:[#allocation7 + $0x98] sm:$0xf]
    %v2455 = vld [vmem:[#allocation7 + $0x9c] sm:$0xf]
    %v2456 = vld [vmem:[#allocation7 + $0xa0] sm:$0xf]
    %v2457 = vld [vmem:[#allocation7 + $0xa4] sm:$0xf]
    %v2458 = vld [vmem:[#allocation7 + $0xa8] sm:$0xf]
    %v2459 = vld [vmem:[#allocation7 + $0xac] sm:$0xf]
    %v2460 = vld [vmem:[#allocation7 + $0xb0] sm:$0xf]
    %v2461 = vld [vmem:[#allocation7 + $0xb4] sm:$0xf]
    %v2462 = vld [vmem:[#allocation7 + $0xb8] sm:$0xf]
    %v2463 = vld [vmem:[#allocation7 + $0xbc] sm:$0xf]
    %v2464 = vld [vmem:[#allocation7 + $0xc0] sm:$0xf]
    %v2465 = vld [vmem:[#allocation7 + $0xc4] sm:$0xf]
    %v2466 = vld [vmem:[#allocation7 + $0xc8] sm:$0xf]
    %v2467 = vld [vmem:[#allocation7 + $0xcc] sm:$0xf]
    %v2468 = vld [vmem:[#allocation7 + $0xd0] sm:$0xf]
    %v2469 = vld [vmem:[#allocation7 + $0xd4] sm:$0xf]
    %v2470 = vld [vmem:[#allocation7 + $0xd8] sm:$0xf]
    %v2471 = vld [vmem:[#allocation7 + $0xdc] sm:$0xf]
    %v2472 = vld [vmem:[#allocation7 + $0xe0] sm:$0xf]
    %v2473 = vld [vmem:[#allocation7 + $0xe4] sm:$0xf]
    %v2474 = vld [vmem:[#allocation7 + $0xe8] sm:$0xf]
    %v2475 = vld [vmem:[#allocation7 + $0xec] sm:$0xf]
    %v2476 = vld [vmem:[#allocation7 + $0xf0] sm:$0xf]
    %v2477 = vld [vmem:[#allocation7 + $0xf4] sm:$0xf]
    %v2478 = vld [vmem:[#allocation7 + $0xf8] sm:$0xf]
    %v2479 = vld [vmem:[#allocation7 + $0xfc] sm:$0xf]
    %v2480 = vld [vmem:[#allocation7 + $0x100] sm:$0xf]
    %v2481 = vld [vmem:[#allocation7 + $0x104] sm:$0xf]
    %v2482 = vld [vmem:[#allocation7 + $0x108] sm:$0xf]
    %v2483 = vld [vmem:[#allocation7 + $0x10c] sm:$0xf]
    %v2484 = vld [vmem:[#allocation7 + $0x110] sm:$0xf]
    %v2485 = vld [vmem:[#allocation7 + $0x114] sm:$0xf]
    %v2486 = vld [vmem:[#allocation7 + $0x118] sm:$0xf]
    %v2487 = vld [vmem:[#allocation7 + $0x11c] sm:$0xf]
    %v2488 = vld [vmem:[#allocation7 + $0x120] sm:$0xf]
    %v2489 = vld [vmem:[#allocation7 + $0x124] sm:$0xf]
    %v2490 = vld [vmem:[#allocation7 + $0x128] sm:$0xf]
    %v2491 = vld [vmem:[#allocation7 + $0x12c] sm:$0xf]
    %v2492 = vld [vmem:[#allocation7 + $0x130] sm:$0xf]
    %v2493 = vld [vmem:[#allocation7 + $0x134] sm:$0xf]
    %v2494 = vld [vmem:[#allocation7 + $0x138] sm:$0xf]
    %v2495 = vld [vmem:[#allocation7 + $0x13c] sm:$0xf]
    %v2496 = vld [vmem:[#allocation7 + $0x140] sm:$0xf]
    %v2497 = vld [vmem:[#allocation7 + $0x144] sm:$0xf]
    %v2498 = vld [vmem:[#allocation7 + $0x148] sm:$0xf]
    %v2499 = vld [vmem:[#allocation7 + $0x14c] sm:$0xf]
    %v2500 = vld [vmem:[#allocation7 + $0x150] sm:$0xf]
    %v2501 = vld [vmem:[#allocation7 + $0x154] sm:$0xf]
    %v2502 = vld [vmem:[#allocation7 + $0x158] sm:$0xf]
    %v2503 = vld [vmem:[#allocation7 + $0x15c] sm:$0xf]
    %v2504 = vld [vmem:[#allocation7 + $0x160] sm:$0xf]
    %v2505 = vld [vmem:[#allocation7 + $0x164] sm:$0xf]
    %v2506 = vld [vmem:[#allocation7 + $0x168] sm:$0xf]
    %v2507 = vld [vmem:[#allocation7 + $0x16c] sm:$0xf]
    %v2508 = vld [vmem:[#allocation7 + $0x170] sm:$0xf]
    %v2509 = vld [vmem:[#allocation7 + $0x174] sm:$0xf]
    %v2510 = vld [vmem:[#allocation7 + $0x178] sm:$0xf]
    %v2511 = vld [vmem:[#allocation7 + $0x17c] sm:$0xf]
    %v2512 = vld [vmem:[#allocation7 + $0x180] sm:$0xf]
    %v2513 = vld [vmem:[#allocation7 + $0x184] sm:$0xf]
    %v2514 = vld [vmem:[#allocation7 + $0x188] sm:$0xf]
    %v2515 = vld [vmem:[#allocation7 + $0x18c] sm:$0xf]
    %v2516 = vld [vmem:[#allocation7 + $0x190] sm:$0xf]
    %v2517 = vld [vmem:[#allocation7 + $0x194] sm:$0xf]
    %v2518 = vld [vmem:[#allocation7 + $0x198] sm:$0xf]
    %v2519 = vld [vmem:[#allocation7 + $0x19c] sm:$0xf]
    %v2520 = vld [vmem:[#allocation7 + $0x1a0] sm:$0xf]
    %v2521 = vld [vmem:[#allocation7 + $0x1a4] sm:$0xf]
    %v2522 = vld [vmem:[#allocation7 + $0x1a8] sm:$0xf]
    %v2523 = vld [vmem:[#allocation7 + $0x1ac] sm:$0xf]
    %v2524 = vld [vmem:[#allocation7 + $0x1b0] sm:$0xf]
    %v2525 = vld [vmem:[#allocation7 + $0x1b4] sm:$0xf]
    %v2526 = vld [vmem:[#allocation7 + $0x1b8] sm:$0xf]
    %v2527 = vld [vmem:[#allocation7 + $0x1bc] sm:$0xf]
    %v2528 = vld [vmem:[#allocation7 + $0x1c0] sm:$0xf]
    %v2529 = vld [vmem:[#allocation7 + $0x1c4] sm:$0xf]
    %v2530 = vld [vmem:[#allocation7 + $0x1c8] sm:$0xf]
    %v2531 = vld [vmem:[#allocation7 + $0x1cc] sm:$0xf]
    %v2532 = vld [vmem:[#allocation7 + $0x1d0] sm:$0xf]
    %v2533 = vld [vmem:[#allocation7 + $0x1d4] sm:$0xf]
    %v2534 = vld [vmem:[#allocation7 + $0x1d8] sm:$0xf]
    %v2535 = vld [vmem:[#allocation7 + $0x1dc] sm:$0xf]
    %v2536 = vld [vmem:[#allocation7 + $0x1e0] sm:$0xf]
    %v2537 = vld [vmem:[#allocation7 + $0x1e4] sm:$0xf]
    %v2538 = vld [vmem:[#allocation7 + $0x1e8] sm:$0xf]
    %v2539 = vld [vmem:[#allocation7 + $0x1ec] sm:$0xf]
    %v2540 = vld [vmem:[#allocation7 + $0x1f0] sm:$0xf]
    %v2541 = vld [vmem:[#allocation7 + $0x1f4] sm:$0xf]
    %v2542 = vld [vmem:[#allocation7 + $0x1f8] sm:$0xf]
    %v2543 = vld [vmem:[#allocation7 + $0x1fc] sm:$0xf]
    %v2672 = vunpack.c.l.b16 %v2416
    %v2673 = vunpack.c.l.b16 %v2417
    %v2674 = vunpack.c.l.b16 %v2418
    %v2675 = vunpack.c.l.b16 %v2419
    %v2676 = vunpack.c.l.b16 %v2420
    %v2677 = vunpack.c.l.b16 %v2421
    %v2678 = vunpack.c.l.b16 %v2422
    %v2679 = vunpack.c.l.b16 %v2423
    %v2680 = vunpack.c.l.b16 %v2424
    %v2681 = vunpack.c.l.b16 %v2425
    %v2682 = vunpack.c.l.b16 %v2426
    %v2683 = vunpack.c.l.b16 %v2427
    %v2684 = vunpack.c.l.b16 %v2428
    %v2685 = vunpack.c.l.b16 %v2429
    %v2686 = vunpack.c.l.b16 %v2430
    %v2687 = vunpack.c.l.b16 %v2431
    %v2688 = vunpack.c.l.b16 %v2432
    %v2689 = vunpack.c.l.b16 %v2433
    %v2690 = vunpack.c.l.b16 %v2434
    %v2691 = vunpack.c.l.b16 %v2435
    %v2692 = vunpack.c.l.b16 %v2436
    %v2693 = vunpack.c.l.b16 %v2437
    %v2694 = vunpack.c.l.b16 %v2438
    %v2695 = vunpack.c.l.b16 %v2439
    %v2696 = vunpack.c.l.b16 %v2440
    %v2697 = vunpack.c.l.b16 %v2441
    %v2698 = vunpack.c.l.b16 %v2442
    %v2699 = vunpack.c.l.b16 %v2443
    %v2700 = vunpack.c.l.b16 %v2444
    %v2701 = vunpack.c.l.b16 %v2445
    %v2702 = vunpack.c.l.b16 %v2446
    %v2703 = vunpack.c.l.b16 %v2447
    %v2704 = vunpack.c.l.b16 %v2448
    %v2705 = vunpack.c.l.b16 %v2449
    %v2706 = vunpack.c.l.b16 %v2450
    %v2707 = vunpack.c.l.b16 %v2451
    %v2708 = vunpack.c.l.b16 %v2452
    %v2709 = vunpack.c.l.b16 %v2453
    %v2710 = vunpack.c.l.b16 %v2454
    %v2711 = vunpack.c.l.b16 %v2455
    %v2712 = vunpack.c.l.b16 %v2456
    %v2713 = vunpack.c.l.b16 %v2457
    %v2714 = vunpack.c.l.b16 %v2458
    %v2715 = vunpack.c.l.b16 %v2459
    %v2716 = vunpack.c.l.b16 %v2460
    %v2717 = vunpack.c.l.b16 %v2461
    %v2718 = vunpack.c.l.b16 %v2462
    %v2719 = vunpack.c.l.b16 %v2463
    %v2720 = vunpack.c.l.b16 %v2464
    %v2721 = vunpack.c.l.b16 %v2465
    %v2722 = vunpack.c.l.b16 %v2466
    %v2723 = vunpack.c.l.b16 %v2467
    %v2724 = vunpack.c.l.b16 %v2468
    %v2725 = vunpack.c.l.b16 %v2469
    %v2726 = vunpack.c.l.b16 %v2470
    %v2727 = vunpack.c.l.b16 %v2471
    %v2728 = vunpack.c.l.b16 %v2472
    %v2729 = vunpack.c.l.b16 %v2473
    %v2730 = vunpack.c.l.b16 %v2474
    %v2731 = vunpack.c.l.b16 %v2475
    %v2732 = vunpack.c.l.b16 %v2476
    %v2733 = vunpack.c.l.b16 %v2477
    %v2734 = vunpack.c.l.b16 %v2478
    %v2735 = vunpack.c.l.b16 %v2479
    %v2736 = vunpack.c.l.b16 %v2480
    %v2737 = vunpack.c.l.b16 %v2481
    %v2738 = vunpack.c.l.b16 %v2482
    %v2739 = vunpack.c.l.b16 %v2483
    %v2740 = vunpack.c.l.b16 %v2484
    %v2741 = vunpack.c.l.b16 %v2485
    %v2742 = vunpack.c.l.b16 %v2486
    %v2743 = vunpack.c.l.b16 %v2487
    %v2744 = vunpack.c.l.b16 %v2488
    %v2745 = vunpack.c.l.b16 %v2489
    %v2746 = vunpack.c.l.b16 %v2490
    %v2747 = vunpack.c.l.b16 %v2491
    %v2748 = vunpack.c.l.b16 %v2492
    %v2749 = vunpack.c.l.b16 %v2493
    %v2750 = vunpack.c.l.b16 %v2494
    %v2751 = vunpack.c.l.b16 %v2495
    %v2752 = vunpack.c.l.b16 %v2496
    %v2753 = vunpack.c.l.b16 %v2497
    %v2754 = vunpack.c.l.b16 %v2498
    %v2755 = vunpack.c.l.b16 %v2499
    %v2756 = vunpack.c.l.b16 %v2500
    %v2757 = vunpack.c.l.b16 %v2501
    %v2758 = vunpack.c.l.b16 %v2502
    %v2759 = vunpack.c.l.b16 %v2503
    %v2760 = vunpack.c.l.b16 %v2504
    %v2761 = vunpack.c.l.b16 %v2505
    %v2762 = vunpack.c.l.b16 %v2506
    %v2763 = vunpack.c.l.b16 %v2507
    %v2764 = vunpack.c.l.b16 %v2508
    %v2765 = vunpack.c.l.b16 %v2509
    %v2766 = vunpack.c.l.b16 %v2510
    %v2767 = vunpack.c.l.b16 %v2511
    %v2768 = vunpack.c.l.b16 %v2512
    %v2769 = vunpack.c.l.b16 %v2513
    %v2770 = vunpack.c.l.b16 %v2514
    %v2771 = vunpack.c.l.b16 %v2515
    %v2772 = vunpack.c.l.b16 %v2516
    %v2773 = vunpack.c.l.b16 %v2517
    %v2774 = vunpack.c.l.b16 %v2518
    %v2775 = vunpack.c.l.b16 %v2519
    %v2776 = vunpack.c.l.b16 %v2520
    %v2777 = vunpack.c.l.b16 %v2521
    %v2778 = vunpack.c.l.b16 %v2522
    %v2779 = vunpack.c.l.b16 %v2523
    %v2780 = vunpack.c.l.b16 %v2524
    %v2781 = vunpack.c.l.b16 %v2525
    %v2782 = vunpack.c.l.b16 %v2526
    %v2783 = vunpack.c.l.b16 %v2527
    %v2784 = vunpack.c.l.b16 %v2528
    %v2785 = vunpack.c.l.b16 %v2529
    %v2786 = vunpack.c.l.b16 %v2530
    %v2787 = vunpack.c.l.b16 %v2531
    %v2788 = vunpack.c.l.b16 %v2532
    %v2789 = vunpack.c.l.b16 %v2533
    %v2790 = vunpack.c.l.b16 %v2534
    %v2791 = vunpack.c.l.b16 %v2535
    %v2792 = vunpack.c.l.b16 %v2536
    %v2793 = vunpack.c.l.b16 %v2537
    %v2794 = vunpack.c.l.b16 %v2538
    %v2795 = vunpack.c.l.b16 %v2539
    %v2796 = vunpack.c.l.b16 %v2540
    %v2797 = vunpack.c.l.b16 %v2541
    %v2798 = vunpack.c.l.b16 %v2542
    %v2799 = vunpack.c.l.b16 %v2543
    %v2800 = vpack.c.b16 %v2673, %v2672
    %v2801 = vpack.c.b16 %v2675, %v2674
    %v2802 = vpack.c.b16 %v2677, %v2676
    %v2803 = vpack.c.b16 %v2679, %v2678
    %v2804 = vpack.c.b16 %v2681, %v2680
    %v2805 = vpack.c.b16 %v2683, %v2682
    %v2806 = vpack.c.b16 %v2685, %v2684
    %v2807 = vpack.c.b16 %v2687, %v2686
    %v2808 = vpack.c.b16 %v2689, %v2688
    %v2809 = vpack.c.b16 %v2691, %v2690
    %v2810 = vpack.c.b16 %v2693, %v2692
    %v2811 = vpack.c.b16 %v2695, %v2694
    %v2812 = vpack.c.b16 %v2697, %v2696
    %v2813 = vpack.c.b16 %v2699, %v2698
    %v2814 = vpack.c.b16 %v2701, %v2700
    %v2815 = vpack.c.b16 %v2703, %v2702
    %v2816 = vpack.c.b16 %v2705, %v2704
    %v2817 = vpack.c.b16 %v2707, %v2706
    %v2818 = vpack.c.b16 %v2709, %v2708
    %v2819 = vpack.c.b16 %v2711, %v2710
    %v2820 = vpack.c.b16 %v2713, %v2712
    %v2821 = vpack.c.b16 %v2715, %v2714
    %v2822 = vpack.c.b16 %v2717, %v2716
    %v2823 = vpack.c.b16 %v2719, %v2718
    %v2824 = vpack.c.b16 %v2721, %v2720
    %v2825 = vpack.c.b16 %v2723, %v2722
    %v2826 = vpack.c.b16 %v2725, %v2724
    %v2827 = vpack.c.b16 %v2727, %v2726
    %v2828 = vpack.c.b16 %v2729, %v2728
    %v2829 = vpack.c.b16 %v2731, %v2730
    %v2830 = vpack.c.b16 %v2733, %v2732
    %v2831 = vpack.c.b16 %v2735, %v2734
    %v2832 = vpack.c.b16 %v2737, %v2736
    %v2833 = vpack.c.b16 %v2739, %v2738
    %v2834 = vpack.c.b16 %v2741, %v2740
    %v2835 = vpack.c.b16 %v2743, %v2742
    %v2836 = vpack.c.b16 %v2745, %v2744
    %v2837 = vpack.c.b16 %v2747, %v2746
    %v2838 = vpack.c.b16 %v2749, %v2748
    %v2839 = vpack.c.b16 %v2751, %v2750
    %v2840 = vpack.c.b16 %v2753, %v2752
    %v2841 = vpack.c.b16 %v2755, %v2754
    %v2842 = vpack.c.b16 %v2757, %v2756
    %v2843 = vpack.c.b16 %v2759, %v2758
    %v2844 = vpack.c.b16 %v2761, %v2760
    %v2845 = vpack.c.b16 %v2763, %v2762
    %v2846 = vpack.c.b16 %v2765, %v2764
    %v2847 = vpack.c.b16 %v2767, %v2766
    %v2848 = vpack.c.b16 %v2769, %v2768
    %v2849 = vpack.c.b16 %v2771, %v2770
    %v2850 = vpack.c.b16 %v2773, %v2772
    %v2851 = vpack.c.b16 %v2775, %v2774
    %v2852 = vpack.c.b16 %v2777, %v2776
    %v2853 = vpack.c.b16 %v2779, %v2778
    %v2854 = vpack.c.b16 %v2781, %v2780
    %v2855 = vpack.c.b16 %v2783, %v2782
    %v2856 = vpack.c.b16 %v2785, %v2784
    %v2857 = vpack.c.b16 %v2787, %v2786
    %v2858 = vpack.c.b16 %v2789, %v2788
    %v2859 = vpack.c.b16 %v2791, %v2790
    %v2860 = vpack.c.b16 %v2793, %v2792
    %v2861 = vpack.c.b16 %v2795, %v2794
    %v2862 = vpack.c.b16 %v2797, %v2796
    %v2863 = vpack.c.b16 %v2799, %v2798
    %2928 = vmatprep.subr.bf16.mxu0 0
    %2929 = vmatpush1.bf16.msra.mxu0 %v2807
    %2930 = vmatprep.subr.bf16.mxu0 0
    %2931 = vmatpush1.bf16.msra.mxu0 %v2806
    %2932 = vmatprep.subr.bf16.mxu0 0
    %2933 = vmatpush1.bf16.msra.mxu0 %v2805
    %2934 = vmatprep.subr.bf16.mxu0 0
    %2935 = vmatpush1.bf16.msra.mxu0 %v2804
    %2936 = vmatprep.subr.bf16.mxu0 0
    %2937 = vmatpush1.bf16.msra.mxu0 %v2803
    %2938 = vmatprep.subr.bf16.mxu0 0
    %2939 = vmatpush1.bf16.msra.mxu0 %v2802
    %2940 = vmatprep.subr.bf16.mxu0 0
    %2941 = vmatpush1.bf16.msra.mxu0 %v2801
    %2942 = vmatprep.subr.bf16.mxu0 0
    %2943 = vmatpush1.bf16.msra.mxu0 %v2800
    %2944 = vmatprep.subr.bf16.mxu0 0
    %2945 = vmatpush2.bf16.msra.mxu0 %v2815
    %2946 = vmatprep.subr.bf16.mxu0 0
    %2947 = vmatpush2.bf16.msra.mxu0 %v2814
    %2948 = vmatprep.subr.bf16.mxu0 0
    %2949 = vmatpush2.bf16.msra.mxu0 %v2813
    %2950 = vmatprep.subr.bf16.mxu0 0
    %2951 = vmatpush2.bf16.msra.mxu0 %v2812
    %2952 = vmatprep.subr.bf16.mxu0 0
    %2953 = vmatpush2.bf16.msra.mxu0 %v2811
    %2954 = vmatprep.subr.bf16.mxu0 0
    %2955 = vmatpush2.bf16.msra.mxu0 %v2810
    %2956 = vmatprep.subr.bf16.mxu0 0
    %2957 = vmatpush2.bf16.msra.mxu0 %v2809
    %2958 = vmatprep.subr.bf16.mxu0 0
    %2959 = vmatpush2.bf16.msra.mxu0 %v2808
    %2960 = vmatprep.mubr.bf16.mxu0 %v2161
    %2961 = vmatmul.mubr.bf16.gmra.mxu0 %v2160
    %v2962 = vpop.f32.mrf.mxu0
    %v2963 = vadd.f32 0.0, %v2962
    %v2964 = vpop.f32.mrf.mxu0
    %v2965 = vpop.f32.mrf.mxu0
    %v2966 = vadd.f32 0.0, %v2965
    %v2967 = vpop.f32.mrf.mxu0
    %2968 = vmatprep.mubr.bf16.mxu0 %v2227
    %2969 = vmatmul.mubr.bf16.gmra.mxu0 %v2226
    %v2970 = vpop.f32.mrf.mxu0
    %v2971 = vadd.f32 0.0, %v2970
    %v2972 = vpop.f32.mrf.mxu0
    %v2973 = vpop.f32.mrf.mxu0
    %v2974 = vadd.f32 0.0, %v2973
    %v2975 = vpop.f32.mrf.mxu0
    %2976 = vdwg.mxu0
    %2977 = vmatprep.subr.bf16.mxu0 0
    %2978 = vmatpush1.bf16.msra.mxu0 %v2823
    %2979 = vmatprep.subr.bf16.mxu0 0
    %2980 = vmatpush1.bf16.msra.mxu0 %v2822
    %2981 = vmatprep.subr.bf16.mxu0 0
    %2982 = vmatpush1.bf16.msra.mxu0 %v2821
    %2983 = vmatprep.subr.bf16.mxu0 0
    %2984 = vmatpush1.bf16.msra.mxu0 %v2820
    %2985 = vmatprep.subr.bf16.mxu0 0
    %2986 = vmatpush1.bf16.msra.mxu0 %v2819
    %2987 = vmatprep.subr.bf16.mxu0 0
    %2988 = vmatpush1.bf16.msra.mxu0 %v2818
    %2989 = vmatprep.subr.bf16.mxu0 0
    %2990 = vmatpush1.bf16.msra.mxu0 %v2817
    %2991 = vmatprep.subr.bf16.mxu0 0
    %2992 = vmatpush1.bf16.msra.mxu0 %v2816
    %2993 = vmatprep.subr.bf16.mxu0 0
    %2994 = vmatpush2.bf16.msra.mxu0 %v2831
    %2995 = vmatprep.subr.bf16.mxu0 0
    %2996 = vmatpush2.bf16.msra.mxu0 %v2830
    %2997 = vmatprep.subr.bf16.mxu0 0
    %2998 = vmatpush2.bf16.msra.mxu0 %v2829
    %2999 = vmatprep.subr.bf16.mxu0 0
    %3000 = vmatpush2.bf16.msra.mxu0 %v2828
    %3001 = vmatprep.subr.bf16.mxu0 0
    %3002 = vmatpush2.bf16.msra.mxu0 %v2827
    %3003 = vmatprep.subr.bf16.mxu0 0
    %3004 = vmatpush2.bf16.msra.mxu0 %v2826
    %3005 = vmatprep.subr.bf16.mxu0 0
    %3006 = vmatpush2.bf16.msra.mxu0 %v2825
    %3007 = vmatprep.subr.bf16.mxu0 0
    %3008 = vmatpush2.bf16.msra.mxu0 %v2824
    %3009 = vmatprep.mubr.bf16.mxu0 %v2265
    %3010 = vmatmul.mubr.bf16.gmra.mxu0 %v2264
    %v3011 = vpop.f32.mrf.mxu0
    %v3012 = vadd.f32 %v2963, %v3011
    %v3013 = vpop.f32.mrf.mxu0
    %v3014 = vpop.f32.mrf.mxu0
    %v3015 = vadd.f32 %v2966, %v3014
    %v3016 = vpop.f32.mrf.mxu0
    %3017 = vmatprep.mubr.bf16.mxu0 %v2331
    %3018 = vmatmul.mubr.bf16.gmra.mxu0 %v2330
    %v3019 = vpop.f32.mrf.mxu0
    %v3020 = vadd.f32 %v2971, %v3019
    %v3021 = vpop.f32.mrf.mxu0
    %v3022 = vpop.f32.mrf.mxu0
    %v3023 = vadd.f32 %v2974, %v3022
    %v3024 = vpop.f32.mrf.mxu0
    %3025 = vdwg.mxu0
    %3026 = vmatprep.subr.bf16.mxu0 0
    %3027 = vmatpush1.bf16.msra.mxu0 %v2839
    %3028 = vmatprep.subr.bf16.mxu0 0
    %3029 = vmatpush1.bf16.msra.mxu0 %v2838
    %3030 = vmatprep.subr.bf16.mxu0 0
    %3031 = vmatpush1.bf16.msra.mxu0 %v2837
    %3032 = vmatprep.subr.bf16.mxu0 0
    %3033 = vmatpush1.bf16.msra.mxu0 %v2836
    %3034 = vmatprep.subr.bf16.mxu0 0
    %3035 = vmatpush1.bf16.msra.mxu0 %v2835
    %3036 = vmatprep.subr.bf16.mxu0 0
    %3037 = vmatpush1.bf16.msra.mxu0 %v2834
    %3038 = vmatprep.subr.bf16.mxu0 0
    %3039 = vmatpush1.bf16.msra.mxu0 %v2833
    %3040 = vmatprep.subr.bf16.mxu0 0
    %3041 = vmatpush1.bf16.msra.mxu0 %v2832
    %3042 = vmatprep.subr.bf16.mxu0 0
    %3043 = vmatpush2.bf16.msra.mxu0 %v2847
    %3044 = vmatprep.subr.bf16.mxu0 0
    %3045 = vmatpush2.bf16.msra.mxu0 %v2846
    %3046 = vmatprep.subr.bf16.mxu0 0
    %3047 = vmatpush2.bf16.msra.mxu0 %v2845
    %3048 = vmatprep.subr.bf16.mxu0 0
    %3049 = vmatpush2.bf16.msra.mxu0 %v2844
    %3050 = vmatprep.subr.bf16.mxu0 0
    %3051 = vmatpush2.bf16.msra.mxu0 %v2843
    %3052 = vmatprep.subr.bf16.mxu0 0
    %3053 = vmatpush2.bf16.msra.mxu0 %v2842
    %3054 = vmatprep.subr.bf16.mxu0 0
    %3055 = vmatpush2.bf16.msra.mxu0 %v2841
    %3056 = vmatprep.subr.bf16.mxu0 0
    %3057 = vmatpush2.bf16.msra.mxu0 %v2840
    %3058 = vmatprep.mubr.bf16.mxu0 %v2337
    %3059 = vmatmul.mubr.bf16.gmra.mxu0 %v2336
    %v3060 = vpop.f32.mrf.mxu0
    %v3061 = vadd.f32 %v3012, %v3060
    %v3062 = vpop.f32.mrf.mxu0
    %v3063 = vpop.f32.mrf.mxu0
    %v3064 = vadd.f32 %v3015, %v3063
    %v3065 = vpop.f32.mrf.mxu0
    %3066 = vmatprep.mubr.bf16.mxu0 %v2371
    %3067 = vmatmul.mubr.bf16.gmra.mxu0 %v2370
    %v3068 = vpop.f32.mrf.mxu0
    %v3069 = vadd.f32 %v3020, %v3068
    %v3070 = vpop.f32.mrf.mxu0
    %v3071 = vpop.f32.mrf.mxu0
    %v3072 = vadd.f32 %v3023, %v3071
    %v3073 = vpop.f32.mrf.mxu0
    %3074 = vdwg.mxu0
    %3075 = vmatprep.subr.bf16.mxu0 0
    %3076 = vmatpush1.bf16.msra.mxu0 %v2855
    %3077 = vmatprep.subr.bf16.mxu0 0
    %3078 = vmatpush1.bf16.msra.mxu0 %v2854
    %3079 = vmatprep.subr.bf16.mxu0 0
    %3080 = vmatpush1.bf16.msra.mxu0 %v2853
    %3081 = vmatprep.subr.bf16.mxu0 0
    %3082 = vmatpush1.bf16.msra.mxu0 %v2852
    %3083 = vmatprep.subr.bf16.mxu0 0
    %3084 = vmatpush1.bf16.msra.mxu0 %v2851
    %3085 = vmatprep.subr.bf16.mxu0 0
    %3086 = vmatpush1.bf16.msra.mxu0 %v2850
    %3087 = vmatprep.subr.bf16.mxu0 0
    %3088 = vmatpush1.bf16.msra.mxu0 %v2849
    %3089 = vmatprep.subr.bf16.mxu0 0
    %3090 = vmatpush1.bf16.msra.mxu0 %v2848
    %3091 = vmatprep.subr.bf16.mxu0 0
    %3092 = vmatpush2.bf16.msra.mxu0 %v2863
    %3093 = vmatprep.subr.bf16.mxu0 0
    %3094 = vmatpush2.bf16.msra.mxu0 %v2862
    %3095 = vmatprep.subr.bf16.mxu0 0
    %3096 = vmatpush2.bf16.msra.mxu0 %v2861
    %3097 = vmatprep.subr.bf16.mxu0 0
    %3098 = vmatpush2.bf16.msra.mxu0 %v2860
    %3099 = vmatprep.subr.bf16.mxu0 0
    %3100 = vmatpush2.bf16.msra.mxu0 %v2859
    %3101 = vmatprep.subr.bf16.mxu0 0
    %3102 = vmatpush2.bf16.msra.mxu0 %v2858
    %3103 = vmatprep.subr.bf16.mxu0 0
    %3104 = vmatpush2.bf16.msra.mxu0 %v2857
    %3105 = vmatprep.subr.bf16.mxu0 0
    %3106 = vmatpush2.bf16.msra.mxu0 %v2856
    %3107 = vmatprep.mubr.bf16.mxu0 %v2377
    %3108 = vmatmul.mubr.bf16.gmra.mxu0 %v2376
    %v3109 = vpop.f32.mrf.mxu0
    %v3110 = vadd.f32 %v3061, %v3109
    %v3111 = vpop.f32.mrf.mxu0
    %v3112 = vpop.f32.mrf.mxu0
    %v3113 = vadd.f32 %v3064, %v3112
    %v3114 = vpop.f32.mrf.mxu0
    %3115 = vmatprep.mubr.bf16.mxu0 %v2411
    %3116 = vmatmul.mubr.bf16.gmra.mxu0 %v2410
    %v3117 = vpop.f32.mrf.mxu0
    %v3118 = vadd.f32 %v3069, %v3117
    %v3119 = vpop.f32.mrf.mxu0
    %v3120 = vpop.f32.mrf.mxu0
    %v3121 = vadd.f32 %v3072, %v3120
    %v3122 = vpop.f32.mrf.mxu0
    %3123 = vdwg.mxu0
    %v3124 = vcombine.low %v2013, %v1863
    %v3126 = vunpack.c.l.s4 1966171168
    %v3127 = vunpack.c.0.s8 %v3126
    %v3128 = vlaneseq
    %v3129 = vshrl.u32 %v3128, 7
    %v3130 = vsub.s32 %v3127, %v3129
    %v3131 = vrot.slane %v3124, %v3130
    %v3132 = vcombine.low %v2127, %v3131
    %v3133 = vcombine.high %v2127, %v3131
    %v3135 = vunpack.c.l.s4 1966171168
    %v3136 = vunpack.c.0.s8 %v3135
    %v3137 = vlaneseq
    %v3138 = vshrl.u32 %v3137, 7
    %v3139 = vsub.s32 %v3136, %v3138
    %v3140 = vrot.slane %v3132, %v3139
    %v3142 = vunpack.c.l.s4 1966171168
    %v3143 = vunpack.c.0.s8 %v3142
    %v3144 = vlaneseq
    %v3145 = vshrl.u32 %v3144, 7
    %v3146 = vsub.s32 %v3143, %v3145
    %v3147 = vrot.slane %v3133, %v3146
    %v3148 = vcombine.low %v2138, %v3140
    %v3149 = vcombine.low %v2145, %v3147
    %v3150 = vcombine.low %v2028, %v1863
    %v3151 = vcombine.low %v2043, %v1863
    %v3153 = vunpack.c.l.s4 1966171168
    %v3154 = vunpack.c.0.s8 %v3153
    %v3155 = vlaneseq
    %v3156 = vshrl.u32 %v3155, 7
    %v3157 = vsub.s32 %v3154, %v3156
    %v3158 = vrot.slane %v3150, %v3157
    %v3160 = vunpack.c.l.s4 1966171168
    %v3161 = vunpack.c.0.s8 %v3160
    %v3162 = vlaneseq
    %v3163 = vshrl.u32 %v3162, 7
    %v3164 = vsub.s32 %v3161, %v3163
    %v3165 = vrot.slane %v3151, %v3164
    %v3166 = vcombine.low %v2179, %v3158
    %v3167 = vcombine.high %v2179, %v3158
    %v3168 = vcombine.low %v2193, %v3165
    %v3169 = vcombine.high %v2193, %v3165
    %v3171 = vunpack.c.l.s4 1966171168
    %v3172 = vunpack.c.0.s8 %v3171
    %v3173 = vlaneseq
    %v3174 = vshrl.u32 %v3173, 7
    %v3175 = vsub.s32 %v3172, %v3174
    %v3176 = vrot.slane %v3166, %v3175
    %v3178 = vunpack.c.l.s4 1966171168
    %v3179 = vunpack.c.0.s8 %v3178
    %v3180 = vlaneseq
    %v3181 = vshrl.u32 %v3180, 7
    %v3182 = vsub.s32 %v3179, %v3181
    %v3183 = vrot.slane %v3167, %v3182
    %v3185 = vunpack.c.l.s4 1966171168
    %v3186 = vunpack.c.0.s8 %v3185
    %v3187 = vlaneseq
    %v3188 = vshrl.u32 %v3187, 7
    %v3189 = vsub.s32 %v3186, %v3188
    %v3190 = vrot.slane %v3168, %v3189
    %v3192 = vunpack.c.l.s4 1966171168
    %v3193 = vunpack.c.0.s8 %v3192
    %v3194 = vlaneseq
    %v3195 = vshrl.u32 %v3194, 7
    %v3196 = vsub.s32 %v3193, %v3195
    %v3197 = vrot.slane %v3169, %v3196
    %v3198 = vcombine.low %v3176, %v3190
    %v3199 = vcombine.low %v3183, %v3197
    %v3204 = vcombine.low %v3140, %v3176
    %v3205 = vcombine.low %v3147, %v3183
    %v3206 = vcombine.low %v2103, %v1863
    %v3208 = vunpack.c.l.s4 1966171168
    %v3209 = vunpack.c.0.s8 %v3208
    %v3210 = vlaneseq
    %v3211 = vshrl.u32 %v3210, 7
    %v3212 = vsub.s32 %v3209, %v3211
    %v3213 = vrot.slane %v3206, %v3212
    %v3214 = vcombine.low %v2353, %v3213
    %v3215 = vcombine.high %v2353, %v3213
    %v3217 = vunpack.c.l.s4 1966171168
    %v3218 = vunpack.c.0.s8 %v3217
    %v3219 = vlaneseq
    %v3220 = vshrl.u32 %v3219, 7
    %v3221 = vsub.s32 %v3218, %v3220
    %v3222 = vrot.slane %v3214, %v3221
    %v3224 = vunpack.c.l.s4 1966171168
    %v3225 = vunpack.c.0.s8 %v3224
    %v3226 = vlaneseq
    %v3227 = vshrl.u32 %v3226, 7
    %v3228 = vsub.s32 %v3225, %v3227
    %v3229 = vrot.slane %v3215, %v3228
    %v3230 = vcombine.low %v3190, %v3222
    %v3231 = vcombine.low %v3197, %v3229
    %s3236 = scalar_lea.vmem [#allocation7], 512
    %v3237 = vld [vmem:[%s3236] sm:$0xf]
    %v3238 = vld [vmem:[%s3236 + $0x4] sm:$0xf]
    %v3239 = vld [vmem:[%s3236 + $0x8] sm:$0xf]
    %v3240 = vld [vmem:[%s3236 + $0xc] sm:$0xf]
    %v3241 = vld [vmem:[%s3236 + $0x10] sm:$0xf]
    %v3242 = vld [vmem:[%s3236 + $0x14] sm:$0xf]
    %v3243 = vld [vmem:[%s3236 + $0x18] sm:$0xf]
    %v3244 = vld [vmem:[%s3236 + $0x1c] sm:$0xf]
    %v3245 = vld [vmem:[%s3236 + $0x20] sm:$0xf]
    %v3246 = vld [vmem:[%s3236 + $0x24] sm:$0xf]
    %v3247 = vld [vmem:[%s3236 + $0x28] sm:$0xf]
    %v3248 = vld [vmem:[%s3236 + $0x2c] sm:$0xf]
    %v3249 = vld [vmem:[%s3236 + $0x30] sm:$0xf]
    %v3250 = vld [vmem:[%s3236 + $0x34] sm:$0xf]
    %v3251 = vld [vmem:[%s3236 + $0x38] sm:$0xf]
    %v3252 = vld [vmem:[%s3236 + $0x3c] sm:$0xf]
    %v3253 = vld [vmem:[%s3236 + $0x40] sm:$0xf]
    %v3254 = vld [vmem:[%s3236 + $0x44] sm:$0xf]
    %v3255 = vld [vmem:[%s3236 + $0x48] sm:$0xf]
    %v3256 = vld [vmem:[%s3236 + $0x4c] sm:$0xf]
    %v3257 = vld [vmem:[%s3236 + $0x50] sm:$0xf]
    %v3258 = vld [vmem:[%s3236 + $0x54] sm:$0xf]
    %v3259 = vld [vmem:[%s3236 + $0x58] sm:$0xf]
    %v3260 = vld [vmem:[%s3236 + $0x5c] sm:$0xf]
    %v3261 = vld [vmem:[%s3236 + $0x60] sm:$0xf]
    %v3262 = vld [vmem:[%s3236 + $0x64] sm:$0xf]
    %v3263 = vld [vmem:[%s3236 + $0x68] sm:$0xf]
    %v3264 = vld [vmem:[%s3236 + $0x6c] sm:$0xf]
    %v3265 = vld [vmem:[%s3236 + $0x70] sm:$0xf]
    %v3266 = vld [vmem:[%s3236 + $0x74] sm:$0xf]
    %v3267 = vld [vmem:[%s3236 + $0x78] sm:$0xf]
    %v3268 = vld [vmem:[%s3236 + $0x7c] sm:$0xf]
    %v3269 = vld [vmem:[%s3236 + $0x80] sm:$0xf]
    %v3270 = vld [vmem:[%s3236 + $0x84] sm:$0xf]
    %v3271 = vld [vmem:[%s3236 + $0x88] sm:$0xf]
    %v3272 = vld [vmem:[%s3236 + $0x8c] sm:$0xf]
    %v3273 = vld [vmem:[%s3236 + $0x90] sm:$0xf]
    %v3274 = vld [vmem:[%s3236 + $0x94] sm:$0xf]
    %v3275 = vld [vmem:[%s3236 + $0x98] sm:$0xf]
    %v3276 = vld [vmem:[%s3236 + $0x9c] sm:$0xf]
    %v3277 = vld [vmem:[%s3236 + $0xa0] sm:$0xf]
    %v3278 = vld [vmem:[%s3236 + $0xa4] sm:$0xf]
    %v3279 = vld [vmem:[%s3236 + $0xa8] sm:$0xf]
    %v3280 = vld [vmem:[%s3236 + $0xac] sm:$0xf]
    %v3281 = vld [vmem:[%s3236 + $0xb0] sm:$0xf]
    %v3282 = vld [vmem:[%s3236 + $0xb4] sm:$0xf]
    %v3283 = vld [vmem:[%s3236 + $0xb8] sm:$0xf]
    %v3284 = vld [vmem:[%s3236 + $0xbc] sm:$0xf]
    %v3285 = vld [vmem:[%s3236 + $0xc0] sm:$0xf]
    %v3286 = vld [vmem:[%s3236 + $0xc4] sm:$0xf]
    %v3287 = vld [vmem:[%s3236 + $0xc8] sm:$0xf]
    %v3288 = vld [vmem:[%s3236 + $0xcc] sm:$0xf]
    %v3289 = vld [vmem:[%s3236 + $0xd0] sm:$0xf]
    %v3290 = vld [vmem:[%s3236 + $0xd4] sm:$0xf]
    %v3291 = vld [vmem:[%s3236 + $0xd8] sm:$0xf]
    %v3292 = vld [vmem:[%s3236 + $0xdc] sm:$0xf]
    %v3293 = vld [vmem:[%s3236 + $0xe0] sm:$0xf]
    %v3294 = vld [vmem:[%s3236 + $0xe4] sm:$0xf]
    %v3295 = vld [vmem:[%s3236 + $0xe8] sm:$0xf]
    %v3296 = vld [vmem:[%s3236 + $0xec] sm:$0xf]
    %v3297 = vld [vmem:[%s3236 + $0xf0] sm:$0xf]
    %v3298 = vld [vmem:[%s3236 + $0xf4] sm:$0xf]
    %v3299 = vld [vmem:[%s3236 + $0xf8] sm:$0xf]
    %v3300 = vld [vmem:[%s3236 + $0xfc] sm:$0xf]
    %v3301 = vld [vmem:[%s3236 + $0x100] sm:$0xf]
    %v3302 = vld [vmem:[%s3236 + $0x104] sm:$0xf]
    %v3303 = vld [vmem:[%s3236 + $0x108] sm:$0xf]
    %v3304 = vld [vmem:[%s3236 + $0x10c] sm:$0xf]
    %v3305 = vld [vmem:[%s3236 + $0x110] sm:$0xf]
    %v3306 = vld [vmem:[%s3236 + $0x114] sm:$0xf]
    %v3307 = vld [vmem:[%s3236 + $0x118] sm:$0xf]
    %v3308 = vld [vmem:[%s3236 + $0x11c] sm:$0xf]
    %v3309 = vld [vmem:[%s3236 + $0x120] sm:$0xf]
    %v3310 = vld [vmem:[%s3236 + $0x124] sm:$0xf]
    %v3311 = vld [vmem:[%s3236 + $0x128] sm:$0xf]
    %v3312 = vld [vmem:[%s3236 + $0x12c] sm:$0xf]
    %v3313 = vld [vmem:[%s3236 + $0x130] sm:$0xf]
    %v3314 = vld [vmem:[%s3236 + $0x134] sm:$0xf]
    %v3315 = vld [vmem:[%s3236 + $0x138] sm:$0xf]
    %v3316 = vld [vmem:[%s3236 + $0x13c] sm:$0xf]
    %v3317 = vld [vmem:[%s3236 + $0x140] sm:$0xf]
    %v3318 = vld [vmem:[%s3236 + $0x144] sm:$0xf]
    %v3319 = vld [vmem:[%s3236 + $0x148] sm:$0xf]
    %v3320 = vld [vmem:[%s3236 + $0x14c] sm:$0xf]
    %v3321 = vld [vmem:[%s3236 + $0x150] sm:$0xf]
    %v3322 = vld [vmem:[%s3236 + $0x154] sm:$0xf]
    %v3323 = vld [vmem:[%s3236 + $0x158] sm:$0xf]
    %v3324 = vld [vmem:[%s3236 + $0x15c] sm:$0xf]
    %v3325 = vld [vmem:[%s3236 + $0x160] sm:$0xf]
    %v3326 = vld [vmem:[%s3236 + $0x164] sm:$0xf]
    %v3327 = vld [vmem:[%s3236 + $0x168] sm:$0xf]
    %v3328 = vld [vmem:[%s3236 + $0x16c] sm:$0xf]
    %v3329 = vld [vmem:[%s3236 + $0x170] sm:$0xf]
    %v3330 = vld [vmem:[%s3236 + $0x174] sm:$0xf]
    %v3331 = vld [vmem:[%s3236 + $0x178] sm:$0xf]
    %v3332 = vld [vmem:[%s3236 + $0x17c] sm:$0xf]
    %v3333 = vld [vmem:[%s3236 + $0x180] sm:$0xf]
    %v3334 = vld [vmem:[%s3236 + $0x184] sm:$0xf]
    %v3335 = vld [vmem:[%s3236 + $0x188] sm:$0xf]
    %v3336 = vld [vmem:[%s3236 + $0x18c] sm:$0xf]
    %v3337 = vld [vmem:[%s3236 + $0x190] sm:$0xf]
    %v3338 = vld [vmem:[%s3236 + $0x194] sm:$0xf]
    %v3339 = vld [vmem:[%s3236 + $0x198] sm:$0xf]
    %v3340 = vld [vmem:[%s3236 + $0x19c] sm:$0xf]
    %v3341 = vld [vmem:[%s3236 + $0x1a0] sm:$0xf]
    %v3342 = vld [vmem:[%s3236 + $0x1a4] sm:$0xf]
    %v3343 = vld [vmem:[%s3236 + $0x1a8] sm:$0xf]
    %v3344 = vld [vmem:[%s3236 + $0x1ac] sm:$0xf]
    %v3345 = vld [vmem:[%s3236 + $0x1b0] sm:$0xf]
    %v3346 = vld [vmem:[%s3236 + $0x1b4] sm:$0xf]
    %v3347 = vld [vmem:[%s3236 + $0x1b8] sm:$0xf]
    %v3348 = vld [vmem:[%s3236 + $0x1bc] sm:$0xf]
    %v3349 = vld [vmem:[%s3236 + $0x1c0] sm:$0xf]
    %v3350 = vld [vmem:[%s3236 + $0x1c4] sm:$0xf]
    %v3351 = vld [vmem:[%s3236 + $0x1c8] sm:$0xf]
    %v3352 = vld [vmem:[%s3236 + $0x1cc] sm:$0xf]
    %v3353 = vld [vmem:[%s3236 + $0x1d0] sm:$0xf]
    %v3354 = vld [vmem:[%s3236 + $0x1d4] sm:$0xf]
    %v3355 = vld [vmem:[%s3236 + $0x1d8] sm:$0xf]
    %v3356 = vld [vmem:[%s3236 + $0x1dc] sm:$0xf]
    %v3357 = vld [vmem:[%s3236 + $0x1e0] sm:$0xf]
    %v3358 = vld [vmem:[%s3236 + $0x1e4] sm:$0xf]
    %v3359 = vld [vmem:[%s3236 + $0x1e8] sm:$0xf]
    %v3360 = vld [vmem:[%s3236 + $0x1ec] sm:$0xf]
    %v3361 = vld [vmem:[%s3236 + $0x1f0] sm:$0xf]
    %v3362 = vld [vmem:[%s3236 + $0x1f4] sm:$0xf]
    %v3363 = vld [vmem:[%s3236 + $0x1f8] sm:$0xf]
    %v3364 = vld [vmem:[%s3236 + $0x1fc] sm:$0xf]
    %v3493 = vunpack.c.l.b16 %v3237
    %v3494 = vunpack.c.l.b16 %v3238
    %v3495 = vunpack.c.l.b16 %v3239
    %v3496 = vunpack.c.l.b16 %v3240
    %v3497 = vunpack.c.l.b16 %v3241
    %v3498 = vunpack.c.l.b16 %v3242
    %v3499 = vunpack.c.l.b16 %v3243
    %v3500 = vunpack.c.l.b16 %v3244
    %v3501 = vunpack.c.l.b16 %v3245
    %v3502 = vunpack.c.l.b16 %v3246
    %v3503 = vunpack.c.l.b16 %v3247
    %v3504 = vunpack.c.l.b16 %v3248
    %v3505 = vunpack.c.l.b16 %v3249
    %v3506 = vunpack.c.l.b16 %v3250
    %v3507 = vunpack.c.l.b16 %v3251
    %v3508 = vunpack.c.l.b16 %v3252
    %v3509 = vunpack.c.l.b16 %v3253
    %v3510 = vunpack.c.l.b16 %v3254
    %v3511 = vunpack.c.l.b16 %v3255
    %v3512 = vunpack.c.l.b16 %v3256
    %v3513 = vunpack.c.l.b16 %v3257
    %v3514 = vunpack.c.l.b16 %v3258
    %v3515 = vunpack.c.l.b16 %v3259
    %v3516 = vunpack.c.l.b16 %v3260
    %v3517 = vunpack.c.l.b16 %v3261
    %v3518 = vunpack.c.l.b16 %v3262
    %v3519 = vunpack.c.l.b16 %v3263
    %v3520 = vunpack.c.l.b16 %v3264
    %v3521 = vunpack.c.l.b16 %v3265
    %v3522 = vunpack.c.l.b16 %v3266
    %v3523 = vunpack.c.l.b16 %v3267
    %v3524 = vunpack.c.l.b16 %v3268
    %v3525 = vunpack.c.l.b16 %v3269
    %v3526 = vunpack.c.l.b16 %v3270
    %v3527 = vunpack.c.l.b16 %v3271
    %v3528 = vunpack.c.l.b16 %v3272
    %v3529 = vunpack.c.l.b16 %v3273
    %v3530 = vunpack.c.l.b16 %v3274
    %v3531 = vunpack.c.l.b16 %v3275
    %v3532 = vunpack.c.l.b16 %v3276
    %v3533 = vunpack.c.l.b16 %v3277
    %v3534 = vunpack.c.l.b16 %v3278
    %v3535 = vunpack.c.l.b16 %v3279
    %v3536 = vunpack.c.l.b16 %v3280
    %v3537 = vunpack.c.l.b16 %v3281
    %v3538 = vunpack.c.l.b16 %v3282
    %v3539 = vunpack.c.l.b16 %v3283
    %v3540 = vunpack.c.l.b16 %v3284
    %v3541 = vunpack.c.l.b16 %v3285
    %v3542 = vunpack.c.l.b16 %v3286
    %v3543 = vunpack.c.l.b16 %v3287
    %v3544 = vunpack.c.l.b16 %v3288
    %v3545 = vunpack.c.l.b16 %v3289
    %v3546 = vunpack.c.l.b16 %v3290
    %v3547 = vunpack.c.l.b16 %v3291
    %v3548 = vunpack.c.l.b16 %v3292
    %v3549 = vunpack.c.l.b16 %v3293
    %v3550 = vunpack.c.l.b16 %v3294
    %v3551 = vunpack.c.l.b16 %v3295
    %v3552 = vunpack.c.l.b16 %v3296
    %v3553 = vunpack.c.l.b16 %v3297
    %v3554 = vunpack.c.l.b16 %v3298
    %v3555 = vunpack.c.l.b16 %v3299
    %v3556 = vunpack.c.l.b16 %v3300
    %v3557 = vunpack.c.l.b16 %v3301
    %v3558 = vunpack.c.l.b16 %v3302
    %v3559 = vunpack.c.l.b16 %v3303
    %v3560 = vunpack.c.l.b16 %v3304
    %v3561 = vunpack.c.l.b16 %v3305
    %v3562 = vunpack.c.l.b16 %v3306
    %v3563 = vunpack.c.l.b16 %v3307
    %v3564 = vunpack.c.l.b16 %v3308
    %v3565 = vunpack.c.l.b16 %v3309
    %v3566 = vunpack.c.l.b16 %v3310
    %v3567 = vunpack.c.l.b16 %v3311
    %v3568 = vunpack.c.l.b16 %v3312
    %v3569 = vunpack.c.l.b16 %v3313
    %v3570 = vunpack.c.l.b16 %v3314
    %v3571 = vunpack.c.l.b16 %v3315
    %v3572 = vunpack.c.l.b16 %v3316
    %v3573 = vunpack.c.l.b16 %v3317
    %v3574 = vunpack.c.l.b16 %v3318
    %v3575 = vunpack.c.l.b16 %v3319
    %v3576 = vunpack.c.l.b16 %v3320
    %v3577 = vunpack.c.l.b16 %v3321
    %v3578 = vunpack.c.l.b16 %v3322
    %v3579 = vunpack.c.l.b16 %v3323
    %v3580 = vunpack.c.l.b16 %v3324
    %v3581 = vunpack.c.l.b16 %v3325
    %v3582 = vunpack.c.l.b16 %v3326
    %v3583 = vunpack.c.l.b16 %v3327
    %v3584 = vunpack.c.l.b16 %v3328
    %v3585 = vunpack.c.l.b16 %v3329
    %v3586 = vunpack.c.l.b16 %v3330
    %v3587 = vunpack.c.l.b16 %v3331
    %v3588 = vunpack.c.l.b16 %v3332
    %v3589 = vunpack.c.l.b16 %v3333
    %v3590 = vunpack.c.l.b16 %v3334
    %v3591 = vunpack.c.l.b16 %v3335
    %v3592 = vunpack.c.l.b16 %v3336
    %v3593 = vunpack.c.l.b16 %v3337
    %v3594 = vunpack.c.l.b16 %v3338
    %v3595 = vunpack.c.l.b16 %v3339
    %v3596 = vunpack.c.l.b16 %v3340
    %v3597 = vunpack.c.l.b16 %v3341
    %v3598 = vunpack.c.l.b16 %v3342
    %v3599 = vunpack.c.l.b16 %v3343
    %v3600 = vunpack.c.l.b16 %v3344
    %v3601 = vunpack.c.l.b16 %v3345
    %v3602 = vunpack.c.l.b16 %v3346
    %v3603 = vunpack.c.l.b16 %v3347
    %v3604 = vunpack.c.l.b16 %v3348
    %v3605 = vunpack.c.l.b16 %v3349
    %v3606 = vunpack.c.l.b16 %v3350
    %v3607 = vunpack.c.l.b16 %v3351
    %v3608 = vunpack.c.l.b16 %v3352
    %v3609 = vunpack.c.l.b16 %v3353
    %v3610 = vunpack.c.l.b16 %v3354
    %v3611 = vunpack.c.l.b16 %v3355
    %v3612 = vunpack.c.l.b16 %v3356
    %v3613 = vunpack.c.l.b16 %v3357
    %v3614 = vunpack.c.l.b16 %v3358
    %v3615 = vunpack.c.l.b16 %v3359
    %v3616 = vunpack.c.l.b16 %v3360
    %v3617 = vunpack.c.l.b16 %v3361
    %v3618 = vunpack.c.l.b16 %v3362
    %v3619 = vunpack.c.l.b16 %v3363
    %v3620 = vunpack.c.l.b16 %v3364
    %v3621 = vpack.c.b16 %v3494, %v3493
    %v3622 = vpack.c.b16 %v3496, %v3495
    %v3623 = vpack.c.b16 %v3498, %v3497
    %v3624 = vpack.c.b16 %v3500, %v3499
    %v3625 = vpack.c.b16 %v3502, %v3501
    %v3626 = vpack.c.b16 %v3504, %v3503
    %v3627 = vpack.c.b16 %v3506, %v3505
    %v3628 = vpack.c.b16 %v3508, %v3507
    %v3629 = vpack.c.b16 %v3510, %v3509
    %v3630 = vpack.c.b16 %v3512, %v3511
    %v3631 = vpack.c.b16 %v3514, %v3513
    %v3632 = vpack.c.b16 %v3516, %v3515
    %v3633 = vpack.c.b16 %v3518, %v3517
    %v3634 = vpack.c.b16 %v3520, %v3519
    %v3635 = vpack.c.b16 %v3522, %v3521
    %v3636 = vpack.c.b16 %v3524, %v3523
    %v3637 = vpack.c.b16 %v3526, %v3525
    %v3638 = vpack.c.b16 %v3528, %v3527
    %v3639 = vpack.c.b16 %v3530, %v3529
    %v3640 = vpack.c.b16 %v3532, %v3531
    %v3641 = vpack.c.b16 %v3534, %v3533
    %v3642 = vpack.c.b16 %v3536, %v3535
    %v3643 = vpack.c.b16 %v3538, %v3537
    %v3644 = vpack.c.b16 %v3540, %v3539
    %v3645 = vpack.c.b16 %v3542, %v3541
    %v3646 = vpack.c.b16 %v3544, %v3543
    %v3647 = vpack.c.b16 %v3546, %v3545
    %v3648 = vpack.c.b16 %v3548, %v3547
    %v3649 = vpack.c.b16 %v3550, %v3549
    %v3650 = vpack.c.b16 %v3552, %v3551
    %v3651 = vpack.c.b16 %v3554, %v3553
    %v3652 = vpack.c.b16 %v3556, %v3555
    %v3653 = vpack.c.b16 %v3558, %v3557
    %v3654 = vpack.c.b16 %v3560, %v3559
    %v3655 = vpack.c.b16 %v3562, %v3561
    %v3656 = vpack.c.b16 %v3564, %v3563
    %v3657 = vpack.c.b16 %v3566, %v3565
    %v3658 = vpack.c.b16 %v3568, %v3567
    %v3659 = vpack.c.b16 %v3570, %v3569
    %v3660 = vpack.c.b16 %v3572, %v3571
    %v3661 = vpack.c.b16 %v3574, %v3573
    %v3662 = vpack.c.b16 %v3576, %v3575
    %v3663 = vpack.c.b16 %v3578, %v3577
    %v3664 = vpack.c.b16 %v3580, %v3579
    %v3665 = vpack.c.b16 %v3582, %v3581
    %v3666 = vpack.c.b16 %v3584, %v3583
    %v3667 = vpack.c.b16 %v3586, %v3585
    %v3668 = vpack.c.b16 %v3588, %v3587
    %v3669 = vpack.c.b16 %v3590, %v3589
    %v3670 = vpack.c.b16 %v3592, %v3591
    %v3671 = vpack.c.b16 %v3594, %v3593
    %v3672 = vpack.c.b16 %v3596, %v3595
    %v3673 = vpack.c.b16 %v3598, %v3597
    %v3674 = vpack.c.b16 %v3600, %v3599
    %v3675 = vpack.c.b16 %v3602, %v3601
    %v3676 = vpack.c.b16 %v3604, %v3603
    %v3677 = vpack.c.b16 %v3606, %v3605
    %v3678 = vpack.c.b16 %v3608, %v3607
    %v3679 = vpack.c.b16 %v3610, %v3609
    %v3680 = vpack.c.b16 %v3612, %v3611
    %v3681 = vpack.c.b16 %v3614, %v3613
    %v3682 = vpack.c.b16 %v3616, %v3615
    %v3683 = vpack.c.b16 %v3618, %v3617
    %v3684 = vpack.c.b16 %v3620, %v3619
    %3749 = vmatprep.subr.bf16.mxu0 0
    %3750 = vmatpush1.bf16.msra.mxu0 %v3628
    %3751 = vmatprep.subr.bf16.mxu0 0
    %3752 = vmatpush1.bf16.msra.mxu0 %v3627
    %3753 = vmatprep.subr.bf16.mxu0 0
    %3754 = vmatpush1.bf16.msra.mxu0 %v3626
    %3755 = vmatprep.subr.bf16.mxu0 0
    %3756 = vmatpush1.bf16.msra.mxu0 %v3625
    %3757 = vmatprep.subr.bf16.mxu0 0
    %3758 = vmatpush1.bf16.msra.mxu0 %v3624
    %3759 = vmatprep.subr.bf16.mxu0 0
    %3760 = vmatpush1.bf16.msra.mxu0 %v3623
    %3761 = vmatprep.subr.bf16.mxu0 0
    %3762 = vmatpush1.bf16.msra.mxu0 %v3622
    %3763 = vmatprep.subr.bf16.mxu0 0
    %3764 = vmatpush1.bf16.msra.mxu0 %v3621
    %3765 = vmatprep.subr.bf16.mxu0 0
    %3766 = vmatpush2.bf16.msra.mxu0 %v3636
    %3767 = vmatprep.subr.bf16.mxu0 0
    %3768 = vmatpush2.bf16.msra.mxu0 %v3635
    %3769 = vmatprep.subr.bf16.mxu0 0
    %3770 = vmatpush2.bf16.msra.mxu0 %v3634
    %3771 = vmatprep.subr.bf16.mxu0 0
    %3772 = vmatpush2.bf16.msra.mxu0 %v3633
    %3773 = vmatprep.subr.bf16.mxu0 0
    %3774 = vmatpush2.bf16.msra.mxu0 %v3632
    %3775 = vmatprep.subr.bf16.mxu0 0
    %3776 = vmatpush2.bf16.msra.mxu0 %v3631
    %3777 = vmatprep.subr.bf16.mxu0 0
    %3778 = vmatpush2.bf16.msra.mxu0 %v3630
    %3779 = vmatprep.subr.bf16.mxu0 0
    %3780 = vmatpush2.bf16.msra.mxu0 %v3629
    %3781 = vmatprep.mubr.bf16.mxu0 %v2265
    %3782 = vmatmul.mubr.bf16.gmra.mxu0 %v2264
    %v3783 = vpop.f32.mrf.mxu0
    %v3784 = vadd.f32 0.0, %v3783
    %v3785 = vpop.f32.mrf.mxu0
    %v3786 = vpop.f32.mrf.mxu0
    %v3787 = vadd.f32 0.0, %v3786
    %v3788 = vpop.f32.mrf.mxu0
    %3789 = vmatprep.mubr.bf16.mxu0 %v2331
    %3790 = vmatmul.mubr.bf16.gmra.mxu0 %v2330
    %v3791 = vpop.f32.mrf.mxu0
    %v3792 = vadd.f32 0.0, %v3791
    %v3793 = vpop.f32.mrf.mxu0
    %v3794 = vpop.f32.mrf.mxu0
    %v3795 = vadd.f32 0.0, %v3794
    %v3796 = vpop.f32.mrf.mxu0
    %3797 = vdwg.mxu0
    %3798 = vmatprep.subr.bf16.mxu0 0
    %3799 = vmatpush1.bf16.msra.mxu0 %v3644
    %3800 = vmatprep.subr.bf16.mxu0 0
    %3801 = vmatpush1.bf16.msra.mxu0 %v3643
    %3802 = vmatprep.subr.bf16.mxu0 0
    %3803 = vmatpush1.bf16.msra.mxu0 %v3642
    %3804 = vmatprep.subr.bf16.mxu0 0
    %3805 = vmatpush1.bf16.msra.mxu0 %v3641
    %3806 = vmatprep.subr.bf16.mxu0 0
    %3807 = vmatpush1.bf16.msra.mxu0 %v3640
    %3808 = vmatprep.subr.bf16.mxu0 0
    %3809 = vmatpush1.bf16.msra.mxu0 %v3639
    %3810 = vmatprep.subr.bf16.mxu0 0
    %3811 = vmatpush1.bf16.msra.mxu0 %v3638
    %3812 = vmatprep.subr.bf16.mxu0 0
    %3813 = vmatpush1.bf16.msra.mxu0 %v3637
    %3814 = vmatprep.subr.bf16.mxu0 0
    %3815 = vmatpush2.bf16.msra.mxu0 %v3652
    %3816 = vmatprep.subr.bf16.mxu0 0
    %3817 = vmatpush2.bf16.msra.mxu0 %v3651
    %3818 = vmatprep.subr.bf16.mxu0 0
    %3819 = vmatpush2.bf16.msra.mxu0 %v3650
    %3820 = vmatprep.subr.bf16.mxu0 0
    %3821 = vmatpush2.bf16.msra.mxu0 %v3649
    %3822 = vmatprep.subr.bf16.mxu0 0
    %3823 = vmatpush2.bf16.msra.mxu0 %v3648
    %3824 = vmatprep.subr.bf16.mxu0 0
    %3825 = vmatpush2.bf16.msra.mxu0 %v3647
    %3826 = vmatprep.subr.bf16.mxu0 0
    %3827 = vmatpush2.bf16.msra.mxu0 %v3646
    %3828 = vmatprep.subr.bf16.mxu0 0
    %3829 = vmatpush2.bf16.msra.mxu0 %v3645
    %3830 = vmatprep.mubr.bf16.mxu0 %v3149
    %3831 = vmatmul.mubr.bf16.gmra.mxu0 %v3148
    %v3832 = vpop.f32.mrf.mxu0
    %v3833 = vadd.f32 %v3784, %v3832
    %v3834 = vpop.f32.mrf.mxu0
    %v3835 = vpop.f32.mrf.mxu0
    %v3836 = vadd.f32 %v3787, %v3835
    %v3837 = vpop.f32.mrf.mxu0
    %3838 = vmatprep.mubr.bf16.mxu0 %v3199
    %3839 = vmatmul.mubr.bf16.gmra.mxu0 %v3198
    %v3840 = vpop.f32.mrf.mxu0
    %v3841 = vadd.f32 %v3792, %v3840
    %v3842 = vpop.f32.mrf.mxu0
    %v3843 = vpop.f32.mrf.mxu0
    %v3844 = vadd.f32 %v3795, %v3843
    %v3845 = vpop.f32.mrf.mxu0
    %3846 = vdwg.mxu0
    %3847 = vmatprep.subr.bf16.mxu0 0
    %3848 = vmatpush1.bf16.msra.mxu0 %v3660
    %3849 = vmatprep.subr.bf16.mxu0 0
    %3850 = vmatpush1.bf16.msra.mxu0 %v3659
    %3851 = vmatprep.subr.bf16.mxu0 0
    %3852 = vmatpush1.bf16.msra.mxu0 %v3658
    %3853 = vmatprep.subr.bf16.mxu0 0
    %3854 = vmatpush1.bf16.msra.mxu0 %v3657
    %3855 = vmatprep.subr.bf16.mxu0 0
    %3856 = vmatpush1.bf16.msra.mxu0 %v3656
    %3857 = vmatprep.subr.bf16.mxu0 0
    %3858 = vmatpush1.bf16.msra.mxu0 %v3655
    %3859 = vmatprep.subr.bf16.mxu0 0
    %3860 = vmatpush1.bf16.msra.mxu0 %v3654
    %3861 = vmatprep.subr.bf16.mxu0 0
    %3862 = vmatpush1.bf16.msra.mxu0 %v3653
    %3863 = vmatprep.subr.bf16.mxu0 0
    %3864 = vmatpush2.bf16.msra.mxu0 %v3668
    %3865 = vmatprep.subr.bf16.mxu0 0
    %3866 = vmatpush2.bf16.msra.mxu0 %v3667
    %3867 = vmatprep.subr.bf16.mxu0 0
    %3868 = vmatpush2.bf16.msra.mxu0 %v3666
    %3869 = vmatprep.subr.bf16.mxu0 0
    %3870 = vmatpush2.bf16.msra.mxu0 %v3665
    %3871 = vmatprep.subr.bf16.mxu0 0
    %3872 = vmatpush2.bf16.msra.mxu0 %v3664
    %3873 = vmatprep.subr.bf16.mxu0 0
    %3874 = vmatpush2.bf16.msra.mxu0 %v3663
    %3875 = vmatprep.subr.bf16.mxu0 0
    %3876 = vmatpush2.bf16.msra.mxu0 %v3662
    %3877 = vmatprep.subr.bf16.mxu0 0
    %3878 = vmatpush2.bf16.msra.mxu0 %v3661
    %3879 = vmatprep.mubr.bf16.mxu0 %v2377
    %3880 = vmatmul.mubr.bf16.gmra.mxu0 %v2376
    %v3881 = vpop.f32.mrf.mxu0
    %v3882 = vadd.f32 %v3833, %v3881
    %v3883 = vpop.f32.mrf.mxu0
    %v3884 = vpop.f32.mrf.mxu0
    %v3885 = vadd.f32 %v3836, %v3884
    %v3886 = vpop.f32.mrf.mxu0
    %3887 = vmatprep.mubr.bf16.mxu0 %v2411
    %3888 = vmatmul.mubr.bf16.gmra.mxu0 %v2410
    %v3889 = vpop.f32.mrf.mxu0
    %v3890 = vadd.f32 %v3841, %v3889
    %v3891 = vpop.f32.mrf.mxu0
    %v3892 = vpop.f32.mrf.mxu0
    %v3893 = vadd.f32 %v3844, %v3892
    %v3894 = vpop.f32.mrf.mxu0
    %3895 = vdwg.mxu0
    %3896 = vmatprep.subr.bf16.mxu0 0
    %3897 = vmatpush1.bf16.msra.mxu0 %v3676
    %3898 = vmatprep.subr.bf16.mxu0 0
    %3899 = vmatpush1.bf16.msra.mxu0 %v3675
    %3900 = vmatprep.subr.bf16.mxu0 0
    %3901 = vmatpush1.bf16.msra.mxu0 %v3674
    %3902 = vmatprep.subr.bf16.mxu0 0
    %3903 = vmatpush1.bf16.msra.mxu0 %v3673
    %3904 = vmatprep.subr.bf16.mxu0 0
    %3905 = vmatpush1.bf16.msra.mxu0 %v3672
    %3906 = vmatprep.subr.bf16.mxu0 0
    %3907 = vmatpush1.bf16.msra.mxu0 %v3671
    %3908 = vmatprep.subr.bf16.mxu0 0
    %3909 = vmatpush1.bf16.msra.mxu0 %v3670
    %3910 = vmatprep.subr.bf16.mxu0 0
    %3911 = vmatpush1.bf16.msra.mxu0 %v3669
    %3912 = vmatprep.subr.bf16.mxu0 0
    %3913 = vmatpush2.bf16.msra.mxu0 %v3684
    %3914 = vmatprep.subr.bf16.mxu0 0
    %3915 = vmatpush2.bf16.msra.mxu0 %v3683
    %3916 = vmatprep.subr.bf16.mxu0 0
    %3917 = vmatpush2.bf16.msra.mxu0 %v3682
    %3918 = vmatprep.subr.bf16.mxu0 0
    %3919 = vmatpush2.bf16.msra.mxu0 %v3681
    %3920 = vmatprep.subr.bf16.mxu0 0
    %3921 = vmatpush2.bf16.msra.mxu0 %v3680
    %3922 = vmatprep.subr.bf16.mxu0 0
    %3923 = vmatpush2.bf16.msra.mxu0 %v3679
    %3924 = vmatprep.subr.bf16.mxu0 0
    %3925 = vmatpush2.bf16.msra.mxu0 %v3678
    %3926 = vmatprep.subr.bf16.mxu0 0
    %3927 = vmatpush2.bf16.msra.mxu0 %v3677
    %3928 = vmatprep.mubr.bf16.mxu0 %v3205
    %3929 = vmatmul.mubr.bf16.gmra.mxu0 %v3204
    %v3930 = vpop.f32.mrf.mxu0
    %v3931 = vadd.f32 %v3882, %v3930
    %v3932 = vpop.f32.mrf.mxu0
    %v3933 = vpop.f32.mrf.mxu0
    %v3934 = vadd.f32 %v3885, %v3933
    %v3935 = vpop.f32.mrf.mxu0
    %3936 = vmatprep.mubr.bf16.mxu0 %v3231
    %3937 = vmatmul.mubr.bf16.gmra.mxu0 %v3230
    %v3938 = vpop.f32.mrf.mxu0
    %v3939 = vadd.f32 %v3890, %v3938
    %v3940 = vpop.f32.mrf.mxu0
    %v3941 = vpop.f32.mrf.mxu0
    %v3942 = vadd.f32 %v3893, %v3941
    %v3943 = vpop.f32.mrf.mxu0
    %3944 = vdwg.mxu0
    %v3945 = vcombine.low %v2362, %v2138
    %v3946 = vcombine.low %v2369, %v2145
    %v3949 = vcombine.low %v2402, %v2138
    %v3950 = vcombine.low %v2409, %v2145
    %s3953 = scalar_lea.vmem [#allocation7], 1024
    %v3954 = vld [vmem:[%s3953] sm:$0xf]
    %v3955 = vld [vmem:[%s3953 + $0x4] sm:$0xf]
    %v3956 = vld [vmem:[%s3953 + $0x8] sm:$0xf]
    %v3957 = vld [vmem:[%s3953 + $0xc] sm:$0xf]
    %v3958 = vld [vmem:[%s3953 + $0x10] sm:$0xf]
    %v3959 = vld [vmem:[%s3953 + $0x14] sm:$0xf]
    %v3960 = vld [vmem:[%s3953 + $0x18] sm:$0xf]
    %v3961 = vld [vmem:[%s3953 + $0x1c] sm:$0xf]
    %v3962 = vld [vmem:[%s3953 + $0x20] sm:$0xf]
    %v3963 = vld [vmem:[%s3953 + $0x24] sm:$0xf]
    %v3964 = vld [vmem:[%s3953 + $0x28] sm:$0xf]
    %v3965 = vld [vmem:[%s3953 + $0x2c] sm:$0xf]
    %v3966 = vld [vmem:[%s3953 + $0x30] sm:$0xf]
    %v3967 = vld [vmem:[%s3953 + $0x34] sm:$0xf]
    %v3968 = vld [vmem:[%s3953 + $0x38] sm:$0xf]
    %v3969 = vld [vmem:[%s3953 + $0x3c] sm:$0xf]
    %v3970 = vld [vmem:[%s3953 + $0x40] sm:$0xf]
    %v3971 = vld [vmem:[%s3953 + $0x44] sm:$0xf]
    %v3972 = vld [vmem:[%s3953 + $0x48] sm:$0xf]
    %v3973 = vld [vmem:[%s3953 + $0x4c] sm:$0xf]
    %v3974 = vld [vmem:[%s3953 + $0x50] sm:$0xf]
    %v3975 = vld [vmem:[%s3953 + $0x54] sm:$0xf]
    %v3976 = vld [vmem:[%s3953 + $0x58] sm:$0xf]
    %v3977 = vld [vmem:[%s3953 + $0x5c] sm:$0xf]
    %v3978 = vld [vmem:[%s3953 + $0x60] sm:$0xf]
    %v3979 = vld [vmem:[%s3953 + $0x64] sm:$0xf]
    %v3980 = vld [vmem:[%s3953 + $0x68] sm:$0xf]
    %v3981 = vld [vmem:[%s3953 + $0x6c] sm:$0xf]
    %v3982 = vld [vmem:[%s3953 + $0x70] sm:$0xf]
    %v3983 = vld [vmem:[%s3953 + $0x74] sm:$0xf]
    %v3984 = vld [vmem:[%s3953 + $0x78] sm:$0xf]
    %v3985 = vld [vmem:[%s3953 + $0x7c] sm:$0xf]
    %v3986 = vld [vmem:[%s3953 + $0x80] sm:$0xf]
    %v3987 = vld [vmem:[%s3953 + $0x84] sm:$0xf]
    %v3988 = vld [vmem:[%s3953 + $0x88] sm:$0xf]
    %v3989 = vld [vmem:[%s3953 + $0x8c] sm:$0xf]
    %v3990 = vld [vmem:[%s3953 + $0x90] sm:$0xf]
    %v3991 = vld [vmem:[%s3953 + $0x94] sm:$0xf]
    %v3992 = vld [vmem:[%s3953 + $0x98] sm:$0xf]
    %v3993 = vld [vmem:[%s3953 + $0x9c] sm:$0xf]
    %v3994 = vld [vmem:[%s3953 + $0xa0] sm:$0xf]
    %v3995 = vld [vmem:[%s3953 + $0xa4] sm:$0xf]
    %v3996 = vld [vmem:[%s3953 + $0xa8] sm:$0xf]
    %v3997 = vld [vmem:[%s3953 + $0xac] sm:$0xf]
    %v3998 = vld [vmem:[%s3953 + $0xb0] sm:$0xf]
    %v3999 = vld [vmem:[%s3953 + $0xb4] sm:$0xf]
    %v4000 = vld [vmem:[%s3953 + $0xb8] sm:$0xf]
    %v4001 = vld [vmem:[%s3953 + $0xbc] sm:$0xf]
    %v4002 = vld [vmem:[%s3953 + $0xc0] sm:$0xf]
    %v4003 = vld [vmem:[%s3953 + $0xc4] sm:$0xf]
    %v4004 = vld [vmem:[%s3953 + $0xc8] sm:$0xf]
    %v4005 = vld [vmem:[%s3953 + $0xcc] sm:$0xf]
    %v4006 = vld [vmem:[%s3953 + $0xd0] sm:$0xf]
    %v4007 = vld [vmem:[%s3953 + $0xd4] sm:$0xf]
    %v4008 = vld [vmem:[%s3953 + $0xd8] sm:$0xf]
    %v4009 = vld [vmem:[%s3953 + $0xdc] sm:$0xf]
    %v4010 = vld [vmem:[%s3953 + $0xe0] sm:$0xf]
    %v4011 = vld [vmem:[%s3953 + $0xe4] sm:$0xf]
    %v4012 = vld [vmem:[%s3953 + $0xe8] sm:$0xf]
    %v4013 = vld [vmem:[%s3953 + $0xec] sm:$0xf]
    %v4014 = vld [vmem:[%s3953 + $0xf0] sm:$0xf]
    %v4015 = vld [vmem:[%s3953 + $0xf4] sm:$0xf]
    %v4016 = vld [vmem:[%s3953 + $0xf8] sm:$0xf]
    %v4017 = vld [vmem:[%s3953 + $0xfc] sm:$0xf]
    %v4018 = vld [vmem:[%s3953 + $0x100] sm:$0xf]
    %v4019 = vld [vmem:[%s3953 + $0x104] sm:$0xf]
    %v4020 = vld [vmem:[%s3953 + $0x108] sm:$0xf]
    %v4021 = vld [vmem:[%s3953 + $0x10c] sm:$0xf]
    %v4022 = vld [vmem:[%s3953 + $0x110] sm:$0xf]
    %v4023 = vld [vmem:[%s3953 + $0x114] sm:$0xf]
    %v4024 = vld [vmem:[%s3953 + $0x118] sm:$0xf]
    %v4025 = vld [vmem:[%s3953 + $0x11c] sm:$0xf]
    %v4026 = vld [vmem:[%s3953 + $0x120] sm:$0xf]
    %v4027 = vld [vmem:[%s3953 + $0x124] sm:$0xf]
    %v4028 = vld [vmem:[%s3953 + $0x128] sm:$0xf]
    %v4029 = vld [vmem:[%s3953 + $0x12c] sm:$0xf]
    %v4030 = vld [vmem:[%s3953 + $0x130] sm:$0xf]
    %v4031 = vld [vmem:[%s3953 + $0x134] sm:$0xf]
    %v4032 = vld [vmem:[%s3953 + $0x138] sm:$0xf]
    %v4033 = vld [vmem:[%s3953 + $0x13c] sm:$0xf]
    %v4034 = vld [vmem:[%s3953 + $0x140] sm:$0xf]
    %v4035 = vld [vmem:[%s3953 + $0x144] sm:$0xf]
    %v4036 = vld [vmem:[%s3953 + $0x148] sm:$0xf]
    %v4037 = vld [vmem:[%s3953 + $0x14c] sm:$0xf]
    %v4038 = vld [vmem:[%s3953 + $0x150] sm:$0xf]
    %v4039 = vld [vmem:[%s3953 + $0x154] sm:$0xf]
    %v4040 = vld [vmem:[%s3953 + $0x158] sm:$0xf]
    %v4041 = vld [vmem:[%s3953 + $0x15c] sm:$0xf]
    %v4042 = vld [vmem:[%s3953 + $0x160] sm:$0xf]
    %v4043 = vld [vmem:[%s3953 + $0x164] sm:$0xf]
    %v4044 = vld [vmem:[%s3953 + $0x168] sm:$0xf]
    %v4045 = vld [vmem:[%s3953 + $0x16c] sm:$0xf]
    %v4046 = vld [vmem:[%s3953 + $0x170] sm:$0xf]
    %v4047 = vld [vmem:[%s3953 + $0x174] sm:$0xf]
    %v4048 = vld [vmem:[%s3953 + $0x178] sm:$0xf]
    %v4049 = vld [vmem:[%s3953 + $0x17c] sm:$0xf]
    %v4050 = vld [vmem:[%s3953 + $0x180] sm:$0xf]
    %v4051 = vld [vmem:[%s3953 + $0x184] sm:$0xf]
    %v4052 = vld [vmem:[%s3953 + $0x188] sm:$0xf]
    %v4053 = vld [vmem:[%s3953 + $0x18c] sm:$0xf]
    %v4054 = vld [vmem:[%s3953 + $0x190] sm:$0xf]
    %v4055 = vld [vmem:[%s3953 + $0x194] sm:$0xf]
    %v4056 = vld [vmem:[%s3953 + $0x198] sm:$0xf]
    %v4057 = vld [vmem:[%s3953 + $0x19c] sm:$0xf]
    %v4058 = vld [vmem:[%s3953 + $0x1a0] sm:$0xf]
    %v4059 = vld [vmem:[%s3953 + $0x1a4] sm:$0xf]
    %v4060 = vld [vmem:[%s3953 + $0x1a8] sm:$0xf]
    %v4061 = vld [vmem:[%s3953 + $0x1ac] sm:$0xf]
    %v4062 = vld [vmem:[%s3953 + $0x1b0] sm:$0xf]
    %v4063 = vld [vmem:[%s3953 + $0x1b4] sm:$0xf]
    %v4064 = vld [vmem:[%s3953 + $0x1b8] sm:$0xf]
    %v4065 = vld [vmem:[%s3953 + $0x1bc] sm:$0xf]
    %v4066 = vld [vmem:[%s3953 + $0x1c0] sm:$0xf]
    %v4067 = vld [vmem:[%s3953 + $0x1c4] sm:$0xf]
    %v4068 = vld [vmem:[%s3953 + $0x1c8] sm:$0xf]
    %v4069 = vld [vmem:[%s3953 + $0x1cc] sm:$0xf]
    %v4070 = vld [vmem:[%s3953 + $0x1d0] sm:$0xf]
    %v4071 = vld [vmem:[%s3953 + $0x1d4] sm:$0xf]
    %v4072 = vld [vmem:[%s3953 + $0x1d8] sm:$0xf]
    %v4073 = vld [vmem:[%s3953 + $0x1dc] sm:$0xf]
    %v4074 = vld [vmem:[%s3953 + $0x1e0] sm:$0xf]
    %v4075 = vld [vmem:[%s3953 + $0x1e4] sm:$0xf]
    %v4076 = vld [vmem:[%s3953 + $0x1e8] sm:$0xf]
    %v4077 = vld [vmem:[%s3953 + $0x1ec] sm:$0xf]
    %v4078 = vld [vmem:[%s3953 + $0x1f0] sm:$0xf]
    %v4079 = vld [vmem:[%s3953 + $0x1f4] sm:$0xf]
    %v4080 = vld [vmem:[%s3953 + $0x1f8] sm:$0xf]
    %v4081 = vld [vmem:[%s3953 + $0x1fc] sm:$0xf]
    %v4210 = vunpack.c.l.b16 %v3954
    %v4211 = vunpack.c.l.b16 %v3955
    %v4212 = vunpack.c.l.b16 %v3956
    %v4213 = vunpack.c.l.b16 %v3957
    %v4214 = vunpack.c.l.b16 %v3958
    %v4215 = vunpack.c.l.b16 %v3959
    %v4216 = vunpack.c.l.b16 %v3960
    %v4217 = vunpack.c.l.b16 %v3961
    %v4218 = vunpack.c.l.b16 %v3962
    %v4219 = vunpack.c.l.b16 %v3963
    %v4220 = vunpack.c.l.b16 %v3964
    %v4221 = vunpack.c.l.b16 %v3965
    %v4222 = vunpack.c.l.b16 %v3966
    %v4223 = vunpack.c.l.b16 %v3967
    %v4224 = vunpack.c.l.b16 %v3968
    %v4225 = vunpack.c.l.b16 %v3969
    %v4226 = vunpack.c.l.b16 %v3970
    %v4227 = vunpack.c.l.b16 %v3971
    %v4228 = vunpack.c.l.b16 %v3972
    %v4229 = vunpack.c.l.b16 %v3973
    %v4230 = vunpack.c.l.b16 %v3974
    %v4231 = vunpack.c.l.b16 %v3975
    %v4232 = vunpack.c.l.b16 %v3976
    %v4233 = vunpack.c.l.b16 %v3977
    %v4234 = vunpack.c.l.b16 %v3978
    %v4235 = vunpack.c.l.b16 %v3979
    %v4236 = vunpack.c.l.b16 %v3980
    %v4237 = vunpack.c.l.b16 %v3981
    %v4238 = vunpack.c.l.b16 %v3982
    %v4239 = vunpack.c.l.b16 %v3983
    %v4240 = vunpack.c.l.b16 %v3984
    %v4241 = vunpack.c.l.b16 %v3985
    %v4242 = vunpack.c.l.b16 %v3986
    %v4243 = vunpack.c.l.b16 %v3987
    %v4244 = vunpack.c.l.b16 %v3988
    %v4245 = vunpack.c.l.b16 %v3989
    %v4246 = vunpack.c.l.b16 %v3990
    %v4247 = vunpack.c.l.b16 %v3991
    %v4248 = vunpack.c.l.b16 %v3992
    %v4249 = vunpack.c.l.b16 %v3993
    %v4250 = vunpack.c.l.b16 %v3994
    %v4251 = vunpack.c.l.b16 %v3995
    %v4252 = vunpack.c.l.b16 %v3996
    %v4253 = vunpack.c.l.b16 %v3997
    %v4254 = vunpack.c.l.b16 %v3998
    %v4255 = vunpack.c.l.b16 %v3999
    %v4256 = vunpack.c.l.b16 %v4000
    %v4257 = vunpack.c.l.b16 %v4001
    %v4258 = vunpack.c.l.b16 %v4002
    %v4259 = vunpack.c.l.b16 %v4003
    %v4260 = vunpack.c.l.b16 %v4004
    %v4261 = vunpack.c.l.b16 %v4005
    %v4262 = vunpack.c.l.b16 %v4006
    %v4263 = vunpack.c.l.b16 %v4007
    %v4264 = vunpack.c.l.b16 %v4008
    %v4265 = vunpack.c.l.b16 %v4009
    %v4266 = vunpack.c.l.b16 %v4010
    %v4267 = vunpack.c.l.b16 %v4011
    %v4268 = vunpack.c.l.b16 %v4012
    %v4269 = vunpack.c.l.b16 %v4013
    %v4270 = vunpack.c.l.b16 %v4014
    %v4271 = vunpack.c.l.b16 %v4015
    %v4272 = vunpack.c.l.b16 %v4016
    %v4273 = vunpack.c.l.b16 %v4017
    %v4274 = vunpack.c.l.b16 %v4018
    %v4275 = vunpack.c.l.b16 %v4019
    %v4276 = vunpack.c.l.b16 %v4020
    %v4277 = vunpack.c.l.b16 %v4021
    %v4278 = vunpack.c.l.b16 %v4022
    %v4279 = vunpack.c.l.b16 %v4023
    %v4280 = vunpack.c.l.b16 %v4024
    %v4281 = vunpack.c.l.b16 %v4025
    %v4282 = vunpack.c.l.b16 %v4026
    %v4283 = vunpack.c.l.b16 %v4027
    %v4284 = vunpack.c.l.b16 %v4028
    %v4285 = vunpack.c.l.b16 %v4029
    %v4286 = vunpack.c.l.b16 %v4030
    %v4287 = vunpack.c.l.b16 %v4031
    %v4288 = vunpack.c.l.b16 %v4032
    %v4289 = vunpack.c.l.b16 %v4033
    %v4290 = vunpack.c.l.b16 %v4034
    %v4291 = vunpack.c.l.b16 %v4035
    %v4292 = vunpack.c.l.b16 %v4036
    %v4293 = vunpack.c.l.b16 %v4037
    %v4294 = vunpack.c.l.b16 %v4038
    %v4295 = vunpack.c.l.b16 %v4039
    %v4296 = vunpack.c.l.b16 %v4040
    %v4297 = vunpack.c.l.b16 %v4041
    %v4298 = vunpack.c.l.b16 %v4042
    %v4299 = vunpack.c.l.b16 %v4043
    %v4300 = vunpack.c.l.b16 %v4044
    %v4301 = vunpack.c.l.b16 %v4045
    %v4302 = vunpack.c.l.b16 %v4046
    %v4303 = vunpack.c.l.b16 %v4047
    %v4304 = vunpack.c.l.b16 %v4048
    %v4305 = vunpack.c.l.b16 %v4049
    %v4306 = vunpack.c.l.b16 %v4050
    %v4307 = vunpack.c.l.b16 %v4051
    %v4308 = vunpack.c.l.b16 %v4052
    %v4309 = vunpack.c.l.b16 %v4053
    %v4310 = vunpack.c.l.b16 %v4054
    %v4311 = vunpack.c.l.b16 %v4055
    %v4312 = vunpack.c.l.b16 %v4056
    %v4313 = vunpack.c.l.b16 %v4057
    %v4314 = vunpack.c.l.b16 %v4058
    %v4315 = vunpack.c.l.b16 %v4059
    %v4316 = vunpack.c.l.b16 %v4060
    %v4317 = vunpack.c.l.b16 %v4061
    %v4318 = vunpack.c.l.b16 %v4062
    %v4319 = vunpack.c.l.b16 %v4063
    %v4320 = vunpack.c.l.b16 %v4064
    %v4321 = vunpack.c.l.b16 %v4065
    %v4322 = vunpack.c.l.b16 %v4066
    %v4323 = vunpack.c.l.b16 %v4067
    %v4324 = vunpack.c.l.b16 %v4068
    %v4325 = vunpack.c.l.b16 %v4069
    %v4326 = vunpack.c.l.b16 %v4070
    %v4327 = vunpack.c.l.b16 %v4071
    %v4328 = vunpack.c.l.b16 %v4072
    %v4329 = vunpack.c.l.b16 %v4073
    %v4330 = vunpack.c.l.b16 %v4074
    %v4331 = vunpack.c.l.b16 %v4075
    %v4332 = vunpack.c.l.b16 %v4076
    %v4333 = vunpack.c.l.b16 %v4077
    %v4334 = vunpack.c.l.b16 %v4078
    %v4335 = vunpack.c.l.b16 %v4079
    %v4336 = vunpack.c.l.b16 %v4080
    %v4337 = vunpack.c.l.b16 %v4081
    %v4338 = vpack.c.b16 %v4211, %v4210
    %v4339 = vpack.c.b16 %v4213, %v4212
    %v4340 = vpack.c.b16 %v4215, %v4214
    %v4341 = vpack.c.b16 %v4217, %v4216
    %v4342 = vpack.c.b16 %v4219, %v4218
    %v4343 = vpack.c.b16 %v4221, %v4220
    %v4344 = vpack.c.b16 %v4223, %v4222
    %v4345 = vpack.c.b16 %v4225, %v4224
    %v4346 = vpack.c.b16 %v4227, %v4226
    %v4347 = vpack.c.b16 %v4229, %v4228
    %v4348 = vpack.c.b16 %v4231, %v4230
    %v4349 = vpack.c.b16 %v4233, %v4232
    %v4350 = vpack.c.b16 %v4235, %v4234
    %v4351 = vpack.c.b16 %v4237, %v4236
    %v4352 = vpack.c.b16 %v4239, %v4238
    %v4353 = vpack.c.b16 %v4241, %v4240
    %v4354 = vpack.c.b16 %v4243, %v4242
    %v4355 = vpack.c.b16 %v4245, %v4244
    %v4356 = vpack.c.b16 %v4247, %v4246
    %v4357 = vpack.c.b16 %v4249, %v4248
    %v4358 = vpack.c.b16 %v4251, %v4250
    %v4359 = vpack.c.b16 %v4253, %v4252
    %v4360 = vpack.c.b16 %v4255, %v4254
    %v4361 = vpack.c.b16 %v4257, %v4256
    %v4362 = vpack.c.b16 %v4259, %v4258
    %v4363 = vpack.c.b16 %v4261, %v4260
    %v4364 = vpack.c.b16 %v4263, %v4262
    %v4365 = vpack.c.b16 %v4265, %v4264
    %v4366 = vpack.c.b16 %v4267, %v4266
    %v4367 = vpack.c.b16 %v4269, %v4268
    %v4368 = vpack.c.b16 %v4271, %v4270
    %v4369 = vpack.c.b16 %v4273, %v4272
    %v4370 = vpack.c.b16 %v4275, %v4274
    %v4371 = vpack.c.b16 %v4277, %v4276
    %v4372 = vpack.c.b16 %v4279, %v4278
    %v4373 = vpack.c.b16 %v4281, %v4280
    %v4374 = vpack.c.b16 %v4283, %v4282
    %v4375 = vpack.c.b16 %v4285, %v4284
    %v4376 = vpack.c.b16 %v4287, %v4286
    %v4377 = vpack.c.b16 %v4289, %v4288
    %v4378 = vpack.c.b16 %v4291, %v4290
    %v4379 = vpack.c.b16 %v4293, %v4292
    %v4380 = vpack.c.b16 %v4295, %v4294
    %v4381 = vpack.c.b16 %v4297, %v4296
    %v4382 = vpack.c.b16 %v4299, %v4298
    %v4383 = vpack.c.b16 %v4301, %v4300
    %v4384 = vpack.c.b16 %v4303, %v4302
    %v4385 = vpack.c.b16 %v4305, %v4304
    %v4386 = vpack.c.b16 %v4307, %v4306
    %v4387 = vpack.c.b16 %v4309, %v4308
    %v4388 = vpack.c.b16 %v4311, %v4310
    %v4389 = vpack.c.b16 %v4313, %v4312
    %v4390 = vpack.c.b16 %v4315, %v4314
    %v4391 = vpack.c.b16 %v4317, %v4316
    %v4392 = vpack.c.b16 %v4319, %v4318
    %v4393 = vpack.c.b16 %v4321, %v4320
    %v4394 = vpack.c.b16 %v4323, %v4322
    %v4395 = vpack.c.b16 %v4325, %v4324
    %v4396 = vpack.c.b16 %v4327, %v4326
    %v4397 = vpack.c.b16 %v4329, %v4328
    %v4398 = vpack.c.b16 %v4331, %v4330
    %v4399 = vpack.c.b16 %v4333, %v4332
    %v4400 = vpack.c.b16 %v4335, %v4334
    %v4401 = vpack.c.b16 %v4337, %v4336
    %4466 = vmatprep.subr.bf16.mxu0 0
    %4467 = vmatpush1.bf16.msra.mxu0 %v4345
    %4468 = vmatprep.subr.bf16.mxu0 0
    %4469 = vmatpush1.bf16.msra.mxu0 %v4344
    %4470 = vmatprep.subr.bf16.mxu0 0
    %4471 = vmatpush1.bf16.msra.mxu0 %v4343
    %4472 = vmatprep.subr.bf16.mxu0 0
    %4473 = vmatpush1.bf16.msra.mxu0 %v4342
    %4474 = vmatprep.subr.bf16.mxu0 0
    %4475 = vmatpush1.bf16.msra.mxu0 %v4341
    %4476 = vmatprep.subr.bf16.mxu0 0
    %4477 = vmatpush1.bf16.msra.mxu0 %v4340
    %4478 = vmatprep.subr.bf16.mxu0 0
    %4479 = vmatpush1.bf16.msra.mxu0 %v4339
    %4480 = vmatprep.subr.bf16.mxu0 0
    %4481 = vmatpush1.bf16.msra.mxu0 %v4338
    %4482 = vmatprep.subr.bf16.mxu0 0
    %4483 = vmatpush2.bf16.msra.mxu0 %v4353
    %4484 = vmatprep.subr.bf16.mxu0 0
    %4485 = vmatpush2.bf16.msra.mxu0 %v4352
    %4486 = vmatprep.subr.bf16.mxu0 0
    %4487 = vmatpush2.bf16.msra.mxu0 %v4351
    %4488 = vmatprep.subr.bf16.mxu0 0
    %4489 = vmatpush2.bf16.msra.mxu0 %v4350
    %4490 = vmatprep.subr.bf16.mxu0 0
    %4491 = vmatpush2.bf16.msra.mxu0 %v4349
    %4492 = vmatprep.subr.bf16.mxu0 0
    %4493 = vmatpush2.bf16.msra.mxu0 %v4348
    %4494 = vmatprep.subr.bf16.mxu0 0
    %4495 = vmatpush2.bf16.msra.mxu0 %v4347
    %4496 = vmatprep.subr.bf16.mxu0 0
    %4497 = vmatpush2.bf16.msra.mxu0 %v4346
    %4498 = vmatprep.mubr.bf16.mxu0 %v2337
    %4499 = vmatmul.mubr.bf16.gmra.mxu0 %v2336
    %v4500 = vpop.f32.mrf.mxu0
    %v4501 = vadd.f32 0.0, %v4500
    %v4502 = vpop.f32.mrf.mxu0
    %v4503 = vpop.f32.mrf.mxu0
    %v4504 = vadd.f32 0.0, %v4503
    %v4505 = vpop.f32.mrf.mxu0
    %4506 = vmatprep.mubr.bf16.mxu0 %v2371
    %4507 = vmatmul.mubr.bf16.gmra.mxu0 %v2370
    %v4508 = vpop.f32.mrf.mxu0
    %v4509 = vadd.f32 0.0, %v4508
    %v4510 = vpop.f32.mrf.mxu0
    %v4511 = vpop.f32.mrf.mxu0
    %v4512 = vadd.f32 0.0, %v4511
    %v4513 = vpop.f32.mrf.mxu0
    %4514 = vdwg.mxu0
    %4515 = vmatprep.subr.bf16.mxu0 0
    %4516 = vmatpush1.bf16.msra.mxu0 %v4361
    %4517 = vmatprep.subr.bf16.mxu0 0
    %4518 = vmatpush1.bf16.msra.mxu0 %v4360
    %4519 = vmatprep.subr.bf16.mxu0 0
    %4520 = vmatpush1.bf16.msra.mxu0 %v4359
    %4521 = vmatprep.subr.bf16.mxu0 0
    %4522 = vmatpush1.bf16.msra.mxu0 %v4358
    %4523 = vmatprep.subr.bf16.mxu0 0
    %4524 = vmatpush1.bf16.msra.mxu0 %v4357
    %4525 = vmatprep.subr.bf16.mxu0 0
    %4526 = vmatpush1.bf16.msra.mxu0 %v4356
    %4527 = vmatprep.subr.bf16.mxu0 0
    %4528 = vmatpush1.bf16.msra.mxu0 %v4355
    %4529 = vmatprep.subr.bf16.mxu0 0
    %4530 = vmatpush1.bf16.msra.mxu0 %v4354
    %4531 = vmatprep.subr.bf16.mxu0 0
    %4532 = vmatpush2.bf16.msra.mxu0 %v4369
    %4533 = vmatprep.subr.bf16.mxu0 0
    %4534 = vmatpush2.bf16.msra.mxu0 %v4368
    %4535 = vmatprep.subr.bf16.mxu0 0
    %4536 = vmatpush2.bf16.msra.mxu0 %v4367
    %4537 = vmatprep.subr.bf16.mxu0 0
    %4538 = vmatpush2.bf16.msra.mxu0 %v4366
    %4539 = vmatprep.subr.bf16.mxu0 0
    %4540 = vmatpush2.bf16.msra.mxu0 %v4365
    %4541 = vmatprep.subr.bf16.mxu0 0
    %4542 = vmatpush2.bf16.msra.mxu0 %v4364
    %4543 = vmatprep.subr.bf16.mxu0 0
    %4544 = vmatpush2.bf16.msra.mxu0 %v4363
    %4545 = vmatprep.subr.bf16.mxu0 0
    %4546 = vmatpush2.bf16.msra.mxu0 %v4362
    %4547 = vmatprep.mubr.bf16.mxu0 %v2377
    %4548 = vmatmul.mubr.bf16.gmra.mxu0 %v2376
    %v4549 = vpop.f32.mrf.mxu0
    %v4550 = vadd.f32 %v4501, %v4549
    %v4551 = vpop.f32.mrf.mxu0
    %v4552 = vpop.f32.mrf.mxu0
    %v4553 = vadd.f32 %v4504, %v4552
    %v4554 = vpop.f32.mrf.mxu0
    %4555 = vmatprep.mubr.bf16.mxu0 %v2411
    %4556 = vmatmul.mubr.bf16.gmra.mxu0 %v2410
    %v4557 = vpop.f32.mrf.mxu0
    %v4558 = vadd.f32 %v4509, %v4557
    %v4559 = vpop.f32.mrf.mxu0
    %v4560 = vpop.f32.mrf.mxu0
    %v4561 = vadd.f32 %v4512, %v4560
    %v4562 = vpop.f32.mrf.mxu0
    %4563 = vdwg.mxu0
    %4564 = vmatprep.subr.bf16.mxu0 0
    %4565 = vmatpush1.bf16.msra.mxu0 %v4377
    %4566 = vmatprep.subr.bf16.mxu0 0
    %4567 = vmatpush1.bf16.msra.mxu0 %v4376
    %4568 = vmatprep.subr.bf16.mxu0 0
    %4569 = vmatpush1.bf16.msra.mxu0 %v4375
    %4570 = vmatprep.subr.bf16.mxu0 0
    %4571 = vmatpush1.bf16.msra.mxu0 %v4374
    %4572 = vmatprep.subr.bf16.mxu0 0
    %4573 = vmatpush1.bf16.msra.mxu0 %v4373
    %4574 = vmatprep.subr.bf16.mxu0 0
    %4575 = vmatpush1.bf16.msra.mxu0 %v4372
    %4576 = vmatprep.subr.bf16.mxu0 0
    %4577 = vmatpush1.bf16.msra.mxu0 %v4371
    %4578 = vmatprep.subr.bf16.mxu0 0
    %4579 = vmatpush1.bf16.msra.mxu0 %v4370
    %4580 = vmatprep.subr.bf16.mxu0 0
    %4581 = vmatpush2.bf16.msra.mxu0 %v4385
    %4582 = vmatprep.subr.bf16.mxu0 0
    %4583 = vmatpush2.bf16.msra.mxu0 %v4384
    %4584 = vmatprep.subr.bf16.mxu0 0
    %4585 = vmatpush2.bf16.msra.mxu0 %v4383
    %4586 = vmatprep.subr.bf16.mxu0 0
    %4587 = vmatpush2.bf16.msra.mxu0 %v4382
    %4588 = vmatprep.subr.bf16.mxu0 0
    %4589 = vmatpush2.bf16.msra.mxu0 %v4381
    %4590 = vmatprep.subr.bf16.mxu0 0
    %4591 = vmatpush2.bf16.msra.mxu0 %v4380
    %4592 = vmatprep.subr.bf16.mxu0 0
    %4593 = vmatpush2.bf16.msra.mxu0 %v4379
    %4594 = vmatprep.subr.bf16.mxu0 0
    %4595 = vmatpush2.bf16.msra.mxu0 %v4378
    %4596 = vmatprep.mubr.bf16.mxu0 %v2227
    %4597 = vmatmul.mubr.bf16.gmra.mxu0 %v2226
    %v4598 = vpop.f32.mrf.mxu0
    %v4599 = vadd.f32 %v4550, %v4598
    %v4600 = vpop.f32.mrf.mxu0
    %v4601 = vpop.f32.mrf.mxu0
    %v4602 = vadd.f32 %v4553, %v4601
    %v4603 = vpop.f32.mrf.mxu0
    %4604 = vmatprep.mubr.bf16.mxu0 %v3946
    %4605 = vmatmul.mubr.bf16.gmra.mxu0 %v3945
    %v4606 = vpop.f32.mrf.mxu0
    %v4607 = vadd.f32 %v4558, %v4606
    %v4608 = vpop.f32.mrf.mxu0
    %v4609 = vpop.f32.mrf.mxu0
    %v4610 = vadd.f32 %v4561, %v4609
    %v4611 = vpop.f32.mrf.mxu0
    %4612 = vdwg.mxu0
    %4613 = vmatprep.subr.bf16.mxu0 0
    %4614 = vmatpush1.bf16.msra.mxu0 %v4393
    %4615 = vmatprep.subr.bf16.mxu0 0
    %4616 = vmatpush1.bf16.msra.mxu0 %v4392
    %4617 = vmatprep.subr.bf16.mxu0 0
    %4618 = vmatpush1.bf16.msra.mxu0 %v4391
    %4619 = vmatprep.subr.bf16.mxu0 0
    %4620 = vmatpush1.bf16.msra.mxu0 %v4390
    %4621 = vmatprep.subr.bf16.mxu0 0
    %4622 = vmatpush1.bf16.msra.mxu0 %v4389
    %4623 = vmatprep.subr.bf16.mxu0 0
    %4624 = vmatpush1.bf16.msra.mxu0 %v4388
    %4625 = vmatprep.subr.bf16.mxu0 0
    %4626 = vmatpush1.bf16.msra.mxu0 %v4387
    %4627 = vmatprep.subr.bf16.mxu0 0
    %4628 = vmatpush1.bf16.msra.mxu0 %v4386
    %4629 = vmatprep.subr.bf16.mxu0 0
    %4630 = vmatpush2.bf16.msra.mxu0 %v4401
    %4631 = vmatprep.subr.bf16.mxu0 0
    %4632 = vmatpush2.bf16.msra.mxu0 %v4400
    %4633 = vmatprep.subr.bf16.mxu0 0
    %4634 = vmatpush2.bf16.msra.mxu0 %v4399
    %4635 = vmatprep.subr.bf16.mxu0 0
    %4636 = vmatpush2.bf16.msra.mxu0 %v4398
    %4637 = vmatprep.subr.bf16.mxu0 0
    %4638 = vmatpush2.bf16.msra.mxu0 %v4397
    %4639 = vmatprep.subr.bf16.mxu0 0
    %4640 = vmatpush2.bf16.msra.mxu0 %v4396
    %4641 = vmatprep.subr.bf16.mxu0 0
    %4642 = vmatpush2.bf16.msra.mxu0 %v4395
    %4643 = vmatprep.subr.bf16.mxu0 0
    %4644 = vmatpush2.bf16.msra.mxu0 %v4394
    %4645 = vmatprep.mubr.bf16.mxu0 %v2331
    %4646 = vmatmul.mubr.bf16.gmra.mxu0 %v2330
    %v4647 = vpop.f32.mrf.mxu0
    %v4648 = vadd.f32 %v4599, %v4647
    %v4649 = vpop.f32.mrf.mxu0
    %v4650 = vpop.f32.mrf.mxu0
    %v4651 = vadd.f32 %v4602, %v4650
    %v4652 = vpop.f32.mrf.mxu0
    %4653 = vmatprep.mubr.bf16.mxu0 %v3950
    %4654 = vmatmul.mubr.bf16.gmra.mxu0 %v3949
    %v4655 = vpop.f32.mrf.mxu0
    %v4656 = vadd.f32 %v4607, %v4655
    %v4657 = vpop.f32.mrf.mxu0
    %v4658 = vpop.f32.mrf.mxu0
    %v4659 = vadd.f32 %v4610, %v4658
    %v4660 = vpop.f32.mrf.mxu0
    %4661 = vdwg.mxu0
    %v4662 = vcombine.low %v3222, %v2138
    %v4663 = vcombine.low %v3229, %v2145
    %s4666 = scalar_lea.vmem [#allocation7], 1536
    %v4667 = vld [vmem:[%s4666] sm:$0xf]
    %v4668 = vld [vmem:[%s4666 + $0x4] sm:$0xf]
    %v4669 = vld [vmem:[%s4666 + $0x8] sm:$0xf]
    %v4670 = vld [vmem:[%s4666 + $0xc] sm:$0xf]
    %v4671 = vld [vmem:[%s4666 + $0x10] sm:$0xf]
    %v4672 = vld [vmem:[%s4666 + $0x14] sm:$0xf]
    %v4673 = vld [vmem:[%s4666 + $0x18] sm:$0xf]
    %v4674 = vld [vmem:[%s4666 + $0x1c] sm:$0xf]
    %v4675 = vld [vmem:[%s4666 + $0x20] sm:$0xf]
    %v4676 = vld [vmem:[%s4666 + $0x24] sm:$0xf]
    %v4677 = vld [vmem:[%s4666 + $0x28] sm:$0xf]
    %v4678 = vld [vmem:[%s4666 + $0x2c] sm:$0xf]
    %v4679 = vld [vmem:[%s4666 + $0x30] sm:$0xf]
    %v4680 = vld [vmem:[%s4666 + $0x34] sm:$0xf]
    %v4681 = vld [vmem:[%s4666 + $0x38] sm:$0xf]
    %v4682 = vld [vmem:[%s4666 + $0x3c] sm:$0xf]
    %v4683 = vld [vmem:[%s4666 + $0x40] sm:$0xf]
    %v4684 = vld [vmem:[%s4666 + $0x44] sm:$0xf]
    %v4685 = vld [vmem:[%s4666 + $0x48] sm:$0xf]
    %v4686 = vld [vmem:[%s4666 + $0x4c] sm:$0xf]
    %v4687 = vld [vmem:[%s4666 + $0x50] sm:$0xf]
    %v4688 = vld [vmem:[%s4666 + $0x54] sm:$0xf]
    %v4689 = vld [vmem:[%s4666 + $0x58] sm:$0xf]
    %v4690 = vld [vmem:[%s4666 + $0x5c] sm:$0xf]
    %v4691 = vld [vmem:[%s4666 + $0x60] sm:$0xf]
    %v4692 = vld [vmem:[%s4666 + $0x64] sm:$0xf]
    %v4693 = vld [vmem:[%s4666 + $0x68] sm:$0xf]
    %v4694 = vld [vmem:[%s4666 + $0x6c] sm:$0xf]
    %v4695 = vld [vmem:[%s4666 + $0x70] sm:$0xf]
    %v4696 = vld [vmem:[%s4666 + $0x74] sm:$0xf]
    %v4697 = vld [vmem:[%s4666 + $0x78] sm:$0xf]
    %v4698 = vld [vmem:[%s4666 + $0x7c] sm:$0xf]
    %v4699 = vld [vmem:[%s4666 + $0x80] sm:$0xf]
    %v4700 = vld [vmem:[%s4666 + $0x84] sm:$0xf]
    %v4701 = vld [vmem:[%s4666 + $0x88] sm:$0xf]
    %v4702 = vld [vmem:[%s4666 + $0x8c] sm:$0xf]
    %v4703 = vld [vmem:[%s4666 + $0x90] sm:$0xf]
    %v4704 = vld [vmem:[%s4666 + $0x94] sm:$0xf]
    %v4705 = vld [vmem:[%s4666 + $0x98] sm:$0xf]
    %v4706 = vld [vmem:[%s4666 + $0x9c] sm:$0xf]
    %v4707 = vld [vmem:[%s4666 + $0xa0] sm:$0xf]
    %v4708 = vld [vmem:[%s4666 + $0xa4] sm:$0xf]
    %v4709 = vld [vmem:[%s4666 + $0xa8] sm:$0xf]
    %v4710 = vld [vmem:[%s4666 + $0xac] sm:$0xf]
    %v4711 = vld [vmem:[%s4666 + $0xb0] sm:$0xf]
    %v4712 = vld [vmem:[%s4666 + $0xb4] sm:$0xf]
    %v4713 = vld [vmem:[%s4666 + $0xb8] sm:$0xf]
    %v4714 = vld [vmem:[%s4666 + $0xbc] sm:$0xf]
    %v4715 = vld [vmem:[%s4666 + $0xc0] sm:$0xf]
    %v4716 = vld [vmem:[%s4666 + $0xc4] sm:$0xf]
    %v4717 = vld [vmem:[%s4666 + $0xc8] sm:$0xf]
    %v4718 = vld [vmem:[%s4666 + $0xcc] sm:$0xf]
    %v4719 = vld [vmem:[%s4666 + $0xd0] sm:$0xf]
    %v4720 = vld [vmem:[%s4666 + $0xd4] sm:$0xf]
    %v4721 = vld [vmem:[%s4666 + $0xd8] sm:$0xf]
    %v4722 = vld [vmem:[%s4666 + $0xdc] sm:$0xf]
    %v4723 = vld [vmem:[%s4666 + $0xe0] sm:$0xf]
    %v4724 = vld [vmem:[%s4666 + $0xe4] sm:$0xf]
    %v4725 = vld [vmem:[%s4666 + $0xe8] sm:$0xf]
    %v4726 = vld [vmem:[%s4666 + $0xec] sm:$0xf]
    %v4727 = vld [vmem:[%s4666 + $0xf0] sm:$0xf]
    %v4728 = vld [vmem:[%s4666 + $0xf4] sm:$0xf]
    %v4729 = vld [vmem:[%s4666 + $0xf8] sm:$0xf]
    %v4730 = vld [vmem:[%s4666 + $0xfc] sm:$0xf]
    %v4731 = vld [vmem:[%s4666 + $0x100] sm:$0xf]
    %v4732 = vld [vmem:[%s4666 + $0x104] sm:$0xf]
    %v4733 = vld [vmem:[%s4666 + $0x108] sm:$0xf]
    %v4734 = vld [vmem:[%s4666 + $0x10c] sm:$0xf]
    %v4735 = vld [vmem:[%s4666 + $0x110] sm:$0xf]
    %v4736 = vld [vmem:[%s4666 + $0x114] sm:$0xf]
    %v4737 = vld [vmem:[%s4666 + $0x118] sm:$0xf]
    %v4738 = vld [vmem:[%s4666 + $0x11c] sm:$0xf]
    %v4739 = vld [vmem:[%s4666 + $0x120] sm:$0xf]
    %v4740 = vld [vmem:[%s4666 + $0x124] sm:$0xf]
    %v4741 = vld [vmem:[%s4666 + $0x128] sm:$0xf]
    %v4742 = vld [vmem:[%s4666 + $0x12c] sm:$0xf]
    %v4743 = vld [vmem:[%s4666 + $0x130] sm:$0xf]
    %v4744 = vld [vmem:[%s4666 + $0x134] sm:$0xf]
    %v4745 = vld [vmem:[%s4666 + $0x138] sm:$0xf]
    %v4746 = vld [vmem:[%s4666 + $0x13c] sm:$0xf]
    %v4747 = vld [vmem:[%s4666 + $0x140] sm:$0xf]
    %v4748 = vld [vmem:[%s4666 + $0x144] sm:$0xf]
    %v4749 = vld [vmem:[%s4666 + $0x148] sm:$0xf]
    %v4750 = vld [vmem:[%s4666 + $0x14c] sm:$0xf]
    %v4751 = vld [vmem:[%s4666 + $0x150] sm:$0xf]
    %v4752 = vld [vmem:[%s4666 + $0x154] sm:$0xf]
    %v4753 = vld [vmem:[%s4666 + $0x158] sm:$0xf]
    %v4754 = vld [vmem:[%s4666 + $0x15c] sm:$0xf]
    %v4755 = vld [vmem:[%s4666 + $0x160] sm:$0xf]
    %v4756 = vld [vmem:[%s4666 + $0x164] sm:$0xf]
    %v4757 = vld [vmem:[%s4666 + $0x168] sm:$0xf]
    %v4758 = vld [vmem:[%s4666 + $0x16c] sm:$0xf]
    %v4759 = vld [vmem:[%s4666 + $0x170] sm:$0xf]
    %v4760 = vld [vmem:[%s4666 + $0x174] sm:$0xf]
    %v4761 = vld [vmem:[%s4666 + $0x178] sm:$0xf]
    %v4762 = vld [vmem:[%s4666 + $0x17c] sm:$0xf]
    %v4763 = vld [vmem:[%s4666 + $0x180] sm:$0xf]
    %v4764 = vld [vmem:[%s4666 + $0x184] sm:$0xf]
    %v4765 = vld [vmem:[%s4666 + $0x188] sm:$0xf]
    %v4766 = vld [vmem:[%s4666 + $0x18c] sm:$0xf]
    %v4767 = vld [vmem:[%s4666 + $0x190] sm:$0xf]
    %v4768 = vld [vmem:[%s4666 + $0x194] sm:$0xf]
    %v4769 = vld [vmem:[%s4666 + $0x198] sm:$0xf]
    %v4770 = vld [vmem:[%s4666 + $0x19c] sm:$0xf]
    %v4771 = vld [vmem:[%s4666 + $0x1a0] sm:$0xf]
    %v4772 = vld [vmem:[%s4666 + $0x1a4] sm:$0xf]
    %v4773 = vld [vmem:[%s4666 + $0x1a8] sm:$0xf]
    %v4774 = vld [vmem:[%s4666 + $0x1ac] sm:$0xf]
    %v4775 = vld [vmem:[%s4666 + $0x1b0] sm:$0xf]
    %v4776 = vld [vmem:[%s4666 + $0x1b4] sm:$0xf]
    %v4777 = vld [vmem:[%s4666 + $0x1b8] sm:$0xf]
    %v4778 = vld [vmem:[%s4666 + $0x1bc] sm:$0xf]
    %v4779 = vld [vmem:[%s4666 + $0x1c0] sm:$0xf]
    %v4780 = vld [vmem:[%s4666 + $0x1c4] sm:$0xf]
    %v4781 = vld [vmem:[%s4666 + $0x1c8] sm:$0xf]
    %v4782 = vld [vmem:[%s4666 + $0x1cc] sm:$0xf]
    %v4783 = vld [vmem:[%s4666 + $0x1d0] sm:$0xf]
    %v4784 = vld [vmem:[%s4666 + $0x1d4] sm:$0xf]
    %v4785 = vld [vmem:[%s4666 + $0x1d8] sm:$0xf]
    %v4786 = vld [vmem:[%s4666 + $0x1dc] sm:$0xf]
    %v4787 = vld [vmem:[%s4666 + $0x1e0] sm:$0xf]
    %v4788 = vld [vmem:[%s4666 + $0x1e4] sm:$0xf]
    %v4789 = vld [vmem:[%s4666 + $0x1e8] sm:$0xf]
    %v4790 = vld [vmem:[%s4666 + $0x1ec] sm:$0xf]
    %v4791 = vld [vmem:[%s4666 + $0x1f0] sm:$0xf]
    %v4792 = vld [vmem:[%s4666 + $0x1f4] sm:$0xf]
    %v4793 = vld [vmem:[%s4666 + $0x1f8] sm:$0xf]
    %v4794 = vld [vmem:[%s4666 + $0x1fc] sm:$0xf]
    %v4923 = vunpack.c.l.b16 %v4667
    %v4924 = vunpack.c.l.b16 %v4668
    %v4925 = vunpack.c.l.b16 %v4669
    %v4926 = vunpack.c.l.b16 %v4670
    %v4927 = vunpack.c.l.b16 %v4671
    %v4928 = vunpack.c.l.b16 %v4672
    %v4929 = vunpack.c.l.b16 %v4673
    %v4930 = vunpack.c.l.b16 %v4674
    %v4931 = vunpack.c.l.b16 %v4675
    %v4932 = vunpack.c.l.b16 %v4676
    %v4933 = vunpack.c.l.b16 %v4677
    %v4934 = vunpack.c.l.b16 %v4678
    %v4935 = vunpack.c.l.b16 %v4679
    %v4936 = vunpack.c.l.b16 %v4680
    %v4937 = vunpack.c.l.b16 %v4681
    %v4938 = vunpack.c.l.b16 %v4682
    %v4939 = vunpack.c.l.b16 %v4683
    %v4940 = vunpack.c.l.b16 %v4684
    %v4941 = vunpack.c.l.b16 %v4685
    %v4942 = vunpack.c.l.b16 %v4686
    %v4943 = vunpack.c.l.b16 %v4687
    %v4944 = vunpack.c.l.b16 %v4688
    %v4945 = vunpack.c.l.b16 %v4689
    %v4946 = vunpack.c.l.b16 %v4690
    %v4947 = vunpack.c.l.b16 %v4691
    %v4948 = vunpack.c.l.b16 %v4692
    %v4949 = vunpack.c.l.b16 %v4693
    %v4950 = vunpack.c.l.b16 %v4694
    %v4951 = vunpack.c.l.b16 %v4695
    %v4952 = vunpack.c.l.b16 %v4696
    %v4953 = vunpack.c.l.b16 %v4697
    %v4954 = vunpack.c.l.b16 %v4698
    %v4955 = vunpack.c.l.b16 %v4699
    %v4956 = vunpack.c.l.b16 %v4700
    %v4957 = vunpack.c.l.b16 %v4701
    %v4958 = vunpack.c.l.b16 %v4702
    %v4959 = vunpack.c.l.b16 %v4703
    %v4960 = vunpack.c.l.b16 %v4704
    %v4961 = vunpack.c.l.b16 %v4705
    %v4962 = vunpack.c.l.b16 %v4706
    %v4963 = vunpack.c.l.b16 %v4707
    %v4964 = vunpack.c.l.b16 %v4708
    %v4965 = vunpack.c.l.b16 %v4709
    %v4966 = vunpack.c.l.b16 %v4710
    %v4967 = vunpack.c.l.b16 %v4711
    %v4968 = vunpack.c.l.b16 %v4712
    %v4969 = vunpack.c.l.b16 %v4713
    %v4970 = vunpack.c.l.b16 %v4714
    %v4971 = vunpack.c.l.b16 %v4715
    %v4972 = vunpack.c.l.b16 %v4716
    %v4973 = vunpack.c.l.b16 %v4717
    %v4974 = vunpack.c.l.b16 %v4718
    %v4975 = vunpack.c.l.b16 %v4719
    %v4976 = vunpack.c.l.b16 %v4720
    %v4977 = vunpack.c.l.b16 %v4721
    %v4978 = vunpack.c.l.b16 %v4722
    %v4979 = vunpack.c.l.b16 %v4723
    %v4980 = vunpack.c.l.b16 %v4724
    %v4981 = vunpack.c.l.b16 %v4725
    %v4982 = vunpack.c.l.b16 %v4726
    %v4983 = vunpack.c.l.b16 %v4727
    %v4984 = vunpack.c.l.b16 %v4728
    %v4985 = vunpack.c.l.b16 %v4729
    %v4986 = vunpack.c.l.b16 %v4730
    %v4987 = vunpack.c.l.b16 %v4731
    %v4988 = vunpack.c.l.b16 %v4732
    %v4989 = vunpack.c.l.b16 %v4733
    %v4990 = vunpack.c.l.b16 %v4734
    %v4991 = vunpack.c.l.b16 %v4735
    %v4992 = vunpack.c.l.b16 %v4736
    %v4993 = vunpack.c.l.b16 %v4737
    %v4994 = vunpack.c.l.b16 %v4738
    %v4995 = vunpack.c.l.b16 %v4739
    %v4996 = vunpack.c.l.b16 %v4740
    %v4997 = vunpack.c.l.b16 %v4741
    %v4998 = vunpack.c.l.b16 %v4742
    %v4999 = vunpack.c.l.b16 %v4743
    %v5000 = vunpack.c.l.b16 %v4744
    %v5001 = vunpack.c.l.b16 %v4745
    %v5002 = vunpack.c.l.b16 %v4746
    %v5003 = vunpack.c.l.b16 %v4747
    %v5004 = vunpack.c.l.b16 %v4748
    %v5005 = vunpack.c.l.b16 %v4749
    %v5006 = vunpack.c.l.b16 %v4750
    %v5007 = vunpack.c.l.b16 %v4751
    %v5008 = vunpack.c.l.b16 %v4752
    %v5009 = vunpack.c.l.b16 %v4753
    %v5010 = vunpack.c.l.b16 %v4754
    %v5011 = vunpack.c.l.b16 %v4755
    %v5012 = vunpack.c.l.b16 %v4756
    %v5013 = vunpack.c.l.b16 %v4757
    %v5014 = vunpack.c.l.b16 %v4758
    %v5015 = vunpack.c.l.b16 %v4759
    %v5016 = vunpack.c.l.b16 %v4760
    %v5017 = vunpack.c.l.b16 %v4761
    %v5018 = vunpack.c.l.b16 %v4762
    %v5019 = vunpack.c.l.b16 %v4763
    %v5020 = vunpack.c.l.b16 %v4764
    %v5021 = vunpack.c.l.b16 %v4765
    %v5022 = vunpack.c.l.b16 %v4766
    %v5023 = vunpack.c.l.b16 %v4767
    %v5024 = vunpack.c.l.b16 %v4768
    %v5025 = vunpack.c.l.b16 %v4769
    %v5026 = vunpack.c.l.b16 %v4770
    %v5027 = vunpack.c.l.b16 %v4771
    %v5028 = vunpack.c.l.b16 %v4772
    %v5029 = vunpack.c.l.b16 %v4773
    %v5030 = vunpack.c.l.b16 %v4774
    %v5031 = vunpack.c.l.b16 %v4775
    %v5032 = vunpack.c.l.b16 %v4776
    %v5033 = vunpack.c.l.b16 %v4777
    %v5034 = vunpack.c.l.b16 %v4778
    %v5035 = vunpack.c.l.b16 %v4779
    %v5036 = vunpack.c.l.b16 %v4780
    %v5037 = vunpack.c.l.b16 %v4781
    %v5038 = vunpack.c.l.b16 %v4782
    %v5039 = vunpack.c.l.b16 %v4783
    %v5040 = vunpack.c.l.b16 %v4784
    %v5041 = vunpack.c.l.b16 %v4785
    %v5042 = vunpack.c.l.b16 %v4786
    %v5043 = vunpack.c.l.b16 %v4787
    %v5044 = vunpack.c.l.b16 %v4788
    %v5045 = vunpack.c.l.b16 %v4789
    %v5046 = vunpack.c.l.b16 %v4790
    %v5047 = vunpack.c.l.b16 %v4791
    %v5048 = vunpack.c.l.b16 %v4792
    %v5049 = vunpack.c.l.b16 %v4793
    %v5050 = vunpack.c.l.b16 %v4794
    %v5051 = vpack.c.b16 %v4924, %v4923
    %v5052 = vpack.c.b16 %v4926, %v4925
    %v5053 = vpack.c.b16 %v4928, %v4927
    %v5054 = vpack.c.b16 %v4930, %v4929
    %v5055 = vpack.c.b16 %v4932, %v4931
    %v5056 = vpack.c.b16 %v4934, %v4933
    %v5057 = vpack.c.b16 %v4936, %v4935
    %v5058 = vpack.c.b16 %v4938, %v4937
    %v5059 = vpack.c.b16 %v4940, %v4939
    %v5060 = vpack.c.b16 %v4942, %v4941
    %v5061 = vpack.c.b16 %v4944, %v4943
    %v5062 = vpack.c.b16 %v4946, %v4945
    %v5063 = vpack.c.b16 %v4948, %v4947
    %v5064 = vpack.c.b16 %v4950, %v4949
    %v5065 = vpack.c.b16 %v4952, %v4951
    %v5066 = vpack.c.b16 %v4954, %v4953
    %v5067 = vpack.c.b16 %v4956, %v4955
    %v5068 = vpack.c.b16 %v4958, %v4957
    %v5069 = vpack.c.b16 %v4960, %v4959
    %v5070 = vpack.c.b16 %v4962, %v4961
    %v5071 = vpack.c.b16 %v4964, %v4963
    %v5072 = vpack.c.b16 %v4966, %v4965
    %v5073 = vpack.c.b16 %v4968, %v4967
    %v5074 = vpack.c.b16 %v4970, %v4969
    %v5075 = vpack.c.b16 %v4972, %v4971
    %v5076 = vpack.c.b16 %v4974, %v4973
    %v5077 = vpack.c.b16 %v4976, %v4975
    %v5078 = vpack.c.b16 %v4978, %v4977
    %v5079 = vpack.c.b16 %v4980, %v4979
    %v5080 = vpack.c.b16 %v4982, %v4981
    %v5081 = vpack.c.b16 %v4984, %v4983
    %v5082 = vpack.c.b16 %v4986, %v4985
    %v5083 = vpack.c.b16 %v4988, %v4987
    %v5084 = vpack.c.b16 %v4990, %v4989
    %v5085 = vpack.c.b16 %v4992, %v4991
    %v5086 = vpack.c.b16 %v4994, %v4993
    %v5087 = vpack.c.b16 %v4996, %v4995
    %v5088 = vpack.c.b16 %v4998, %v4997
    %v5089 = vpack.c.b16 %v5000, %v4999
    %v5090 = vpack.c.b16 %v5002, %v5001
    %v5091 = vpack.c.b16 %v5004, %v5003
    %v5092 = vpack.c.b16 %v5006, %v5005
    %v5093 = vpack.c.b16 %v5008, %v5007
    %v5094 = vpack.c.b16 %v5010, %v5009
    %v5095 = vpack.c.b16 %v5012, %v5011
    %v5096 = vpack.c.b16 %v5014, %v5013
    %v5097 = vpack.c.b16 %v5016, %v5015
    %v5098 = vpack.c.b16 %v5018, %v5017
    %v5099 = vpack.c.b16 %v5020, %v5019
    %v5100 = vpack.c.b16 %v5022, %v5021
    %v5101 = vpack.c.b16 %v5024, %v5023
    %v5102 = vpack.c.b16 %v5026, %v5025
    %v5103 = vpack.c.b16 %v5028, %v5027
    %v5104 = vpack.c.b16 %v5030, %v5029
    %v5105 = vpack.c.b16 %v5032, %v5031
    %v5106 = vpack.c.b16 %v5034, %v5033
    %v5107 = vpack.c.b16 %v5036, %v5035
    %v5108 = vpack.c.b16 %v5038, %v5037
    %v5109 = vpack.c.b16 %v5040, %v5039
    %v5110 = vpack.c.b16 %v5042, %v5041
    %v5111 = vpack.c.b16 %v5044, %v5043
    %v5112 = vpack.c.b16 %v5046, %v5045
    %v5113 = vpack.c.b16 %v5048, %v5047
    %v5114 = vpack.c.b16 %v5050, %v5049
    %5179 = vmatprep.subr.bf16.mxu0 0
    %5180 = vmatpush1.bf16.msra.mxu0 %v5058
    %5181 = vmatprep.subr.bf16.mxu0 0
    %5182 = vmatpush1.bf16.msra.mxu0 %v5057
    %5183 = vmatprep.subr.bf16.mxu0 0
    %5184 = vmatpush1.bf16.msra.mxu0 %v5056
    %5185 = vmatprep.subr.bf16.mxu0 0
    %5186 = vmatpush1.bf16.msra.mxu0 %v5055
    %5187 = vmatprep.subr.bf16.mxu0 0
    %5188 = vmatpush1.bf16.msra.mxu0 %v5054
    %5189 = vmatprep.subr.bf16.mxu0 0
    %5190 = vmatpush1.bf16.msra.mxu0 %v5053
    %5191 = vmatprep.subr.bf16.mxu0 0
    %5192 = vmatpush1.bf16.msra.mxu0 %v5052
    %5193 = vmatprep.subr.bf16.mxu0 0
    %5194 = vmatpush1.bf16.msra.mxu0 %v5051
    %5195 = vmatprep.subr.bf16.mxu0 0
    %5196 = vmatpush2.bf16.msra.mxu0 %v5066
    %5197 = vmatprep.subr.bf16.mxu0 0
    %5198 = vmatpush2.bf16.msra.mxu0 %v5065
    %5199 = vmatprep.subr.bf16.mxu0 0
    %5200 = vmatpush2.bf16.msra.mxu0 %v5064
    %5201 = vmatprep.subr.bf16.mxu0 0
    %5202 = vmatpush2.bf16.msra.mxu0 %v5063
    %5203 = vmatprep.subr.bf16.mxu0 0
    %5204 = vmatpush2.bf16.msra.mxu0 %v5062
    %5205 = vmatprep.subr.bf16.mxu0 0
    %5206 = vmatpush2.bf16.msra.mxu0 %v5061
    %5207 = vmatprep.subr.bf16.mxu0 0
    %5208 = vmatpush2.bf16.msra.mxu0 %v5060
    %5209 = vmatprep.subr.bf16.mxu0 0
    %5210 = vmatpush2.bf16.msra.mxu0 %v5059
    %5211 = vmatprep.mubr.bf16.mxu0 %v2377
    %5212 = vmatmul.mubr.bf16.gmra.mxu0 %v2376
    %v5213 = vpop.f32.mrf.mxu0
    %v5214 = vadd.f32 0.0, %v5213
    %v5215 = vpop.f32.mrf.mxu0
    %v5216 = vpop.f32.mrf.mxu0
    %v5217 = vadd.f32 0.0, %v5216
    %v5218 = vpop.f32.mrf.mxu0
    %5219 = vmatprep.mubr.bf16.mxu0 %v2411
    %5220 = vmatmul.mubr.bf16.gmra.mxu0 %v2410
    %v5221 = vpop.f32.mrf.mxu0
    %v5222 = vadd.f32 0.0, %v5221
    %v5223 = vpop.f32.mrf.mxu0
    %v5224 = vpop.f32.mrf.mxu0
    %v5225 = vadd.f32 0.0, %v5224
    %v5226 = vpop.f32.mrf.mxu0
    %5227 = vdwg.mxu0
    %5228 = vmatprep.subr.bf16.mxu0 0
    %5229 = vmatpush1.bf16.msra.mxu0 %v5074
    %5230 = vmatprep.subr.bf16.mxu0 0
    %5231 = vmatpush1.bf16.msra.mxu0 %v5073
    %5232 = vmatprep.subr.bf16.mxu0 0
    %5233 = vmatpush1.bf16.msra.mxu0 %v5072
    %5234 = vmatprep.subr.bf16.mxu0 0
    %5235 = vmatpush1.bf16.msra.mxu0 %v5071
    %5236 = vmatprep.subr.bf16.mxu0 0
    %5237 = vmatpush1.bf16.msra.mxu0 %v5070
    %5238 = vmatprep.subr.bf16.mxu0 0
    %5239 = vmatpush1.bf16.msra.mxu0 %v5069
    %5240 = vmatprep.subr.bf16.mxu0 0
    %5241 = vmatpush1.bf16.msra.mxu0 %v5068
    %5242 = vmatprep.subr.bf16.mxu0 0
    %5243 = vmatpush1.bf16.msra.mxu0 %v5067
    %5244 = vmatprep.subr.bf16.mxu0 0
    %5245 = vmatpush2.bf16.msra.mxu0 %v5082
    %5246 = vmatprep.subr.bf16.mxu0 0
    %5247 = vmatpush2.bf16.msra.mxu0 %v5081
    %5248 = vmatprep.subr.bf16.mxu0 0
    %5249 = vmatpush2.bf16.msra.mxu0 %v5080
    %5250 = vmatprep.subr.bf16.mxu0 0
    %5251 = vmatpush2.bf16.msra.mxu0 %v5079
    %5252 = vmatprep.subr.bf16.mxu0 0
    %5253 = vmatpush2.bf16.msra.mxu0 %v5078
    %5254 = vmatprep.subr.bf16.mxu0 0
    %5255 = vmatpush2.bf16.msra.mxu0 %v5077
    %5256 = vmatprep.subr.bf16.mxu0 0
    %5257 = vmatpush2.bf16.msra.mxu0 %v5076
    %5258 = vmatprep.subr.bf16.mxu0 0
    %5259 = vmatpush2.bf16.msra.mxu0 %v5075
    %5260 = vmatprep.mubr.bf16.mxu0 %v3205
    %5261 = vmatmul.mubr.bf16.gmra.mxu0 %v3204
    %v5262 = vpop.f32.mrf.mxu0
    %v5263 = vadd.f32 %v5214, %v5262
    %v5264 = vpop.f32.mrf.mxu0
    %v5265 = vpop.f32.mrf.mxu0
    %v5266 = vadd.f32 %v5217, %v5265
    %v5267 = vpop.f32.mrf.mxu0
    %5268 = vmatprep.mubr.bf16.mxu0 %v3231
    %5269 = vmatmul.mubr.bf16.gmra.mxu0 %v3230
    %v5270 = vpop.f32.mrf.mxu0
    %v5271 = vadd.f32 %v5222, %v5270
    %v5272 = vpop.f32.mrf.mxu0
    %v5273 = vpop.f32.mrf.mxu0
    %v5274 = vadd.f32 %v5225, %v5273
    %v5275 = vpop.f32.mrf.mxu0
    %5276 = vdwg.mxu0
    %5277 = vmatprep.subr.bf16.mxu0 0
    %5278 = vmatpush1.bf16.msra.mxu0 %v5090
    %5279 = vmatprep.subr.bf16.mxu0 0
    %5280 = vmatpush1.bf16.msra.mxu0 %v5089
    %5281 = vmatprep.subr.bf16.mxu0 0
    %5282 = vmatpush1.bf16.msra.mxu0 %v5088
    %5283 = vmatprep.subr.bf16.mxu0 0
    %5284 = vmatpush1.bf16.msra.mxu0 %v5087
    %5285 = vmatprep.subr.bf16.mxu0 0
    %5286 = vmatpush1.bf16.msra.mxu0 %v5086
    %5287 = vmatprep.subr.bf16.mxu0 0
    %5288 = vmatpush1.bf16.msra.mxu0 %v5085
    %5289 = vmatprep.subr.bf16.mxu0 0
    %5290 = vmatpush1.bf16.msra.mxu0 %v5084
    %5291 = vmatprep.subr.bf16.mxu0 0
    %5292 = vmatpush1.bf16.msra.mxu0 %v5083
    %5293 = vmatprep.subr.bf16.mxu0 0
    %5294 = vmatpush2.bf16.msra.mxu0 %v5098
    %5295 = vmatprep.subr.bf16.mxu0 0
    %5296 = vmatpush2.bf16.msra.mxu0 %v5097
    %5297 = vmatprep.subr.bf16.mxu0 0
    %5298 = vmatpush2.bf16.msra.mxu0 %v5096
    %5299 = vmatprep.subr.bf16.mxu0 0
    %5300 = vmatpush2.bf16.msra.mxu0 %v5095
    %5301 = vmatprep.subr.bf16.mxu0 0
    %5302 = vmatpush2.bf16.msra.mxu0 %v5094
    %5303 = vmatprep.subr.bf16.mxu0 0
    %5304 = vmatpush2.bf16.msra.mxu0 %v5093
    %5305 = vmatprep.subr.bf16.mxu0 0
    %5306 = vmatpush2.bf16.msra.mxu0 %v5092
    %5307 = vmatprep.subr.bf16.mxu0 0
    %5308 = vmatpush2.bf16.msra.mxu0 %v5091
    %5309 = vmatprep.mubr.bf16.mxu0 %v2331
    %5310 = vmatmul.mubr.bf16.gmra.mxu0 %v2330
    %v5311 = vpop.f32.mrf.mxu0
    %v5312 = vadd.f32 %v5263, %v5311
    %v5313 = vpop.f32.mrf.mxu0
    %v5314 = vpop.f32.mrf.mxu0
    %v5315 = vadd.f32 %v5266, %v5314
    %v5316 = vpop.f32.mrf.mxu0
    %5317 = vmatprep.mubr.bf16.mxu0 %v3950
    %5318 = vmatmul.mubr.bf16.gmra.mxu0 %v3949
    %v5319 = vpop.f32.mrf.mxu0
    %v5320 = vadd.f32 %v5271, %v5319
    %v5321 = vpop.f32.mrf.mxu0
    %v5322 = vpop.f32.mrf.mxu0
    %v5323 = vadd.f32 %v5274, %v5322
    %v5324 = vpop.f32.mrf.mxu0
    %5325 = vdwg.mxu0
    %5326 = vmatprep.subr.bf16.mxu0 0
    %5327 = vmatpush1.bf16.msra.mxu0 %v5106
    %5328 = vmatprep.subr.bf16.mxu0 0
    %5329 = vmatpush1.bf16.msra.mxu0 %v5105
    %5330 = vmatprep.subr.bf16.mxu0 0
    %5331 = vmatpush1.bf16.msra.mxu0 %v5104
    %5332 = vmatprep.subr.bf16.mxu0 0
    %5333 = vmatpush1.bf16.msra.mxu0 %v5103
    %5334 = vmatprep.subr.bf16.mxu0 0
    %5335 = vmatpush1.bf16.msra.mxu0 %v5102
    %5336 = vmatprep.subr.bf16.mxu0 0
    %5337 = vmatpush1.bf16.msra.mxu0 %v5101
    %5338 = vmatprep.subr.bf16.mxu0 0
    %5339 = vmatpush1.bf16.msra.mxu0 %v5100
    %5340 = vmatprep.subr.bf16.mxu0 0
    %5341 = vmatpush1.bf16.msra.mxu0 %v5099
    %5342 = vmatprep.subr.bf16.mxu0 0
    %5343 = vmatpush2.bf16.msra.mxu0 %v5114
    %5344 = vmatprep.subr.bf16.mxu0 0
    %5345 = vmatpush2.bf16.msra.mxu0 %v5113
    %5346 = vmatprep.subr.bf16.mxu0 0
    %5347 = vmatpush2.bf16.msra.mxu0 %v5112
    %5348 = vmatprep.subr.bf16.mxu0 0
    %5349 = vmatpush2.bf16.msra.mxu0 %v5111
    %5350 = vmatprep.subr.bf16.mxu0 0
    %5351 = vmatpush2.bf16.msra.mxu0 %v5110
    %5352 = vmatprep.subr.bf16.mxu0 0
    %5353 = vmatpush2.bf16.msra.mxu0 %v5109
    %5354 = vmatprep.subr.bf16.mxu0 0
    %5355 = vmatpush2.bf16.msra.mxu0 %v5108
    %5356 = vmatprep.subr.bf16.mxu0 0
    %5357 = vmatpush2.bf16.msra.mxu0 %v5107
    %5358 = vmatprep.mubr.bf16.mxu0 %v3199
    %5359 = vmatmul.mubr.bf16.gmra.mxu0 %v3198
    %v5360 = vpop.f32.mrf.mxu0
    %v5361 = vadd.f32 %v5312, %v5360
    %v5362 = vpop.f32.mrf.mxu0
    %v5363 = vpop.f32.mrf.mxu0
    %v5364 = vadd.f32 %v5315, %v5363
    %v5365 = vpop.f32.mrf.mxu0
    %5366 = vmatprep.mubr.bf16.mxu0 %v4663
    %5367 = vmatmul.mubr.bf16.gmra.mxu0 %v4662
    %v5368 = vpop.f32.mrf.mxu0
    %v5369 = vadd.f32 %v5320, %v5368
    %v5370 = vpop.f32.mrf.mxu0
    %v5371 = vpop.f32.mrf.mxu0
    %v5372 = vadd.f32 %v5323, %v5371
    %v5373 = vpop.f32.mrf.mxu0
    %5374 = vdwg.mxu0
    %v5375 = vld [vmem:[%s5] sm:$0x1]
    %v5376 = vld [vmem:[%s6] sm:$0x1]
    %v5377 = vadd.f32 %v3110, %v3113
    %v5378 = vadd.f32 %v5377, %v3118
    %v5379 = vadd.f32 %v5378, %v3121
    %v5380 = vrot.slane %v5379, 4
    %v5381 = vadd.f32 %v5379, %v5380
    %v5382 = vrot.slane %v5381, 2
    %v5383 = vadd.f32 %v5381, %v5382
    %v5384 = vrot.slane %v5383, 1
    %v5385 = vadd.f32 %v5383, %v5384
    %v5386 = vadd.f32 %v5385, 0.0
    %v5387 = vmul.f32 %v3110, %v3110
    %v5388 = vmul.f32 %v3113, %v3113
    %v5389 = vmul.f32 %v3118, %v3118
    %v5390 = vmul.f32 %v3121, %v3121
    %v5391 = vadd.f32 %v5387, %v5388
    %v5392 = vadd.f32 %v5391, %v5389
    %v5393 = vadd.f32 %v5392, %v5390
    %v5394 = vrot.slane %v5393, 4
    %v5395 = vadd.f32 %v5393, %v5394
    %v5396 = vrot.slane %v5395, 2
    %v5397 = vadd.f32 %v5395, %v5396
    %v5398 = vrot.slane %v5397, 1
    %v5399 = vadd.f32 %v5397, %v5398
    %v5400 = vadd.f32 %v5399, 0.0
    %v5401 = vadd.f32 %v3931, %v3934
    %v5402 = vadd.f32 %v5401, %v3939
    %v5403 = vadd.f32 %v5402, %v3942
    %v5404 = vrot.slane %v5403, 4
    %v5405 = vadd.f32 %v5403, %v5404
    %v5406 = vrot.slane %v5405, 2
    %v5407 = vadd.f32 %v5405, %v5406
    %v5408 = vrot.slane %v5407, 1
    %v5409 = vadd.f32 %v5407, %v5408
    %v5410 = vadd.f32 %v5386, %v5409
    %v5411 = vmul.f32 %v3931, %v3931
    %v5412 = vmul.f32 %v3934, %v3934
    %v5413 = vmul.f32 %v3939, %v3939
    %v5414 = vmul.f32 %v3942, %v3942
    %v5415 = vadd.f32 %v5411, %v5412
    %v5416 = vadd.f32 %v5415, %v5413
    %v5417 = vadd.f32 %v5416, %v5414
    %v5418 = vrot.slane %v5417, 4
    %v5419 = vadd.f32 %v5417, %v5418
    %v5420 = vrot.slane %v5419, 2
    %v5421 = vadd.f32 %v5419, %v5420
    %v5422 = vrot.slane %v5421, 1
    %v5423 = vadd.f32 %v5421, %v5422
    %v5424 = vadd.f32 %v5400, %v5423
    %v5425 = vadd.f32 %v4648, %v4651
    %v5426 = vadd.f32 %v5425, %v4656
    %v5427 = vadd.f32 %v5426, %v4659
    %v5428 = vrot.slane %v5427, 4
    %v5429 = vadd.f32 %v5427, %v5428
    %v5430 = vrot.slane %v5429, 2
    %v5431 = vadd.f32 %v5429, %v5430
    %v5432 = vrot.slane %v5431, 1
    %v5433 = vadd.f32 %v5431, %v5432
    %v5434 = vadd.f32 %v5410, %v5433
    %v5435 = vmul.f32 %v4648, %v4648
    %v5436 = vmul.f32 %v4651, %v4651
    %v5437 = vmul.f32 %v4656, %v4656
    %v5438 = vmul.f32 %v4659, %v4659
    %v5439 = vadd.f32 %v5435, %v5436
    %v5440 = vadd.f32 %v5439, %v5437
    %v5441 = vadd.f32 %v5440, %v5438
    %v5442 = vrot.slane %v5441, 4
    %v5443 = vadd.f32 %v5441, %v5442
    %v5444 = vrot.slane %v5443, 2
    %v5445 = vadd.f32 %v5443, %v5444
    %v5446 = vrot.slane %v5445, 1
    %v5447 = vadd.f32 %v5445, %v5446
    %v5448 = vadd.f32 %v5424, %v5447
    %v5449 = vadd.f32 %v5361, %v5364
    %v5450 = vadd.f32 %v5449, %v5369
    %v5451 = vadd.f32 %v5450, %v5372
    %v5452 = vrot.slane %v5451, 4
    %v5453 = vadd.f32 %v5451, %v5452
    %v5454 = vrot.slane %v5453, 2
    %v5455 = vadd.f32 %v5453, %v5454
    %v5456 = vrot.slane %v5455, 1
    %v5457 = vadd.f32 %v5455, %v5456
    %v5458 = vadd.f32 %v5434, %v5457
    %v5459 = vmul.f32 %v5361, %v5361
    %v5460 = vmul.f32 %v5364, %v5364
    %v5461 = vmul.f32 %v5369, %v5369
    %v5462 = vmul.f32 %v5372, %v5372
    %v5463 = vadd.f32 %v5459, %v5460
    %v5464 = vadd.f32 %v5463, %v5461
    %v5465 = vadd.f32 %v5464, %v5462
    %v5466 = vrot.slane %v5465, 4
    %v5467 = vadd.f32 %v5465, %v5466
    %v5468 = vrot.slane %v5467, 2
    %v5469 = vadd.f32 %v5467, %v5468
    %v5470 = vrot.slane %v5469, 1
    %v5471 = vadd.f32 %v5469, %v5470
    %v5472 = vadd.f32 %v5448, %v5471
    %v5473 = vrcp.pop 128.0
    %v5474 = vmul.f32 %v5458, %v5473
    %v5475 = vmul.f32 %v5472, %v5473
    %v5476 = vmul.f32 %v5474, %v5474
    %v5477 = vsub.f32 %v5475, %v5476
    %v5478 = vadd.f32 %v5477, 1e-05
    %v5479 = vrsqrt.pop %v5478
    %v5480 = vmul.f32 %v5375, %v5479
    %v5481 = vmul.f32 %v5474, %v5480
    %v5482 = vsub.f32 %v5376, %v5481
    %v5484 = vlaneseq
    %v5485 = vshrl.u32 %v5484, 7
    %v5486 = vsub.s32 0, %v5485
    %v5487 = vrot.slane %v5480, %v5486
    %v5489 = vmul.f32 %v3110, %v5487
    %v5490 = vmul.f32 %v3113, %v5487
    %v5491 = vmul.f32 %v3118, %v5487
    %v5492 = vmul.f32 %v3121, %v5487
    %v5494 = vlaneseq
    %v5495 = vshrl.u32 %v5494, 7
    %v5496 = vsub.s32 0, %v5495
    %v5497 = vrot.slane %v5482, %v5496
    %v5499 = vadd.f32 %v5489, %v5497
    %v5500 = vadd.f32 %v5490, %v5497
    %v5501 = vadd.f32 %v5491, %v5497
    %v5502 = vadd.f32 %v5492, %v5497
    %v5503 = vmax.f32 %v5499, 0.0
    %v5504 = vmax.f32 %v5500, 0.0
    %v5505 = vmax.f32 %v5501, 0.0
    %v5506 = vmax.f32 %v5502, 0.0
    %v5507 = vpack.c.bf16 %v5504, %v5503
    %v5508 = vpack.c.bf16 %v5506, %v5505
    %v5509 = vmul.f32 %v3931, %v5487
    %v5510 = vmul.f32 %v3934, %v5487
    %v5511 = vmul.f32 %v3939, %v5487
    %v5512 = vmul.f32 %v3942, %v5487
    %v5513 = vadd.f32 %v5509, %v5497
    %v5514 = vadd.f32 %v5510, %v5497
    %v5515 = vadd.f32 %v5511, %v5497
    %v5516 = vadd.f32 %v5512, %v5497
    %v5517 = vmax.f32 %v5513, 0.0
    %v5518 = vmax.f32 %v5514, 0.0
    %v5519 = vmax.f32 %v5515, 0.0
    %v5520 = vmax.f32 %v5516, 0.0
    %v5521 = vpack.c.bf16 %v5518, %v5517
    %v5522 = vpack.c.bf16 %v5520, %v5519
    %v5523 = vmul.f32 %v4648, %v5487
    %v5524 = vmul.f32 %v4651, %v5487
    %v5525 = vmul.f32 %v4656, %v5487
    %v5526 = vmul.f32 %v4659, %v5487
    %v5527 = vadd.f32 %v5523, %v5497
    %v5528 = vadd.f32 %v5524, %v5497
    %v5529 = vadd.f32 %v5525, %v5497
    %v5530 = vadd.f32 %v5526, %v5497
    %v5531 = vmax.f32 %v5527, 0.0
    %v5532 = vmax.f32 %v5528, 0.0
    %v5533 = vmax.f32 %v5529, 0.0
    %v5534 = vmax.f32 %v5530, 0.0
    %v5535 = vpack.c.bf16 %v5532, %v5531
    %v5536 = vpack.c.bf16 %v5534, %v5533
    %v5537 = vmul.f32 %v5361, %v5487
    %v5538 = vmul.f32 %v5364, %v5487
    %v5539 = vmul.f32 %v5369, %v5487
    %v5540 = vmul.f32 %v5372, %v5487
    %v5541 = vadd.f32 %v5537, %v5497
    %v5542 = vadd.f32 %v5538, %v5497
    %v5543 = vadd.f32 %v5539, %v5497
    %v5544 = vadd.f32 %v5540, %v5497
    %v5545 = vmax.f32 %v5541, 0.0
    %v5546 = vmax.f32 %v5542, 0.0
    %v5547 = vmax.f32 %v5543, 0.0
    %v5548 = vmax.f32 %v5544, 0.0
    %v5549 = vpack.c.bf16 %v5546, %v5545
    %v5550 = vpack.c.bf16 %v5548, %v5547
    %v5553 = vcombine.high %v5507, %v5507
    %v5555 = vunpack.c.l.s4 1966171168
    %v5556 = vunpack.c.0.s8 %v5555
    %v5557 = vlaneseq
    %v5558 = vshrl.u32 %v5557, 7
    %v5559 = vsub.s32 %v5556, %v5558
    %v5560 = vrot.slane %v5507, %v5559
    %v5562 = vunpack.c.l.s4 1966171168
    %v5563 = vunpack.c.0.s8 %v5562
    %v5564 = vlaneseq
    %v5565 = vshrl.u32 %v5564, 7
    %v5566 = vsub.s32 %v5563, %v5565
    %v5567 = vrot.slane %v5553, %v5566
    %v5568 = vcombine.high %v5560, %v5560
    %v5569 = vcombine.high %v5567, %v5567
    %v5571 = vunpack.c.l.s4 1966171168
    %v5572 = vunpack.c.0.s8 %v5571
    %v5573 = vlaneseq
    %v5574 = vshrl.u32 %v5573, 7
    %v5575 = vsub.s32 %v5572, %v5574
    %v5576 = vrot.slane %v5560, %v5575
    %v5578 = vunpack.c.l.s4 1966171168
    %v5579 = vunpack.c.0.s8 %v5578
    %v5580 = vlaneseq
    %v5581 = vshrl.u32 %v5580, 7
    %v5582 = vsub.s32 %v5579, %v5581
    %v5583 = vrot.slane %v5567, %v5582
    %v5585 = vunpack.c.l.s4 1966171168
    %v5586 = vunpack.c.0.s8 %v5585
    %v5587 = vlaneseq
    %v5588 = vshrl.u32 %v5587, 7
    %v5589 = vsub.s32 %v5586, %v5588
    %v5590 = vrot.slane %v5568, %v5589
    %v5592 = vunpack.c.l.s4 1966171168
    %v5593 = vunpack.c.0.s8 %v5592
    %v5594 = vlaneseq
    %v5595 = vshrl.u32 %v5594, 7
    %v5596 = vsub.s32 %v5593, %v5595
    %v5597 = vrot.slane %v5569, %v5596
    %v5598 = vcombine.high %v5576, %v5576
    %v5599 = vcombine.high %v5583, %v5583
    %v5600 = vcombine.high %v5590, %v5590
    %v5601 = vcombine.high %v5597, %v5597
    %v5602 = vcombine.high %v5508, %v5508
    %v5604 = vunpack.c.l.s4 1966171168
    %v5605 = vunpack.c.0.s8 %v5604
    %v5606 = vlaneseq
    %v5607 = vshrl.u32 %v5606, 7
    %v5608 = vsub.s32 %v5605, %v5607
    %v5609 = vrot.slane %v5508, %v5608
    %v5611 = vunpack.c.l.s4 1966171168
    %v5612 = vunpack.c.0.s8 %v5611
    %v5613 = vlaneseq
    %v5614 = vshrl.u32 %v5613, 7
    %v5615 = vsub.s32 %v5612, %v5614
    %v5616 = vrot.slane %v5602, %v5615
    %v5617 = vcombine.high %v5609, %v5609
    %v5618 = vcombine.high %v5616, %v5616
    %v5620 = vunpack.c.l.s4 1966171168
    %v5621 = vunpack.c.0.s8 %v5620
    %v5622 = vlaneseq
    %v5623 = vshrl.u32 %v5622, 7
    %v5624 = vsub.s32 %v5621, %v5623
    %v5625 = vrot.slane %v5609, %v5624
    %v5627 = vunpack.c.l.s4 1966171168
    %v5628 = vunpack.c.0.s8 %v5627
    %v5629 = vlaneseq
    %v5630 = vshrl.u32 %v5629, 7
    %v5631 = vsub.s32 %v5628, %v5630
    %v5632 = vrot.slane %v5616, %v5631
    %v5634 = vunpack.c.l.s4 1966171168
    %v5635 = vunpack.c.0.s8 %v5634
    %v5636 = vlaneseq
    %v5637 = vshrl.u32 %v5636, 7
    %v5638 = vsub.s32 %v5635, %v5637
    %v5639 = vrot.slane %v5617, %v5638
    %v5641 = vunpack.c.l.s4 1966171168
    %v5642 = vunpack.c.0.s8 %v5641
    %v5643 = vlaneseq
    %v5644 = vshrl.u32 %v5643, 7
    %v5645 = vsub.s32 %v5642, %v5644
    %v5646 = vrot.slane %v5618, %v5645
    %v5647 = vcombine.high %v5625, %v5625
    %v5648 = vcombine.high %v5632, %v5632
    %v5649 = vcombine.high %v5639, %v5639
    %v5650 = vcombine.high %v5646, %v5646
    %v5653 = vcombine.high %v5521, %v5521
    %v5655 = vunpack.c.l.s4 1966171168
    %v5656 = vunpack.c.0.s8 %v5655
    %v5657 = vlaneseq
    %v5658 = vshrl.u32 %v5657, 7
    %v5659 = vsub.s32 %v5656, %v5658
    %v5660 = vrot.slane %v5521, %v5659
    %v5662 = vunpack.c.l.s4 1966171168
    %v5663 = vunpack.c.0.s8 %v5662
    %v5664 = vlaneseq
    %v5665 = vshrl.u32 %v5664, 7
    %v5666 = vsub.s32 %v5663, %v5665
    %v5667 = vrot.slane %v5653, %v5666
    %v5668 = vcombine.high %v5660, %v5660
    %v5669 = vcombine.high %v5667, %v5667
    %v5671 = vunpack.c.l.s4 1966171168
    %v5672 = vunpack.c.0.s8 %v5671
    %v5673 = vlaneseq
    %v5674 = vshrl.u32 %v5673, 7
    %v5675 = vsub.s32 %v5672, %v5674
    %v5676 = vrot.slane %v5660, %v5675
    %v5678 = vunpack.c.l.s4 1966171168
    %v5679 = vunpack.c.0.s8 %v5678
    %v5680 = vlaneseq
    %v5681 = vshrl.u32 %v5680, 7
    %v5682 = vsub.s32 %v5679, %v5681
    %v5683 = vrot.slane %v5667, %v5682
    %v5685 = vunpack.c.l.s4 1966171168
    %v5686 = vunpack.c.0.s8 %v5685
    %v5687 = vlaneseq
    %v5688 = vshrl.u32 %v5687, 7
    %v5689 = vsub.s32 %v5686, %v5688
    %v5690 = vrot.slane %v5668, %v5689
    %v5692 = vunpack.c.l.s4 1966171168
    %v5693 = vunpack.c.0.s8 %v5692
    %v5694 = vlaneseq
    %v5695 = vshrl.u32 %v5694, 7
    %v5696 = vsub.s32 %v5693, %v5695
    %v5697 = vrot.slane %v5669, %v5696
    %v5698 = vcombine.high %v5676, %v5676
    %v5699 = vcombine.high %v5683, %v5683
    %v5700 = vcombine.high %v5690, %v5690
    %v5701 = vcombine.high %v5697, %v5697
    %v5702 = vcombine.high %v5522, %v5522
    %v5704 = vunpack.c.l.s4 1966171168
    %v5705 = vunpack.c.0.s8 %v5704
    %v5706 = vlaneseq
    %v5707 = vshrl.u32 %v5706, 7
    %v5708 = vsub.s32 %v5705, %v5707
    %v5709 = vrot.slane %v5522, %v5708
    %v5711 = vunpack.c.l.s4 1966171168
    %v5712 = vunpack.c.0.s8 %v5711
    %v5713 = vlaneseq
    %v5714 = vshrl.u32 %v5713, 7
    %v5715 = vsub.s32 %v5712, %v5714
    %v5716 = vrot.slane %v5702, %v5715
    %v5717 = vcombine.high %v5709, %v5709
    %v5718 = vcombine.high %v5716, %v5716
    %v5720 = vunpack.c.l.s4 1966171168
    %v5721 = vunpack.c.0.s8 %v5720
    %v5722 = vlaneseq
    %v5723 = vshrl.u32 %v5722, 7
    %v5724 = vsub.s32 %v5721, %v5723
    %v5725 = vrot.slane %v5709, %v5724
    %v5727 = vunpack.c.l.s4 1966171168
    %v5728 = vunpack.c.0.s8 %v5727
    %v5729 = vlaneseq
    %v5730 = vshrl.u32 %v5729, 7
    %v5731 = vsub.s32 %v5728, %v5730
    %v5732 = vrot.slane %v5716, %v5731
    %v5734 = vunpack.c.l.s4 1966171168
    %v5735 = vunpack.c.0.s8 %v5734
    %v5736 = vlaneseq
    %v5737 = vshrl.u32 %v5736, 7
    %v5738 = vsub.s32 %v5735, %v5737
    %v5739 = vrot.slane %v5717, %v5738
    %v5741 = vunpack.c.l.s4 1966171168
    %v5742 = vunpack.c.0.s8 %v5741
    %v5743 = vlaneseq
    %v5744 = vshrl.u32 %v5743, 7
    %v5745 = vsub.s32 %v5742, %v5744
    %v5746 = vrot.slane %v5718, %v5745
    %v5747 = vcombine.high %v5725, %v5725
    %v5748 = vcombine.high %v5732, %v5732
    %v5749 = vcombine.high %v5739, %v5739
    %v5750 = vcombine.high %v5746, %v5746
    %v5753 = vcombine.high %v5535, %v5535
    %v5755 = vunpack.c.l.s4 1966171168
    %v5756 = vunpack.c.0.s8 %v5755
    %v5757 = vlaneseq
    %v5758 = vshrl.u32 %v5757, 7
    %v5759 = vsub.s32 %v5756, %v5758
    %v5760 = vrot.slane %v5535, %v5759
    %v5762 = vunpack.c.l.s4 1966171168
    %v5763 = vunpack.c.0.s8 %v5762
    %v5764 = vlaneseq
    %v5765 = vshrl.u32 %v5764, 7
    %v5766 = vsub.s32 %v5763, %v5765
    %v5767 = vrot.slane %v5753, %v5766
    %v5768 = vcombine.high %v5760, %v5760
    %v5769 = vcombine.high %v5767, %v5767
    %v5771 = vunpack.c.l.s4 1966171168
    %v5772 = vunpack.c.0.s8 %v5771
    %v5773 = vlaneseq
    %v5774 = vshrl.u32 %v5773, 7
    %v5775 = vsub.s32 %v5772, %v5774
    %v5776 = vrot.slane %v5760, %v5775
    %v5778 = vunpack.c.l.s4 1966171168
    %v5779 = vunpack.c.0.s8 %v5778
    %v5780 = vlaneseq
    %v5781 = vshrl.u32 %v5780, 7
    %v5782 = vsub.s32 %v5779, %v5781
    %v5783 = vrot.slane %v5767, %v5782
    %v5785 = vunpack.c.l.s4 1966171168
    %v5786 = vunpack.c.0.s8 %v5785
    %v5787 = vlaneseq
    %v5788 = vshrl.u32 %v5787, 7
    %v5789 = vsub.s32 %v5786, %v5788
    %v5790 = vrot.slane %v5768, %v5789
    %v5792 = vunpack.c.l.s4 1966171168
    %v5793 = vunpack.c.0.s8 %v5792
    %v5794 = vlaneseq
    %v5795 = vshrl.u32 %v5794, 7
    %v5796 = vsub.s32 %v5793, %v5795
    %v5797 = vrot.slane %v5769, %v5796
    %v5798 = vcombine.high %v5776, %v5776
    %v5799 = vcombine.high %v5783, %v5783
    %v5800 = vcombine.high %v5790, %v5790
    %v5801 = vcombine.high %v5797, %v5797
    %v5802 = vcombine.high %v5536, %v5536
    %v5804 = vunpack.c.l.s4 1966171168
    %v5805 = vunpack.c.0.s8 %v5804
    %v5806 = vlaneseq
    %v5807 = vshrl.u32 %v5806, 7
    %v5808 = vsub.s32 %v5805, %v5807
    %v5809 = vrot.slane %v5536, %v5808
    %v5811 = vunpack.c.l.s4 1966171168
    %v5812 = vunpack.c.0.s8 %v5811
    %v5813 = vlaneseq
    %v5814 = vshrl.u32 %v5813, 7
    %v5815 = vsub.s32 %v5812, %v5814
    %v5816 = vrot.slane %v5802, %v5815
    %v5817 = vcombine.high %v5809, %v5809
    %v5818 = vcombine.high %v5816, %v5816
    %v5820 = vunpack.c.l.s4 1966171168
    %v5821 = vunpack.c.0.s8 %v5820
    %v5822 = vlaneseq
    %v5823 = vshrl.u32 %v5822, 7
    %v5824 = vsub.s32 %v5821, %v5823
    %v5825 = vrot.slane %v5809, %v5824
    %v5827 = vunpack.c.l.s4 1966171168
    %v5828 = vunpack.c.0.s8 %v5827
    %v5829 = vlaneseq
    %v5830 = vshrl.u32 %v5829, 7
    %v5831 = vsub.s32 %v5828, %v5830
    %v5832 = vrot.slane %v5816, %v5831
    %v5834 = vunpack.c.l.s4 1966171168
    %v5835 = vunpack.c.0.s8 %v5834
    %v5836 = vlaneseq
    %v5837 = vshrl.u32 %v5836, 7
    %v5838 = vsub.s32 %v5835, %v5837
    %v5839 = vrot.slane %v5817, %v5838
    %v5841 = vunpack.c.l.s4 1966171168
    %v5842 = vunpack.c.0.s8 %v5841
    %v5843 = vlaneseq
    %v5844 = vshrl.u32 %v5843, 7
    %v5845 = vsub.s32 %v5842, %v5844
    %v5846 = vrot.slane %v5818, %v5845
    %v5847 = vcombine.high %v5825, %v5825
    %v5848 = vcombine.high %v5832, %v5832
    %v5849 = vcombine.high %v5839, %v5839
    %v5850 = vcombine.high %v5846, %v5846
    %v5853 = vcombine.high %v5549, %v5549
    %v5855 = vunpack.c.l.s4 1966171168
    %v5856 = vunpack.c.0.s8 %v5855
    %v5857 = vlaneseq
    %v5858 = vshrl.u32 %v5857, 7
    %v5859 = vsub.s32 %v5856, %v5858
    %v5860 = vrot.slane %v5549, %v5859
    %v5862 = vunpack.c.l.s4 1966171168
    %v5863 = vunpack.c.0.s8 %v5862
    %v5864 = vlaneseq
    %v5865 = vshrl.u32 %v5864, 7
    %v5866 = vsub.s32 %v5863, %v5865
    %v5867 = vrot.slane %v5853, %v5866
    %v5868 = vcombine.high %v5860, %v5860
    %v5869 = vcombine.high %v5867, %v5867
    %v5871 = vunpack.c.l.s4 1966171168
    %v5872 = vunpack.c.0.s8 %v5871
    %v5873 = vlaneseq
    %v5874 = vshrl.u32 %v5873, 7
    %v5875 = vsub.s32 %v5872, %v5874
    %v5876 = vrot.slane %v5860, %v5875
    %v5878 = vunpack.c.l.s4 1966171168
    %v5879 = vunpack.c.0.s8 %v5878
    %v5880 = vlaneseq
    %v5881 = vshrl.u32 %v5880, 7
    %v5882 = vsub.s32 %v5879, %v5881
    %v5883 = vrot.slane %v5867, %v5882
    %v5885 = vunpack.c.l.s4 1966171168
    %v5886 = vunpack.c.0.s8 %v5885
    %v5887 = vlaneseq
    %v5888 = vshrl.u32 %v5887, 7
    %v5889 = vsub.s32 %v5886, %v5888
    %v5890 = vrot.slane %v5868, %v5889
    %v5892 = vunpack.c.l.s4 1966171168
    %v5893 = vunpack.c.0.s8 %v5892
    %v5894 = vlaneseq
    %v5895 = vshrl.u32 %v5894, 7
    %v5896 = vsub.s32 %v5893, %v5895
    %v5897 = vrot.slane %v5869, %v5896
    %v5898 = vcombine.high %v5876, %v5876
    %v5899 = vcombine.high %v5883, %v5883
    %v5900 = vcombine.high %v5890, %v5890
    %v5901 = vcombine.high %v5897, %v5897
    %v5902 = vcombine.high %v5550, %v5550
    %v5904 = vunpack.c.l.s4 1966171168
    %v5905 = vunpack.c.0.s8 %v5904
    %v5906 = vlaneseq
    %v5907 = vshrl.u32 %v5906, 7
    %v5908 = vsub.s32 %v5905, %v5907
    %v5909 = vrot.slane %v5550, %v5908
    %v5911 = vunpack.c.l.s4 1966171168
    %v5912 = vunpack.c.0.s8 %v5911
    %v5913 = vlaneseq
    %v5914 = vshrl.u32 %v5913, 7
    %v5915 = vsub.s32 %v5912, %v5914
    %v5916 = vrot.slane %v5902, %v5915
    %v5917 = vcombine.high %v5909, %v5909
    %v5918 = vcombine.high %v5916, %v5916
    %v5920 = vunpack.c.l.s4 1966171168
    %v5921 = vunpack.c.0.s8 %v5920
    %v5922 = vlaneseq
    %v5923 = vshrl.u32 %v5922, 7
    %v5924 = vsub.s32 %v5921, %v5923
    %v5925 = vrot.slane %v5909, %v5924
    %v5927 = vunpack.c.l.s4 1966171168
    %v5928 = vunpack.c.0.s8 %v5927
    %v5929 = vlaneseq
    %v5930 = vshrl.u32 %v5929, 7
    %v5931 = vsub.s32 %v5928, %v5930
    %v5932 = vrot.slane %v5916, %v5931
    %v5934 = vunpack.c.l.s4 1966171168
    %v5935 = vunpack.c.0.s8 %v5934
    %v5936 = vlaneseq
    %v5937 = vshrl.u32 %v5936, 7
    %v5938 = vsub.s32 %v5935, %v5937
    %v5939 = vrot.slane %v5917, %v5938
    %v5941 = vunpack.c.l.s4 1966171168
    %v5942 = vunpack.c.0.s8 %v5941
    %v5943 = vlaneseq
    %v5944 = vshrl.u32 %v5943, 7
    %v5945 = vsub.s32 %v5942, %v5944
    %v5946 = vrot.slane %v5918, %v5945
    %v5947 = vcombine.high %v5925, %v5925
    %v5948 = vcombine.high %v5932, %v5932
    %v5949 = vcombine.high %v5939, %v5939
    %v5950 = vcombine.high %v5946, %v5946
    %v5951 = vcombine.low %v1856, %v1856
    %v5953 = vunpack.c.l.s4 1966171168
    %v5954 = vunpack.c.0.s8 %v5953
    %v5955 = vlaneseq
    %v5956 = vshrl.u32 %v5955, 7
    %v5957 = vsub.s32 %v5954, %v5956
    %v5958 = vrot.slane %v5951, %v5957
    %v5959 = vcombine.low %v5958, %v5958
    %v5960 = vcombine.low 0, %v5576
    %v5961 = vcombine.low %v5676, %v5590
    %v5962 = vcombine.low %v5690, %v5598
    %v5963 = vcombine.low %v5698, %v5600
    %v5965 = vunpack.c.l.s4 1966171168
    %v5966 = vunpack.c.0.s8 %v5965
    %v5967 = vlaneseq
    %v5968 = vshrl.u32 %v5967, 7
    %v5969 = vsub.s32 %v5966, %v5968
    %v5970 = vrot.slane %v5960, %v5969
    %v5972 = vunpack.c.l.s4 1966171168
    %v5973 = vunpack.c.0.s8 %v5972
    %v5974 = vlaneseq
    %v5975 = vshrl.u32 %v5974, 7
    %v5976 = vsub.s32 %v5973, %v5975
    %v5977 = vrot.slane %v5961, %v5976
    %v5979 = vunpack.c.l.s4 1966171168
    %v5980 = vunpack.c.0.s8 %v5979
    %v5981 = vlaneseq
    %v5982 = vshrl.u32 %v5981, 7
    %v5983 = vsub.s32 %v5980, %v5982
    %v5984 = vrot.slane %v5962, %v5983
    %v5986 = vunpack.c.l.s4 1966171168
    %v5987 = vunpack.c.0.s8 %v5986
    %v5988 = vlaneseq
    %v5989 = vshrl.u32 %v5988, 7
    %v5990 = vsub.s32 %v5987, %v5989
    %v5991 = vrot.slane %v5963, %v5990
    %v5992 = vcombine.low %v5970, %v5977
    %v5993 = vcombine.low %v5984, %v5991
    %v5995 = vunpack.c.l.s4 1966171168
    %v5996 = vunpack.c.0.s8 %v5995
    %v5997 = vlaneseq
    %v5998 = vshrl.u32 %v5997, 7
    %v5999 = vsub.s32 %v5996, %v5998
    %v6000 = vrot.slane %v5992, %v5999
    %v6002 = vunpack.c.l.s4 1966171168
    %v6003 = vunpack.c.0.s8 %v6002
    %v6004 = vlaneseq
    %v6005 = vshrl.u32 %v6004, 7
    %v6006 = vsub.s32 %v6003, %v6005
    %v6007 = vrot.slane %v5993, %v6006
    %v6008 = vcombine.low %v6000, %v6007
    %v6009 = vcombine.low 0, %v5776
    %v6010 = vcombine.low %v5876, %v5790
    %v6011 = vcombine.low %v5890, %v5798
    %v6012 = vcombine.low %v5898, %v5800
    %v6014 = vunpack.c.l.s4 1966171168
    %v6015 = vunpack.c.0.s8 %v6014
    %v6016 = vlaneseq
    %v6017 = vshrl.u32 %v6016, 7
    %v6018 = vsub.s32 %v6015, %v6017
    %v6019 = vrot.slane %v6009, %v6018
    %v6021 = vunpack.c.l.s4 1966171168
    %v6022 = vunpack.c.0.s8 %v6021
    %v6023 = vlaneseq
    %v6024 = vshrl.u32 %v6023, 7
    %v6025 = vsub.s32 %v6022, %v6024
    %v6026 = vrot.slane %v6010, %v6025
    %v6028 = vunpack.c.l.s4 1966171168
    %v6029 = vunpack.c.0.s8 %v6028
    %v6030 = vlaneseq
    %v6031 = vshrl.u32 %v6030, 7
    %v6032 = vsub.s32 %v6029, %v6031
    %v6033 = vrot.slane %v6011, %v6032
    %v6035 = vunpack.c.l.s4 1966171168
    %v6036 = vunpack.c.0.s8 %v6035
    %v6037 = vlaneseq
    %v6038 = vshrl.u32 %v6037, 7
    %v6039 = vsub.s32 %v6036, %v6038
    %v6040 = vrot.slane %v6012, %v6039
    %v6041 = vcombine.low %v6019, %v6026
    %v6042 = vcombine.low %v6033, %v6040
    %v6044 = vunpack.c.l.s4 1966171168
    %v6045 = vunpack.c.0.s8 %v6044
    %v6046 = vlaneseq
    %v6047 = vshrl.u32 %v6046, 7
    %v6048 = vsub.s32 %v6045, %v6047
    %v6049 = vrot.slane %v6041, %v6048
    %v6051 = vunpack.c.l.s4 1966171168
    %v6052 = vunpack.c.0.s8 %v6051
    %v6053 = vlaneseq
    %v6054 = vshrl.u32 %v6053, 7
    %v6055 = vsub.s32 %v6052, %v6054
    %v6056 = vrot.slane %v6042, %v6055
    %v6057 = vcombine.low %v6049, %v6056
    %v6058 = vcombine.low 0, %v5583
    %v6059 = vcombine.low %v5683, %v5597
    %v6060 = vcombine.low %v5697, %v5599
    %v6061 = vcombine.low %v5699, %v5601
    %v6063 = vunpack.c.l.s4 1966171168
    %v6064 = vunpack.c.0.s8 %v6063
    %v6065 = vlaneseq
    %v6066 = vshrl.u32 %v6065, 7
    %v6067 = vsub.s32 %v6064, %v6066
    %v6068 = vrot.slane %v6058, %v6067
    %v6070 = vunpack.c.l.s4 1966171168
    %v6071 = vunpack.c.0.s8 %v6070
    %v6072 = vlaneseq
    %v6073 = vshrl.u32 %v6072, 7
    %v6074 = vsub.s32 %v6071, %v6073
    %v6075 = vrot.slane %v6059, %v6074
    %v6077 = vunpack.c.l.s4 1966171168
    %v6078 = vunpack.c.0.s8 %v6077
    %v6079 = vlaneseq
    %v6080 = vshrl.u32 %v6079, 7
    %v6081 = vsub.s32 %v6078, %v6080
    %v6082 = vrot.slane %v6060, %v6081
    %v6084 = vunpack.c.l.s4 1966171168
    %v6085 = vunpack.c.0.s8 %v6084
    %v6086 = vlaneseq
    %v6087 = vshrl.u32 %v6086, 7
    %v6088 = vsub.s32 %v6085, %v6087
    %v6089 = vrot.slane %v6061, %v6088
    %v6090 = vcombine.low %v6068, %v6075
    %v6091 = vcombine.low %v6082, %v6089
    %v6093 = vunpack.c.l.s4 1966171168
    %v6094 = vunpack.c.0.s8 %v6093
    %v6095 = vlaneseq
    %v6096 = vshrl.u32 %v6095, 7
    %v6097 = vsub.s32 %v6094, %v6096
    %v6098 = vrot.slane %v6090, %v6097
    %v6100 = vunpack.c.l.s4 1966171168
    %v6101 = vunpack.c.0.s8 %v6100
    %v6102 = vlaneseq
    %v6103 = vshrl.u32 %v6102, 7
    %v6104 = vsub.s32 %v6101, %v6103
    %v6105 = vrot.slane %v6091, %v6104
    %v6106 = vcombine.low %v6098, %v6105
    %v6107 = vcombine.low 0, %v5783
    %v6108 = vcombine.low %v5883, %v5797
    %v6109 = vcombine.low %v5897, %v5799
    %v6110 = vcombine.low %v5899, %v5801
    %v6112 = vunpack.c.l.s4 1966171168
    %v6113 = vunpack.c.0.s8 %v6112
    %v6114 = vlaneseq
    %v6115 = vshrl.u32 %v6114, 7
    %v6116 = vsub.s32 %v6113, %v6115
    %v6117 = vrot.slane %v6107, %v6116
    %v6119 = vunpack.c.l.s4 1966171168
    %v6120 = vunpack.c.0.s8 %v6119
    %v6121 = vlaneseq
    %v6122 = vshrl.u32 %v6121, 7
    %v6123 = vsub.s32 %v6120, %v6122
    %v6124 = vrot.slane %v6108, %v6123
    %v6126 = vunpack.c.l.s4 1966171168
    %v6127 = vunpack.c.0.s8 %v6126
    %v6128 = vlaneseq
    %v6129 = vshrl.u32 %v6128, 7
    %v6130 = vsub.s32 %v6127, %v6129
    %v6131 = vrot.slane %v6109, %v6130
    %v6133 = vunpack.c.l.s4 1966171168
    %v6134 = vunpack.c.0.s8 %v6133
    %v6135 = vlaneseq
    %v6136 = vshrl.u32 %v6135, 7
    %v6137 = vsub.s32 %v6134, %v6136
    %v6138 = vrot.slane %v6110, %v6137
    %v6139 = vcombine.low %v6117, %v6124
    %v6140 = vcombine.low %v6131, %v6138
    %v6142 = vunpack.c.l.s4 1966171168
    %v6143 = vunpack.c.0.s8 %v6142
    %v6144 = vlaneseq
    %v6145 = vshrl.u32 %v6144, 7
    %v6146 = vsub.s32 %v6143, %v6145
    %v6147 = vrot.slane %v6139, %v6146
    %v6149 = vunpack.c.l.s4 1966171168
    %v6150 = vunpack.c.0.s8 %v6149
    %v6151 = vlaneseq
    %v6152 = vshrl.u32 %v6151, 7
    %v6153 = vsub.s32 %v6150, %v6152
    %v6154 = vrot.slane %v6140, %v6153
    %v6155 = vcombine.low %v6147, %v6154
    %v6156 = vcombine.low 0, %v5625
    %v6157 = vcombine.low %v5725, %v5639
    %v6158 = vcombine.low %v5739, %v5647
    %v6159 = vcombine.low %v5747, %v5649
    %v6161 = vunpack.c.l.s4 1966171168
    %v6162 = vunpack.c.0.s8 %v6161
    %v6163 = vlaneseq
    %v6164 = vshrl.u32 %v6163, 7
    %v6165 = vsub.s32 %v6162, %v6164
    %v6166 = vrot.slane %v6156, %v6165
    %v6168 = vunpack.c.l.s4 1966171168
    %v6169 = vunpack.c.0.s8 %v6168
    %v6170 = vlaneseq
    %v6171 = vshrl.u32 %v6170, 7
    %v6172 = vsub.s32 %v6169, %v6171
    %v6173 = vrot.slane %v6157, %v6172
    %v6175 = vunpack.c.l.s4 1966171168
    %v6176 = vunpack.c.0.s8 %v6175
    %v6177 = vlaneseq
    %v6178 = vshrl.u32 %v6177, 7
    %v6179 = vsub.s32 %v6176, %v6178
    %v6180 = vrot.slane %v6158, %v6179
    %v6182 = vunpack.c.l.s4 1966171168
    %v6183 = vunpack.c.0.s8 %v6182
    %v6184 = vlaneseq
    %v6185 = vshrl.u32 %v6184, 7
    %v6186 = vsub.s32 %v6183, %v6185
    %v6187 = vrot.slane %v6159, %v6186
    %v6188 = vcombine.low %v6166, %v6173
    %v6189 = vcombine.low %v6180, %v6187
    %v6191 = vunpack.c.l.s4 1966171168
    %v6192 = vunpack.c.0.s8 %v6191
    %v6193 = vlaneseq
    %v6194 = vshrl.u32 %v6193, 7
    %v6195 = vsub.s32 %v6192, %v6194
    %v6196 = vrot.slane %v6188, %v6195
    %v6198 = vunpack.c.l.s4 1966171168
    %v6199 = vunpack.c.0.s8 %v6198
    %v6200 = vlaneseq
    %v6201 = vshrl.u32 %v6200, 7
    %v6202 = vsub.s32 %v6199, %v6201
    %v6203 = vrot.slane %v6189, %v6202
    %v6204 = vcombine.low %v6196, %v6203
    %v6205 = vcombine.low 0, %v5825
    %v6206 = vcombine.low %v5925, %v5839
    %v6207 = vcombine.low %v5939, %v5847
    %v6208 = vcombine.low %v5947, %v5849
    %v6210 = vunpack.c.l.s4 1966171168
    %v6211 = vunpack.c.0.s8 %v6210
    %v6212 = vlaneseq
    %v6213 = vshrl.u32 %v6212, 7
    %v6214 = vsub.s32 %v6211, %v6213
    %v6215 = vrot.slane %v6205, %v6214
    %v6217 = vunpack.c.l.s4 1966171168
    %v6218 = vunpack.c.0.s8 %v6217
    %v6219 = vlaneseq
    %v6220 = vshrl.u32 %v6219, 7
    %v6221 = vsub.s32 %v6218, %v6220
    %v6222 = vrot.slane %v6206, %v6221
    %v6224 = vunpack.c.l.s4 1966171168
    %v6225 = vunpack.c.0.s8 %v6224
    %v6226 = vlaneseq
    %v6227 = vshrl.u32 %v6226, 7
    %v6228 = vsub.s32 %v6225, %v6227
    %v6229 = vrot.slane %v6207, %v6228
    %v6231 = vunpack.c.l.s4 1966171168
    %v6232 = vunpack.c.0.s8 %v6231
    %v6233 = vlaneseq
    %v6234 = vshrl.u32 %v6233, 7
    %v6235 = vsub.s32 %v6232, %v6234
    %v6236 = vrot.slane %v6208, %v6235
    %v6237 = vcombine.low %v6215, %v6222
    %v6238 = vcombine.low %v6229, %v6236
    %v6240 = vunpack.c.l.s4 1966171168
    %v6241 = vunpack.c.0.s8 %v6240
    %v6242 = vlaneseq
    %v6243 = vshrl.u32 %v6242, 7
    %v6244 = vsub.s32 %v6241, %v6243
    %v6245 = vrot.slane %v6237, %v6244
    %v6247 = vunpack.c.l.s4 1966171168
    %v6248 = vunpack.c.0.s8 %v6247
    %v6249 = vlaneseq
    %v6250 = vshrl.u32 %v6249, 7
    %v6251 = vsub.s32 %v6248, %v6250
    %v6252 = vrot.slane %v6238, %v6251
    %v6253 = vcombine.low %v6245, %v6252
    %v6254 = vcombine.low 0, %v5632
    %v6255 = vcombine.low %v5732, %v5646
    %v6256 = vcombine.low %v5746, %v5648
    %v6257 = vcombine.low %v5748, %v5650
    %v6259 = vunpack.c.l.s4 1966171168
    %v6260 = vunpack.c.0.s8 %v6259
    %v6261 = vlaneseq
    %v6262 = vshrl.u32 %v6261, 7
    %v6263 = vsub.s32 %v6260, %v6262
    %v6264 = vrot.slane %v6254, %v6263
    %v6266 = vunpack.c.l.s4 1966171168
    %v6267 = vunpack.c.0.s8 %v6266
    %v6268 = vlaneseq
    %v6269 = vshrl.u32 %v6268, 7
    %v6270 = vsub.s32 %v6267, %v6269
    %v6271 = vrot.slane %v6255, %v6270
    %v6273 = vunpack.c.l.s4 1966171168
    %v6274 = vunpack.c.0.s8 %v6273
    %v6275 = vlaneseq
    %v6276 = vshrl.u32 %v6275, 7
    %v6277 = vsub.s32 %v6274, %v6276
    %v6278 = vrot.slane %v6256, %v6277
    %v6280 = vunpack.c.l.s4 1966171168
    %v6281 = vunpack.c.0.s8 %v6280
    %v6282 = vlaneseq
    %v6283 = vshrl.u32 %v6282, 7
    %v6284 = vsub.s32 %v6281, %v6283
    %v6285 = vrot.slane %v6257, %v6284
    %v6286 = vcombine.low %v6264, %v6271
    %v6287 = vcombine.low %v6278, %v6285
    %v6289 = vunpack.c.l.s4 1966171168
    %v6290 = vunpack.c.0.s8 %v6289
    %v6291 = vlaneseq
    %v6292 = vshrl.u32 %v6291, 7
    %v6293 = vsub.s32 %v6290, %v6292
    %v6294 = vrot.slane %v6286, %v6293
    %v6296 = vunpack.c.l.s4 1966171168
    %v6297 = vunpack.c.0.s8 %v6296
    %v6298 = vlaneseq
    %v6299 = vshrl.u32 %v6298, 7
    %v6300 = vsub.s32 %v6297, %v6299
    %v6301 = vrot.slane %v6287, %v6300
    %v6302 = vcombine.low %v6294, %v6301
    %v6311 = vcombine.low %v5576, %v5676
    %v6312 = vcombine.low %v5590, %v5690
    %v6313 = vcombine.low %v5598, %v5698
    %v6314 = vcombine.low %v5600, %v5700
    %v6316 = vunpack.c.l.s4 1966171168
    %v6317 = vunpack.c.0.s8 %v6316
    %v6318 = vlaneseq
    %v6319 = vshrl.u32 %v6318, 7
    %v6320 = vsub.s32 %v6317, %v6319
    %v6321 = vrot.slane %v6311, %v6320
    %v6323 = vunpack.c.l.s4 1966171168
    %v6324 = vunpack.c.0.s8 %v6323
    %v6325 = vlaneseq
    %v6326 = vshrl.u32 %v6325, 7
    %v6327 = vsub.s32 %v6324, %v6326
    %v6328 = vrot.slane %v6312, %v6327
    %v6330 = vunpack.c.l.s4 1966171168
    %v6331 = vunpack.c.0.s8 %v6330
    %v6332 = vlaneseq
    %v6333 = vshrl.u32 %v6332, 7
    %v6334 = vsub.s32 %v6331, %v6333
    %v6335 = vrot.slane %v6313, %v6334
    %v6337 = vunpack.c.l.s4 1966171168
    %v6338 = vunpack.c.0.s8 %v6337
    %v6339 = vlaneseq
    %v6340 = vshrl.u32 %v6339, 7
    %v6341 = vsub.s32 %v6338, %v6340
    %v6342 = vrot.slane %v6314, %v6341
    %v6343 = vcombine.low %v6321, %v6328
    %v6344 = vcombine.low %v6335, %v6342
    %v6346 = vunpack.c.l.s4 1966171168
    %v6347 = vunpack.c.0.s8 %v6346
    %v6348 = vlaneseq
    %v6349 = vshrl.u32 %v6348, 7
    %v6350 = vsub.s32 %v6347, %v6349
    %v6351 = vrot.slane %v6343, %v6350
    %v6353 = vunpack.c.l.s4 1966171168
    %v6354 = vunpack.c.0.s8 %v6353
    %v6355 = vlaneseq
    %v6356 = vshrl.u32 %v6355, 7
    %v6357 = vsub.s32 %v6354, %v6356
    %v6358 = vrot.slane %v6344, %v6357
    %v6359 = vcombine.low %v6351, %v6358
    %v6360 = vcombine.low %v5776, %v5876
    %v6361 = vcombine.low %v5790, %v5890
    %v6362 = vcombine.low %v5798, %v5898
    %v6363 = vcombine.low %v5800, %v5900
    %v6365 = vunpack.c.l.s4 1966171168
    %v6366 = vunpack.c.0.s8 %v6365
    %v6367 = vlaneseq
    %v6368 = vshrl.u32 %v6367, 7
    %v6369 = vsub.s32 %v6366, %v6368
    %v6370 = vrot.slane %v6360, %v6369
    %v6372 = vunpack.c.l.s4 1966171168
    %v6373 = vunpack.c.0.s8 %v6372
    %v6374 = vlaneseq
    %v6375 = vshrl.u32 %v6374, 7
    %v6376 = vsub.s32 %v6373, %v6375
    %v6377 = vrot.slane %v6361, %v6376
    %v6379 = vunpack.c.l.s4 1966171168
    %v6380 = vunpack.c.0.s8 %v6379
    %v6381 = vlaneseq
    %v6382 = vshrl.u32 %v6381, 7
    %v6383 = vsub.s32 %v6380, %v6382
    %v6384 = vrot.slane %v6362, %v6383
    %v6386 = vunpack.c.l.s4 1966171168
    %v6387 = vunpack.c.0.s8 %v6386
    %v6388 = vlaneseq
    %v6389 = vshrl.u32 %v6388, 7
    %v6390 = vsub.s32 %v6387, %v6389
    %v6391 = vrot.slane %v6363, %v6390
    %v6392 = vcombine.low %v6370, %v6377
    %v6393 = vcombine.low %v6384, %v6391
    %v6395 = vunpack.c.l.s4 1966171168
    %v6396 = vunpack.c.0.s8 %v6395
    %v6397 = vlaneseq
    %v6398 = vshrl.u32 %v6397, 7
    %v6399 = vsub.s32 %v6396, %v6398
    %v6400 = vrot.slane %v6392, %v6399
    %v6402 = vunpack.c.l.s4 1966171168
    %v6403 = vunpack.c.0.s8 %v6402
    %v6404 = vlaneseq
    %v6405 = vshrl.u32 %v6404, 7
    %v6406 = vsub.s32 %v6403, %v6405
    %v6407 = vrot.slane %v6393, %v6406
    %v6408 = vcombine.low %v6400, %v6407
    %v6409 = vcombine.low %v5583, %v5683
    %v6410 = vcombine.low %v5597, %v5697
    %v6411 = vcombine.low %v5599, %v5699
    %v6412 = vcombine.low %v5601, %v5701
    %v6414 = vunpack.c.l.s4 1966171168
    %v6415 = vunpack.c.0.s8 %v6414
    %v6416 = vlaneseq
    %v6417 = vshrl.u32 %v6416, 7
    %v6418 = vsub.s32 %v6415, %v6417
    %v6419 = vrot.slane %v6409, %v6418
    %v6421 = vunpack.c.l.s4 1966171168
    %v6422 = vunpack.c.0.s8 %v6421
    %v6423 = vlaneseq
    %v6424 = vshrl.u32 %v6423, 7
    %v6425 = vsub.s32 %v6422, %v6424
    %v6426 = vrot.slane %v6410, %v6425
    %v6428 = vunpack.c.l.s4 1966171168
    %v6429 = vunpack.c.0.s8 %v6428
    %v6430 = vlaneseq
    %v6431 = vshrl.u32 %v6430, 7
    %v6432 = vsub.s32 %v6429, %v6431
    %v6433 = vrot.slane %v6411, %v6432
    %v6435 = vunpack.c.l.s4 1966171168
    %v6436 = vunpack.c.0.s8 %v6435
    %v6437 = vlaneseq
    %v6438 = vshrl.u32 %v6437, 7
    %v6439 = vsub.s32 %v6436, %v6438
    %v6440 = vrot.slane %v6412, %v6439
    %v6441 = vcombine.low %v6419, %v6426
    %v6442 = vcombine.low %v6433, %v6440
    %v6444 = vunpack.c.l.s4 1966171168
    %v6445 = vunpack.c.0.s8 %v6444
    %v6446 = vlaneseq
    %v6447 = vshrl.u32 %v6446, 7
    %v6448 = vsub.s32 %v6445, %v6447
    %v6449 = vrot.slane %v6441, %v6448
    %v6451 = vunpack.c.l.s4 1966171168
    %v6452 = vunpack.c.0.s8 %v6451
    %v6453 = vlaneseq
    %v6454 = vshrl.u32 %v6453, 7
    %v6455 = vsub.s32 %v6452, %v6454
    %v6456 = vrot.slane %v6442, %v6455
    %v6457 = vcombine.low %v6449, %v6456
    %v6458 = vcombine.low %v5783, %v5883
    %v6459 = vcombine.low %v5797, %v5897
    %v6460 = vcombine.low %v5799, %v5899
    %v6461 = vcombine.low %v5801, %v5901
    %v6463 = vunpack.c.l.s4 1966171168
    %v6464 = vunpack.c.0.s8 %v6463
    %v6465 = vlaneseq
    %v6466 = vshrl.u32 %v6465, 7
    %v6467 = vsub.s32 %v6464, %v6466
    %v6468 = vrot.slane %v6458, %v6467
    %v6470 = vunpack.c.l.s4 1966171168
    %v6471 = vunpack.c.0.s8 %v6470
    %v6472 = vlaneseq
    %v6473 = vshrl.u32 %v6472, 7
    %v6474 = vsub.s32 %v6471, %v6473
    %v6475 = vrot.slane %v6459, %v6474
    %v6477 = vunpack.c.l.s4 1966171168
    %v6478 = vunpack.c.0.s8 %v6477
    %v6479 = vlaneseq
    %v6480 = vshrl.u32 %v6479, 7
    %v6481 = vsub.s32 %v6478, %v6480
    %v6482 = vrot.slane %v6460, %v6481
    %v6484 = vunpack.c.l.s4 1966171168
    %v6485 = vunpack.c.0.s8 %v6484
    %v6486 = vlaneseq
    %v6487 = vshrl.u32 %v6486, 7
    %v6488 = vsub.s32 %v6485, %v6487
    %v6489 = vrot.slane %v6461, %v6488
    %v6490 = vcombine.low %v6468, %v6475
    %v6491 = vcombine.low %v6482, %v6489
    %v6493 = vunpack.c.l.s4 1966171168
    %v6494 = vunpack.c.0.s8 %v6493
    %v6495 = vlaneseq
    %v6496 = vshrl.u32 %v6495, 7
    %v6497 = vsub.s32 %v6494, %v6496
    %v6498 = vrot.slane %v6490, %v6497
    %v6500 = vunpack.c.l.s4 1966171168
    %v6501 = vunpack.c.0.s8 %v6500
    %v6502 = vlaneseq
    %v6503 = vshrl.u32 %v6502, 7
    %v6504 = vsub.s32 %v6501, %v6503
    %v6505 = vrot.slane %v6491, %v6504
    %v6506 = vcombine.low %v6498, %v6505
    %v6507 = vcombine.low %v5625, %v5725
    %v6508 = vcombine.low %v5639, %v5739
    %v6509 = vcombine.low %v5647, %v5747
    %v6510 = vcombine.low %v5649, %v5749
    %v6512 = vunpack.c.l.s4 1966171168
    %v6513 = vunpack.c.0.s8 %v6512
    %v6514 = vlaneseq
    %v6515 = vshrl.u32 %v6514, 7
    %v6516 = vsub.s32 %v6513, %v6515
    %v6517 = vrot.slane %v6507, %v6516
    %v6519 = vunpack.c.l.s4 1966171168
    %v6520 = vunpack.c.0.s8 %v6519
    %v6521 = vlaneseq
    %v6522 = vshrl.u32 %v6521, 7
    %v6523 = vsub.s32 %v6520, %v6522
    %v6524 = vrot.slane %v6508, %v6523
    %v6526 = vunpack.c.l.s4 1966171168
    %v6527 = vunpack.c.0.s8 %v6526
    %v6528 = vlaneseq
    %v6529 = vshrl.u32 %v6528, 7
    %v6530 = vsub.s32 %v6527, %v6529
    %v6531 = vrot.slane %v6509, %v6530
    %v6533 = vunpack.c.l.s4 1966171168
    %v6534 = vunpack.c.0.s8 %v6533
    %v6535 = vlaneseq
    %v6536 = vshrl.u32 %v6535, 7
    %v6537 = vsub.s32 %v6534, %v6536
    %v6538 = vrot.slane %v6510, %v6537
    %v6539 = vcombine.low %v6517, %v6524
    %v6540 = vcombine.low %v6531, %v6538
    %v6542 = vunpack.c.l.s4 1966171168
    %v6543 = vunpack.c.0.s8 %v6542
    %v6544 = vlaneseq
    %v6545 = vshrl.u32 %v6544, 7
    %v6546 = vsub.s32 %v6543, %v6545
    %v6547 = vrot.slane %v6539, %v6546
    %v6549 = vunpack.c.l.s4 1966171168
    %v6550 = vunpack.c.0.s8 %v6549
    %v6551 = vlaneseq
    %v6552 = vshrl.u32 %v6551, 7
    %v6553 = vsub.s32 %v6550, %v6552
    %v6554 = vrot.slane %v6540, %v6553
    %v6555 = vcombine.low %v6547, %v6554
    %v6556 = vcombine.low %v5825, %v5925
    %v6557 = vcombine.low %v5839, %v5939
    %v6558 = vcombine.low %v5847, %v5947
    %v6559 = vcombine.low %v5849, %v5949
    %v6561 = vunpack.c.l.s4 1966171168
    %v6562 = vunpack.c.0.s8 %v6561
    %v6563 = vlaneseq
    %v6564 = vshrl.u32 %v6563, 7
    %v6565 = vsub.s32 %v6562, %v6564
    %v6566 = vrot.slane %v6556, %v6565
    %v6568 = vunpack.c.l.s4 1966171168
    %v6569 = vunpack.c.0.s8 %v6568
    %v6570 = vlaneseq
    %v6571 = vshrl.u32 %v6570, 7
    %v6572 = vsub.s32 %v6569, %v6571
    %v6573 = vrot.slane %v6557, %v6572
    %v6575 = vunpack.c.l.s4 1966171168
    %v6576 = vunpack.c.0.s8 %v6575
    %v6577 = vlaneseq
    %v6578 = vshrl.u32 %v6577, 7
    %v6579 = vsub.s32 %v6576, %v6578
    %v6580 = vrot.slane %v6558, %v6579
    %v6582 = vunpack.c.l.s4 1966171168
    %v6583 = vunpack.c.0.s8 %v6582
    %v6584 = vlaneseq
    %v6585 = vshrl.u32 %v6584, 7
    %v6586 = vsub.s32 %v6583, %v6585
    %v6587 = vrot.slane %v6559, %v6586
    %v6588 = vcombine.low %v6566, %v6573
    %v6589 = vcombine.low %v6580, %v6587
    %v6591 = vunpack.c.l.s4 1966171168
    %v6592 = vunpack.c.0.s8 %v6591
    %v6593 = vlaneseq
    %v6594 = vshrl.u32 %v6593, 7
    %v6595 = vsub.s32 %v6592, %v6594
    %v6596 = vrot.slane %v6588, %v6595
    %v6598 = vunpack.c.l.s4 1966171168
    %v6599 = vunpack.c.0.s8 %v6598
    %v6600 = vlaneseq
    %v6601 = vshrl.u32 %v6600, 7
    %v6602 = vsub.s32 %v6599, %v6601
    %v6603 = vrot.slane %v6589, %v6602
    %v6604 = vcombine.low %v6596, %v6603
    %v6605 = vcombine.low %v5632, %v5732
    %v6606 = vcombine.low %v5646, %v5746
    %v6607 = vcombine.low %v5648, %v5748
    %v6608 = vcombine.low %v5650, %v5750
    %v6610 = vunpack.c.l.s4 1966171168
    %v6611 = vunpack.c.0.s8 %v6610
    %v6612 = vlaneseq
    %v6613 = vshrl.u32 %v6612, 7
    %v6614 = vsub.s32 %v6611, %v6613
    %v6615 = vrot.slane %v6605, %v6614
    %v6617 = vunpack.c.l.s4 1966171168
    %v6618 = vunpack.c.0.s8 %v6617
    %v6619 = vlaneseq
    %v6620 = vshrl.u32 %v6619, 7
    %v6621 = vsub.s32 %v6618, %v6620
    %v6622 = vrot.slane %v6606, %v6621
    %v6624 = vunpack.c.l.s4 1966171168
    %v6625 = vunpack.c.0.s8 %v6624
    %v6626 = vlaneseq
    %v6627 = vshrl.u32 %v6626, 7
    %v6628 = vsub.s32 %v6625, %v6627
    %v6629 = vrot.slane %v6607, %v6628
    %v6631 = vunpack.c.l.s4 1966171168
    %v6632 = vunpack.c.0.s8 %v6631
    %v6633 = vlaneseq
    %v6634 = vshrl.u32 %v6633, 7
    %v6635 = vsub.s32 %v6632, %v6634
    %v6636 = vrot.slane %v6608, %v6635
    %v6637 = vcombine.low %v6615, %v6622
    %v6638 = vcombine.low %v6629, %v6636
    %v6640 = vunpack.c.l.s4 1966171168
    %v6641 = vunpack.c.0.s8 %v6640
    %v6642 = vlaneseq
    %v6643 = vshrl.u32 %v6642, 7
    %v6644 = vsub.s32 %v6641, %v6643
    %v6645 = vrot.slane %v6637, %v6644
    %v6647 = vunpack.c.l.s4 1966171168
    %v6648 = vunpack.c.0.s8 %v6647
    %v6649 = vlaneseq
    %v6650 = vshrl.u32 %v6649, 7
    %v6651 = vsub.s32 %v6648, %v6650
    %v6652 = vrot.slane %v6638, %v6651
    %v6653 = vcombine.low %v6645, %v6652
    %v6661 = vcombine.low 0, %v5832
    %v6662 = vcombine.low %v5932, %v5846
    %v6663 = vcombine.low %v5946, %v5848
    %v6664 = vcombine.low %v5948, %v5850
    %v6666 = vunpack.c.l.s4 1966171168
    %v6667 = vunpack.c.0.s8 %v6666
    %v6668 = vlaneseq
    %v6669 = vshrl.u32 %v6668, 7
    %v6670 = vsub.s32 %v6667, %v6669
    %v6671 = vrot.slane %v6661, %v6670
    %v6673 = vunpack.c.l.s4 1966171168
    %v6674 = vunpack.c.0.s8 %v6673
    %v6675 = vlaneseq
    %v6676 = vshrl.u32 %v6675, 7
    %v6677 = vsub.s32 %v6674, %v6676
    %v6678 = vrot.slane %v6662, %v6677
    %v6680 = vunpack.c.l.s4 1966171168
    %v6681 = vunpack.c.0.s8 %v6680
    %v6682 = vlaneseq
    %v6683 = vshrl.u32 %v6682, 7
    %v6684 = vsub.s32 %v6681, %v6683
    %v6685 = vrot.slane %v6663, %v6684
    %v6687 = vunpack.c.l.s4 1966171168
    %v6688 = vunpack.c.0.s8 %v6687
    %v6689 = vlaneseq
    %v6690 = vshrl.u32 %v6689, 7
    %v6691 = vsub.s32 %v6688, %v6690
    %v6692 = vrot.slane %v6664, %v6691
    %v6693 = vcombine.low %v6671, %v6678
    %v6694 = vcombine.low %v6685, %v6692
    %v6696 = vunpack.c.l.s4 1966171168
    %v6697 = vunpack.c.0.s8 %v6696
    %v6698 = vlaneseq
    %v6699 = vshrl.u32 %v6698, 7
    %v6700 = vsub.s32 %v6697, %v6699
    %v6701 = vrot.slane %v6693, %v6700
    %v6703 = vunpack.c.l.s4 1966171168
    %v6704 = vunpack.c.0.s8 %v6703
    %v6705 = vlaneseq
    %v6706 = vshrl.u32 %v6705, 7
    %v6707 = vsub.s32 %v6704, %v6706
    %v6708 = vrot.slane %v6694, %v6707
    %v6709 = vcombine.low %v6701, %v6708
    %v6711 = vcombine.low %v5832, %v5932
    %v6712 = vcombine.low %v5846, %v5946
    %v6713 = vcombine.low %v5848, %v5948
    %v6714 = vcombine.low %v5850, %v5950
    %v6716 = vunpack.c.l.s4 1966171168
    %v6717 = vunpack.c.0.s8 %v6716
    %v6718 = vlaneseq
    %v6719 = vshrl.u32 %v6718, 7
    %v6720 = vsub.s32 %v6717, %v6719
    %v6721 = vrot.slane %v6711, %v6720
    %v6723 = vunpack.c.l.s4 1966171168
    %v6724 = vunpack.c.0.s8 %v6723
    %v6725 = vlaneseq
    %v6726 = vshrl.u32 %v6725, 7
    %v6727 = vsub.s32 %v6724, %v6726
    %v6728 = vrot.slane %v6712, %v6727
    %v6730 = vunpack.c.l.s4 1966171168
    %v6731 = vunpack.c.0.s8 %v6730
    %v6732 = vlaneseq
    %v6733 = vshrl.u32 %v6732, 7
    %v6734 = vsub.s32 %v6731, %v6733
    %v6735 = vrot.slane %v6713, %v6734
    %v6737 = vunpack.c.l.s4 1966171168
    %v6738 = vunpack.c.0.s8 %v6737
    %v6739 = vlaneseq
    %v6740 = vshrl.u32 %v6739, 7
    %v6741 = vsub.s32 %v6738, %v6740
    %v6742 = vrot.slane %v6714, %v6741
    %v6743 = vcombine.low %v6721, %v6728
    %v6744 = vcombine.low %v6735, %v6742
    %v6746 = vunpack.c.l.s4 1966171168
    %v6747 = vunpack.c.0.s8 %v6746
    %v6748 = vlaneseq
    %v6749 = vshrl.u32 %v6748, 7
    %v6750 = vsub.s32 %v6747, %v6749
    %v6751 = vrot.slane %v6743, %v6750
    %v6753 = vunpack.c.l.s4 1966171168
    %v6754 = vunpack.c.0.s8 %v6753
    %v6755 = vlaneseq
    %v6756 = vshrl.u32 %v6755, 7
    %v6757 = vsub.s32 %v6754, %v6756
    %v6758 = vrot.slane %v6744, %v6757
    %v6759 = vcombine.low %v6751, %v6758
    %v6761 = vld [vmem:[#allocation9] sm:$0xf]
    %v6762 = vld [vmem:[#allocation9 + $0x4] sm:$0xf]
    %v6763 = vld [vmem:[#allocation9 + $0x8] sm:$0xf]
    %v6764 = vld [vmem:[#allocation9 + $0xc] sm:$0xf]
    %v6765 = vld [vmem:[#allocation9 + $0x10] sm:$0xf]
    %v6766 = vld [vmem:[#allocation9 + $0x14] sm:$0xf]
    %v6767 = vld [vmem:[#allocation9 + $0x18] sm:$0xf]
    %v6768 = vld [vmem:[#allocation9 + $0x1c] sm:$0xf]
    %v6769 = vld [vmem:[#allocation9 + $0x20] sm:$0xf]
    %v6770 = vld [vmem:[#allocation9 + $0x24] sm:$0xf]
    %v6771 = vld [vmem:[#allocation9 + $0x28] sm:$0xf]
    %v6772 = vld [vmem:[#allocation9 + $0x2c] sm:$0xf]
    %v6773 = vld [vmem:[#allocation9 + $0x30] sm:$0xf]
    %v6774 = vld [vmem:[#allocation9 + $0x34] sm:$0xf]
    %v6775 = vld [vmem:[#allocation9 + $0x38] sm:$0xf]
    %v6776 = vld [vmem:[#allocation9 + $0x3c] sm:$0xf]
    %v6777 = vld [vmem:[#allocation9 + $0x40] sm:$0xf]
    %v6778 = vld [vmem:[#allocation9 + $0x44] sm:$0xf]
    %v6779 = vld [vmem:[#allocation9 + $0x48] sm:$0xf]
    %v6780 = vld [vmem:[#allocation9 + $0x4c] sm:$0xf]
    %v6781 = vld [vmem:[#allocation9 + $0x50] sm:$0xf]
    %v6782 = vld [vmem:[#allocation9 + $0x54] sm:$0xf]
    %v6783 = vld [vmem:[#allocation9 + $0x58] sm:$0xf]
    %v6784 = vld [vmem:[#allocation9 + $0x5c] sm:$0xf]
    %v6785 = vld [vmem:[#allocation9 + $0x60] sm:$0xf]
    %v6786 = vld [vmem:[#allocation9 + $0x64] sm:$0xf]
    %v6787 = vld [vmem:[#allocation9 + $0x68] sm:$0xf]
    %v6788 = vld [vmem:[#allocation9 + $0x6c] sm:$0xf]
    %v6789 = vld [vmem:[#allocation9 + $0x70] sm:$0xf]
    %v6790 = vld [vmem:[#allocation9 + $0x74] sm:$0xf]
    %v6791 = vld [vmem:[#allocation9 + $0x78] sm:$0xf]
    %v6792 = vld [vmem:[#allocation9 + $0x7c] sm:$0xf]
    %v6793 = vld [vmem:[#allocation9 + $0x80] sm:$0xf]
    %v6794 = vld [vmem:[#allocation9 + $0x84] sm:$0xf]
    %v6795 = vld [vmem:[#allocation9 + $0x88] sm:$0xf]
    %v6796 = vld [vmem:[#allocation9 + $0x8c] sm:$0xf]
    %v6797 = vld [vmem:[#allocation9 + $0x90] sm:$0xf]
    %v6798 = vld [vmem:[#allocation9 + $0x94] sm:$0xf]
    %v6799 = vld [vmem:[#allocation9 + $0x98] sm:$0xf]
    %v6800 = vld [vmem:[#allocation9 + $0x9c] sm:$0xf]
    %v6801 = vld [vmem:[#allocation9 + $0xa0] sm:$0xf]
    %v6802 = vld [vmem:[#allocation9 + $0xa4] sm:$0xf]
    %v6803 = vld [vmem:[#allocation9 + $0xa8] sm:$0xf]
    %v6804 = vld [vmem:[#allocation9 + $0xac] sm:$0xf]
    %v6805 = vld [vmem:[#allocation9 + $0xb0] sm:$0xf]
    %v6806 = vld [vmem:[#allocation9 + $0xb4] sm:$0xf]
    %v6807 = vld [vmem:[#allocation9 + $0xb8] sm:$0xf]
    %v6808 = vld [vmem:[#allocation9 + $0xbc] sm:$0xf]
    %v6809 = vld [vmem:[#allocation9 + $0xc0] sm:$0xf]
    %v6810 = vld [vmem:[#allocation9 + $0xc4] sm:$0xf]
    %v6811 = vld [vmem:[#allocation9 + $0xc8] sm:$0xf]
    %v6812 = vld [vmem:[#allocation9 + $0xcc] sm:$0xf]
    %v6813 = vld [vmem:[#allocation9 + $0xd0] sm:$0xf]
    %v6814 = vld [vmem:[#allocation9 + $0xd4] sm:$0xf]
    %v6815 = vld [vmem:[#allocation9 + $0xd8] sm:$0xf]
    %v6816 = vld [vmem:[#allocation9 + $0xdc] sm:$0xf]
    %v6817 = vld [vmem:[#allocation9 + $0xe0] sm:$0xf]
    %v6818 = vld [vmem:[#allocation9 + $0xe4] sm:$0xf]
    %v6819 = vld [vmem:[#allocation9 + $0xe8] sm:$0xf]
    %v6820 = vld [vmem:[#allocation9 + $0xec] sm:$0xf]
    %v6821 = vld [vmem:[#allocation9 + $0xf0] sm:$0xf]
    %v6822 = vld [vmem:[#allocation9 + $0xf4] sm:$0xf]
    %v6823 = vld [vmem:[#allocation9 + $0xf8] sm:$0xf]
    %v6824 = vld [vmem:[#allocation9 + $0xfc] sm:$0xf]
    %v6889 = vunpack.c.l.b16 %v6761
    %v6890 = vunpack.c.l.b16 %v6762
    %v6891 = vunpack.c.l.b16 %v6763
    %v6892 = vunpack.c.l.b16 %v6764
    %v6893 = vunpack.c.l.b16 %v6765
    %v6894 = vunpack.c.l.b16 %v6766
    %v6895 = vunpack.c.l.b16 %v6767
    %v6896 = vunpack.c.l.b16 %v6768
    %v6897 = vunpack.c.l.b16 %v6769
    %v6898 = vunpack.c.l.b16 %v6770
    %v6899 = vunpack.c.l.b16 %v6771
    %v6900 = vunpack.c.l.b16 %v6772
    %v6901 = vunpack.c.l.b16 %v6773
    %v6902 = vunpack.c.l.b16 %v6774
    %v6903 = vunpack.c.l.b16 %v6775
    %v6904 = vunpack.c.l.b16 %v6776
    %v6905 = vunpack.c.l.b16 %v6777
    %v6906 = vunpack.c.l.b16 %v6778
    %v6907 = vunpack.c.l.b16 %v6779
    %v6908 = vunpack.c.l.b16 %v6780
    %v6909 = vunpack.c.l.b16 %v6781
    %v6910 = vunpack.c.l.b16 %v6782
    %v6911 = vunpack.c.l.b16 %v6783
    %v6912 = vunpack.c.l.b16 %v6784
    %v6913 = vunpack.c.l.b16 %v6785
    %v6914 = vunpack.c.l.b16 %v6786
    %v6915 = vunpack.c.l.b16 %v6787
    %v6916 = vunpack.c.l.b16 %v6788
    %v6917 = vunpack.c.l.b16 %v6789
    %v6918 = vunpack.c.l.b16 %v6790
    %v6919 = vunpack.c.l.b16 %v6791
    %v6920 = vunpack.c.l.b16 %v6792
    %v6921 = vunpack.c.l.b16 %v6793
    %v6922 = vunpack.c.l.b16 %v6794
    %v6923 = vunpack.c.l.b16 %v6795
    %v6924 = vunpack.c.l.b16 %v6796
    %v6925 = vunpack.c.l.b16 %v6797
    %v6926 = vunpack.c.l.b16 %v6798
    %v6927 = vunpack.c.l.b16 %v6799
    %v6928 = vunpack.c.l.b16 %v6800
    %v6929 = vunpack.c.l.b16 %v6801
    %v6930 = vunpack.c.l.b16 %v6802
    %v6931 = vunpack.c.l.b16 %v6803
    %v6932 = vunpack.c.l.b16 %v6804
    %v6933 = vunpack.c.l.b16 %v6805
    %v6934 = vunpack.c.l.b16 %v6806
    %v6935 = vunpack.c.l.b16 %v6807
    %v6936 = vunpack.c.l.b16 %v6808
    %v6937 = vunpack.c.l.b16 %v6809
    %v6938 = vunpack.c.l.b16 %v6810
    %v6939 = vunpack.c.l.b16 %v6811
    %v6940 = vunpack.c.l.b16 %v6812
    %v6941 = vunpack.c.l.b16 %v6813
    %v6942 = vunpack.c.l.b16 %v6814
    %v6943 = vunpack.c.l.b16 %v6815
    %v6944 = vunpack.c.l.b16 %v6816
    %v6945 = vunpack.c.l.b16 %v6817
    %v6946 = vunpack.c.l.b16 %v6818
    %v6947 = vunpack.c.l.b16 %v6819
    %v6948 = vunpack.c.l.b16 %v6820
    %v6949 = vunpack.c.l.b16 %v6821
    %v6950 = vunpack.c.l.b16 %v6822
    %v6951 = vunpack.c.l.b16 %v6823
    %v6952 = vunpack.c.l.b16 %v6824
    %v6953 = vpack.c.b16 %v6890, %v6889
    %v6954 = vpack.c.b16 %v6892, %v6891
    %v6955 = vpack.c.b16 %v6894, %v6893
    %v6956 = vpack.c.b16 %v6896, %v6895
    %v6957 = vpack.c.b16 %v6898, %v6897
    %v6958 = vpack.c.b16 %v6900, %v6899
    %v6959 = vpack.c.b16 %v6902, %v6901
    %v6960 = vpack.c.b16 %v6904, %v6903
    %v6961 = vpack.c.b16 %v6906, %v6905
    %v6962 = vpack.c.b16 %v6908, %v6907
    %v6963 = vpack.c.b16 %v6910, %v6909
    %v6964 = vpack.c.b16 %v6912, %v6911
    %v6965 = vpack.c.b16 %v6914, %v6913
    %v6966 = vpack.c.b16 %v6916, %v6915
    %v6967 = vpack.c.b16 %v6918, %v6917
    %v6968 = vpack.c.b16 %v6920, %v6919
    %v6969 = vpack.c.b16 %v6922, %v6921
    %v6970 = vpack.c.b16 %v6924, %v6923
    %v6971 = vpack.c.b16 %v6926, %v6925
    %v6972 = vpack.c.b16 %v6928, %v6927
    %v6973 = vpack.c.b16 %v6930, %v6929
    %v6974 = vpack.c.b16 %v6932, %v6931
    %v6975 = vpack.c.b16 %v6934, %v6933
    %v6976 = vpack.c.b16 %v6936, %v6935
    %v6977 = vpack.c.b16 %v6938, %v6937
    %v6978 = vpack.c.b16 %v6940, %v6939
    %v6979 = vpack.c.b16 %v6942, %v6941
    %v6980 = vpack.c.b16 %v6944, %v6943
    %v6981 = vpack.c.b16 %v6946, %v6945
    %v6982 = vpack.c.b16 %v6948, %v6947
    %v6983 = vpack.c.b16 %v6950, %v6949
    %v6984 = vpack.c.b16 %v6952, %v6951
    %7017 = vmatprep.subr.bf16.mxu0 0
    %7018 = vmatpush1.bf16.msra.mxu0 %v6960
    %7019 = vmatprep.subr.bf16.mxu0 0
    %7020 = vmatpush1.bf16.msra.mxu0 %v6959
    %7021 = vmatprep.subr.bf16.mxu0 0
    %7022 = vmatpush1.bf16.msra.mxu0 %v6958
    %7023 = vmatprep.subr.bf16.mxu0 0
    %7024 = vmatpush1.bf16.msra.mxu0 %v6957
    %7025 = vmatprep.subr.bf16.mxu0 0
    %7026 = vmatpush1.bf16.msra.mxu0 %v6956
    %7027 = vmatprep.subr.bf16.mxu0 0
    %7028 = vmatpush1.bf16.msra.mxu0 %v6955
    %7029 = vmatprep.subr.bf16.mxu0 0
    %7030 = vmatpush1.bf16.msra.mxu0 %v6954
    %7031 = vmatprep.subr.bf16.mxu0 0
    %7032 = vmatpush1.bf16.msra.mxu0 %v6953
    %7033 = vmatprep.subr.bf16.mxu0 0
    %7034 = vmatpush2.bf16.msra.mxu0 %v6968
    %7035 = vmatprep.subr.bf16.mxu0 0
    %7036 = vmatpush2.bf16.msra.mxu0 %v6967
    %7037 = vmatprep.subr.bf16.mxu0 0
    %7038 = vmatpush2.bf16.msra.mxu0 %v6966
    %7039 = vmatprep.subr.bf16.mxu0 0
    %7040 = vmatpush2.bf16.msra.mxu0 %v6965
    %7041 = vmatprep.subr.bf16.mxu0 0
    %7042 = vmatpush2.bf16.msra.mxu0 %v6964
    %7043 = vmatprep.subr.bf16.mxu0 0
    %7044 = vmatpush2.bf16.msra.mxu0 %v6963
    %7045 = vmatprep.subr.bf16.mxu0 0
    %7046 = vmatpush2.bf16.msra.mxu0 %v6962
    %7047 = vmatprep.subr.bf16.mxu0 0
    %7048 = vmatpush2.bf16.msra.mxu0 %v6961
    %7049 = vmatprep.mubr.bf16.mxu0 %v5959
    %7050 = vmatmul.mubr.bf16.gmra.mxu0 %v5959
    %v7051 = vpop.f32.mrf.mxu0
    %v7052 = vadd.f32 0.0, %v7051
    %v7053 = vpop.f32.mrf.mxu0
    %v7054 = vpop.f32.mrf.mxu0
    %v7055 = vadd.f32 0.0, %v7054
    %v7056 = vpop.f32.mrf.mxu0
    %7057 = vmatprep.mubr.bf16.mxu0 %v6359
    %7058 = vmatmul.mubr.bf16.gmra.mxu0 %v6008
    %v7059 = vpop.f32.mrf.mxu0
    %v7060 = vadd.f32 0.0, %v7059
    %v7061 = vpop.f32.mrf.mxu0
    %v7062 = vpop.f32.mrf.mxu0
    %v7063 = vadd.f32 0.0, %v7062
    %v7064 = vpop.f32.mrf.mxu0
    %7065 = vmatprep.mubr.bf16.mxu0 %v6408
    %7066 = vmatmul.mubr.bf16.gmra.mxu0 %v6057
    %v7067 = vpop.f32.mrf.mxu0
    %v7068 = vadd.f32 0.0, %v7067
    %v7069 = vpop.f32.mrf.mxu0
    %v7070 = vpop.f32.mrf.mxu0
    %v7071 = vadd.f32 0.0, %v7070
    %v7072 = vpop.f32.mrf.mxu0
    %7073 = vmatprep.mubr.bf16.mxu0 %v6457
    %7074 = vmatmul.mubr.bf16.gmra.mxu0 %v6106
    %v7075 = vpop.f32.mrf.mxu0
    %v7076 = vadd.f32 0.0, %v7075
    %v7077 = vpop.f32.mrf.mxu0
    %v7078 = vpop.f32.mrf.mxu0
    %v7079 = vadd.f32 0.0, %v7078
    %v7080 = vpop.f32.mrf.mxu0
    %7081 = vmatprep.mubr.bf16.mxu0 %v6506
    %7082 = vmatmul.mubr.bf16.gmra.mxu0 %v6155
    %v7083 = vpop.f32.mrf.mxu0
    %v7084 = vadd.f32 0.0, %v7083
    %v7085 = vpop.f32.mrf.mxu0
    %v7086 = vpop.f32.mrf.mxu0
    %v7087 = vadd.f32 0.0, %v7086
    %v7088 = vpop.f32.mrf.mxu0
    %7089 = vmatprep.mubr.bf16.mxu0 %v6555
    %7090 = vmatmul.mubr.bf16.gmra.mxu0 %v6204
    %v7091 = vpop.f32.mrf.mxu0
    %v7092 = vadd.f32 0.0, %v7091
    %v7093 = vpop.f32.mrf.mxu0
    %v7094 = vpop.f32.mrf.mxu0
    %v7095 = vadd.f32 0.0, %v7094
    %v7096 = vpop.f32.mrf.mxu0
    %7097 = vmatprep.mubr.bf16.mxu0 %v6604
    %7098 = vmatmul.mubr.bf16.gmra.mxu0 %v6253
    %v7099 = vpop.f32.mrf.mxu0
    %v7100 = vadd.f32 0.0, %v7099
    %v7101 = vpop.f32.mrf.mxu0
    %v7102 = vpop.f32.mrf.mxu0
    %v7103 = vadd.f32 0.0, %v7102
    %v7104 = vpop.f32.mrf.mxu0
    %7105 = vmatprep.mubr.bf16.mxu0 %v6653
    %7106 = vmatmul.mubr.bf16.gmra.mxu0 %v6302
    %v7107 = vpop.f32.mrf.mxu0
    %v7108 = vadd.f32 0.0, %v7107
    %v7109 = vpop.f32.mrf.mxu0
    %v7110 = vpop.f32.mrf.mxu0
    %v7111 = vadd.f32 0.0, %v7110
    %v7112 = vpop.f32.mrf.mxu0
    %7113 = vdwg.mxu0
    %7114 = vmatprep.subr.bf16.mxu0 0
    %7115 = vmatpush1.bf16.msra.mxu0 %v6976
    %7116 = vmatprep.subr.bf16.mxu0 0
    %7117 = vmatpush1.bf16.msra.mxu0 %v6975
    %7118 = vmatprep.subr.bf16.mxu0 0
    %7119 = vmatpush1.bf16.msra.mxu0 %v6974
    %7120 = vmatprep.subr.bf16.mxu0 0
    %7121 = vmatpush1.bf16.msra.mxu0 %v6973
    %7122 = vmatprep.subr.bf16.mxu0 0
    %7123 = vmatpush1.bf16.msra.mxu0 %v6972
    %7124 = vmatprep.subr.bf16.mxu0 0
    %7125 = vmatpush1.bf16.msra.mxu0 %v6971
    %7126 = vmatprep.subr.bf16.mxu0 0
    %7127 = vmatpush1.bf16.msra.mxu0 %v6970
    %7128 = vmatprep.subr.bf16.mxu0 0
    %7129 = vmatpush1.bf16.msra.mxu0 %v6969
    %7130 = vmatprep.subr.bf16.mxu0 0
    %7131 = vmatpush2.bf16.msra.mxu0 %v6984
    %7132 = vmatprep.subr.bf16.mxu0 0
    %7133 = vmatpush2.bf16.msra.mxu0 %v6983
    %7134 = vmatprep.subr.bf16.mxu0 0
    %7135 = vmatpush2.bf16.msra.mxu0 %v6982
    %7136 = vmatprep.subr.bf16.mxu0 0
    %7137 = vmatpush2.bf16.msra.mxu0 %v6981
    %7138 = vmatprep.subr.bf16.mxu0 0
    %7139 = vmatpush2.bf16.msra.mxu0 %v6980
    %7140 = vmatprep.subr.bf16.mxu0 0
    %7141 = vmatpush2.bf16.msra.mxu0 %v6979
    %7142 = vmatprep.subr.bf16.mxu0 0
    %7143 = vmatpush2.bf16.msra.mxu0 %v6978
    %7144 = vmatprep.subr.bf16.mxu0 0
    %7145 = vmatpush2.bf16.msra.mxu0 %v6977
    %7146 = vmatprep.mubr.bf16.mxu0 %v6359
    %7147 = vmatmul.mubr.bf16.gmra.mxu0 %v6008
    %v7148 = vpop.f32.mrf.mxu0
    %v7149 = vadd.f32 %v7052, %v7148
    %v7150 = vpop.f32.mrf.mxu0
    %v7151 = vpop.f32.mrf.mxu0
    %v7152 = vadd.f32 %v7055, %v7151
    %v7153 = vpop.f32.mrf.mxu0
    %7154 = vmatprep.mubr.bf16.mxu0 %v6408
    %7155 = vmatmul.mubr.bf16.gmra.mxu0 %v6057
    %v7156 = vpop.f32.mrf.mxu0
    %v7157 = vadd.f32 %v7060, %v7156
    %v7158 = vpop.f32.mrf.mxu0
    %v7159 = vpop.f32.mrf.mxu0
    %v7160 = vadd.f32 %v7063, %v7159
    %v7161 = vpop.f32.mrf.mxu0
    %7162 = vmatprep.mubr.bf16.mxu0 %v6457
    %7163 = vmatmul.mubr.bf16.gmra.mxu0 %v6106
    %v7164 = vpop.f32.mrf.mxu0
    %v7165 = vadd.f32 %v7068, %v7164
    %v7166 = vpop.f32.mrf.mxu0
    %v7167 = vpop.f32.mrf.mxu0
    %v7168 = vadd.f32 %v7071, %v7167
    %v7169 = vpop.f32.mrf.mxu0
    %7170 = vmatprep.mubr.bf16.mxu0 %v6506
    %7171 = vmatmul.mubr.bf16.gmra.mxu0 %v6155
    %v7172 = vpop.f32.mrf.mxu0
    %v7173 = vadd.f32 %v7076, %v7172
    %v7174 = vpop.f32.mrf.mxu0
    %v7175 = vpop.f32.mrf.mxu0
    %v7176 = vadd.f32 %v7079, %v7175
    %v7177 = vpop.f32.mrf.mxu0
    %7178 = vmatprep.mubr.bf16.mxu0 %v6555
    %7179 = vmatmul.mubr.bf16.gmra.mxu0 %v6204
    %v7180 = vpop.f32.mrf.mxu0
    %v7181 = vadd.f32 %v7084, %v7180
    %v7182 = vpop.f32.mrf.mxu0
    %v7183 = vpop.f32.mrf.mxu0
    %v7184 = vadd.f32 %v7087, %v7183
    %v7185 = vpop.f32.mrf.mxu0
    %7186 = vmatprep.mubr.bf16.mxu0 %v6604
    %7187 = vmatmul.mubr.bf16.gmra.mxu0 %v6253
    %v7188 = vpop.f32.mrf.mxu0
    %v7189 = vadd.f32 %v7092, %v7188
    %v7190 = vpop.f32.mrf.mxu0
    %v7191 = vpop.f32.mrf.mxu0
    %v7192 = vadd.f32 %v7095, %v7191
    %v7193 = vpop.f32.mrf.mxu0
    %7194 = vmatprep.mubr.bf16.mxu0 %v6653
    %7195 = vmatmul.mubr.bf16.gmra.mxu0 %v6302
    %v7196 = vpop.f32.mrf.mxu0
    %v7197 = vadd.f32 %v7100, %v7196
    %v7198 = vpop.f32.mrf.mxu0
    %v7199 = vpop.f32.mrf.mxu0
    %v7200 = vadd.f32 %v7103, %v7199
    %v7201 = vpop.f32.mrf.mxu0
    %7202 = vmatprep.mubr.bf16.mxu0 %v6759
    %7203 = vmatmul.mubr.bf16.gmra.mxu0 %v6709
    %v7204 = vpop.f32.mrf.mxu0
    %v7205 = vadd.f32 %v7108, %v7204
    %v7206 = vpop.f32.mrf.mxu0
    %v7207 = vpop.f32.mrf.mxu0
    %v7208 = vadd.f32 %v7111, %v7207
    %v7209 = vpop.f32.mrf.mxu0
    %7210 = vdwg.mxu0
    %v7211 = vcombine.low %v5700, 0
    %v7213 = vunpack.c.l.s4 1966171168
    %v7214 = vunpack.c.0.s8 %v7213
    %v7215 = vlaneseq
    %v7216 = vshrl.u32 %v7215, 7
    %v7217 = vsub.s32 %v7214, %v7216
    %v7218 = vrot.slane %v7211, %v7217
    %v7219 = vcombine.low %v5977, %v5984
    %v7220 = vcombine.low %v5991, %v7218
    %v7222 = vunpack.c.l.s4 1966171168
    %v7223 = vunpack.c.0.s8 %v7222
    %v7224 = vlaneseq
    %v7225 = vshrl.u32 %v7224, 7
    %v7226 = vsub.s32 %v7223, %v7225
    %v7227 = vrot.slane %v7219, %v7226
    %v7229 = vunpack.c.l.s4 1966171168
    %v7230 = vunpack.c.0.s8 %v7229
    %v7231 = vlaneseq
    %v7232 = vshrl.u32 %v7231, 7
    %v7233 = vsub.s32 %v7230, %v7232
    %v7234 = vrot.slane %v7220, %v7233
    %v7235 = vcombine.low %v7227, %v7234
    %v7236 = vcombine.low %v5900, 0
    %v7238 = vunpack.c.l.s4 1966171168
    %v7239 = vunpack.c.0.s8 %v7238
    %v7240 = vlaneseq
    %v7241 = vshrl.u32 %v7240, 7
    %v7242 = vsub.s32 %v7239, %v7241
    %v7243 = vrot.slane %v7236, %v7242
    %v7244 = vcombine.low %v6026, %v6033
    %v7245 = vcombine.low %v6040, %v7243
    %v7247 = vunpack.c.l.s4 1966171168
    %v7248 = vunpack.c.0.s8 %v7247
    %v7249 = vlaneseq
    %v7250 = vshrl.u32 %v7249, 7
    %v7251 = vsub.s32 %v7248, %v7250
    %v7252 = vrot.slane %v7244, %v7251
    %v7254 = vunpack.c.l.s4 1966171168
    %v7255 = vunpack.c.0.s8 %v7254
    %v7256 = vlaneseq
    %v7257 = vshrl.u32 %v7256, 7
    %v7258 = vsub.s32 %v7255, %v7257
    %v7259 = vrot.slane %v7245, %v7258
    %v7260 = vcombine.low %v7252, %v7259
    %v7261 = vcombine.low %v5701, 0
    %v7263 = vunpack.c.l.s4 1966171168
    %v7264 = vunpack.c.0.s8 %v7263
    %v7265 = vlaneseq
    %v7266 = vshrl.u32 %v7265, 7
    %v7267 = vsub.s32 %v7264, %v7266
    %v7268 = vrot.slane %v7261, %v7267
    %v7269 = vcombine.low %v6075, %v6082
    %v7270 = vcombine.low %v6089, %v7268
    %v7272 = vunpack.c.l.s4 1966171168
    %v7273 = vunpack.c.0.s8 %v7272
    %v7274 = vlaneseq
    %v7275 = vshrl.u32 %v7274, 7
    %v7276 = vsub.s32 %v7273, %v7275
    %v7277 = vrot.slane %v7269, %v7276
    %v7279 = vunpack.c.l.s4 1966171168
    %v7280 = vunpack.c.0.s8 %v7279
    %v7281 = vlaneseq
    %v7282 = vshrl.u32 %v7281, 7
    %v7283 = vsub.s32 %v7280, %v7282
    %v7284 = vrot.slane %v7270, %v7283
    %v7285 = vcombine.low %v7277, %v7284
    %v7286 = vcombine.low %v5901, 0
    %v7288 = vunpack.c.l.s4 1966171168
    %v7289 = vunpack.c.0.s8 %v7288
    %v7290 = vlaneseq
    %v7291 = vshrl.u32 %v7290, 7
    %v7292 = vsub.s32 %v7289, %v7291
    %v7293 = vrot.slane %v7286, %v7292
    %v7294 = vcombine.low %v6124, %v6131
    %v7295 = vcombine.low %v6138, %v7293
    %v7297 = vunpack.c.l.s4 1966171168
    %v7298 = vunpack.c.0.s8 %v7297
    %v7299 = vlaneseq
    %v7300 = vshrl.u32 %v7299, 7
    %v7301 = vsub.s32 %v7298, %v7300
    %v7302 = vrot.slane %v7294, %v7301
    %v7304 = vunpack.c.l.s4 1966171168
    %v7305 = vunpack.c.0.s8 %v7304
    %v7306 = vlaneseq
    %v7307 = vshrl.u32 %v7306, 7
    %v7308 = vsub.s32 %v7305, %v7307
    %v7309 = vrot.slane %v7295, %v7308
    %v7310 = vcombine.low %v7302, %v7309
    %v7311 = vcombine.low %v5749, 0
    %v7313 = vunpack.c.l.s4 1966171168
    %v7314 = vunpack.c.0.s8 %v7313
    %v7315 = vlaneseq
    %v7316 = vshrl.u32 %v7315, 7
    %v7317 = vsub.s32 %v7314, %v7316
    %v7318 = vrot.slane %v7311, %v7317
    %v7319 = vcombine.low %v6173, %v6180
    %v7320 = vcombine.low %v6187, %v7318
    %v7322 = vunpack.c.l.s4 1966171168
    %v7323 = vunpack.c.0.s8 %v7322
    %v7324 = vlaneseq
    %v7325 = vshrl.u32 %v7324, 7
    %v7326 = vsub.s32 %v7323, %v7325
    %v7327 = vrot.slane %v7319, %v7326
    %v7329 = vunpack.c.l.s4 1966171168
    %v7330 = vunpack.c.0.s8 %v7329
    %v7331 = vlaneseq
    %v7332 = vshrl.u32 %v7331, 7
    %v7333 = vsub.s32 %v7330, %v7332
    %v7334 = vrot.slane %v7320, %v7333
    %v7335 = vcombine.low %v7327, %v7334
    %v7336 = vcombine.low %v5949, 0
    %v7338 = vunpack.c.l.s4 1966171168
    %v7339 = vunpack.c.0.s8 %v7338
    %v7340 = vlaneseq
    %v7341 = vshrl.u32 %v7340, 7
    %v7342 = vsub.s32 %v7339, %v7341
    %v7343 = vrot.slane %v7336, %v7342
    %v7344 = vcombine.low %v6222, %v6229
    %v7345 = vcombine.low %v6236, %v7343
    %v7347 = vunpack.c.l.s4 1966171168
    %v7348 = vunpack.c.0.s8 %v7347
    %v7349 = vlaneseq
    %v7350 = vshrl.u32 %v7349, 7
    %v7351 = vsub.s32 %v7348, %v7350
    %v7352 = vrot.slane %v7344, %v7351
    %v7354 = vunpack.c.l.s4 1966171168
    %v7355 = vunpack.c.0.s8 %v7354
    %v7356 = vlaneseq
    %v7357 = vshrl.u32 %v7356, 7
    %v7358 = vsub.s32 %v7355, %v7357
    %v7359 = vrot.slane %v7345, %v7358
    %v7360 = vcombine.low %v7352, %v7359
    %v7361 = vcombine.low %v5750, 0
    %v7363 = vunpack.c.l.s4 1966171168
    %v7364 = vunpack.c.0.s8 %v7363
    %v7365 = vlaneseq
    %v7366 = vshrl.u32 %v7365, 7
    %v7367 = vsub.s32 %v7364, %v7366
    %v7368 = vrot.slane %v7361, %v7367
    %v7369 = vcombine.low %v6271, %v6278
    %v7370 = vcombine.low %v6285, %v7368
    %v7372 = vunpack.c.l.s4 1966171168
    %v7373 = vunpack.c.0.s8 %v7372
    %v7374 = vlaneseq
    %v7375 = vshrl.u32 %v7374, 7
    %v7376 = vsub.s32 %v7373, %v7375
    %v7377 = vrot.slane %v7369, %v7376
    %v7379 = vunpack.c.l.s4 1966171168
    %v7380 = vunpack.c.0.s8 %v7379
    %v7381 = vlaneseq
    %v7382 = vshrl.u32 %v7381, 7
    %v7383 = vsub.s32 %v7380, %v7382
    %v7384 = vrot.slane %v7370, %v7383
    %v7385 = vcombine.low %v7377, %v7384
    %v7393 = vcombine.low %v5950, 0
    %v7395 = vunpack.c.l.s4 1966171168
    %v7396 = vunpack.c.0.s8 %v7395
    %v7397 = vlaneseq
    %v7398 = vshrl.u32 %v7397, 7
    %v7399 = vsub.s32 %v7396, %v7398
    %v7400 = vrot.slane %v7393, %v7399
    %v7401 = vcombine.low %v6678, %v6685
    %v7402 = vcombine.low %v6692, %v7400
    %v7404 = vunpack.c.l.s4 1966171168
    %v7405 = vunpack.c.0.s8 %v7404
    %v7406 = vlaneseq
    %v7407 = vshrl.u32 %v7406, 7
    %v7408 = vsub.s32 %v7405, %v7407
    %v7409 = vrot.slane %v7401, %v7408
    %v7411 = vunpack.c.l.s4 1966171168
    %v7412 = vunpack.c.0.s8 %v7411
    %v7413 = vlaneseq
    %v7414 = vshrl.u32 %v7413, 7
    %v7415 = vsub.s32 %v7412, %v7414
    %v7416 = vrot.slane %v7402, %v7415
    %v7417 = vcombine.low %v7409, %v7416
    %s7419 = scalar_lea.vmem [#allocation9], 256
    %v7420 = vld [vmem:[%s7419] sm:$0xf]
    %v7421 = vld [vmem:[%s7419 + $0x4] sm:$0xf]
    %v7422 = vld [vmem:[%s7419 + $0x8] sm:$0xf]
    %v7423 = vld [vmem:[%s7419 + $0xc] sm:$0xf]
    %v7424 = vld [vmem:[%s7419 + $0x10] sm:$0xf]
    %v7425 = vld [vmem:[%s7419 + $0x14] sm:$0xf]
    %v7426 = vld [vmem:[%s7419 + $0x18] sm:$0xf]
    %v7427 = vld [vmem:[%s7419 + $0x1c] sm:$0xf]
    %v7428 = vld [vmem:[%s7419 + $0x20] sm:$0xf]
    %v7429 = vld [vmem:[%s7419 + $0x24] sm:$0xf]
    %v7430 = vld [vmem:[%s7419 + $0x28] sm:$0xf]
    %v7431 = vld [vmem:[%s7419 + $0x2c] sm:$0xf]
    %v7432 = vld [vmem:[%s7419 + $0x30] sm:$0xf]
    %v7433 = vld [vmem:[%s7419 + $0x34] sm:$0xf]
    %v7434 = vld [vmem:[%s7419 + $0x38] sm:$0xf]
    %v7435 = vld [vmem:[%s7419 + $0x3c] sm:$0xf]
    %v7436 = vld [vmem:[%s7419 + $0x40] sm:$0xf]
    %v7437 = vld [vmem:[%s7419 + $0x44] sm:$0xf]
    %v7438 = vld [vmem:[%s7419 + $0x48] sm:$0xf]
    %v7439 = vld [vmem:[%s7419 + $0x4c] sm:$0xf]
    %v7440 = vld [vmem:[%s7419 + $0x50] sm:$0xf]
    %v7441 = vld [vmem:[%s7419 + $0x54] sm:$0xf]
    %v7442 = vld [vmem:[%s7419 + $0x58] sm:$0xf]
    %v7443 = vld [vmem:[%s7419 + $0x5c] sm:$0xf]
    %v7444 = vld [vmem:[%s7419 + $0x60] sm:$0xf]
    %v7445 = vld [vmem:[%s7419 + $0x64] sm:$0xf]
    %v7446 = vld [vmem:[%s7419 + $0x68] sm:$0xf]
    %v7447 = vld [vmem:[%s7419 + $0x6c] sm:$0xf]
    %v7448 = vld [vmem:[%s7419 + $0x70] sm:$0xf]
    %v7449 = vld [vmem:[%s7419 + $0x74] sm:$0xf]
    %v7450 = vld [vmem:[%s7419 + $0x78] sm:$0xf]
    %v7451 = vld [vmem:[%s7419 + $0x7c] sm:$0xf]
    %v7452 = vld [vmem:[%s7419 + $0x80] sm:$0xf]
    %v7453 = vld [vmem:[%s7419 + $0x84] sm:$0xf]
    %v7454 = vld [vmem:[%s7419 + $0x88] sm:$0xf]
    %v7455 = vld [vmem:[%s7419 + $0x8c] sm:$0xf]
    %v7456 = vld [vmem:[%s7419 + $0x90] sm:$0xf]
    %v7457 = vld [vmem:[%s7419 + $0x94] sm:$0xf]
    %v7458 = vld [vmem:[%s7419 + $0x98] sm:$0xf]
    %v7459 = vld [vmem:[%s7419 + $0x9c] sm:$0xf]
    %v7460 = vld [vmem:[%s7419 + $0xa0] sm:$0xf]
    %v7461 = vld [vmem:[%s7419 + $0xa4] sm:$0xf]
    %v7462 = vld [vmem:[%s7419 + $0xa8] sm:$0xf]
    %v7463 = vld [vmem:[%s7419 + $0xac] sm:$0xf]
    %v7464 = vld [vmem:[%s7419 + $0xb0] sm:$0xf]
    %v7465 = vld [vmem:[%s7419 + $0xb4] sm:$0xf]
    %v7466 = vld [vmem:[%s7419 + $0xb8] sm:$0xf]
    %v7467 = vld [vmem:[%s7419 + $0xbc] sm:$0xf]
    %v7468 = vld [vmem:[%s7419 + $0xc0] sm:$0xf]
    %v7469 = vld [vmem:[%s7419 + $0xc4] sm:$0xf]
    %v7470 = vld [vmem:[%s7419 + $0xc8] sm:$0xf]
    %v7471 = vld [vmem:[%s7419 + $0xcc] sm:$0xf]
    %v7472 = vld [vmem:[%s7419 + $0xd0] sm:$0xf]
    %v7473 = vld [vmem:[%s7419 + $0xd4] sm:$0xf]
    %v7474 = vld [vmem:[%s7419 + $0xd8] sm:$0xf]
    %v7475 = vld [vmem:[%s7419 + $0xdc] sm:$0xf]
    %v7476 = vld [vmem:[%s7419 + $0xe0] sm:$0xf]
    %v7477 = vld [vmem:[%s7419 + $0xe4] sm:$0xf]
    %v7478 = vld [vmem:[%s7419 + $0xe8] sm:$0xf]
    %v7479 = vld [vmem:[%s7419 + $0xec] sm:$0xf]
    %v7480 = vld [vmem:[%s7419 + $0xf0] sm:$0xf]
    %v7481 = vld [vmem:[%s7419 + $0xf4] sm:$0xf]
    %v7482 = vld [vmem:[%s7419 + $0xf8] sm:$0xf]
    %v7483 = vld [vmem:[%s7419 + $0xfc] sm:$0xf]
    %v7548 = vunpack.c.l.b16 %v7420
    %v7549 = vunpack.c.l.b16 %v7421
    %v7550 = vunpack.c.l.b16 %v7422
    %v7551 = vunpack.c.l.b16 %v7423
    %v7552 = vunpack.c.l.b16 %v7424
    %v7553 = vunpack.c.l.b16 %v7425
    %v7554 = vunpack.c.l.b16 %v7426
    %v7555 = vunpack.c.l.b16 %v7427
    %v7556 = vunpack.c.l.b16 %v7428
    %v7557 = vunpack.c.l.b16 %v7429
    %v7558 = vunpack.c.l.b16 %v7430
    %v7559 = vunpack.c.l.b16 %v7431
    %v7560 = vunpack.c.l.b16 %v7432
    %v7561 = vunpack.c.l.b16 %v7433
    %v7562 = vunpack.c.l.b16 %v7434
    %v7563 = vunpack.c.l.b16 %v7435
    %v7564 = vunpack.c.l.b16 %v7436
    %v7565 = vunpack.c.l.b16 %v7437
    %v7566 = vunpack.c.l.b16 %v7438
    %v7567 = vunpack.c.l.b16 %v7439
    %v7568 = vunpack.c.l.b16 %v7440
    %v7569 = vunpack.c.l.b16 %v7441
    %v7570 = vunpack.c.l.b16 %v7442
    %v7571 = vunpack.c.l.b16 %v7443
    %v7572 = vunpack.c.l.b16 %v7444
    %v7573 = vunpack.c.l.b16 %v7445
    %v7574 = vunpack.c.l.b16 %v7446
    %v7575 = vunpack.c.l.b16 %v7447
    %v7576 = vunpack.c.l.b16 %v7448
    %v7577 = vunpack.c.l.b16 %v7449
    %v7578 = vunpack.c.l.b16 %v7450
    %v7579 = vunpack.c.l.b16 %v7451
    %v7580 = vunpack.c.l.b16 %v7452
    %v7581 = vunpack.c.l.b16 %v7453
    %v7582 = vunpack.c.l.b16 %v7454
    %v7583 = vunpack.c.l.b16 %v7455
    %v7584 = vunpack.c.l.b16 %v7456
    %v7585 = vunpack.c.l.b16 %v7457
    %v7586 = vunpack.c.l.b16 %v7458
    %v7587 = vunpack.c.l.b16 %v7459
    %v7588 = vunpack.c.l.b16 %v7460
    %v7589 = vunpack.c.l.b16 %v7461
    %v7590 = vunpack.c.l.b16 %v7462
    %v7591 = vunpack.c.l.b16 %v7463
    %v7592 = vunpack.c.l.b16 %v7464
    %v7593 = vunpack.c.l.b16 %v7465
    %v7594 = vunpack.c.l.b16 %v7466
    %v7595 = vunpack.c.l.b16 %v7467
    %v7596 = vunpack.c.l.b16 %v7468
    %v7597 = vunpack.c.l.b16 %v7469
    %v7598 = vunpack.c.l.b16 %v7470
    %v7599 = vunpack.c.l.b16 %v7471
    %v7600 = vunpack.c.l.b16 %v7472
    %v7601 = vunpack.c.l.b16 %v7473
    %v7602 = vunpack.c.l.b16 %v7474
    %v7603 = vunpack.c.l.b16 %v7475
    %v7604 = vunpack.c.l.b16 %v7476
    %v7605 = vunpack.c.l.b16 %v7477
    %v7606 = vunpack.c.l.b16 %v7478
    %v7607 = vunpack.c.l.b16 %v7479
    %v7608 = vunpack.c.l.b16 %v7480
    %v7609 = vunpack.c.l.b16 %v7481
    %v7610 = vunpack.c.l.b16 %v7482
    %v7611 = vunpack.c.l.b16 %v7483
    %v7612 = vpack.c.b16 %v7549, %v7548
    %v7613 = vpack.c.b16 %v7551, %v7550
    %v7614 = vpack.c.b16 %v7553, %v7552
    %v7615 = vpack.c.b16 %v7555, %v7554
    %v7616 = vpack.c.b16 %v7557, %v7556
    %v7617 = vpack.c.b16 %v7559, %v7558
    %v7618 = vpack.c.b16 %v7561, %v7560
    %v7619 = vpack.c.b16 %v7563, %v7562
    %v7620 = vpack.c.b16 %v7565, %v7564
    %v7621 = vpack.c.b16 %v7567, %v7566
    %v7622 = vpack.c.b16 %v7569, %v7568
    %v7623 = vpack.c.b16 %v7571, %v7570
    %v7624 = vpack.c.b16 %v7573, %v7572
    %v7625 = vpack.c.b16 %v7575, %v7574
    %v7626 = vpack.c.b16 %v7577, %v7576
    %v7627 = vpack.c.b16 %v7579, %v7578
    %v7628 = vpack.c.b16 %v7581, %v7580
    %v7629 = vpack.c.b16 %v7583, %v7582
    %v7630 = vpack.c.b16 %v7585, %v7584
    %v7631 = vpack.c.b16 %v7587, %v7586
    %v7632 = vpack.c.b16 %v7589, %v7588
    %v7633 = vpack.c.b16 %v7591, %v7590
    %v7634 = vpack.c.b16 %v7593, %v7592
    %v7635 = vpack.c.b16 %v7595, %v7594
    %v7636 = vpack.c.b16 %v7597, %v7596
    %v7637 = vpack.c.b16 %v7599, %v7598
    %v7638 = vpack.c.b16 %v7601, %v7600
    %v7639 = vpack.c.b16 %v7603, %v7602
    %v7640 = vpack.c.b16 %v7605, %v7604
    %v7641 = vpack.c.b16 %v7607, %v7606
    %v7642 = vpack.c.b16 %v7609, %v7608
    %v7643 = vpack.c.b16 %v7611, %v7610
    %7676 = vmatprep.subr.bf16.mxu0 0
    %7677 = vmatpush1.bf16.msra.mxu0 %v7619
    %7678 = vmatprep.subr.bf16.mxu0 0
    %7679 = vmatpush1.bf16.msra.mxu0 %v7618
    %7680 = vmatprep.subr.bf16.mxu0 0
    %7681 = vmatpush1.bf16.msra.mxu0 %v7617
    %7682 = vmatprep.subr.bf16.mxu0 0
    %7683 = vmatpush1.bf16.msra.mxu0 %v7616
    %7684 = vmatprep.subr.bf16.mxu0 0
    %7685 = vmatpush1.bf16.msra.mxu0 %v7615
    %7686 = vmatprep.subr.bf16.mxu0 0
    %7687 = vmatpush1.bf16.msra.mxu0 %v7614
    %7688 = vmatprep.subr.bf16.mxu0 0
    %7689 = vmatpush1.bf16.msra.mxu0 %v7613
    %7690 = vmatprep.subr.bf16.mxu0 0
    %7691 = vmatpush1.bf16.msra.mxu0 %v7612
    %7692 = vmatprep.subr.bf16.mxu0 0
    %7693 = vmatpush2.bf16.msra.mxu0 %v7627
    %7694 = vmatprep.subr.bf16.mxu0 0
    %7695 = vmatpush2.bf16.msra.mxu0 %v7626
    %7696 = vmatprep.subr.bf16.mxu0 0
    %7697 = vmatpush2.bf16.msra.mxu0 %v7625
    %7698 = vmatprep.subr.bf16.mxu0 0
    %7699 = vmatpush2.bf16.msra.mxu0 %v7624
    %7700 = vmatprep.subr.bf16.mxu0 0
    %7701 = vmatpush2.bf16.msra.mxu0 %v7623
    %7702 = vmatprep.subr.bf16.mxu0 0
    %7703 = vmatpush2.bf16.msra.mxu0 %v7622
    %7704 = vmatprep.subr.bf16.mxu0 0
    %7705 = vmatpush2.bf16.msra.mxu0 %v7621
    %7706 = vmatprep.subr.bf16.mxu0 0
    %7707 = vmatpush2.bf16.msra.mxu0 %v7620
    %7708 = vmatprep.mubr.bf16.mxu0 %v5959
    %7709 = vmatmul.mubr.bf16.gmra.mxu0 %v5959
    %v7710 = vpop.f32.mrf.mxu0
    %v7711 = vadd.f32 0.0, %v7710
    %v7712 = vpop.f32.mrf.mxu0
    %v7713 = vpop.f32.mrf.mxu0
    %v7714 = vadd.f32 0.0, %v7713
    %v7715 = vpop.f32.mrf.mxu0
    %7716 = vmatprep.mubr.bf16.mxu0 %v7235
    %7717 = vmatmul.mubr.bf16.gmra.mxu0 %v6359
    %v7718 = vpop.f32.mrf.mxu0
    %v7719 = vadd.f32 0.0, %v7718
    %v7720 = vpop.f32.mrf.mxu0
    %v7721 = vpop.f32.mrf.mxu0
    %v7722 = vadd.f32 0.0, %v7721
    %v7723 = vpop.f32.mrf.mxu0
    %7724 = vmatprep.mubr.bf16.mxu0 %v7260
    %7725 = vmatmul.mubr.bf16.gmra.mxu0 %v6408
    %v7726 = vpop.f32.mrf.mxu0
    %v7727 = vadd.f32 0.0, %v7726
    %v7728 = vpop.f32.mrf.mxu0
    %v7729 = vpop.f32.mrf.mxu0
    %v7730 = vadd.f32 0.0, %v7729
    %v7731 = vpop.f32.mrf.mxu0
    %7732 = vmatprep.mubr.bf16.mxu0 %v7285
    %7733 = vmatmul.mubr.bf16.gmra.mxu0 %v6457
    %v7734 = vpop.f32.mrf.mxu0
    %v7735 = vadd.f32 0.0, %v7734
    %v7736 = vpop.f32.mrf.mxu0
    %v7737 = vpop.f32.mrf.mxu0
    %v7738 = vadd.f32 0.0, %v7737
    %v7739 = vpop.f32.mrf.mxu0
    %7740 = vmatprep.mubr.bf16.mxu0 %v7310
    %7741 = vmatmul.mubr.bf16.gmra.mxu0 %v6506
    %v7742 = vpop.f32.mrf.mxu0
    %v7743 = vadd.f32 0.0, %v7742
    %v7744 = vpop.f32.mrf.mxu0
    %v7745 = vpop.f32.mrf.mxu0
    %v7746 = vadd.f32 0.0, %v7745
    %v7747 = vpop.f32.mrf.mxu0
    %7748 = vmatprep.mubr.bf16.mxu0 %v7335
    %7749 = vmatmul.mubr.bf16.gmra.mxu0 %v6555
    %v7750 = vpop.f32.mrf.mxu0
    %v7751 = vadd.f32 0.0, %v7750
    %v7752 = vpop.f32.mrf.mxu0
    %v7753 = vpop.f32.mrf.mxu0
    %v7754 = vadd.f32 0.0, %v7753
    %v7755 = vpop.f32.mrf.mxu0
    %7756 = vmatprep.mubr.bf16.mxu0 %v7360
    %7757 = vmatmul.mubr.bf16.gmra.mxu0 %v6604
    %v7758 = vpop.f32.mrf.mxu0
    %v7759 = vadd.f32 0.0, %v7758
    %v7760 = vpop.f32.mrf.mxu0
    %v7761 = vpop.f32.mrf.mxu0
    %v7762 = vadd.f32 0.0, %v7761
    %v7763 = vpop.f32.mrf.mxu0
    %7764 = vmatprep.mubr.bf16.mxu0 %v7385
    %7765 = vmatmul.mubr.bf16.gmra.mxu0 %v6653
    %v7766 = vpop.f32.mrf.mxu0
    %v7767 = vadd.f32 0.0, %v7766
    %v7768 = vpop.f32.mrf.mxu0
    %v7769 = vpop.f32.mrf.mxu0
    %v7770 = vadd.f32 0.0, %v7769
    %v7771 = vpop.f32.mrf.mxu0
    %7772 = vdwg.mxu0
    %7773 = vmatprep.subr.bf16.mxu0 0
    %7774 = vmatpush1.bf16.msra.mxu0 %v7635
    %7775 = vmatprep.subr.bf16.mxu0 0
    %7776 = vmatpush1.bf16.msra.mxu0 %v7634
    %7777 = vmatprep.subr.bf16.mxu0 0
    %7778 = vmatpush1.bf16.msra.mxu0 %v7633
    %7779 = vmatprep.subr.bf16.mxu0 0
    %7780 = vmatpush1.bf16.msra.mxu0 %v7632
    %7781 = vmatprep.subr.bf16.mxu0 0
    %7782 = vmatpush1.bf16.msra.mxu0 %v7631
    %7783 = vmatprep.subr.bf16.mxu0 0
    %7784 = vmatpush1.bf16.msra.mxu0 %v7630
    %7785 = vmatprep.subr.bf16.mxu0 0
    %7786 = vmatpush1.bf16.msra.mxu0 %v7629
    %7787 = vmatprep.subr.bf16.mxu0 0
    %7788 = vmatpush1.bf16.msra.mxu0 %v7628
    %7789 = vmatprep.subr.bf16.mxu0 0
    %7790 = vmatpush2.bf16.msra.mxu0 %v7643
    %7791 = vmatprep.subr.bf16.mxu0 0
    %7792 = vmatpush2.bf16.msra.mxu0 %v7642
    %7793 = vmatprep.subr.bf16.mxu0 0
    %7794 = vmatpush2.bf16.msra.mxu0 %v7641
    %7795 = vmatprep.subr.bf16.mxu0 0
    %7796 = vmatpush2.bf16.msra.mxu0 %v7640
    %7797 = vmatprep.subr.bf16.mxu0 0
    %7798 = vmatpush2.bf16.msra.mxu0 %v7639
    %7799 = vmatprep.subr.bf16.mxu0 0
    %7800 = vmatpush2.bf16.msra.mxu0 %v7638
    %7801 = vmatprep.subr.bf16.mxu0 0
    %7802 = vmatpush2.bf16.msra.mxu0 %v7637
    %7803 = vmatprep.subr.bf16.mxu0 0
    %7804 = vmatpush2.bf16.msra.mxu0 %v7636
    %7805 = vmatprep.mubr.bf16.mxu0 %v7235
    %7806 = vmatmul.mubr.bf16.gmra.mxu0 %v6359
    %v7807 = vpop.f32.mrf.mxu0
    %v7808 = vadd.f32 %v7711, %v7807
    %v7809 = vpop.f32.mrf.mxu0
    %v7810 = vpop.f32.mrf.mxu0
    %v7811 = vadd.f32 %v7714, %v7810
    %v7812 = vpop.f32.mrf.mxu0
    %7813 = vmatprep.mubr.bf16.mxu0 %v7260
    %7814 = vmatmul.mubr.bf16.gmra.mxu0 %v6408
    %v7815 = vpop.f32.mrf.mxu0
    %v7816 = vadd.f32 %v7719, %v7815
    %v7817 = vpop.f32.mrf.mxu0
    %v7818 = vpop.f32.mrf.mxu0
    %v7819 = vadd.f32 %v7722, %v7818
    %v7820 = vpop.f32.mrf.mxu0
    %7821 = vmatprep.mubr.bf16.mxu0 %v7285
    %7822 = vmatmul.mubr.bf16.gmra.mxu0 %v6457
    %v7823 = vpop.f32.mrf.mxu0
    %v7824 = vadd.f32 %v7727, %v7823
    %v7825 = vpop.f32.mrf.mxu0
    %v7826 = vpop.f32.mrf.mxu0
    %v7827 = vadd.f32 %v7730, %v7826
    %v7828 = vpop.f32.mrf.mxu0
    %7829 = vmatprep.mubr.bf16.mxu0 %v7310
    %7830 = vmatmul.mubr.bf16.gmra.mxu0 %v6506
    %v7831 = vpop.f32.mrf.mxu0
    %v7832 = vadd.f32 %v7735, %v7831
    %v7833 = vpop.f32.mrf.mxu0
    %v7834 = vpop.f32.mrf.mxu0
    %v7835 = vadd.f32 %v7738, %v7834
    %v7836 = vpop.f32.mrf.mxu0
    %7837 = vmatprep.mubr.bf16.mxu0 %v7335
    %7838 = vmatmul.mubr.bf16.gmra.mxu0 %v6555
    %v7839 = vpop.f32.mrf.mxu0
    %v7840 = vadd.f32 %v7743, %v7839
    %v7841 = vpop.f32.mrf.mxu0
    %v7842 = vpop.f32.mrf.mxu0
    %v7843 = vadd.f32 %v7746, %v7842
    %v7844 = vpop.f32.mrf.mxu0
    %7845 = vmatprep.mubr.bf16.mxu0 %v7360
    %7846 = vmatmul.mubr.bf16.gmra.mxu0 %v6604
    %v7847 = vpop.f32.mrf.mxu0
    %v7848 = vadd.f32 %v7751, %v7847
    %v7849 = vpop.f32.mrf.mxu0
    %v7850 = vpop.f32.mrf.mxu0
    %v7851 = vadd.f32 %v7754, %v7850
    %v7852 = vpop.f32.mrf.mxu0
    %7853 = vmatprep.mubr.bf16.mxu0 %v7385
    %7854 = vmatmul.mubr.bf16.gmra.mxu0 %v6653
    %v7855 = vpop.f32.mrf.mxu0
    %v7856 = vadd.f32 %v7759, %v7855
    %v7857 = vpop.f32.mrf.mxu0
    %v7858 = vpop.f32.mrf.mxu0
    %v7859 = vadd.f32 %v7762, %v7858
    %v7860 = vpop.f32.mrf.mxu0
    %7861 = vmatprep.mubr.bf16.mxu0 %v7417
    %7862 = vmatmul.mubr.bf16.gmra.mxu0 %v6759
    %v7863 = vpop.f32.mrf.mxu0
    %v7864 = vadd.f32 %v7767, %v7863
    %v7865 = vpop.f32.mrf.mxu0
    %v7866 = vpop.f32.mrf.mxu0
    %v7867 = vadd.f32 %v7770, %v7866
    %v7868 = vpop.f32.mrf.mxu0
    %7869 = vdwg.mxu0
    %s7870 = scalar_lea.vmem [#allocation9], 512
    %v7871 = vld [vmem:[%s7870] sm:$0xf]
    %v7872 = vld [vmem:[%s7870 + $0x4] sm:$0xf]
    %v7873 = vld [vmem:[%s7870 + $0x8] sm:$0xf]
    %v7874 = vld [vmem:[%s7870 + $0xc] sm:$0xf]
    %v7875 = vld [vmem:[%s7870 + $0x10] sm:$0xf]
    %v7876 = vld [vmem:[%s7870 + $0x14] sm:$0xf]
    %v7877 = vld [vmem:[%s7870 + $0x18] sm:$0xf]
    %v7878 = vld [vmem:[%s7870 + $0x1c] sm:$0xf]
    %v7879 = vld [vmem:[%s7870 + $0x20] sm:$0xf]
    %v7880 = vld [vmem:[%s7870 + $0x24] sm:$0xf]
    %v7881 = vld [vmem:[%s7870 + $0x28] sm:$0xf]
    %v7882 = vld [vmem:[%s7870 + $0x2c] sm:$0xf]
    %v7883 = vld [vmem:[%s7870 + $0x30] sm:$0xf]
    %v7884 = vld [vmem:[%s7870 + $0x34] sm:$0xf]
    %v7885 = vld [vmem:[%s7870 + $0x38] sm:$0xf]
    %v7886 = vld [vmem:[%s7870 + $0x3c] sm:$0xf]
    %v7887 = vld [vmem:[%s7870 + $0x40] sm:$0xf]
    %v7888 = vld [vmem:[%s7870 + $0x44] sm:$0xf]
    %v7889 = vld [vmem:[%s7870 + $0x48] sm:$0xf]
    %v7890 = vld [vmem:[%s7870 + $0x4c] sm:$0xf]
    %v7891 = vld [vmem:[%s7870 + $0x50] sm:$0xf]
    %v7892 = vld [vmem:[%s7870 + $0x54] sm:$0xf]
    %v7893 = vld [vmem:[%s7870 + $0x58] sm:$0xf]
    %v7894 = vld [vmem:[%s7870 + $0x5c] sm:$0xf]
    %v7895 = vld [vmem:[%s7870 + $0x60] sm:$0xf]
    %v7896 = vld [vmem:[%s7870 + $0x64] sm:$0xf]
    %v7897 = vld [vmem:[%s7870 + $0x68] sm:$0xf]
    %v7898 = vld [vmem:[%s7870 + $0x6c] sm:$0xf]
    %v7899 = vld [vmem:[%s7870 + $0x70] sm:$0xf]
    %v7900 = vld [vmem:[%s7870 + $0x74] sm:$0xf]
    %v7901 = vld [vmem:[%s7870 + $0x78] sm:$0xf]
    %v7902 = vld [vmem:[%s7870 + $0x7c] sm:$0xf]
    %v7903 = vld [vmem:[%s7870 + $0x80] sm:$0xf]
    %v7904 = vld [vmem:[%s7870 + $0x84] sm:$0xf]
    %v7905 = vld [vmem:[%s7870 + $0x88] sm:$0xf]
    %v7906 = vld [vmem:[%s7870 + $0x8c] sm:$0xf]
    %v7907 = vld [vmem:[%s7870 + $0x90] sm:$0xf]
    %v7908 = vld [vmem:[%s7870 + $0x94] sm:$0xf]
    %v7909 = vld [vmem:[%s7870 + $0x98] sm:$0xf]
    %v7910 = vld [vmem:[%s7870 + $0x9c] sm:$0xf]
    %v7911 = vld [vmem:[%s7870 + $0xa0] sm:$0xf]
    %v7912 = vld [vmem:[%s7870 + $0xa4] sm:$0xf]
    %v7913 = vld [vmem:[%s7870 + $0xa8] sm:$0xf]
    %v7914 = vld [vmem:[%s7870 + $0xac] sm:$0xf]
    %v7915 = vld [vmem:[%s7870 + $0xb0] sm:$0xf]
    %v7916 = vld [vmem:[%s7870 + $0xb4] sm:$0xf]
    %v7917 = vld [vmem:[%s7870 + $0xb8] sm:$0xf]
    %v7918 = vld [vmem:[%s7870 + $0xbc] sm:$0xf]
    %v7919 = vld [vmem:[%s7870 + $0xc0] sm:$0xf]
    %v7920 = vld [vmem:[%s7870 + $0xc4] sm:$0xf]
    %v7921 = vld [vmem:[%s7870 + $0xc8] sm:$0xf]
    %v7922 = vld [vmem:[%s7870 + $0xcc] sm:$0xf]
    %v7923 = vld [vmem:[%s7870 + $0xd0] sm:$0xf]
    %v7924 = vld [vmem:[%s7870 + $0xd4] sm:$0xf]
    %v7925 = vld [vmem:[%s7870 + $0xd8] sm:$0xf]
    %v7926 = vld [vmem:[%s7870 + $0xdc] sm:$0xf]
    %v7927 = vld [vmem:[%s7870 + $0xe0] sm:$0xf]
    %v7928 = vld [vmem:[%s7870 + $0xe4] sm:$0xf]
    %v7929 = vld [vmem:[%s7870 + $0xe8] sm:$0xf]
    %v7930 = vld [vmem:[%s7870 + $0xec] sm:$0xf]
    %v7931 = vld [vmem:[%s7870 + $0xf0] sm:$0xf]
    %v7932 = vld [vmem:[%s7870 + $0xf4] sm:$0xf]
    %v7933 = vld [vmem:[%s7870 + $0xf8] sm:$0xf]
    %v7934 = vld [vmem:[%s7870 + $0xfc] sm:$0xf]
    %v7999 = vunpack.c.l.b16 %v7871
    %v8000 = vunpack.c.l.b16 %v7872
    %v8001 = vunpack.c.l.b16 %v7873
    %v8002 = vunpack.c.l.b16 %v7874
    %v8003 = vunpack.c.l.b16 %v7875
    %v8004 = vunpack.c.l.b16 %v7876
    %v8005 = vunpack.c.l.b16 %v7877
    %v8006 = vunpack.c.l.b16 %v7878
    %v8007 = vunpack.c.l.b16 %v7879
    %v8008 = vunpack.c.l.b16 %v7880
    %v8009 = vunpack.c.l.b16 %v7881
    %v8010 = vunpack.c.l.b16 %v7882
    %v8011 = vunpack.c.l.b16 %v7883
    %v8012 = vunpack.c.l.b16 %v7884
    %v8013 = vunpack.c.l.b16 %v7885
    %v8014 = vunpack.c.l.b16 %v7886
    %v8015 = vunpack.c.l.b16 %v7887
    %v8016 = vunpack.c.l.b16 %v7888
    %v8017 = vunpack.c.l.b16 %v7889
    %v8018 = vunpack.c.l.b16 %v7890
    %v8019 = vunpack.c.l.b16 %v7891
    %v8020 = vunpack.c.l.b16 %v7892
    %v8021 = vunpack.c.l.b16 %v7893
    %v8022 = vunpack.c.l.b16 %v7894
    %v8023 = vunpack.c.l.b16 %v7895
    %v8024 = vunpack.c.l.b16 %v7896
    %v8025 = vunpack.c.l.b16 %v7897
    %v8026 = vunpack.c.l.b16 %v7898
    %v8027 = vunpack.c.l.b16 %v7899
    %v8028 = vunpack.c.l.b16 %v7900
    %v8029 = vunpack.c.l.b16 %v7901
    %v8030 = vunpack.c.l.b16 %v7902
    %v8031 = vunpack.c.l.b16 %v7903
    %v8032 = vunpack.c.l.b16 %v7904
    %v8033 = vunpack.c.l.b16 %v7905
    %v8034 = vunpack.c.l.b16 %v7906
    %v8035 = vunpack.c.l.b16 %v7907
    %v8036 = vunpack.c.l.b16 %v7908
    %v8037 = vunpack.c.l.b16 %v7909
    %v8038 = vunpack.c.l.b16 %v7910
    %v8039 = vunpack.c.l.b16 %v7911
    %v8040 = vunpack.c.l.b16 %v7912
    %v8041 = vunpack.c.l.b16 %v7913
    %v8042 = vunpack.c.l.b16 %v7914
    %v8043 = vunpack.c.l.b16 %v7915
    %v8044 = vunpack.c.l.b16 %v7916
    %v8045 = vunpack.c.l.b16 %v7917
    %v8046 = vunpack.c.l.b16 %v7918
    %v8047 = vunpack.c.l.b16 %v7919
    %v8048 = vunpack.c.l.b16 %v7920
    %v8049 = vunpack.c.l.b16 %v7921
    %v8050 = vunpack.c.l.b16 %v7922
    %v8051 = vunpack.c.l.b16 %v7923
    %v8052 = vunpack.c.l.b16 %v7924
    %v8053 = vunpack.c.l.b16 %v7925
    %v8054 = vunpack.c.l.b16 %v7926
    %v8055 = vunpack.c.l.b16 %v7927
    %v8056 = vunpack.c.l.b16 %v7928
    %v8057 = vunpack.c.l.b16 %v7929
    %v8058 = vunpack.c.l.b16 %v7930
    %v8059 = vunpack.c.l.b16 %v7931
    %v8060 = vunpack.c.l.b16 %v7932
    %v8061 = vunpack.c.l.b16 %v7933
    %v8062 = vunpack.c.l.b16 %v7934
    %v8063 = vpack.c.b16 %v8000, %v7999
    %v8064 = vpack.c.b16 %v8002, %v8001
    %v8065 = vpack.c.b16 %v8004, %v8003
    %v8066 = vpack.c.b16 %v8006, %v8005
    %v8067 = vpack.c.b16 %v8008, %v8007
    %v8068 = vpack.c.b16 %v8010, %v8009
    %v8069 = vpack.c.b16 %v8012, %v8011
    %v8070 = vpack.c.b16 %v8014, %v8013
    %v8071 = vpack.c.b16 %v8016, %v8015
    %v8072 = vpack.c.b16 %v8018, %v8017
    %v8073 = vpack.c.b16 %v8020, %v8019
    %v8074 = vpack.c.b16 %v8022, %v8021
    %v8075 = vpack.c.b16 %v8024, %v8023
    %v8076 = vpack.c.b16 %v8026, %v8025
    %v8077 = vpack.c.b16 %v8028, %v8027
    %v8078 = vpack.c.b16 %v8030, %v8029
    %v8079 = vpack.c.b16 %v8032, %v8031
    %v8080 = vpack.c.b16 %v8034, %v8033
    %v8081 = vpack.c.b16 %v8036, %v8035
    %v8082 = vpack.c.b16 %v8038, %v8037
    %v8083 = vpack.c.b16 %v8040, %v8039
    %v8084 = vpack.c.b16 %v8042, %v8041
    %v8085 = vpack.c.b16 %v8044, %v8043
    %v8086 = vpack.c.b16 %v8046, %v8045
    %v8087 = vpack.c.b16 %v8048, %v8047
    %v8088 = vpack.c.b16 %v8050, %v8049
    %v8089 = vpack.c.b16 %v8052, %v8051
    %v8090 = vpack.c.b16 %v8054, %v8053
    %v8091 = vpack.c.b16 %v8056, %v8055
    %v8092 = vpack.c.b16 %v8058, %v8057
    %v8093 = vpack.c.b16 %v8060, %v8059
    %v8094 = vpack.c.b16 %v8062, %v8061
    %8127 = vmatprep.subr.bf16.mxu0 0
    %8128 = vmatpush1.bf16.msra.mxu0 %v8070
    %8129 = vmatprep.subr.bf16.mxu0 0
    %8130 = vmatpush1.bf16.msra.mxu0 %v8069
    %8131 = vmatprep.subr.bf16.mxu0 0
    %8132 = vmatpush1.bf16.msra.mxu0 %v8068
    %8133 = vmatprep.subr.bf16.mxu0 0
    %8134 = vmatpush1.bf16.msra.mxu0 %v8067
    %8135 = vmatprep.subr.bf16.mxu0 0
    %8136 = vmatpush1.bf16.msra.mxu0 %v8066
    %8137 = vmatprep.subr.bf16.mxu0 0
    %8138 = vmatpush1.bf16.msra.mxu0 %v8065
    %8139 = vmatprep.subr.bf16.mxu0 0
    %8140 = vmatpush1.bf16.msra.mxu0 %v8064
    %8141 = vmatprep.subr.bf16.mxu0 0
    %8142 = vmatpush1.bf16.msra.mxu0 %v8063
    %8143 = vmatprep.subr.bf16.mxu0 0
    %8144 = vmatpush2.bf16.msra.mxu0 %v8078
    %8145 = vmatprep.subr.bf16.mxu0 0
    %8146 = vmatpush2.bf16.msra.mxu0 %v8077
    %8147 = vmatprep.subr.bf16.mxu0 0
    %8148 = vmatpush2.bf16.msra.mxu0 %v8076
    %8149 = vmatprep.subr.bf16.mxu0 0
    %8150 = vmatpush2.bf16.msra.mxu0 %v8075
    %8151 = vmatprep.subr.bf16.mxu0 0
    %8152 = vmatpush2.bf16.msra.mxu0 %v8074
    %8153 = vmatprep.subr.bf16.mxu0 0
    %8154 = vmatpush2.bf16.msra.mxu0 %v8073
    %8155 = vmatprep.subr.bf16.mxu0 0
    %8156 = vmatpush2.bf16.msra.mxu0 %v8072
    %8157 = vmatprep.subr.bf16.mxu0 0
    %8158 = vmatpush2.bf16.msra.mxu0 %v8071
    %8159 = vmatprep.mubr.bf16.mxu0 %v6359
    %8160 = vmatmul.mubr.bf16.gmra.mxu0 %v6008
    %v8161 = vpop.f32.mrf.mxu0
    %v8162 = vadd.f32 0.0, %v8161
    %v8163 = vpop.f32.mrf.mxu0
    %v8164 = vpop.f32.mrf.mxu0
    %v8165 = vadd.f32 0.0, %v8164
    %v8166 = vpop.f32.mrf.mxu0
    %8167 = vmatprep.mubr.bf16.mxu0 %v6408
    %8168 = vmatmul.mubr.bf16.gmra.mxu0 %v6057
    %v8169 = vpop.f32.mrf.mxu0
    %v8170 = vadd.f32 0.0, %v8169
    %v8171 = vpop.f32.mrf.mxu0
    %v8172 = vpop.f32.mrf.mxu0
    %v8173 = vadd.f32 0.0, %v8172
    %v8174 = vpop.f32.mrf.mxu0
    %8175 = vmatprep.mubr.bf16.mxu0 %v6457
    %8176 = vmatmul.mubr.bf16.gmra.mxu0 %v6106
    %v8177 = vpop.f32.mrf.mxu0
    %v8178 = vadd.f32 0.0, %v8177
    %v8179 = vpop.f32.mrf.mxu0
    %v8180 = vpop.f32.mrf.mxu0
    %v8181 = vadd.f32 0.0, %v8180
    %v8182 = vpop.f32.mrf.mxu0
    %8183 = vmatprep.mubr.bf16.mxu0 %v6506
    %8184 = vmatmul.mubr.bf16.gmra.mxu0 %v6155
    %v8185 = vpop.f32.mrf.mxu0
    %v8186 = vadd.f32 0.0, %v8185
    %v8187 = vpop.f32.mrf.mxu0
    %v8188 = vpop.f32.mrf.mxu0
    %v8189 = vadd.f32 0.0, %v8188
    %v8190 = vpop.f32.mrf.mxu0
    %8191 = vmatprep.mubr.bf16.mxu0 %v6555
    %8192 = vmatmul.mubr.bf16.gmra.mxu0 %v6204
    %v8193 = vpop.f32.mrf.mxu0
    %v8194 = vadd.f32 0.0, %v8193
    %v8195 = vpop.f32.mrf.mxu0
    %v8196 = vpop.f32.mrf.mxu0
    %v8197 = vadd.f32 0.0, %v8196
    %v8198 = vpop.f32.mrf.mxu0
    %8199 = vmatprep.mubr.bf16.mxu0 %v6604
    %8200 = vmatmul.mubr.bf16.gmra.mxu0 %v6253
    %v8201 = vpop.f32.mrf.mxu0
    %v8202 = vadd.f32 0.0, %v8201
    %v8203 = vpop.f32.mrf.mxu0
    %v8204 = vpop.f32.mrf.mxu0
    %v8205 = vadd.f32 0.0, %v8204
    %v8206 = vpop.f32.mrf.mxu0
    %8207 = vmatprep.mubr.bf16.mxu0 %v6653
    %8208 = vmatmul.mubr.bf16.gmra.mxu0 %v6302
    %v8209 = vpop.f32.mrf.mxu0
    %v8210 = vadd.f32 0.0, %v8209
    %v8211 = vpop.f32.mrf.mxu0
    %v8212 = vpop.f32.mrf.mxu0
    %v8213 = vadd.f32 0.0, %v8212
    %v8214 = vpop.f32.mrf.mxu0
    %8215 = vmatprep.mubr.bf16.mxu0 %v6759
    %8216 = vmatmul.mubr.bf16.gmra.mxu0 %v6709
    %v8217 = vpop.f32.mrf.mxu0
    %v8218 = vadd.f32 0.0, %v8217
    %v8219 = vpop.f32.mrf.mxu0
    %v8220 = vpop.f32.mrf.mxu0
    %v8221 = vadd.f32 0.0, %v8220
    %v8222 = vpop.f32.mrf.mxu0
    %8223 = vdwg.mxu0
    %8224 = vmatprep.subr.bf16.mxu0 0
    %8225 = vmatpush1.bf16.msra.mxu0 %v8086
    %8226 = vmatprep.subr.bf16.mxu0 0
    %8227 = vmatpush1.bf16.msra.mxu0 %v8085
    %8228 = vmatprep.subr.bf16.mxu0 0
    %8229 = vmatpush1.bf16.msra.mxu0 %v8084
    %8230 = vmatprep.subr.bf16.mxu0 0
    %8231 = vmatpush1.bf16.msra.mxu0 %v8083
    %8232 = vmatprep.subr.bf16.mxu0 0
    %8233 = vmatpush1.bf16.msra.mxu0 %v8082
    %8234 = vmatprep.subr.bf16.mxu0 0
    %8235 = vmatpush1.bf16.msra.mxu0 %v8081
    %8236 = vmatprep.subr.bf16.mxu0 0
    %8237 = vmatpush1.bf16.msra.mxu0 %v8080
    %8238 = vmatprep.subr.bf16.mxu0 0
    %8239 = vmatpush1.bf16.msra.mxu0 %v8079
    %8240 = vmatprep.subr.bf16.mxu0 0
    %8241 = vmatpush2.bf16.msra.mxu0 %v8094
    %8242 = vmatprep.subr.bf16.mxu0 0
    %8243 = vmatpush2.bf16.msra.mxu0 %v8093
    %8244 = vmatprep.subr.bf16.mxu0 0
    %8245 = vmatpush2.bf16.msra.mxu0 %v8092
    %8246 = vmatprep.subr.bf16.mxu0 0
    %8247 = vmatpush2.bf16.msra.mxu0 %v8091
    %8248 = vmatprep.subr.bf16.mxu0 0
    %8249 = vmatpush2.bf16.msra.mxu0 %v8090
    %8250 = vmatprep.subr.bf16.mxu0 0
    %8251 = vmatpush2.bf16.msra.mxu0 %v8089
    %8252 = vmatprep.subr.bf16.mxu0 0
    %8253 = vmatpush2.bf16.msra.mxu0 %v8088
    %8254 = vmatprep.subr.bf16.mxu0 0
    %8255 = vmatpush2.bf16.msra.mxu0 %v8087
    %8256 = vmatprep.mubr.bf16.mxu0 %v6408
    %8257 = vmatmul.mubr.bf16.gmra.mxu0 %v6057
    %v8258 = vpop.f32.mrf.mxu0
    %v8259 = vadd.f32 %v8162, %v8258
    %v8260 = vpop.f32.mrf.mxu0
    %v8261 = vpop.f32.mrf.mxu0
    %v8262 = vadd.f32 %v8165, %v8261
    %v8263 = vpop.f32.mrf.mxu0
    %8264 = vmatprep.mubr.bf16.mxu0 %v6457
    %8265 = vmatmul.mubr.bf16.gmra.mxu0 %v6106
    %v8266 = vpop.f32.mrf.mxu0
    %v8267 = vadd.f32 %v8170, %v8266
    %v8268 = vpop.f32.mrf.mxu0
    %v8269 = vpop.f32.mrf.mxu0
    %v8270 = vadd.f32 %v8173, %v8269
    %v8271 = vpop.f32.mrf.mxu0
    %8272 = vmatprep.mubr.bf16.mxu0 %v6506
    %8273 = vmatmul.mubr.bf16.gmra.mxu0 %v6155
    %v8274 = vpop.f32.mrf.mxu0
    %v8275 = vadd.f32 %v8178, %v8274
    %v8276 = vpop.f32.mrf.mxu0
    %v8277 = vpop.f32.mrf.mxu0
    %v8278 = vadd.f32 %v8181, %v8277
    %v8279 = vpop.f32.mrf.mxu0
    %8280 = vmatprep.mubr.bf16.mxu0 %v6555
    %8281 = vmatmul.mubr.bf16.gmra.mxu0 %v6204
    %v8282 = vpop.f32.mrf.mxu0
    %v8283 = vadd.f32 %v8186, %v8282
    %v8284 = vpop.f32.mrf.mxu0
    %v8285 = vpop.f32.mrf.mxu0
    %v8286 = vadd.f32 %v8189, %v8285
    %v8287 = vpop.f32.mrf.mxu0
    %8288 = vmatprep.mubr.bf16.mxu0 %v6604
    %8289 = vmatmul.mubr.bf16.gmra.mxu0 %v6253
    %v8290 = vpop.f32.mrf.mxu0
    %v8291 = vadd.f32 %v8194, %v8290
    %v8292 = vpop.f32.mrf.mxu0
    %v8293 = vpop.f32.mrf.mxu0
    %v8294 = vadd.f32 %v8197, %v8293
    %v8295 = vpop.f32.mrf.mxu0
    %8296 = vmatprep.mubr.bf16.mxu0 %v6653
    %8297 = vmatmul.mubr.bf16.gmra.mxu0 %v6302
    %v8298 = vpop.f32.mrf.mxu0
    %v8299 = vadd.f32 %v8202, %v8298
    %v8300 = vpop.f32.mrf.mxu0
    %v8301 = vpop.f32.mrf.mxu0
    %v8302 = vadd.f32 %v8205, %v8301
    %v8303 = vpop.f32.mrf.mxu0
    %8304 = vmatprep.mubr.bf16.mxu0 %v6759
    %8305 = vmatmul.mubr.bf16.gmra.mxu0 %v6709
    %v8306 = vpop.f32.mrf.mxu0
    %v8307 = vadd.f32 %v8210, %v8306
    %v8308 = vpop.f32.mrf.mxu0
    %v8309 = vpop.f32.mrf.mxu0
    %v8310 = vadd.f32 %v8213, %v8309
    %v8311 = vpop.f32.mrf.mxu0
    %8312 = vmatprep.mubr.bf16.mxu0 %v5959
    %8313 = vmatmul.mubr.bf16.gmra.mxu0 %v5959
    %v8314 = vpop.f32.mrf.mxu0
    %v8315 = vadd.f32 %v8218, %v8314
    %v8316 = vpop.f32.mrf.mxu0
    %v8317 = vpop.f32.mrf.mxu0
    %v8318 = vadd.f32 %v8221, %v8317
    %v8319 = vpop.f32.mrf.mxu0
    %8320 = vdwg.mxu0
    %s8321 = scalar_lea.vmem [#allocation9], 768
    %v8322 = vld [vmem:[%s8321] sm:$0xf]
    %v8323 = vld [vmem:[%s8321 + $0x4] sm:$0xf]
    %v8324 = vld [vmem:[%s8321 + $0x8] sm:$0xf]
    %v8325 = vld [vmem:[%s8321 + $0xc] sm:$0xf]
    %v8326 = vld [vmem:[%s8321 + $0x10] sm:$0xf]
    %v8327 = vld [vmem:[%s8321 + $0x14] sm:$0xf]
    %v8328 = vld [vmem:[%s8321 + $0x18] sm:$0xf]
    %v8329 = vld [vmem:[%s8321 + $0x1c] sm:$0xf]
    %v8330 = vld [vmem:[%s8321 + $0x20] sm:$0xf]
    %v8331 = vld [vmem:[%s8321 + $0x24] sm:$0xf]
    %v8332 = vld [vmem:[%s8321 + $0x28] sm:$0xf]
    %v8333 = vld [vmem:[%s8321 + $0x2c] sm:$0xf]
    %v8334 = vld [vmem:[%s8321 + $0x30] sm:$0xf]
    %v8335 = vld [vmem:[%s8321 + $0x34] sm:$0xf]
    %v8336 = vld [vmem:[%s8321 + $0x38] sm:$0xf]
    %v8337 = vld [vmem:[%s8321 + $0x3c] sm:$0xf]
    %v8338 = vld [vmem:[%s8321 + $0x40] sm:$0xf]
    %v8339 = vld [vmem:[%s8321 + $0x44] sm:$0xf]
    %v8340 = vld [vmem:[%s8321 + $0x48] sm:$0xf]
    %v8341 = vld [vmem:[%s8321 + $0x4c] sm:$0xf]
    %v8342 = vld [vmem:[%s8321 + $0x50] sm:$0xf]
    %v8343 = vld [vmem:[%s8321 + $0x54] sm:$0xf]
    %v8344 = vld [vmem:[%s8321 + $0x58] sm:$0xf]
    %v8345 = vld [vmem:[%s8321 + $0x5c] sm:$0xf]
    %v8346 = vld [vmem:[%s8321 + $0x60] sm:$0xf]
    %v8347 = vld [vmem:[%s8321 + $0x64] sm:$0xf]
    %v8348 = vld [vmem:[%s8321 + $0x68] sm:$0xf]
    %v8349 = vld [vmem:[%s8321 + $0x6c] sm:$0xf]
    %v8350 = vld [vmem:[%s8321 + $0x70] sm:$0xf]
    %v8351 = vld [vmem:[%s8321 + $0x74] sm:$0xf]
    %v8352 = vld [vmem:[%s8321 + $0x78] sm:$0xf]
    %v8353 = vld [vmem:[%s8321 + $0x7c] sm:$0xf]
    %v8354 = vld [vmem:[%s8321 + $0x80] sm:$0xf]
    %v8355 = vld [vmem:[%s8321 + $0x84] sm:$0xf]
    %v8356 = vld [vmem:[%s8321 + $0x88] sm:$0xf]
    %v8357 = vld [vmem:[%s8321 + $0x8c] sm:$0xf]
    %v8358 = vld [vmem:[%s8321 + $0x90] sm:$0xf]
    %v8359 = vld [vmem:[%s8321 + $0x94] sm:$0xf]
    %v8360 = vld [vmem:[%s8321 + $0x98] sm:$0xf]
    %v8361 = vld [vmem:[%s8321 + $0x9c] sm:$0xf]
    %v8362 = vld [vmem:[%s8321 + $0xa0] sm:$0xf]
    %v8363 = vld [vmem:[%s8321 + $0xa4] sm:$0xf]
    %v8364 = vld [vmem:[%s8321 + $0xa8] sm:$0xf]
    %v8365 = vld [vmem:[%s8321 + $0xac] sm:$0xf]
    %v8366 = vld [vmem:[%s8321 + $0xb0] sm:$0xf]
    %v8367 = vld [vmem:[%s8321 + $0xb4] sm:$0xf]
    %v8368 = vld [vmem:[%s8321 + $0xb8] sm:$0xf]
    %v8369 = vld [vmem:[%s8321 + $0xbc] sm:$0xf]
    %v8370 = vld [vmem:[%s8321 + $0xc0] sm:$0xf]
    %v8371 = vld [vmem:[%s8321 + $0xc4] sm:$0xf]
    %v8372 = vld [vmem:[%s8321 + $0xc8] sm:$0xf]
    %v8373 = vld [vmem:[%s8321 + $0xcc] sm:$0xf]
    %v8374 = vld [vmem:[%s8321 + $0xd0] sm:$0xf]
    %v8375 = vld [vmem:[%s8321 + $0xd4] sm:$0xf]
    %v8376 = vld [vmem:[%s8321 + $0xd8] sm:$0xf]
    %v8377 = vld [vmem:[%s8321 + $0xdc] sm:$0xf]
    %v8378 = vld [vmem:[%s8321 + $0xe0] sm:$0xf]
    %v8379 = vld [vmem:[%s8321 + $0xe4] sm:$0xf]
    %v8380 = vld [vmem:[%s8321 + $0xe8] sm:$0xf]
    %v8381 = vld [vmem:[%s8321 + $0xec] sm:$0xf]
    %v8382 = vld [vmem:[%s8321 + $0xf0] sm:$0xf]
    %v8383 = vld [vmem:[%s8321 + $0xf4] sm:$0xf]
    %v8384 = vld [vmem:[%s8321 + $0xf8] sm:$0xf]
    %v8385 = vld [vmem:[%s8321 + $0xfc] sm:$0xf]
    %v8450 = vunpack.c.l.b16 %v8322
    %v8451 = vunpack.c.l.b16 %v8323
    %v8452 = vunpack.c.l.b16 %v8324
    %v8453 = vunpack.c.l.b16 %v8325
    %v8454 = vunpack.c.l.b16 %v8326
    %v8455 = vunpack.c.l.b16 %v8327
    %v8456 = vunpack.c.l.b16 %v8328
    %v8457 = vunpack.c.l.b16 %v8329
    %v8458 = vunpack.c.l.b16 %v8330
    %v8459 = vunpack.c.l.b16 %v8331
    %v8460 = vunpack.c.l.b16 %v8332
    %v8461 = vunpack.c.l.b16 %v8333
    %v8462 = vunpack.c.l.b16 %v8334
    %v8463 = vunpack.c.l.b16 %v8335
    %v8464 = vunpack.c.l.b16 %v8336
    %v8465 = vunpack.c.l.b16 %v8337
    %v8466 = vunpack.c.l.b16 %v8338
    %v8467 = vunpack.c.l.b16 %v8339
    %v8468 = vunpack.c.l.b16 %v8340
    %v8469 = vunpack.c.l.b16 %v8341
    %v8470 = vunpack.c.l.b16 %v8342
    %v8471 = vunpack.c.l.b16 %v8343
    %v8472 = vunpack.c.l.b16 %v8344
    %v8473 = vunpack.c.l.b16 %v8345
    %v8474 = vunpack.c.l.b16 %v8346
    %v8475 = vunpack.c.l.b16 %v8347
    %v8476 = vunpack.c.l.b16 %v8348
    %v8477 = vunpack.c.l.b16 %v8349
    %v8478 = vunpack.c.l.b16 %v8350
    %v8479 = vunpack.c.l.b16 %v8351
    %v8480 = vunpack.c.l.b16 %v8352
    %v8481 = vunpack.c.l.b16 %v8353
    %v8482 = vunpack.c.l.b16 %v8354
    %v8483 = vunpack.c.l.b16 %v8355
    %v8484 = vunpack.c.l.b16 %v8356
    %v8485 = vunpack.c.l.b16 %v8357
    %v8486 = vunpack.c.l.b16 %v8358
    %v8487 = vunpack.c.l.b16 %v8359
    %v8488 = vunpack.c.l.b16 %v8360
    %v8489 = vunpack.c.l.b16 %v8361
    %v8490 = vunpack.c.l.b16 %v8362
    %v8491 = vunpack.c.l.b16 %v8363
    %v8492 = vunpack.c.l.b16 %v8364
    %v8493 = vunpack.c.l.b16 %v8365
    %v8494 = vunpack.c.l.b16 %v8366
    %v8495 = vunpack.c.l.b16 %v8367
    %v8496 = vunpack.c.l.b16 %v8368
    %v8497 = vunpack.c.l.b16 %v8369
    %v8498 = vunpack.c.l.b16 %v8370
    %v8499 = vunpack.c.l.b16 %v8371
    %v8500 = vunpack.c.l.b16 %v8372
    %v8501 = vunpack.c.l.b16 %v8373
    %v8502 = vunpack.c.l.b16 %v8374
    %v8503 = vunpack.c.l.b16 %v8375
    %v8504 = vunpack.c.l.b16 %v8376
    %v8505 = vunpack.c.l.b16 %v8377
    %v8506 = vunpack.c.l.b16 %v8378
    %v8507 = vunpack.c.l.b16 %v8379
    %v8508 = vunpack.c.l.b16 %v8380
    %v8509 = vunpack.c.l.b16 %v8381
    %v8510 = vunpack.c.l.b16 %v8382
    %v8511 = vunpack.c.l.b16 %v8383
    %v8512 = vunpack.c.l.b16 %v8384
    %v8513 = vunpack.c.l.b16 %v8385
    %v8514 = vpack.c.b16 %v8451, %v8450
    %v8515 = vpack.c.b16 %v8453, %v8452
    %v8516 = vpack.c.b16 %v8455, %v8454
    %v8517 = vpack.c.b16 %v8457, %v8456
    %v8518 = vpack.c.b16 %v8459, %v8458
    %v8519 = vpack.c.b16 %v8461, %v8460
    %v8520 = vpack.c.b16 %v8463, %v8462
    %v8521 = vpack.c.b16 %v8465, %v8464
    %v8522 = vpack.c.b16 %v8467, %v8466
    %v8523 = vpack.c.b16 %v8469, %v8468
    %v8524 = vpack.c.b16 %v8471, %v8470
    %v8525 = vpack.c.b16 %v8473, %v8472
    %v8526 = vpack.c.b16 %v8475, %v8474
    %v8527 = vpack.c.b16 %v8477, %v8476
    %v8528 = vpack.c.b16 %v8479, %v8478
    %v8529 = vpack.c.b16 %v8481, %v8480
    %v8530 = vpack.c.b16 %v8483, %v8482
    %v8531 = vpack.c.b16 %v8485, %v8484
    %v8532 = vpack.c.b16 %v8487, %v8486
    %v8533 = vpack.c.b16 %v8489, %v8488
    %v8534 = vpack.c.b16 %v8491, %v8490
    %v8535 = vpack.c.b16 %v8493, %v8492
    %v8536 = vpack.c.b16 %v8495, %v8494
    %v8537 = vpack.c.b16 %v8497, %v8496
    %v8538 = vpack.c.b16 %v8499, %v8498
    %v8539 = vpack.c.b16 %v8501, %v8500
    %v8540 = vpack.c.b16 %v8503, %v8502
    %v8541 = vpack.c.b16 %v8505, %v8504
    %v8542 = vpack.c.b16 %v8507, %v8506
    %v8543 = vpack.c.b16 %v8509, %v8508
    %v8544 = vpack.c.b16 %v8511, %v8510
    %v8545 = vpack.c.b16 %v8513, %v8512
    %8578 = vmatprep.subr.bf16.mxu0 0
    %8579 = vmatpush1.bf16.msra.mxu0 %v8521
    %8580 = vmatprep.subr.bf16.mxu0 0
    %8581 = vmatpush1.bf16.msra.mxu0 %v8520
    %8582 = vmatprep.subr.bf16.mxu0 0
    %8583 = vmatpush1.bf16.msra.mxu0 %v8519
    %8584 = vmatprep.subr.bf16.mxu0 0
    %8585 = vmatpush1.bf16.msra.mxu0 %v8518
    %8586 = vmatprep.subr.bf16.mxu0 0
    %8587 = vmatpush1.bf16.msra.mxu0 %v8517
    %8588 = vmatprep.subr.bf16.mxu0 0
    %8589 = vmatpush1.bf16.msra.mxu0 %v8516
    %8590 = vmatprep.subr.bf16.mxu0 0
    %8591 = vmatpush1.bf16.msra.mxu0 %v8515
    %8592 = vmatprep.subr.bf16.mxu0 0
    %8593 = vmatpush1.bf16.msra.mxu0 %v8514
    %8594 = vmatprep.subr.bf16.mxu0 0
    %8595 = vmatpush2.bf16.msra.mxu0 %v8529
    %8596 = vmatprep.subr.bf16.mxu0 0
    %8597 = vmatpush2.bf16.msra.mxu0 %v8528
    %8598 = vmatprep.subr.bf16.mxu0 0
    %8599 = vmatpush2.bf16.msra.mxu0 %v8527
    %8600 = vmatprep.subr.bf16.mxu0 0
    %8601 = vmatpush2.bf16.msra.mxu0 %v8526
    %8602 = vmatprep.subr.bf16.mxu0 0
    %8603 = vmatpush2.bf16.msra.mxu0 %v8525
    %8604 = vmatprep.subr.bf16.mxu0 0
    %8605 = vmatpush2.bf16.msra.mxu0 %v8524
    %8606 = vmatprep.subr.bf16.mxu0 0
    %8607 = vmatpush2.bf16.msra.mxu0 %v8523
    %8608 = vmatprep.subr.bf16.mxu0 0
    %8609 = vmatpush2.bf16.msra.mxu0 %v8522
    %8610 = vmatprep.mubr.bf16.mxu0 %v7235
    %8611 = vmatmul.mubr.bf16.gmra.mxu0 %v6359
    %v8612 = vpop.f32.mrf.mxu0
    %v8613 = vadd.f32 0.0, %v8612
    %v8614 = vpop.f32.mrf.mxu0
    %v8615 = vpop.f32.mrf.mxu0
    %v8616 = vadd.f32 0.0, %v8615
    %v8617 = vpop.f32.mrf.mxu0
    %8618 = vmatprep.mubr.bf16.mxu0 %v7260
    %8619 = vmatmul.mubr.bf16.gmra.mxu0 %v6408
    %v8620 = vpop.f32.mrf.mxu0
    %v8621 = vadd.f32 0.0, %v8620
    %v8622 = vpop.f32.mrf.mxu0
    %v8623 = vpop.f32.mrf.mxu0
    %v8624 = vadd.f32 0.0, %v8623
    %v8625 = vpop.f32.mrf.mxu0
    %8626 = vmatprep.mubr.bf16.mxu0 %v7285
    %8627 = vmatmul.mubr.bf16.gmra.mxu0 %v6457
    %v8628 = vpop.f32.mrf.mxu0
    %v8629 = vadd.f32 0.0, %v8628
    %v8630 = vpop.f32.mrf.mxu0
    %v8631 = vpop.f32.mrf.mxu0
    %v8632 = vadd.f32 0.0, %v8631
    %v8633 = vpop.f32.mrf.mxu0
    %8634 = vmatprep.mubr.bf16.mxu0 %v7310
    %8635 = vmatmul.mubr.bf16.gmra.mxu0 %v6506
    %v8636 = vpop.f32.mrf.mxu0
    %v8637 = vadd.f32 0.0, %v8636
    %v8638 = vpop.f32.mrf.mxu0
    %v8639 = vpop.f32.mrf.mxu0
    %v8640 = vadd.f32 0.0, %v8639
    %v8641 = vpop.f32.mrf.mxu0
    %8642 = vmatprep.mubr.bf16.mxu0 %v7335
    %8643 = vmatmul.mubr.bf16.gmra.mxu0 %v6555
    %v8644 = vpop.f32.mrf.mxu0
    %v8645 = vadd.f32 0.0, %v8644
    %v8646 = vpop.f32.mrf.mxu0
    %v8647 = vpop.f32.mrf.mxu0
    %v8648 = vadd.f32 0.0, %v8647
    %v8649 = vpop.f32.mrf.mxu0
    %8650 = vmatprep.mubr.bf16.mxu0 %v7360
    %8651 = vmatmul.mubr.bf16.gmra.mxu0 %v6604
    %v8652 = vpop.f32.mrf.mxu0
    %v8653 = vadd.f32 0.0, %v8652
    %v8654 = vpop.f32.mrf.mxu0
    %v8655 = vpop.f32.mrf.mxu0
    %v8656 = vadd.f32 0.0, %v8655
    %v8657 = vpop.f32.mrf.mxu0
    %8658 = vmatprep.mubr.bf16.mxu0 %v7385
    %8659 = vmatmul.mubr.bf16.gmra.mxu0 %v6653
    %v8660 = vpop.f32.mrf.mxu0
    %v8661 = vadd.f32 0.0, %v8660
    %v8662 = vpop.f32.mrf.mxu0
    %v8663 = vpop.f32.mrf.mxu0
    %v8664 = vadd.f32 0.0, %v8663
    %v8665 = vpop.f32.mrf.mxu0
    %8666 = vmatprep.mubr.bf16.mxu0 %v7417
    %8667 = vmatmul.mubr.bf16.gmra.mxu0 %v6759
    %v8668 = vpop.f32.mrf.mxu0
    %v8669 = vadd.f32 0.0, %v8668
    %v8670 = vpop.f32.mrf.mxu0
    %v8671 = vpop.f32.mrf.mxu0
    %v8672 = vadd.f32 0.0, %v8671
    %v8673 = vpop.f32.mrf.mxu0
    %8674 = vdwg.mxu0
    %8675 = vmatprep.subr.bf16.mxu0 0
    %8676 = vmatpush1.bf16.msra.mxu0 %v8537
    %8677 = vmatprep.subr.bf16.mxu0 0
    %8678 = vmatpush1.bf16.msra.mxu0 %v8536
    %8679 = vmatprep.subr.bf16.mxu0 0
    %8680 = vmatpush1.bf16.msra.mxu0 %v8535
    %8681 = vmatprep.subr.bf16.mxu0 0
    %8682 = vmatpush1.bf16.msra.mxu0 %v8534
    %8683 = vmatprep.subr.bf16.mxu0 0
    %8684 = vmatpush1.bf16.msra.mxu0 %v8533
    %8685 = vmatprep.subr.bf16.mxu0 0
    %8686 = vmatpush1.bf16.msra.mxu0 %v8532
    %8687 = vmatprep.subr.bf16.mxu0 0
    %8688 = vmatpush1.bf16.msra.mxu0 %v8531
    %8689 = vmatprep.subr.bf16.mxu0 0
    %8690 = vmatpush1.bf16.msra.mxu0 %v8530
    %8691 = vmatprep.subr.bf16.mxu0 0
    %8692 = vmatpush2.bf16.msra.mxu0 %v8545
    %8693 = vmatprep.subr.bf16.mxu0 0
    %8694 = vmatpush2.bf16.msra.mxu0 %v8544
    %8695 = vmatprep.subr.bf16.mxu0 0
    %8696 = vmatpush2.bf16.msra.mxu0 %v8543
    %8697 = vmatprep.subr.bf16.mxu0 0
    %8698 = vmatpush2.bf16.msra.mxu0 %v8542
    %8699 = vmatprep.subr.bf16.mxu0 0
    %8700 = vmatpush2.bf16.msra.mxu0 %v8541
    %8701 = vmatprep.subr.bf16.mxu0 0
    %8702 = vmatpush2.bf16.msra.mxu0 %v8540
    %8703 = vmatprep.subr.bf16.mxu0 0
    %8704 = vmatpush2.bf16.msra.mxu0 %v8539
    %8705 = vmatprep.subr.bf16.mxu0 0
    %8706 = vmatpush2.bf16.msra.mxu0 %v8538
    %8707 = vmatprep.mubr.bf16.mxu0 %v7260
    %8708 = vmatmul.mubr.bf16.gmra.mxu0 %v6408
    %v8709 = vpop.f32.mrf.mxu0
    %v8710 = vadd.f32 %v8613, %v8709
    %v8711 = vpop.f32.mrf.mxu0
    %v8712 = vpop.f32.mrf.mxu0
    %v8713 = vadd.f32 %v8616, %v8712
    %v8714 = vpop.f32.mrf.mxu0
    %8715 = vmatprep.mubr.bf16.mxu0 %v7285
    %8716 = vmatmul.mubr.bf16.gmra.mxu0 %v6457
    %v8717 = vpop.f32.mrf.mxu0
    %v8718 = vadd.f32 %v8621, %v8717
    %v8719 = vpop.f32.mrf.mxu0
    %v8720 = vpop.f32.mrf.mxu0
    %v8721 = vadd.f32 %v8624, %v8720
    %v8722 = vpop.f32.mrf.mxu0
    %8723 = vmatprep.mubr.bf16.mxu0 %v7310
    %8724 = vmatmul.mubr.bf16.gmra.mxu0 %v6506
    %v8725 = vpop.f32.mrf.mxu0
    %v8726 = vadd.f32 %v8629, %v8725
    %v8727 = vpop.f32.mrf.mxu0
    %v8728 = vpop.f32.mrf.mxu0
    %v8729 = vadd.f32 %v8632, %v8728
    %v8730 = vpop.f32.mrf.mxu0
    %8731 = vmatprep.mubr.bf16.mxu0 %v7335
    %8732 = vmatmul.mubr.bf16.gmra.mxu0 %v6555
    %v8733 = vpop.f32.mrf.mxu0
    %v8734 = vadd.f32 %v8637, %v8733
    %v8735 = vpop.f32.mrf.mxu0
    %v8736 = vpop.f32.mrf.mxu0
    %v8737 = vadd.f32 %v8640, %v8736
    %v8738 = vpop.f32.mrf.mxu0
    %8739 = vmatprep.mubr.bf16.mxu0 %v7360
    %8740 = vmatmul.mubr.bf16.gmra.mxu0 %v6604
    %v8741 = vpop.f32.mrf.mxu0
    %v8742 = vadd.f32 %v8645, %v8741
    %v8743 = vpop.f32.mrf.mxu0
    %v8744 = vpop.f32.mrf.mxu0
    %v8745 = vadd.f32 %v8648, %v8744
    %v8746 = vpop.f32.mrf.mxu0
    %8747 = vmatprep.mubr.bf16.mxu0 %v7385
    %8748 = vmatmul.mubr.bf16.gmra.mxu0 %v6653
    %v8749 = vpop.f32.mrf.mxu0
    %v8750 = vadd.f32 %v8653, %v8749
    %v8751 = vpop.f32.mrf.mxu0
    %v8752 = vpop.f32.mrf.mxu0
    %v8753 = vadd.f32 %v8656, %v8752
    %v8754 = vpop.f32.mrf.mxu0
    %8755 = vmatprep.mubr.bf16.mxu0 %v7417
    %8756 = vmatmul.mubr.bf16.gmra.mxu0 %v6759
    %v8757 = vpop.f32.mrf.mxu0
    %v8758 = vadd.f32 %v8661, %v8757
    %v8759 = vpop.f32.mrf.mxu0
    %v8760 = vpop.f32.mrf.mxu0
    %v8761 = vadd.f32 %v8664, %v8760
    %v8762 = vpop.f32.mrf.mxu0
    %8763 = vmatprep.mubr.bf16.mxu0 %v5959
    %8764 = vmatmul.mubr.bf16.gmra.mxu0 %v5959
    %v8765 = vpop.f32.mrf.mxu0
    %v8766 = vadd.f32 %v8669, %v8765
    %v8767 = vpop.f32.mrf.mxu0
    %v8768 = vpop.f32.mrf.mxu0
    %v8769 = vadd.f32 %v8672, %v8768
    %v8770 = vpop.f32.mrf.mxu0
    %8771 = vdwg.mxu0
    %v8772 = vmax.f32 %v7149, 0.0
    %v8773 = vmax.f32 %v7152, 0.0
    %v8774 = vmax.f32 %v7157, 0.0
    %v8775 = vmax.f32 %v7160, 0.0
    %v8776 = vmax.f32 %v7165, 0.0
    %v8777 = vmax.f32 %v7168, 0.0
    %v8778 = vmax.f32 %v7173, 0.0
    %v8779 = vmax.f32 %v7176, 0.0
    %v8780 = vmax.f32 %v7181, 0.0
    %v8781 = vmax.f32 %v7184, 0.0
    %v8782 = vmax.f32 %v7189, 0.0
    %v8783 = vmax.f32 %v7192, 0.0
    %v8784 = vmax.f32 %v7197, 0.0
    %v8785 = vmax.f32 %v7200, 0.0
    %v8786 = vmax.f32 %v7205, 0.0
    %v8787 = vmax.f32 %v7208, 0.0
    %v8788 = vmin.f32 %v8772, 1.0
    %v8789 = vmin.f32 %v8773, 1.0
    %v8790 = vmin.f32 %v8774, 1.0
    %v8791 = vmin.f32 %v8775, 1.0
    %v8792 = vmin.f32 %v8776, 1.0
    %v8793 = vmin.f32 %v8777, 1.0
    %v8794 = vmin.f32 %v8778, 1.0
    %v8795 = vmin.f32 %v8779, 1.0
    %v8796 = vmin.f32 %v8780, 1.0
    %v8797 = vmin.f32 %v8781, 1.0
    %v8798 = vmin.f32 %v8782, 1.0
    %v8799 = vmin.f32 %v8783, 1.0
    %v8800 = vmin.f32 %v8784, 1.0
    %v8801 = vmin.f32 %v8785, 1.0
    %v8802 = vmin.f32 %v8786, 1.0
    %v8803 = vmin.f32 %v8787, 1.0
    %v8804 = vmax.f32 %v7808, 0.0
    %v8805 = vmax.f32 %v7811, 0.0
    %v8806 = vmax.f32 %v7816, 0.0
    %v8807 = vmax.f32 %v7819, 0.0
    %v8808 = vmax.f32 %v7824, 0.0
    %v8809 = vmax.f32 %v7827, 0.0
    %v8810 = vmax.f32 %v7832, 0.0
    %v8811 = vmax.f32 %v7835, 0.0
    %v8812 = vmax.f32 %v7840, 0.0
    %v8813 = vmax.f32 %v7843, 0.0
    %v8814 = vmax.f32 %v7848, 0.0
    %v8815 = vmax.f32 %v7851, 0.0
    %v8816 = vmax.f32 %v7856, 0.0
    %v8817 = vmax.f32 %v7859, 0.0
    %v8818 = vmax.f32 %v7864, 0.0
    %v8819 = vmax.f32 %v7867, 0.0
    %v8820 = vmin.f32 %v8804, 1.0
    %v8821 = vmin.f32 %v8805, 1.0
    %v8822 = vmin.f32 %v8806, 1.0
    %v8823 = vmin.f32 %v8807, 1.0
    %v8824 = vmin.f32 %v8808, 1.0
    %v8825 = vmin.f32 %v8809, 1.0
    %v8826 = vmin.f32 %v8810, 1.0
    %v8827 = vmin.f32 %v8811, 1.0
    %v8828 = vmin.f32 %v8812, 1.0
    %v8829 = vmin.f32 %v8813, 1.0
    %v8830 = vmin.f32 %v8814, 1.0
    %v8831 = vmin.f32 %v8815, 1.0
    %v8832 = vmin.f32 %v8816, 1.0
    %v8833 = vmin.f32 %v8817, 1.0
    %v8834 = vmin.f32 %v8818, 1.0
    %v8835 = vmin.f32 %v8819, 1.0
    %v8836 = vmax.f32 %v8259, 0.0
    %v8837 = vmax.f32 %v8262, 0.0
    %v8838 = vmax.f32 %v8267, 0.0
    %v8839 = vmax.f32 %v8270, 0.0
    %v8840 = vmax.f32 %v8275, 0.0
    %v8841 = vmax.f32 %v8278, 0.0
    %v8842 = vmax.f32 %v8283, 0.0
    %v8843 = vmax.f32 %v8286, 0.0
    %v8844 = vmax.f32 %v8291, 0.0
    %v8845 = vmax.f32 %v8294, 0.0
    %v8846 = vmax.f32 %v8299, 0.0
    %v8847 = vmax.f32 %v8302, 0.0
    %v8848 = vmax.f32 %v8307, 0.0
    %v8849 = vmax.f32 %v8310, 0.0
    %v8850 = vmax.f32 %v8315, 0.0
    %v8851 = vmax.f32 %v8318, 0.0
    %v8852 = vmin.f32 %v8836, 1.0
    %v8853 = vmin.f32 %v8837, 1.0
    %v8854 = vmin.f32 %v8838, 1.0
    %v8855 = vmin.f32 %v8839, 1.0
    %v8856 = vmin.f32 %v8840, 1.0
    %v8857 = vmin.f32 %v8841, 1.0
    %v8858 = vmin.f32 %v8842, 1.0
    %v8859 = vmin.f32 %v8843, 1.0
    %v8860 = vmin.f32 %v8844, 1.0
    %v8861 = vmin.f32 %v8845, 1.0
    %v8862 = vmin.f32 %v8846, 1.0
    %v8863 = vmin.f32 %v8847, 1.0
    %v8864 = vmin.f32 %v8848, 1.0
    %v8865 = vmin.f32 %v8849, 1.0
    %v8866 = vmin.f32 %v8850, 1.0
    %v8867 = vmin.f32 %v8851, 1.0
    %v8868 = vmax.f32 %v8710, 0.0
    %v8869 = vmax.f32 %v8713, 0.0
    %v8870 = vmax.f32 %v8718, 0.0
    %v8871 = vmax.f32 %v8721, 0.0
    %v8872 = vmax.f32 %v8726, 0.0
    %v8873 = vmax.f32 %v8729, 0.0
    %v8874 = vmax.f32 %v8734, 0.0
    %v8875 = vmax.f32 %v8737, 0.0
    %v8876 = vmax.f32 %v8742, 0.0
    %v8877 = vmax.f32 %v8745, 0.0
    %v8878 = vmax.f32 %v8750, 0.0
    %v8879 = vmax.f32 %v8753, 0.0
    %v8880 = vmax.f32 %v8758, 0.0
    %v8881 = vmax.f32 %v8761, 0.0
    %v8882 = vmax.f32 %v8766, 0.0
    %v8883 = vmax.f32 %v8769, 0.0
    %v8884 = vmin.f32 %v8868, 1.0
    %v8885 = vmin.f32 %v8869, 1.0
    %v8886 = vmin.f32 %v8870, 1.0
    %v8887 = vmin.f32 %v8871, 1.0
    %v8888 = vmin.f32 %v8872, 1.0
    %v8889 = vmin.f32 %v8873, 1.0
    %v8890 = vmin.f32 %v8874, 1.0
    %v8891 = vmin.f32 %v8875, 1.0
    %v8892 = vmin.f32 %v8876, 1.0
    %v8893 = vmin.f32 %v8877, 1.0
    %v8894 = vmin.f32 %v8878, 1.0
    %v8895 = vmin.f32 %v8879, 1.0
    %v8896 = vmin.f32 %v8880, 1.0
    %v8897 = vmin.f32 %v8881, 1.0
    %v8898 = vmin.f32 %v8882, 1.0
    %v8899 = vmin.f32 %v8883, 1.0
    %v8916 = vcombine.high %v8788, %v8788
    %v8918 = vunpack.c.l.s4 1983009808
    %v8919 = vunpack.c.0.s8 %v8918
    %v8920 = vlaneseq
    %v8921 = vshrl.u32 %v8920, 7
    %v8922 = vsub.s32 %v8919, %v8921
    %v8923 = vrot.slane %v8788, %v8922
    %v8925 = vunpack.c.l.s4 1983009808
    %v8926 = vunpack.c.0.s8 %v8925
    %v8927 = vlaneseq
    %v8928 = vshrl.u32 %v8927, 7
    %v8929 = vsub.s32 %v8926, %v8928
    %v8930 = vrot.slane %v8916, %v8929
    %v8931 = vcombine.high %v8923, %v8923
    %v8932 = vcombine.high %v8930, %v8930
    %v8933 = vcombine.high %v8789, %v8789
    %v8935 = vunpack.c.l.s4 1983009808
    %v8936 = vunpack.c.0.s8 %v8935
    %v8937 = vlaneseq
    %v8938 = vshrl.u32 %v8937, 7
    %v8939 = vsub.s32 %v8936, %v8938
    %v8940 = vrot.slane %v8789, %v8939
    %v8942 = vunpack.c.l.s4 1983009808
    %v8943 = vunpack.c.0.s8 %v8942
    %v8944 = vlaneseq
    %v8945 = vshrl.u32 %v8944, 7
    %v8946 = vsub.s32 %v8943, %v8945
    %v8947 = vrot.slane %v8933, %v8946
    %v8948 = vcombine.high %v8940, %v8940
    %v8949 = vcombine.high %v8947, %v8947
    %v8950 = vcombine.high %v8790, %v8790
    %v8952 = vunpack.c.l.s4 1983009808
    %v8953 = vunpack.c.0.s8 %v8952
    %v8954 = vlaneseq
    %v8955 = vshrl.u32 %v8954, 7
    %v8956 = vsub.s32 %v8953, %v8955
    %v8957 = vrot.slane %v8790, %v8956
    %v8959 = vunpack.c.l.s4 1983009808
    %v8960 = vunpack.c.0.s8 %v8959
    %v8961 = vlaneseq
    %v8962 = vshrl.u32 %v8961, 7
    %v8963 = vsub.s32 %v8960, %v8962
    %v8964 = vrot.slane %v8950, %v8963
    %v8965 = vcombine.high %v8957, %v8957
    %v8966 = vcombine.high %v8964, %v8964
    %v8967 = vcombine.high %v8791, %v8791
    %v8969 = vunpack.c.l.s4 1983009808
    %v8970 = vunpack.c.0.s8 %v8969
    %v8971 = vlaneseq
    %v8972 = vshrl.u32 %v8971, 7
    %v8973 = vsub.s32 %v8970, %v8972
    %v8974 = vrot.slane %v8791, %v8973
    %v8976 = vunpack.c.l.s4 1983009808
    %v8977 = vunpack.c.0.s8 %v8976
    %v8978 = vlaneseq
    %v8979 = vshrl.u32 %v8978, 7
    %v8980 = vsub.s32 %v8977, %v8979
    %v8981 = vrot.slane %v8967, %v8980
    %v8982 = vcombine.high %v8974, %v8974
    %v8983 = vcombine.high %v8981, %v8981
    %v8984 = vcombine.high %v8792, %v8792
    %v8986 = vunpack.c.l.s4 1983009808
    %v8987 = vunpack.c.0.s8 %v8986
    %v8988 = vlaneseq
    %v8989 = vshrl.u32 %v8988, 7
    %v8990 = vsub.s32 %v8987, %v8989
    %v8991 = vrot.slane %v8792, %v8990
    %v8993 = vunpack.c.l.s4 1983009808
    %v8994 = vunpack.c.0.s8 %v8993
    %v8995 = vlaneseq
    %v8996 = vshrl.u32 %v8995, 7
    %v8997 = vsub.s32 %v8994, %v8996
    %v8998 = vrot.slane %v8984, %v8997
    %v8999 = vcombine.high %v8991, %v8991
    %v9000 = vcombine.high %v8998, %v8998
    %v9001 = vcombine.high %v8793, %v8793
    %v9003 = vunpack.c.l.s4 1983009808
    %v9004 = vunpack.c.0.s8 %v9003
    %v9005 = vlaneseq
    %v9006 = vshrl.u32 %v9005, 7
    %v9007 = vsub.s32 %v9004, %v9006
    %v9008 = vrot.slane %v8793, %v9007
    %v9010 = vunpack.c.l.s4 1983009808
    %v9011 = vunpack.c.0.s8 %v9010
    %v9012 = vlaneseq
    %v9013 = vshrl.u32 %v9012, 7
    %v9014 = vsub.s32 %v9011, %v9013
    %v9015 = vrot.slane %v9001, %v9014
    %v9016 = vcombine.high %v9008, %v9008
    %v9017 = vcombine.high %v9015, %v9015
    %v9018 = vcombine.high %v8794, %v8794
    %v9020 = vunpack.c.l.s4 1983009808
    %v9021 = vunpack.c.0.s8 %v9020
    %v9022 = vlaneseq
    %v9023 = vshrl.u32 %v9022, 7
    %v9024 = vsub.s32 %v9021, %v9023
    %v9025 = vrot.slane %v8794, %v9024
    %v9027 = vunpack.c.l.s4 1983009808
    %v9028 = vunpack.c.0.s8 %v9027
    %v9029 = vlaneseq
    %v9030 = vshrl.u32 %v9029, 7
    %v9031 = vsub.s32 %v9028, %v9030
    %v9032 = vrot.slane %v9018, %v9031
    %v9033 = vcombine.high %v9025, %v9025
    %v9034 = vcombine.high %v9032, %v9032
    %v9035 = vcombine.high %v8795, %v8795
    %v9037 = vunpack.c.l.s4 1983009808
    %v9038 = vunpack.c.0.s8 %v9037
    %v9039 = vlaneseq
    %v9040 = vshrl.u32 %v9039, 7
    %v9041 = vsub.s32 %v9038, %v9040
    %v9042 = vrot.slane %v8795, %v9041
    %v9044 = vunpack.c.l.s4 1983009808
    %v9045 = vunpack.c.0.s8 %v9044
    %v9046 = vlaneseq
    %v9047 = vshrl.u32 %v9046, 7
    %v9048 = vsub.s32 %v9045, %v9047
    %v9049 = vrot.slane %v9035, %v9048
    %v9050 = vcombine.high %v9042, %v9042
    %v9051 = vcombine.high %v9049, %v9049
    %v9052 = vcombine.high %v8796, %v8796
    %v9054 = vunpack.c.l.s4 1983009808
    %v9055 = vunpack.c.0.s8 %v9054
    %v9056 = vlaneseq
    %v9057 = vshrl.u32 %v9056, 7
    %v9058 = vsub.s32 %v9055, %v9057
    %v9059 = vrot.slane %v8796, %v9058
    %v9061 = vunpack.c.l.s4 1983009808
    %v9062 = vunpack.c.0.s8 %v9061
    %v9063 = vlaneseq
    %v9064 = vshrl.u32 %v9063, 7
    %v9065 = vsub.s32 %v9062, %v9064
    %v9066 = vrot.slane %v9052, %v9065
    %v9067 = vcombine.high %v9059, %v9059
    %v9068 = vcombine.high %v9066, %v9066
    %v9069 = vcombine.high %v8797, %v8797
    %v9071 = vunpack.c.l.s4 1983009808
    %v9072 = vunpack.c.0.s8 %v9071
    %v9073 = vlaneseq
    %v9074 = vshrl.u32 %v9073, 7
    %v9075 = vsub.s32 %v9072, %v9074
    %v9076 = vrot.slane %v8797, %v9075
    %v9078 = vunpack.c.l.s4 1983009808
    %v9079 = vunpack.c.0.s8 %v9078
    %v9080 = vlaneseq
    %v9081 = vshrl.u32 %v9080, 7
    %v9082 = vsub.s32 %v9079, %v9081
    %v9083 = vrot.slane %v9069, %v9082
    %v9084 = vcombine.high %v9076, %v9076
    %v9085 = vcombine.high %v9083, %v9083
    %v9086 = vcombine.high %v8798, %v8798
    %v9088 = vunpack.c.l.s4 1983009808
    %v9089 = vunpack.c.0.s8 %v9088
    %v9090 = vlaneseq
    %v9091 = vshrl.u32 %v9090, 7
    %v9092 = vsub.s32 %v9089, %v9091
    %v9093 = vrot.slane %v8798, %v9092
    %v9095 = vunpack.c.l.s4 1983009808
    %v9096 = vunpack.c.0.s8 %v9095
    %v9097 = vlaneseq
    %v9098 = vshrl.u32 %v9097, 7
    %v9099 = vsub.s32 %v9096, %v9098
    %v9100 = vrot.slane %v9086, %v9099
    %v9101 = vcombine.high %v9093, %v9093
    %v9102 = vcombine.high %v9100, %v9100
    %v9103 = vcombine.high %v8799, %v8799
    %v9105 = vunpack.c.l.s4 1983009808
    %v9106 = vunpack.c.0.s8 %v9105
    %v9107 = vlaneseq
    %v9108 = vshrl.u32 %v9107, 7
    %v9109 = vsub.s32 %v9106, %v9108
    %v9110 = vrot.slane %v8799, %v9109
    %v9112 = vunpack.c.l.s4 1983009808
    %v9113 = vunpack.c.0.s8 %v9112
    %v9114 = vlaneseq
    %v9115 = vshrl.u32 %v9114, 7
    %v9116 = vsub.s32 %v9113, %v9115
    %v9117 = vrot.slane %v9103, %v9116
    %v9118 = vcombine.high %v9110, %v9110
    %v9119 = vcombine.high %v9117, %v9117
    %v9120 = vcombine.high %v8800, %v8800
    %v9122 = vunpack.c.l.s4 1983009808
    %v9123 = vunpack.c.0.s8 %v9122
    %v9124 = vlaneseq
    %v9125 = vshrl.u32 %v9124, 7
    %v9126 = vsub.s32 %v9123, %v9125
    %v9127 = vrot.slane %v8800, %v9126
    %v9129 = vunpack.c.l.s4 1983009808
    %v9130 = vunpack.c.0.s8 %v9129
    %v9131 = vlaneseq
    %v9132 = vshrl.u32 %v9131, 7
    %v9133 = vsub.s32 %v9130, %v9132
    %v9134 = vrot.slane %v9120, %v9133
    %v9135 = vcombine.high %v9127, %v9127
    %v9136 = vcombine.high %v9134, %v9134
    %v9137 = vcombine.high %v8801, %v8801
    %v9139 = vunpack.c.l.s4 1983009808
    %v9140 = vunpack.c.0.s8 %v9139
    %v9141 = vlaneseq
    %v9142 = vshrl.u32 %v9141, 7
    %v9143 = vsub.s32 %v9140, %v9142
    %v9144 = vrot.slane %v8801, %v9143
    %v9146 = vunpack.c.l.s4 1983009808
    %v9147 = vunpack.c.0.s8 %v9146
    %v9148 = vlaneseq
    %v9149 = vshrl.u32 %v9148, 7
    %v9150 = vsub.s32 %v9147, %v9149
    %v9151 = vrot.slane %v9137, %v9150
    %v9152 = vcombine.high %v9144, %v9144
    %v9153 = vcombine.high %v9151, %v9151
    %v9154 = vcombine.high %v8802, %v8802
    %v9156 = vunpack.c.l.s4 1983009808
    %v9157 = vunpack.c.0.s8 %v9156
    %v9158 = vlaneseq
    %v9159 = vshrl.u32 %v9158, 7
    %v9160 = vsub.s32 %v9157, %v9159
    %v9161 = vrot.slane %v8802, %v9160
    %v9163 = vunpack.c.l.s4 1983009808
    %v9164 = vunpack.c.0.s8 %v9163
    %v9165 = vlaneseq
    %v9166 = vshrl.u32 %v9165, 7
    %v9167 = vsub.s32 %v9164, %v9166
    %v9168 = vrot.slane %v9154, %v9167
    %v9169 = vcombine.high %v9161, %v9161
    %v9170 = vcombine.high %v9168, %v9168
    %v9171 = vcombine.high %v8803, %v8803
    %v9173 = vunpack.c.l.s4 1983009808
    %v9174 = vunpack.c.0.s8 %v9173
    %v9175 = vlaneseq
    %v9176 = vshrl.u32 %v9175, 7
    %v9177 = vsub.s32 %v9174, %v9176
    %v9178 = vrot.slane %v8803, %v9177
    %v9180 = vunpack.c.l.s4 1983009808
    %v9181 = vunpack.c.0.s8 %v9180
    %v9182 = vlaneseq
    %v9183 = vshrl.u32 %v9182, 7
    %v9184 = vsub.s32 %v9181, %v9183
    %v9185 = vrot.slane %v9171, %v9184
    %v9186 = vcombine.high %v9178, %v9178
    %v9187 = vcombine.high %v9185, %v9185
    %v9268 = vcombine.high %v8820, %v8820
    %v9270 = vunpack.c.l.s4 1983009808
    %v9271 = vunpack.c.0.s8 %v9270
    %v9272 = vlaneseq
    %v9273 = vshrl.u32 %v9272, 7
    %v9274 = vsub.s32 %v9271, %v9273
    %v9275 = vrot.slane %v8820, %v9274
    %v9277 = vunpack.c.l.s4 1983009808
    %v9278 = vunpack.c.0.s8 %v9277
    %v9279 = vlaneseq
    %v9280 = vshrl.u32 %v9279, 7
    %v9281 = vsub.s32 %v9278, %v9280
    %v9282 = vrot.slane %v9268, %v9281
    %v9283 = vcombine.high %v9275, %v9275
    %v9284 = vcombine.high %v9282, %v9282
    %v9285 = vcombine.high %v8821, %v8821
    %v9287 = vunpack.c.l.s4 1983009808
    %v9288 = vunpack.c.0.s8 %v9287
    %v9289 = vlaneseq
    %v9290 = vshrl.u32 %v9289, 7
    %v9291 = vsub.s32 %v9288, %v9290
    %v9292 = vrot.slane %v8821, %v9291
    %v9294 = vunpack.c.l.s4 1983009808
    %v9295 = vunpack.c.0.s8 %v9294
    %v9296 = vlaneseq
    %v9297 = vshrl.u32 %v9296, 7
    %v9298 = vsub.s32 %v9295, %v9297
    %v9299 = vrot.slane %v9285, %v9298
    %v9300 = vcombine.high %v9292, %v9292
    %v9301 = vcombine.high %v9299, %v9299
    %v9302 = vcombine.high %v8822, %v8822
    %v9304 = vunpack.c.l.s4 1983009808
    %v9305 = vunpack.c.0.s8 %v9304
    %v9306 = vlaneseq
    %v9307 = vshrl.u32 %v9306, 7
    %v9308 = vsub.s32 %v9305, %v9307
    %v9309 = vrot.slane %v8822, %v9308
    %v9311 = vunpack.c.l.s4 1983009808
    %v9312 = vunpack.c.0.s8 %v9311
    %v9313 = vlaneseq
    %v9314 = vshrl.u32 %v9313, 7
    %v9315 = vsub.s32 %v9312, %v9314
    %v9316 = vrot.slane %v9302, %v9315
    %v9317 = vcombine.high %v9309, %v9309
    %v9318 = vcombine.high %v9316, %v9316
    %v9319 = vcombine.high %v8823, %v8823
    %v9321 = vunpack.c.l.s4 1983009808
    %v9322 = vunpack.c.0.s8 %v9321
    %v9323 = vlaneseq
    %v9324 = vshrl.u32 %v9323, 7
    %v9325 = vsub.s32 %v9322, %v9324
    %v9326 = vrot.slane %v8823, %v9325
    %v9328 = vunpack.c.l.s4 1983009808
    %v9329 = vunpack.c.0.s8 %v9328
    %v9330 = vlaneseq
    %v9331 = vshrl.u32 %v9330, 7
    %v9332 = vsub.s32 %v9329, %v9331
    %v9333 = vrot.slane %v9319, %v9332
    %v9334 = vcombine.high %v9326, %v9326
    %v9335 = vcombine.high %v9333, %v9333
    %v9336 = vcombine.high %v8824, %v8824
    %v9338 = vunpack.c.l.s4 1983009808
    %v9339 = vunpack.c.0.s8 %v9338
    %v9340 = vlaneseq
    %v9341 = vshrl.u32 %v9340, 7
    %v9342 = vsub.s32 %v9339, %v9341
    %v9343 = vrot.slane %v8824, %v9342
    %v9345 = vunpack.c.l.s4 1983009808
    %v9346 = vunpack.c.0.s8 %v9345
    %v9347 = vlaneseq
    %v9348 = vshrl.u32 %v9347, 7
    %v9349 = vsub.s32 %v9346, %v9348
    %v9350 = vrot.slane %v9336, %v9349
    %v9351 = vcombine.high %v9343, %v9343
    %v9352 = vcombine.high %v9350, %v9350
    %v9353 = vcombine.high %v8825, %v8825
    %v9355 = vunpack.c.l.s4 1983009808
    %v9356 = vunpack.c.0.s8 %v9355
    %v9357 = vlaneseq
    %v9358 = vshrl.u32 %v9357, 7
    %v9359 = vsub.s32 %v9356, %v9358
    %v9360 = vrot.slane %v8825, %v9359
    %v9362 = vunpack.c.l.s4 1983009808
    %v9363 = vunpack.c.0.s8 %v9362
    %v9364 = vlaneseq
    %v9365 = vshrl.u32 %v9364, 7
    %v9366 = vsub.s32 %v9363, %v9365
    %v9367 = vrot.slane %v9353, %v9366
    %v9368 = vcombine.high %v9360, %v9360
    %v9369 = vcombine.high %v9367, %v9367
    %v9370 = vcombine.high %v8826, %v8826
    %v9372 = vunpack.c.l.s4 1983009808
    %v9373 = vunpack.c.0.s8 %v9372
    %v9374 = vlaneseq
    %v9375 = vshrl.u32 %v9374, 7
    %v9376 = vsub.s32 %v9373, %v9375
    %v9377 = vrot.slane %v8826, %v9376
    %v9379 = vunpack.c.l.s4 1983009808
    %v9380 = vunpack.c.0.s8 %v9379
    %v9381 = vlaneseq
    %v9382 = vshrl.u32 %v9381, 7
    %v9383 = vsub.s32 %v9380, %v9382
    %v9384 = vrot.slane %v9370, %v9383
    %v9385 = vcombine.high %v9377, %v9377
    %v9386 = vcombine.high %v9384, %v9384
    %v9387 = vcombine.high %v8827, %v8827
    %v9389 = vunpack.c.l.s4 1983009808
    %v9390 = vunpack.c.0.s8 %v9389
    %v9391 = vlaneseq
    %v9392 = vshrl.u32 %v9391, 7
    %v9393 = vsub.s32 %v9390, %v9392
    %v9394 = vrot.slane %v8827, %v9393
    %v9396 = vunpack.c.l.s4 1983009808
    %v9397 = vunpack.c.0.s8 %v9396
    %v9398 = vlaneseq
    %v9399 = vshrl.u32 %v9398, 7
    %v9400 = vsub.s32 %v9397, %v9399
    %v9401 = vrot.slane %v9387, %v9400
    %v9402 = vcombine.high %v9394, %v9394
    %v9403 = vcombine.high %v9401, %v9401
    %v9404 = vcombine.high %v8828, %v8828
    %v9406 = vunpack.c.l.s4 1983009808
    %v9407 = vunpack.c.0.s8 %v9406
    %v9408 = vlaneseq
    %v9409 = vshrl.u32 %v9408, 7
    %v9410 = vsub.s32 %v9407, %v9409
    %v9411 = vrot.slane %v8828, %v9410
    %v9413 = vunpack.c.l.s4 1983009808
    %v9414 = vunpack.c.0.s8 %v9413
    %v9415 = vlaneseq
    %v9416 = vshrl.u32 %v9415, 7
    %v9417 = vsub.s32 %v9414, %v9416
    %v9418 = vrot.slane %v9404, %v9417
    %v9419 = vcombine.high %v9411, %v9411
    %v9420 = vcombine.high %v9418, %v9418
    %v9421 = vcombine.high %v8829, %v8829
    %v9423 = vunpack.c.l.s4 1983009808
    %v9424 = vunpack.c.0.s8 %v9423
    %v9425 = vlaneseq
    %v9426 = vshrl.u32 %v9425, 7
    %v9427 = vsub.s32 %v9424, %v9426
    %v9428 = vrot.slane %v8829, %v9427
    %v9430 = vunpack.c.l.s4 1983009808
    %v9431 = vunpack.c.0.s8 %v9430
    %v9432 = vlaneseq
    %v9433 = vshrl.u32 %v9432, 7
    %v9434 = vsub.s32 %v9431, %v9433
    %v9435 = vrot.slane %v9421, %v9434
    %v9436 = vcombine.high %v9428, %v9428
    %v9437 = vcombine.high %v9435, %v9435
    %v9438 = vcombine.high %v8830, %v8830
    %v9440 = vunpack.c.l.s4 1983009808
    %v9441 = vunpack.c.0.s8 %v9440
    %v9442 = vlaneseq
    %v9443 = vshrl.u32 %v9442, 7
    %v9444 = vsub.s32 %v9441, %v9443
    %v9445 = vrot.slane %v8830, %v9444
    %v9447 = vunpack.c.l.s4 1983009808
    %v9448 = vunpack.c.0.s8 %v9447
    %v9449 = vlaneseq
    %v9450 = vshrl.u32 %v9449, 7
    %v9451 = vsub.s32 %v9448, %v9450
    %v9452 = vrot.slane %v9438, %v9451
    %v9453 = vcombine.high %v9445, %v9445
    %v9454 = vcombine.high %v9452, %v9452
    %v9455 = vcombine.high %v8831, %v8831
    %v9457 = vunpack.c.l.s4 1983009808
    %v9458 = vunpack.c.0.s8 %v9457
    %v9459 = vlaneseq
    %v9460 = vshrl.u32 %v9459, 7
    %v9461 = vsub.s32 %v9458, %v9460
    %v9462 = vrot.slane %v8831, %v9461
    %v9464 = vunpack.c.l.s4 1983009808
    %v9465 = vunpack.c.0.s8 %v9464
    %v9466 = vlaneseq
    %v9467 = vshrl.u32 %v9466, 7
    %v9468 = vsub.s32 %v9465, %v9467
    %v9469 = vrot.slane %v9455, %v9468
    %v9470 = vcombine.high %v9462, %v9462
    %v9471 = vcombine.high %v9469, %v9469
    %v9472 = vcombine.high %v8832, %v8832
    %v9474 = vunpack.c.l.s4 1983009808
    %v9475 = vunpack.c.0.s8 %v9474
    %v9476 = vlaneseq
    %v9477 = vshrl.u32 %v9476, 7
    %v9478 = vsub.s32 %v9475, %v9477
    %v9479 = vrot.slane %v8832, %v9478
    %v9481 = vunpack.c.l.s4 1983009808
    %v9482 = vunpack.c.0.s8 %v9481
    %v9483 = vlaneseq
    %v9484 = vshrl.u32 %v9483, 7
    %v9485 = vsub.s32 %v9482, %v9484
    %v9486 = vrot.slane %v9472, %v9485
    %v9487 = vcombine.high %v9479, %v9479
    %v9488 = vcombine.high %v9486, %v9486
    %v9489 = vcombine.high %v8833, %v8833
    %v9491 = vunpack.c.l.s4 1983009808
    %v9492 = vunpack.c.0.s8 %v9491
    %v9493 = vlaneseq
    %v9494 = vshrl.u32 %v9493, 7
    %v9495 = vsub.s32 %v9492, %v9494
    %v9496 = vrot.slane %v8833, %v9495
    %v9498 = vunpack.c.l.s4 1983009808
    %v9499 = vunpack.c.0.s8 %v9498
    %v9500 = vlaneseq
    %v9501 = vshrl.u32 %v9500, 7
    %v9502 = vsub.s32 %v9499, %v9501
    %v9503 = vrot.slane %v9489, %v9502
    %v9504 = vcombine.high %v9496, %v9496
    %v9505 = vcombine.high %v9503, %v9503
    %v9506 = vcombine.high %v8834, %v8834
    %v9508 = vunpack.c.l.s4 1983009808
    %v9509 = vunpack.c.0.s8 %v9508
    %v9510 = vlaneseq
    %v9511 = vshrl.u32 %v9510, 7
    %v9512 = vsub.s32 %v9509, %v9511
    %v9513 = vrot.slane %v8834, %v9512
    %v9515 = vunpack.c.l.s4 1983009808
    %v9516 = vunpack.c.0.s8 %v9515
    %v9517 = vlaneseq
    %v9518 = vshrl.u32 %v9517, 7
    %v9519 = vsub.s32 %v9516, %v9518
    %v9520 = vrot.slane %v9506, %v9519
    %v9521 = vcombine.high %v9513, %v9513
    %v9522 = vcombine.high %v9520, %v9520
    %v9523 = vcombine.high %v8835, %v8835
    %v9525 = vunpack.c.l.s4 1983009808
    %v9526 = vunpack.c.0.s8 %v9525
    %v9527 = vlaneseq
    %v9528 = vshrl.u32 %v9527, 7
    %v9529 = vsub.s32 %v9526, %v9528
    %v9530 = vrot.slane %v8835, %v9529
    %v9532 = vunpack.c.l.s4 1983009808
    %v9533 = vunpack.c.0.s8 %v9532
    %v9534 = vlaneseq
    %v9535 = vshrl.u32 %v9534, 7
    %v9536 = vsub.s32 %v9533, %v9535
    %v9537 = vrot.slane %v9523, %v9536
    %v9538 = vcombine.high %v9530, %v9530
    %v9539 = vcombine.high %v9537, %v9537
    %v9620 = vcombine.high %v8852, %v8852
    %v9622 = vunpack.c.l.s4 1983009808
    %v9623 = vunpack.c.0.s8 %v9622
    %v9624 = vlaneseq
    %v9625 = vshrl.u32 %v9624, 7
    %v9626 = vsub.s32 %v9623, %v9625
    %v9627 = vrot.slane %v8852, %v9626
    %v9629 = vunpack.c.l.s4 1983009808
    %v9630 = vunpack.c.0.s8 %v9629
    %v9631 = vlaneseq
    %v9632 = vshrl.u32 %v9631, 7
    %v9633 = vsub.s32 %v9630, %v9632
    %v9634 = vrot.slane %v9620, %v9633
    %v9635 = vcombine.high %v9627, %v9627
    %v9636 = vcombine.high %v9634, %v9634
    %v9637 = vcombine.high %v8853, %v8853
    %v9639 = vunpack.c.l.s4 1983009808
    %v9640 = vunpack.c.0.s8 %v9639
    %v9641 = vlaneseq
    %v9642 = vshrl.u32 %v9641, 7
    %v9643 = vsub.s32 %v9640, %v9642
    %v9644 = vrot.slane %v8853, %v9643
    %v9646 = vunpack.c.l.s4 1983009808
    %v9647 = vunpack.c.0.s8 %v9646
    %v9648 = vlaneseq
    %v9649 = vshrl.u32 %v9648, 7
    %v9650 = vsub.s32 %v9647, %v9649
    %v9651 = vrot.slane %v9637, %v9650
    %v9652 = vcombine.high %v9644, %v9644
    %v9653 = vcombine.high %v9651, %v9651
    %v9654 = vcombine.high %v8854, %v8854
    %v9656 = vunpack.c.l.s4 1983009808
    %v9657 = vunpack.c.0.s8 %v9656
    %v9658 = vlaneseq
    %v9659 = vshrl.u32 %v9658, 7
    %v9660 = vsub.s32 %v9657, %v9659
    %v9661 = vrot.slane %v8854, %v9660
    %v9663 = vunpack.c.l.s4 1983009808
    %v9664 = vunpack.c.0.s8 %v9663
    %v9665 = vlaneseq
    %v9666 = vshrl.u32 %v9665, 7
    %v9667 = vsub.s32 %v9664, %v9666
    %v9668 = vrot.slane %v9654, %v9667
    %v9669 = vcombine.high %v9661, %v9661
    %v9670 = vcombine.high %v9668, %v9668
    %v9671 = vcombine.high %v8855, %v8855
    %v9673 = vunpack.c.l.s4 1983009808
    %v9674 = vunpack.c.0.s8 %v9673
    %v9675 = vlaneseq
    %v9676 = vshrl.u32 %v9675, 7
    %v9677 = vsub.s32 %v9674, %v9676
    %v9678 = vrot.slane %v8855, %v9677
    %v9680 = vunpack.c.l.s4 1983009808
    %v9681 = vunpack.c.0.s8 %v9680
    %v9682 = vlaneseq
    %v9683 = vshrl.u32 %v9682, 7
    %v9684 = vsub.s32 %v9681, %v9683
    %v9685 = vrot.slane %v9671, %v9684
    %v9686 = vcombine.high %v9678, %v9678
    %v9687 = vcombine.high %v9685, %v9685
    %v9688 = vcombine.high %v8856, %v8856
    %v9690 = vunpack.c.l.s4 1983009808
    %v9691 = vunpack.c.0.s8 %v9690
    %v9692 = vlaneseq
    %v9693 = vshrl.u32 %v9692, 7
    %v9694 = vsub.s32 %v9691, %v9693
    %v9695 = vrot.slane %v8856, %v9694
    %v9697 = vunpack.c.l.s4 1983009808
    %v9698 = vunpack.c.0.s8 %v9697
    %v9699 = vlaneseq
    %v9700 = vshrl.u32 %v9699, 7
    %v9701 = vsub.s32 %v9698, %v9700
    %v9702 = vrot.slane %v9688, %v9701
    %v9703 = vcombine.high %v9695, %v9695
    %v9704 = vcombine.high %v9702, %v9702
    %v9705 = vcombine.high %v8857, %v8857
    %v9707 = vunpack.c.l.s4 1983009808
    %v9708 = vunpack.c.0.s8 %v9707
    %v9709 = vlaneseq
    %v9710 = vshrl.u32 %v9709, 7
    %v9711 = vsub.s32 %v9708, %v9710
    %v9712 = vrot.slane %v8857, %v9711
    %v9714 = vunpack.c.l.s4 1983009808
    %v9715 = vunpack.c.0.s8 %v9714
    %v9716 = vlaneseq
    %v9717 = vshrl.u32 %v9716, 7
    %v9718 = vsub.s32 %v9715, %v9717
    %v9719 = vrot.slane %v9705, %v9718
    %v9720 = vcombine.high %v9712, %v9712
    %v9721 = vcombine.high %v9719, %v9719
    %v9722 = vcombine.high %v8858, %v8858
    %v9724 = vunpack.c.l.s4 1983009808
    %v9725 = vunpack.c.0.s8 %v9724
    %v9726 = vlaneseq
    %v9727 = vshrl.u32 %v9726, 7
    %v9728 = vsub.s32 %v9725, %v9727
    %v9729 = vrot.slane %v8858, %v9728
    %v9731 = vunpack.c.l.s4 1983009808
    %v9732 = vunpack.c.0.s8 %v9731
    %v9733 = vlaneseq
    %v9734 = vshrl.u32 %v9733, 7
    %v9735 = vsub.s32 %v9732, %v9734
    %v9736 = vrot.slane %v9722, %v9735
    %v9737 = vcombine.high %v9729, %v9729
    %v9738 = vcombine.high %v9736, %v9736
    %v9739 = vcombine.high %v8859, %v8859
    %v9741 = vunpack.c.l.s4 1983009808
    %v9742 = vunpack.c.0.s8 %v9741
    %v9743 = vlaneseq
    %v9744 = vshrl.u32 %v9743, 7
    %v9745 = vsub.s32 %v9742, %v9744
    %v9746 = vrot.slane %v8859, %v9745
    %v9748 = vunpack.c.l.s4 1983009808
    %v9749 = vunpack.c.0.s8 %v9748
    %v9750 = vlaneseq
    %v9751 = vshrl.u32 %v9750, 7
    %v9752 = vsub.s32 %v9749, %v9751
    %v9753 = vrot.slane %v9739, %v9752
    %v9754 = vcombine.high %v9746, %v9746
    %v9755 = vcombine.high %v9753, %v9753
    %v9756 = vcombine.high %v8860, %v8860
    %v9758 = vunpack.c.l.s4 1983009808
    %v9759 = vunpack.c.0.s8 %v9758
    %v9760 = vlaneseq
    %v9761 = vshrl.u32 %v9760, 7
    %v9762 = vsub.s32 %v9759, %v9761
    %v9763 = vrot.slane %v8860, %v9762
    %v9765 = vunpack.c.l.s4 1983009808
    %v9766 = vunpack.c.0.s8 %v9765
    %v9767 = vlaneseq
    %v9768 = vshrl.u32 %v9767, 7
    %v9769 = vsub.s32 %v9766, %v9768
    %v9770 = vrot.slane %v9756, %v9769
    %v9771 = vcombine.high %v9763, %v9763
    %v9772 = vcombine.high %v9770, %v9770
    %v9773 = vcombine.high %v8861, %v8861
    %v9775 = vunpack.c.l.s4 1983009808
    %v9776 = vunpack.c.0.s8 %v9775
    %v9777 = vlaneseq
    %v9778 = vshrl.u32 %v9777, 7
    %v9779 = vsub.s32 %v9776, %v9778
    %v9780 = vrot.slane %v8861, %v9779
    %v9782 = vunpack.c.l.s4 1983009808
    %v9783 = vunpack.c.0.s8 %v9782
    %v9784 = vlaneseq
    %v9785 = vshrl.u32 %v9784, 7
    %v9786 = vsub.s32 %v9783, %v9785
    %v9787 = vrot.slane %v9773, %v9786
    %v9788 = vcombine.high %v9780, %v9780
    %v9789 = vcombine.high %v9787, %v9787
    %v9790 = vcombine.high %v8862, %v8862
    %v9792 = vunpack.c.l.s4 1983009808
    %v9793 = vunpack.c.0.s8 %v9792
    %v9794 = vlaneseq
    %v9795 = vshrl.u32 %v9794, 7
    %v9796 = vsub.s32 %v9793, %v9795
    %v9797 = vrot.slane %v8862, %v9796
    %v9799 = vunpack.c.l.s4 1983009808
    %v9800 = vunpack.c.0.s8 %v9799
    %v9801 = vlaneseq
    %v9802 = vshrl.u32 %v9801, 7
    %v9803 = vsub.s32 %v9800, %v9802
    %v9804 = vrot.slane %v9790, %v9803
    %v9805 = vcombine.high %v9797, %v9797
    %v9806 = vcombine.high %v9804, %v9804
    %v9807 = vcombine.high %v8863, %v8863
    %v9809 = vunpack.c.l.s4 1983009808
    %v9810 = vunpack.c.0.s8 %v9809
    %v9811 = vlaneseq
    %v9812 = vshrl.u32 %v9811, 7
    %v9813 = vsub.s32 %v9810, %v9812
    %v9814 = vrot.slane %v8863, %v9813
    %v9816 = vunpack.c.l.s4 1983009808
    %v9817 = vunpack.c.0.s8 %v9816
    %v9818 = vlaneseq
    %v9819 = vshrl.u32 %v9818, 7
    %v9820 = vsub.s32 %v9817, %v9819
    %v9821 = vrot.slane %v9807, %v9820
    %v9822 = vcombine.high %v9814, %v9814
    %v9823 = vcombine.high %v9821, %v9821
    %v9824 = vcombine.high %v8864, %v8864
    %v9826 = vunpack.c.l.s4 1983009808
    %v9827 = vunpack.c.0.s8 %v9826
    %v9828 = vlaneseq
    %v9829 = vshrl.u32 %v9828, 7
    %v9830 = vsub.s32 %v9827, %v9829
    %v9831 = vrot.slane %v8864, %v9830
    %v9833 = vunpack.c.l.s4 1983009808
    %v9834 = vunpack.c.0.s8 %v9833
    %v9835 = vlaneseq
    %v9836 = vshrl.u32 %v9835, 7
    %v9837 = vsub.s32 %v9834, %v9836
    %v9838 = vrot.slane %v9824, %v9837
    %v9839 = vcombine.high %v9831, %v9831
    %v9840 = vcombine.high %v9838, %v9838
    %v9841 = vcombine.high %v8865, %v8865
    %v9843 = vunpack.c.l.s4 1983009808
    %v9844 = vunpack.c.0.s8 %v9843
    %v9845 = vlaneseq
    %v9846 = vshrl.u32 %v9845, 7
    %v9847 = vsub.s32 %v9844, %v9846
    %v9848 = vrot.slane %v8865, %v9847
    %v9850 = vunpack.c.l.s4 1983009808
    %v9851 = vunpack.c.0.s8 %v9850
    %v9852 = vlaneseq
    %v9853 = vshrl.u32 %v9852, 7
    %v9854 = vsub.s32 %v9851, %v9853
    %v9855 = vrot.slane %v9841, %v9854
    %v9856 = vcombine.high %v9848, %v9848
    %v9857 = vcombine.high %v9855, %v9855
    %v9858 = vcombine.high %v8866, %v8866
    %v9860 = vunpack.c.l.s4 1983009808
    %v9861 = vunpack.c.0.s8 %v9860
    %v9862 = vlaneseq
    %v9863 = vshrl.u32 %v9862, 7
    %v9864 = vsub.s32 %v9861, %v9863
    %v9865 = vrot.slane %v8866, %v9864
    %v9867 = vunpack.c.l.s4 1983009808
    %v9868 = vunpack.c.0.s8 %v9867
    %v9869 = vlaneseq
    %v9870 = vshrl.u32 %v9869, 7
    %v9871 = vsub.s32 %v9868, %v9870
    %v9872 = vrot.slane %v9858, %v9871
    %v9873 = vcombine.high %v9865, %v9865
    %v9874 = vcombine.high %v9872, %v9872
    %v9875 = vcombine.high %v8867, %v8867
    %v9877 = vunpack.c.l.s4 1983009808
    %v9878 = vunpack.c.0.s8 %v9877
    %v9879 = vlaneseq
    %v9880 = vshrl.u32 %v9879, 7
    %v9881 = vsub.s32 %v9878, %v9880
    %v9882 = vrot.slane %v8867, %v9881
    %v9884 = vunpack.c.l.s4 1983009808
    %v9885 = vunpack.c.0.s8 %v9884
    %v9886 = vlaneseq
    %v9887 = vshrl.u32 %v9886, 7
    %v9888 = vsub.s32 %v9885, %v9887
    %v9889 = vrot.slane %v9875, %v9888
    %v9890 = vcombine.high %v9882, %v9882
    %v9891 = vcombine.high %v9889, %v9889
    %v9972 = vcombine.high %v8884, %v8884
    %v9974 = vunpack.c.l.s4 1983009808
    %v9975 = vunpack.c.0.s8 %v9974
    %v9976 = vlaneseq
    %v9977 = vshrl.u32 %v9976, 7
    %v9978 = vsub.s32 %v9975, %v9977
    %v9979 = vrot.slane %v8884, %v9978
    %v9981 = vunpack.c.l.s4 1983009808
    %v9982 = vunpack.c.0.s8 %v9981
    %v9983 = vlaneseq
    %v9984 = vshrl.u32 %v9983, 7
    %v9985 = vsub.s32 %v9982, %v9984
    %v9986 = vrot.slane %v9972, %v9985
    %v9987 = vcombine.high %v9979, %v9979
    %v9988 = vcombine.high %v9986, %v9986
    %v9989 = vcombine.high %v8885, %v8885
    %v9991 = vunpack.c.l.s4 1983009808
    %v9992 = vunpack.c.0.s8 %v9991
    %v9993 = vlaneseq
    %v9994 = vshrl.u32 %v9993, 7
    %v9995 = vsub.s32 %v9992, %v9994
    %v9996 = vrot.slane %v8885, %v9995
    %v9998 = vunpack.c.l.s4 1983009808
    %v9999 = vunpack.c.0.s8 %v9998
    %v10000 = vlaneseq
    %v10001 = vshrl.u32 %v10000, 7
    %v10002 = vsub.s32 %v9999, %v10001
    %v10003 = vrot.slane %v9989, %v10002
    %v10004 = vcombine.high %v9996, %v9996
    %v10005 = vcombine.high %v10003, %v10003
    %v10006 = vcombine.high %v8886, %v8886
    %v10008 = vunpack.c.l.s4 1983009808
    %v10009 = vunpack.c.0.s8 %v10008
    %v10010 = vlaneseq
    %v10011 = vshrl.u32 %v10010, 7
    %v10012 = vsub.s32 %v10009, %v10011
    %v10013 = vrot.slane %v8886, %v10012
    %v10015 = vunpack.c.l.s4 1983009808
    %v10016 = vunpack.c.0.s8 %v10015
    %v10017 = vlaneseq
    %v10018 = vshrl.u32 %v10017, 7
    %v10019 = vsub.s32 %v10016, %v10018
    %v10020 = vrot.slane %v10006, %v10019
    %v10021 = vcombine.high %v10013, %v10013
    %v10022 = vcombine.high %v10020, %v10020
    %v10023 = vcombine.high %v8887, %v8887
    %v10025 = vunpack.c.l.s4 1983009808
    %v10026 = vunpack.c.0.s8 %v10025
    %v10027 = vlaneseq
    %v10028 = vshrl.u32 %v10027, 7
    %v10029 = vsub.s32 %v10026, %v10028
    %v10030 = vrot.slane %v8887, %v10029
    %v10032 = vunpack.c.l.s4 1983009808
    %v10033 = vunpack.c.0.s8 %v10032
    %v10034 = vlaneseq
    %v10035 = vshrl.u32 %v10034, 7
    %v10036 = vsub.s32 %v10033, %v10035
    %v10037 = vrot.slane %v10023, %v10036
    %v10038 = vcombine.high %v10030, %v10030
    %v10039 = vcombine.high %v10037, %v10037
    %v10040 = vcombine.high %v8888, %v8888
    %v10042 = vunpack.c.l.s4 1983009808
    %v10043 = vunpack.c.0.s8 %v10042
    %v10044 = vlaneseq
    %v10045 = vshrl.u32 %v10044, 7
    %v10046 = vsub.s32 %v10043, %v10045
    %v10047 = vrot.slane %v8888, %v10046
    %v10049 = vunpack.c.l.s4 1983009808
    %v10050 = vunpack.c.0.s8 %v10049
    %v10051 = vlaneseq
    %v10052 = vshrl.u32 %v10051, 7
    %v10053 = vsub.s32 %v10050, %v10052
    %v10054 = vrot.slane %v10040, %v10053
    %v10055 = vcombine.high %v10047, %v10047
    %v10056 = vcombine.high %v10054, %v10054
    %v10057 = vcombine.high %v8889, %v8889
    %v10059 = vunpack.c.l.s4 1983009808
    %v10060 = vunpack.c.0.s8 %v10059
    %v10061 = vlaneseq
    %v10062 = vshrl.u32 %v10061, 7
    %v10063 = vsub.s32 %v10060, %v10062
    %v10064 = vrot.slane %v8889, %v10063
    %v10066 = vunpack.c.l.s4 1983009808
    %v10067 = vunpack.c.0.s8 %v10066
    %v10068 = vlaneseq
    %v10069 = vshrl.u32 %v10068, 7
    %v10070 = vsub.s32 %v10067, %v10069
    %v10071 = vrot.slane %v10057, %v10070
    %v10072 = vcombine.high %v10064, %v10064
    %v10073 = vcombine.high %v10071, %v10071
    %v10074 = vcombine.high %v8890, %v8890
    %v10076 = vunpack.c.l.s4 1983009808
    %v10077 = vunpack.c.0.s8 %v10076
    %v10078 = vlaneseq
    %v10079 = vshrl.u32 %v10078, 7
    %v10080 = vsub.s32 %v10077, %v10079
    %v10081 = vrot.slane %v8890, %v10080
    %v10083 = vunpack.c.l.s4 1983009808
    %v10084 = vunpack.c.0.s8 %v10083
    %v10085 = vlaneseq
    %v10086 = vshrl.u32 %v10085, 7
    %v10087 = vsub.s32 %v10084, %v10086
    %v10088 = vrot.slane %v10074, %v10087
    %v10089 = vcombine.high %v10081, %v10081
    %v10090 = vcombine.high %v10088, %v10088
    %v10091 = vcombine.high %v8891, %v8891
    %v10093 = vunpack.c.l.s4 1983009808
    %v10094 = vunpack.c.0.s8 %v10093
    %v10095 = vlaneseq
    %v10096 = vshrl.u32 %v10095, 7
    %v10097 = vsub.s32 %v10094, %v10096
    %v10098 = vrot.slane %v8891, %v10097
    %v10100 = vunpack.c.l.s4 1983009808
    %v10101 = vunpack.c.0.s8 %v10100
    %v10102 = vlaneseq
    %v10103 = vshrl.u32 %v10102, 7
    %v10104 = vsub.s32 %v10101, %v10103
    %v10105 = vrot.slane %v10091, %v10104
    %v10106 = vcombine.high %v10098, %v10098
    %v10107 = vcombine.high %v10105, %v10105
    %v10108 = vcombine.high %v8892, %v8892
    %v10110 = vunpack.c.l.s4 1983009808
    %v10111 = vunpack.c.0.s8 %v10110
    %v10112 = vlaneseq
    %v10113 = vshrl.u32 %v10112, 7
    %v10114 = vsub.s32 %v10111, %v10113
    %v10115 = vrot.slane %v8892, %v10114
    %v10117 = vunpack.c.l.s4 1983009808
    %v10118 = vunpack.c.0.s8 %v10117
    %v10119 = vlaneseq
    %v10120 = vshrl.u32 %v10119, 7
    %v10121 = vsub.s32 %v10118, %v10120
    %v10122 = vrot.slane %v10108, %v10121
    %v10123 = vcombine.high %v10115, %v10115
    %v10124 = vcombine.high %v10122, %v10122
    %v10125 = vcombine.high %v8893, %v8893
    %v10127 = vunpack.c.l.s4 1983009808
    %v10128 = vunpack.c.0.s8 %v10127
    %v10129 = vlaneseq
    %v10130 = vshrl.u32 %v10129, 7
    %v10131 = vsub.s32 %v10128, %v10130
    %v10132 = vrot.slane %v8893, %v10131
    %v10134 = vunpack.c.l.s4 1983009808
    %v10135 = vunpack.c.0.s8 %v10134
    %v10136 = vlaneseq
    %v10137 = vshrl.u32 %v10136, 7
    %v10138 = vsub.s32 %v10135, %v10137
    %v10139 = vrot.slane %v10125, %v10138
    %v10140 = vcombine.high %v10132, %v10132
    %v10141 = vcombine.high %v10139, %v10139
    %v10142 = vcombine.high %v8894, %v8894
    %v10144 = vunpack.c.l.s4 1983009808
    %v10145 = vunpack.c.0.s8 %v10144
    %v10146 = vlaneseq
    %v10147 = vshrl.u32 %v10146, 7
    %v10148 = vsub.s32 %v10145, %v10147
    %v10149 = vrot.slane %v8894, %v10148
    %v10151 = vunpack.c.l.s4 1983009808
    %v10152 = vunpack.c.0.s8 %v10151
    %v10153 = vlaneseq
    %v10154 = vshrl.u32 %v10153, 7
    %v10155 = vsub.s32 %v10152, %v10154
    %v10156 = vrot.slane %v10142, %v10155
    %v10157 = vcombine.high %v10149, %v10149
    %v10158 = vcombine.high %v10156, %v10156
    %v10159 = vcombine.high %v8895, %v8895
    %v10161 = vunpack.c.l.s4 1983009808
    %v10162 = vunpack.c.0.s8 %v10161
    %v10163 = vlaneseq
    %v10164 = vshrl.u32 %v10163, 7
    %v10165 = vsub.s32 %v10162, %v10164
    %v10166 = vrot.slane %v8895, %v10165
    %v10168 = vunpack.c.l.s4 1983009808
    %v10169 = vunpack.c.0.s8 %v10168
    %v10170 = vlaneseq
    %v10171 = vshrl.u32 %v10170, 7
    %v10172 = vsub.s32 %v10169, %v10171
    %v10173 = vrot.slane %v10159, %v10172
    %v10174 = vcombine.high %v10166, %v10166
    %v10175 = vcombine.high %v10173, %v10173
    %v10176 = vcombine.high %v8896, %v8896
    %v10178 = vunpack.c.l.s4 1983009808
    %v10179 = vunpack.c.0.s8 %v10178
    %v10180 = vlaneseq
    %v10181 = vshrl.u32 %v10180, 7
    %v10182 = vsub.s32 %v10179, %v10181
    %v10183 = vrot.slane %v8896, %v10182
    %v10185 = vunpack.c.l.s4 1983009808
    %v10186 = vunpack.c.0.s8 %v10185
    %v10187 = vlaneseq
    %v10188 = vshrl.u32 %v10187, 7
    %v10189 = vsub.s32 %v10186, %v10188
    %v10190 = vrot.slane %v10176, %v10189
    %v10191 = vcombine.high %v10183, %v10183
    %v10192 = vcombine.high %v10190, %v10190
    %v10193 = vcombine.high %v8897, %v8897
    %v10195 = vunpack.c.l.s4 1983009808
    %v10196 = vunpack.c.0.s8 %v10195
    %v10197 = vlaneseq
    %v10198 = vshrl.u32 %v10197, 7
    %v10199 = vsub.s32 %v10196, %v10198
    %v10200 = vrot.slane %v8897, %v10199
    %v10202 = vunpack.c.l.s4 1983009808
    %v10203 = vunpack.c.0.s8 %v10202
    %v10204 = vlaneseq
    %v10205 = vshrl.u32 %v10204, 7
    %v10206 = vsub.s32 %v10203, %v10205
    %v10207 = vrot.slane %v10193, %v10206
    %v10208 = vcombine.high %v10200, %v10200
    %v10209 = vcombine.high %v10207, %v10207
    %v10210 = vcombine.high %v8898, %v8898
    %v10212 = vunpack.c.l.s4 1983009808
    %v10213 = vunpack.c.0.s8 %v10212
    %v10214 = vlaneseq
    %v10215 = vshrl.u32 %v10214, 7
    %v10216 = vsub.s32 %v10213, %v10215
    %v10217 = vrot.slane %v8898, %v10216
    %v10219 = vunpack.c.l.s4 1983009808
    %v10220 = vunpack.c.0.s8 %v10219
    %v10221 = vlaneseq
    %v10222 = vshrl.u32 %v10221, 7
    %v10223 = vsub.s32 %v10220, %v10222
    %v10224 = vrot.slane %v10210, %v10223
    %v10225 = vcombine.high %v10217, %v10217
    %v10226 = vcombine.high %v10224, %v10224
    %v10227 = vcombine.high %v8899, %v8899
    %v10229 = vunpack.c.l.s4 1983009808
    %v10230 = vunpack.c.0.s8 %v10229
    %v10231 = vlaneseq
    %v10232 = vshrl.u32 %v10231, 7
    %v10233 = vsub.s32 %v10230, %v10232
    %v10234 = vrot.slane %v8899, %v10233
    %v10236 = vunpack.c.l.s4 1983009808
    %v10237 = vunpack.c.0.s8 %v10236
    %v10238 = vlaneseq
    %v10239 = vshrl.u32 %v10238, 7
    %v10240 = vsub.s32 %v10237, %v10239
    %v10241 = vrot.slane %v10227, %v10240
    %v10242 = vcombine.high %v10234, %v10234
    %v10243 = vcombine.high %v10241, %v10241
    %10308 = vst [vmem:[%s8] sm:$0x3] %v8923
    %10309 = vst [vmem:[%s8 + $0x2] sm:$0x3] %v9275
    %10310 = vst [vmem:[%s8 + $0x4] sm:$0x3] %v8931
    %10311 = vst [vmem:[%s8 + $0x6] sm:$0x3] %v9283
    %10312 = vst [vmem:[%s8 + $0x8] sm:$0x3] %v8930
    %10313 = vst [vmem:[%s8 + $0xa] sm:$0x3] %v9282
    %10314 = vst [vmem:[%s8 + $0xc] sm:$0x3] %v8932
    %10315 = vst [vmem:[%s8 + $0xe] sm:$0x3] %v9284
    %10316 = vst [vmem:[%s8 + $0x10] sm:$0x3] %v8940
    %10317 = vst [vmem:[%s8 + $0x12] sm:$0x3] %v9292
    %10318 = vst [vmem:[%s8 + $0x14] sm:$0x3] %v8948
    %10319 = vst [vmem:[%s8 + $0x16] sm:$0x3] %v9300
    %10320 = vst [vmem:[%s8 + $0x18] sm:$0x3] %v8947
    %10321 = vst [vmem:[%s8 + $0x1a] sm:$0x3] %v9299
    %10322 = vst [vmem:[%s8 + $0x1c] sm:$0x3] %v8949
    %10323 = vst [vmem:[%s8 + $0x1e] sm:$0x3] %v9301
    %10324 = vst [vmem:[%s8 + $0x20] sm:$0x3] %v9627
    %10325 = vst [vmem:[%s8 + $0x22] sm:$0x3] %v9979
    %10326 = vst [vmem:[%s8 + $0x24] sm:$0x3] %v9635
    %10327 = vst [vmem:[%s8 + $0x26] sm:$0x3] %v9987
    %10328 = vst [vmem:[%s8 + $0x28] sm:$0x3] %v9634
    %10329 = vst [vmem:[%s8 + $0x2a] sm:$0x3] %v9986
    %10330 = vst [vmem:[%s8 + $0x2c] sm:$0x3] %v9636
    %10331 = vst [vmem:[%s8 + $0x2e] sm:$0x3] %v9988
    %10332 = vst [vmem:[%s8 + $0x30] sm:$0x3] %v9644
    %10333 = vst [vmem:[%s8 + $0x32] sm:$0x3] %v9996
    %10334 = vst [vmem:[%s8 + $0x34] sm:$0x3] %v9652
    %10335 = vst [vmem:[%s8 + $0x36] sm:$0x3] %v10004
    %10336 = vst [vmem:[%s8 + $0x38] sm:$0x3] %v9651
    %10337 = vst [vmem:[%s8 + $0x3a] sm:$0x3] %v10003
    %10338 = vst [vmem:[%s8 + $0x3c] sm:$0x3] %v9653
    %10339 = vst [vmem:[%s8 + $0x3e] sm:$0x3] %v10005
    %10340 = vst [vmem:[%s8 + $0x40] sm:$0x3] %v8957
    %10341 = vst [vmem:[%s8 + $0x42] sm:$0x3] %v9309
    %10342 = vst [vmem:[%s8 + $0x44] sm:$0x3] %v8965
    %10343 = vst [vmem:[%s8 + $0x46] sm:$0x3] %v9317
    %10344 = vst [vmem:[%s8 + $0x48] sm:$0x3] %v8964
    %10345 = vst [vmem:[%s8 + $0x4a] sm:$0x3] %v9316
    %10346 = vst [vmem:[%s8 + $0x4c] sm:$0x3] %v8966
    %10347 = vst [vmem:[%s8 + $0x4e] sm:$0x3] %v9318
    %10348 = vst [vmem:[%s8 + $0x50] sm:$0x3] %v8974
    %10349 = vst [vmem:[%s8 + $0x52] sm:$0x3] %v9326
    %10350 = vst [vmem:[%s8 + $0x54] sm:$0x3] %v8982
    %10351 = vst [vmem:[%s8 + $0x56] sm:$0x3] %v9334
    %10352 = vst [vmem:[%s8 + $0x58] sm:$0x3] %v8981
    %10353 = vst [vmem:[%s8 + $0x5a] sm:$0x3] %v9333
    %10354 = vst [vmem:[%s8 + $0x5c] sm:$0x3] %v8983
    %10355 = vst [vmem:[%s8 + $0x5e] sm:$0x3] %v9335
    %10356 = vst [vmem:[%s8 + $0x60] sm:$0x3] %v9661
    %10357 = vst [vmem:[%s8 + $0x62] sm:$0x3] %v10013
    %10358 = vst [vmem:[%s8 + $0x64] sm:$0x3] %v9669
    %10359 = vst [vmem:[%s8 + $0x66] sm:$0x3] %v10021
    %10360 = vst [vmem:[%s8 + $0x68] sm:$0x3] %v9668
    %10361 = vst [vmem:[%s8 + $0x6a] sm:$0x3] %v10020
    %10362 = vst [vmem:[%s8 + $0x6c] sm:$0x3] %v9670
    %10363 = vst [vmem:[%s8 + $0x6e] sm:$0x3] %v10022
    %10364 = vst [vmem:[%s8 + $0x70] sm:$0x3] %v9678
    %10365 = vst [vmem:[%s8 + $0x72] sm:$0x3] %v10030
    %10366 = vst [vmem:[%s8 + $0x74] sm:$0x3] %v9686
    %10367 = vst [vmem:[%s8 + $0x76] sm:$0x3] %v10038
    %10368 = vst [vmem:[%s8 + $0x78] sm:$0x3] %v9685
    %10369 = vst [vmem:[%s8 + $0x7a] sm:$0x3] %v10037
    %10370 = vst [vmem:[%s8 + $0x7c] sm:$0x3] %v9687
    %10371 = vst [vmem:[%s8 + $0x7e] sm:$0x3] %v10039
    %10372 = vst [vmem:[%s8 + $0x80] sm:$0x3] %v8991
    %10373 = vst [vmem:[%s8 + $0x82] sm:$0x3] %v9343
    %10374 = vst [vmem:[%s8 + $0x84] sm:$0x3] %v8999
    %10375 = vst [vmem:[%s8 + $0x86] sm:$0x3] %v9351
    %10376 = vst [vmem:[%s8 + $0x88] sm:$0x3] %v8998
    %10377 = vst [vmem:[%s8 + $0x8a] sm:$0x3] %v9350
    %10378 = vst [vmem:[%s8 + $0x8c] sm:$0x3] %v9000
    %10379 = vst [vmem:[%s8 + $0x8e] sm:$0x3] %v9352
    %10380 = vst [vmem:[%s8 + $0x90] sm:$0x3] %v9008
    %10381 = vst [vmem:[%s8 + $0x92] sm:$0x3] %v9360
    %10382 = vst [vmem:[%s8 + $0x94] sm:$0x3] %v9016
    %10383 = vst [vmem:[%s8 + $0x96] sm:$0x3] %v9368
    %10384 = vst [vmem:[%s8 + $0x98] sm:$0x3] %v9015
    %10385 = vst [vmem:[%s8 + $0x9a] sm:$0x3] %v9367
    %10386 = vst [vmem:[%s8 + $0x9c] sm:$0x3] %v9017
    %10387 = vst [vmem:[%s8 + $0x9e] sm:$0x3] %v9369
    %10388 = vst [vmem:[%s8 + $0xa0] sm:$0x3] %v9695
    %10389 = vst [vmem:[%s8 + $0xa2] sm:$0x3] %v10047
    %10390 = vst [vmem:[%s8 + $0xa4] sm:$0x3] %v9703
    %10391 = vst [vmem:[%s8 + $0xa6] sm:$0x3] %v10055
    %10392 = vst [vmem:[%s8 + $0xa8] sm:$0x3] %v9702
    %10393 = vst [vmem:[%s8 + $0xaa] sm:$0x3] %v10054
    %10394 = vst [vmem:[%s8 + $0xac] sm:$0x3] %v9704
    %10395 = vst [vmem:[%s8 + $0xae] sm:$0x3] %v10056
    %10396 = vst [vmem:[%s8 + $0xb0] sm:$0x3] %v9712
    %10397 = vst [vmem:[%s8 + $0xb2] sm:$0x3] %v10064
    %10398 = vst [vmem:[%s8 + $0xb4] sm:$0x3] %v9720
    %10399 = vst [vmem:[%s8 + $0xb6] sm:$0x3] %v10072
    %10400 = vst [vmem:[%s8 + $0xb8] sm:$0x3] %v9719
    %10401 = vst [vmem:[%s8 + $0xba] sm:$0x3] %v10071
    %10402 = vst [vmem:[%s8 + $0xbc] sm:$0x3] %v9721
    %10403 = vst [vmem:[%s8 + $0xbe] sm:$0x3] %v10073
    %10404 = vst [vmem:[%s8 + $0xc0] sm:$0x3] %v9025
    %10405 = vst [vmem:[%s8 + $0xc2] sm:$0x3] %v9377
    %10406 = vst [vmem:[%s8 + $0xc4] sm:$0x3] %v9033
    %10407 = vst [vmem:[%s8 + $0xc6] sm:$0x3] %v9385
    %10408 = vst [vmem:[%s8 + $0xc8] sm:$0x3] %v9032
    %10409 = vst [vmem:[%s8 + $0xca] sm:$0x3] %v9384
    %10410 = vst [vmem:[%s8 + $0xcc] sm:$0x3] %v9034
    %10411 = vst [vmem:[%s8 + $0xce] sm:$0x3] %v9386
    %10412 = vst [vmem:[%s8 + $0xd0] sm:$0x3] %v9042
    %10413 = vst [vmem:[%s8 + $0xd2] sm:$0x3] %v9394
    %10414 = vst [vmem:[%s8 + $0xd4] sm:$0x3] %v9050
    %10415 = vst [vmem:[%s8 + $0xd6] sm:$0x3] %v9402
    %10416 = vst [vmem:[%s8 + $0xd8] sm:$0x3] %v9049
    %10417 = vst [vmem:[%s8 + $0xda] sm:$0x3] %v9401
    %10418 = vst [vmem:[%s8 + $0xdc] sm:$0x3] %v9051
    %10419 = vst [vmem:[%s8 + $0xde] sm:$0x3] %v9403
    %10420 = vst [vmem:[%s8 + $0xe0] sm:$0x3] %v9729
    %10421 = vst [vmem:[%s8 + $0xe2] sm:$0x3] %v10081
    %10422 = vst [vmem:[%s8 + $0xe4] sm:$0x3] %v9737
    %10423 = vst [vmem:[%s8 + $0xe6] sm:$0x3] %v10089
    %10424 = vst [vmem:[%s8 + $0xe8] sm:$0x3] %v9736
    %10425 = vst [vmem:[%s8 + $0xea] sm:$0x3] %v10088
    %10426 = vst [vmem:[%s8 + $0xec] sm:$0x3] %v9738
    %10427 = vst [vmem:[%s8 + $0xee] sm:$0x3] %v10090
    %10428 = vst [vmem:[%s8 + $0xf0] sm:$0x3] %v9746
    %10429 = vst [vmem:[%s8 + $0xf2] sm:$0x3] %v10098
    %10430 = vst [vmem:[%s8 + $0xf4] sm:$0x3] %v9754
    %10431 = vst [vmem:[%s8 + $0xf6] sm:$0x3] %v10106
    %10432 = vst [vmem:[%s8 + $0xf8] sm:$0x3] %v9753
    %10433 = vst [vmem:[%s8 + $0xfa] sm:$0x3] %v10105
    %10434 = vst [vmem:[%s8 + $0xfc] sm:$0x3] %v9755
    %10435 = vst [vmem:[%s8 + $0xfe] sm:$0x3] %v10107
    %10436 = vst [vmem:[%s8 + $0x100] sm:$0x3] %v9059
    %10437 = vst [vmem:[%s8 + $0x102] sm:$0x3] %v9411
    %10438 = vst [vmem:[%s8 + $0x104] sm:$0x3] %v9067
    %10439 = vst [vmem:[%s8 + $0x106] sm:$0x3] %v9419
    %10440 = vst [vmem:[%s8 + $0x108] sm:$0x3] %v9066
    %10441 = vst [vmem:[%s8 + $0x10a] sm:$0x3] %v9418
    %10442 = vst [vmem:[%s8 + $0x10c] sm:$0x3] %v9068
    %10443 = vst [vmem:[%s8 + $0x10e] sm:$0x3] %v9420
    %10444 = vst [vmem:[%s8 + $0x110] sm:$0x3] %v9076
    %10445 = vst [vmem:[%s8 + $0x112] sm:$0x3] %v9428
    %10446 = vst [vmem:[%s8 + $0x114] sm:$0x3] %v9084
    %10447 = vst [vmem:[%s8 + $0x116] sm:$0x3] %v9436
    %10448 = vst [vmem:[%s8 + $0x118] sm:$0x3] %v9083
    %10449 = vst [vmem:[%s8 + $0x11a] sm:$0x3] %v9435
    %10450 = vst [vmem:[%s8 + $0x11c] sm:$0x3] %v9085
    %10451 = vst [vmem:[%s8 + $0x11e] sm:$0x3] %v9437
    %10452 = vst [vmem:[%s8 + $0x120] sm:$0x3] %v9763
    %10453 = vst [vmem:[%s8 + $0x122] sm:$0x3] %v10115
    %10454 = vst [vmem:[%s8 + $0x124] sm:$0x3] %v9771
    %10455 = vst [vmem:[%s8 + $0x126] sm:$0x3] %v10123
    %10456 = vst [vmem:[%s8 + $0x128] sm:$0x3] %v9770
    %10457 = vst [vmem:[%s8 + $0x12a] sm:$0x3] %v10122
    %10458 = vst [vmem:[%s8 + $0x12c] sm:$0x3] %v9772
    %10459 = vst [vmem:[%s8 + $0x12e] sm:$0x3] %v10124
    %10460 = vst [vmem:[%s8 + $0x130] sm:$0x3] %v9780
    %10461 = vst [vmem:[%s8 + $0x132] sm:$0x3] %v10132
    %10462 = vst [vmem:[%s8 + $0x134] sm:$0x3] %v9788
    %10463 = vst [vmem:[%s8 + $0x136] sm:$0x3] %v10140
    %10464 = vst [vmem:[%s8 + $0x138] sm:$0x3] %v9787
    %10465 = vst [vmem:[%s8 + $0x13a] sm:$0x3] %v10139
    %10466 = vst [vmem:[%s8 + $0x13c] sm:$0x3] %v9789
    %10467 = vst [vmem:[%s8 + $0x13e] sm:$0x3] %v10141
    %10468 = vst [vmem:[%s8 + $0x140] sm:$0x3] %v9093
    %10469 = vst [vmem:[%s8 + $0x142] sm:$0x3] %v9445
    %10470 = vst [vmem:[%s8 + $0x144] sm:$0x3] %v9101
    %10471 = vst [vmem:[%s8 + $0x146] sm:$0x3] %v9453
    %10472 = vst [vmem:[%s8 + $0x148] sm:$0x3] %v9100
    %10473 = vst [vmem:[%s8 + $0x14a] sm:$0x3] %v9452
    %10474 = vst [vmem:[%s8 + $0x14c] sm:$0x3] %v9102
    %10475 = vst [vmem:[%s8 + $0x14e] sm:$0x3] %v9454
    %10476 = vst [vmem:[%s8 + $0x150] sm:$0x3] %v9110
    %10477 = vst [vmem:[%s8 + $0x152] sm:$0x3] %v9462
    %10478 = vst [vmem:[%s8 + $0x154] sm:$0x3] %v9118
    %10479 = vst [vmem:[%s8 + $0x156] sm:$0x3] %v9470
    %10480 = vst [vmem:[%s8 + $0x158] sm:$0x3] %v9117
    %10481 = vst [vmem:[%s8 + $0x15a] sm:$0x3] %v9469
    %10482 = vst [vmem:[%s8 + $0x15c] sm:$0x3] %v9119
    %10483 = vst [vmem:[%s8 + $0x15e] sm:$0x3] %v9471
    %10484 = vst [vmem:[%s8 + $0x160] sm:$0x3] %v9797
    %10485 = vst [vmem:[%s8 + $0x162] sm:$0x3] %v10149
    %10486 = vst [vmem:[%s8 + $0x164] sm:$0x3] %v9805
    %10487 = vst [vmem:[%s8 + $0x166] sm:$0x3] %v10157
    %10488 = vst [vmem:[%s8 + $0x168] sm:$0x3] %v9804
    %10489 = vst [vmem:[%s8 + $0x16a] sm:$0x3] %v10156
    %10490 = vst [vmem:[%s8 + $0x16c] sm:$0x3] %v9806
    %10491 = vst [vmem:[%s8 + $0x16e] sm:$0x3] %v10158
    %10492 = vst [vmem:[%s8 + $0x170] sm:$0x3] %v9814
    %10493 = vst [vmem:[%s8 + $0x172] sm:$0x3] %v10166
    %10494 = vst [vmem:[%s8 + $0x174] sm:$0x3] %v9822
    %10495 = vst [vmem:[%s8 + $0x176] sm:$0x3] %v10174
    %10496 = vst [vmem:[%s8 + $0x178] sm:$0x3] %v9821
    %10497 = vst [vmem:[%s8 + $0x17a] sm:$0x3] %v10173
    %10498 = vst [vmem:[%s8 + $0x17c] sm:$0x3] %v9823
    %10499 = vst [vmem:[%s8 + $0x17e] sm:$0x3] %v10175
    %10500 = vst [vmem:[%s8 + $0x180] sm:$0x3] %v9127
    %10501 = vst [vmem:[%s8 + $0x182] sm:$0x3] %v9479
    %10502 = vst [vmem:[%s8 + $0x184] sm:$0x3] %v9135
    %10503 = vst [vmem:[%s8 + $0x186] sm:$0x3] %v9487
    %10504 = vst [vmem:[%s8 + $0x188] sm:$0x3] %v9134
    %10505 = vst [vmem:[%s8 + $0x18a] sm:$0x3] %v9486
    %10506 = vst [vmem:[%s8 + $0x18c] sm:$0x3] %v9136
    %10507 = vst [vmem:[%s8 + $0x18e] sm:$0x3] %v9488
    %10508 = vst [vmem:[%s8 + $0x190] sm:$0x3] %v9144
    %10509 = vst [vmem:[%s8 + $0x192] sm:$0x3] %v9496
    %10510 = vst [vmem:[%s8 + $0x194] sm:$0x3] %v9152
    %10511 = vst [vmem:[%s8 + $0x196] sm:$0x3] %v9504
    %10512 = vst [vmem:[%s8 + $0x198] sm:$0x3] %v9151
    %10513 = vst [vmem:[%s8 + $0x19a] sm:$0x3] %v9503
    %10514 = vst [vmem:[%s8 + $0x19c] sm:$0x3] %v9153
    %10515 = vst [vmem:[%s8 + $0x19e] sm:$0x3] %v9505
    %10516 = vst [vmem:[%s8 + $0x1a0] sm:$0x3] %v9831
    %10517 = vst [vmem:[%s8 + $0x1a2] sm:$0x3] %v10183
    %10518 = vst [vmem:[%s8 + $0x1a4] sm:$0x3] %v9839
    %10519 = vst [vmem:[%s8 + $0x1a6] sm:$0x3] %v10191
    %10520 = vst [vmem:[%s8 + $0x1a8] sm:$0x3] %v9838
    %10521 = vst [vmem:[%s8 + $0x1aa] sm:$0x3] %v10190
    %10522 = vst [vmem:[%s8 + $0x1ac] sm:$0x3] %v9840
    %10523 = vst [vmem:[%s8 + $0x1ae] sm:$0x3] %v10192
    %10524 = vst [vmem:[%s8 + $0x1b0] sm:$0x3] %v9848
    %10525 = vst [vmem:[%s8 + $0x1b2] sm:$0x3] %v10200
    %10526 = vst [vmem:[%s8 + $0x1b4] sm:$0x3] %v9856
    %10527 = vst [vmem:[%s8 + $0x1b6] sm:$0x3] %v10208
    %10528 = vst [vmem:[%s8 + $0x1b8] sm:$0x3] %v9855
    %10529 = vst [vmem:[%s8 + $0x1ba] sm:$0x3] %v10207
    %10530 = vst [vmem:[%s8 + $0x1bc] sm:$0x3] %v9857
    %10531 = vst [vmem:[%s8 + $0x1be] sm:$0x3] %v10209
    %10532 = vst [vmem:[%s8 + $0x1c0] sm:$0x3] %v9161
    %10533 = vst [vmem:[%s8 + $0x1c2] sm:$0x3] %v9513
    %10534 = vst [vmem:[%s8 + $0x1c4] sm:$0x3] %v9169
    %10535 = vst [vmem:[%s8 + $0x1c6] sm:$0x3] %v9521
    %10536 = vst [vmem:[%s8 + $0x1c8] sm:$0x3] %v9168
    %10537 = vst [vmem:[%s8 + $0x1ca] sm:$0x3] %v9520
    %10538 = vst [vmem:[%s8 + $0x1cc] sm:$0x3] %v9170
    %10539 = vst [vmem:[%s8 + $0x1ce] sm:$0x3] %v9522
    %10540 = vst [vmem:[%s8 + $0x1d0] sm:$0x3] %v9178
    %10541 = vst [vmem:[%s8 + $0x1d2] sm:$0x3] %v9530
    %10542 = vst [vmem:[%s8 + $0x1d4] sm:$0x3] %v9186
    %10543 = vst [vmem:[%s8 + $0x1d6] sm:$0x3] %v9538
    %10544 = vst [vmem:[%s8 + $0x1d8] sm:$0x3] %v9185
    %10545 = vst [vmem:[%s8 + $0x1da] sm:$0x3] %v9537
    %10546 = vst [vmem:[%s8 + $0x1dc] sm:$0x3] %v9187
    %10547 = vst [vmem:[%s8 + $0x1de] sm:$0x3] %v9539
    %10548 = vst [vmem:[%s8 + $0x1e0] sm:$0x3] %v9865
    %10549 = vst [vmem:[%s8 + $0x1e2] sm:$0x3] %v10217
    %10550 = vst [vmem:[%s8 + $0x1e4] sm:$0x3] %v9873
    %10551 = vst [vmem:[%s8 + $0x1e6] sm:$0x3] %v10225
    %10552 = vst [vmem:[%s8 + $0x1e8] sm:$0x3] %v9872
    %10553 = vst [vmem:[%s8 + $0x1ea] sm:$0x3] %v10224
    %10554 = vst [vmem:[%s8 + $0x1ec] sm:$0x3] %v9874
    %10555 = vst [vmem:[%s8 + $0x1ee] sm:$0x3] %v10226
    %10556 = vst [vmem:[%s8 + $0x1f0] sm:$0x3] %v9882
    %10557 = vst [vmem:[%s8 + $0x1f2] sm:$0x3] %v10234
    %10558 = vst [vmem:[%s8 + $0x1f4] sm:$0x3] %v9890
    %10559 = vst [vmem:[%s8 + $0x1f6] sm:$0x3] %v10242
    %10560 = vst [vmem:[%s8 + $0x1f8] sm:$0x3] %v9889
    %10561 = vst [vmem:[%s8 + $0x1fa] sm:$0x3] %v10241
    %10562 = vst [vmem:[%s8 + $0x1fc] sm:$0x3] %v9891
    %10563 = vst [vmem:[%s8 + $0x1fe] sm:$0x3] %v10243
    // Predicated region
    $region54: #{decoders_forward.1} parent=1 // pred_check
      _
    $region55: #{decoders_forward.1} parent=1 // pred_check_branch
      %10565 = sbr.rel (0) target = $region57
    $region56: #{decoders_forward.1} parent=1 // pred_region
      _
    $region57: #{decoders_forward.1} parent=1 // pred_fallthru
      _
    // Predicated region
    $region58: #{decoders_forward.1} parent=1 // pred_check
      _
    $region59: #{decoders_forward.1} parent=1 // pred_check_branch
      %10567 = sbr.rel (0) target = $region61
    $region60: #{decoders_forward.1} parent=1 // pred_region
      _
    $region61: #{decoders_forward.1} parent=1 // pred_fallthru
      _
    %10568 = vsyncpa [#allocation3], 1
    %10569 = vsyncpa [#allocation5], 1
    %10570 = vsyncpa [#allocation8], 1

</llo_original>
